<compile_context>
chip_gen: v6e
topology: v6e:2x2x1
jax: 0.10.0
libtpu: 0.0.40
codegen_flags: <defaults>
</compile_context>

<pallas_src>
import functools

import jax
import jax.numpy as jnp
from jax.experimental import pallas as pl
from jax.experimental.pallas import tpu as pltpu


# ----------------------------------------------------------------------------
# padded channel sizes (lane-dense multiples of 128; logical size in parens)
# ----------------------------------------------------------------------------
STEM_K = 32     # stem patch K: 9 taps x 3 channels = 27 (padded to 32)
C_STEM = 128    # stem output (24)
C_B1 = 128      # block-1 output (24)
C_B2E = 128     # block-2 expand (96)
C_B2P = 128     # block-2 / block-3 output (48)
C_B3E = 256     # block-3 expand (192)
C_SE = 128      # SE squeeze (12)
C_HEAD = 128    # head channels (128)
C_OUT = 128     # classifier output (num_classes, padded)

ACT_DTYPE = jnp.bfloat16    # inter-layer activation storage dtype (HBM traffic /2)


# ----------------------------------------------------------------------------
# helpers
# ----------------------------------------------------------------------------
def _sigmoid(x):
    # exp -> EUP, approx reciprocal -> EUP: the whole sigmoid stays off the VALU.
    return pl.reciprocal(1.0 + jnp.exp(-x), approx=True)


def _cparams(n_axes=1):
    return pltpu.CompilerParams(
        dimension_semantics=("parallel",) * n_axes,
        vmem_limit_bytes=32 * 1024 * 1024)


# ----------------------------------------------------------------------------
# Pallas kernels
# ----------------------------------------------------------------------------
def _matmul_kernel(a_ref, w_ref, b_ref, o_ref, *, act):
    """Fused A @ W + b (+SiLU). Used for the patch-packed stem conv."""
    a = a_ref[...].astype(jnp.bfloat16)
    acc = jnp.dot(a, w_ref[...], preferred_element_type=jnp.float32)
    acc = acc + b_ref[...]
    if act == "silu":
        acc = acc * _sigmoid(acc)
    o_ref[...] = acc.astype(o_ref.dtype)


def _conv3x3_s1_kernel(x_ref, w_ref, b_ref, o_ref, *, act):
    """3x3/s1 conv on a padded NHWC tile (one image per grid step).

    9 accumulated MXU dots (K = C per tap) + folded-BN bias + SiLU + residual.
    The residual is the centre of the already-loaded padded tile, so the
    feature map is DMA'd exactly once.
    """
    _, hp, wp, c = x_ref.shape
    h, w = hp - 2, wp - 2
    n = w_ref.shape[2]
    x = x_ref[0].astype(jnp.float32)                       # [hp, wp, c]
    acc = jnp.zeros((h * w, n), jnp.float32)
    for kh in range(3):
        for kw in range(3):
            tap = x[kh:kh + h, kw:kw + w, :].reshape(h * w, c)
            acc = acc + jnp.dot(tap.astype(jnp.bfloat16), w_ref[kh * 3 + kw],
                                preferred_element_type=jnp.float32)
    acc = acc + b_ref[...]
    if act == "silu":
        acc = acc * _sigmoid(acc)
    res = x[1:1 + h, 1:1 + w, :].reshape(h * w, c)         # residual = input tile centre
    o_ref[0] = (acc + res).astype(o_ref.dtype)


def _block2_kernel(p00_ref, p01_ref, p10_ref, p11_ref,
                   we_ref, be_ref, wp_ref, bp_ref, o_ref):
    """FusedMBConv(expand=4, stride 2), fully fused (one image per grid step).

    Stride-2 3x3 expand conv from 4 even/odd phases (static unit-stride taps)
    + SiLU, then the 1x1 projection -- the expanded map never leaves VMEM.
    """
    _, hq, wq, c = p00_ref.shape
    ho, wo = hq - 1, wq - 1
    n_e = we_ref.shape[2]
    phases = (p00_ref[0].astype(jnp.float32), p01_ref[0].astype(jnp.float32),
              p10_ref[0].astype(jnp.float32), p11_ref[0].astype(jnp.float32))
    acc = jnp.zeros((ho * wo, n_e), jnp.float32)
    for kh in range(3):
        for kw in range(3):
            ph = phases[(kh % 2) * 2 + (kw % 2)]
            tap = ph[kh // 2:kh // 2 + ho, kw // 2:kw // 2 + wo, :]
            tap = tap.reshape(ho * wo, c)
            acc = acc + jnp.dot(tap.astype(jnp.bfloat16), we_ref[kh * 3 + kw],
                                preferred_element_type=jnp.float32)
    acc = acc + be_ref[...]
    acc = acc * _sigmoid(acc)                              # SiLU on expanded map
    y = jnp.dot(acc.astype(jnp.bfloat16), wp_ref[...],     # 1x1 project (in VMEM)
                preferred_element_type=jnp.float32) + bp_ref[...]
    o_ref[0] = y.astype(o_ref.dtype)


def _block3_head_kernel(x_ref,
                        we_ref, be_ref,
                        wd_ref, sd_ref, bd_ref,
                        w1_ref, b1_ref, w2_ref, b2_ref,
                        wp_ref, bp_ref,
                        wh_ref, bh_ref,
                        wf_ref, bf_ref,
                        o_ref, *, h, w):
    """MBConv(expand=4, SE) + head 1x1 conv + GAP + folded classifier, per image.

    Every intermediate (expanded map, dwconv output, SE gate, head features)
    stays in VMEM/vregs; the residual is the kernel's own input.
    """
    hw = h * w
    x = x_ref[0]                                                 # [hw, C_B2P] bf16

    # --- 1x1 expand + SiLU
    e = jnp.dot(x, we_ref[...], preferred_element_type=jnp.float32) + be_ref[...]
    e = e * _sigmoid(e)                                          # [hw, C_B3E] f32

    # --- depthwise 3x3 (SAME, stride 1) on [h, w, C_B3E]; in-kernel zero halo
    c = e.shape[-1]
    e3 = e.reshape(h, w, c)
    zrow = jnp.zeros((1, w, c), jnp.float32)
    ep = jnp.concatenate([zrow, e3, zrow], axis=0)               # [h+2, w, c]
    zcol = jnp.zeros((h + 2, 1, c), jnp.float32)
    ep = jnp.concatenate([zcol, ep, zcol], axis=1)               # [h+2, w+2, c]
    d = jnp.zeros((h, w, c), jnp.float32)
    for kh in range(3):
        for kw in range(3):
            d = d + ep[kh:kh + h, kw:kw + w, :] * wd_ref[kh * 3 + kw]
    d = d * sd_ref[...] + bd_ref[...]                            # folded BN
    d = d * _sigmoid(d)                                          # SiLU
    d2 = d.reshape(hw, c)

    # --- squeeze-excitation: GAP -> FC1 -> SiLU -> FC2 -> sigmoid
    pooled = jnp.sum(d2, axis=0, keepdims=True) * (1.0 / float(hw))   # [1, c]
    s = jnp.dot(pooled.astype(jnp.bfloat16), w1_ref[...],
                preferred_element_type=jnp.float32) + b1_ref[...]
    s = s * _sigmoid(s)
    g = jnp.dot(s.astype(jnp.bfloat16), w2_ref[...],
                preferred_element_type=jnp.float32) + b2_ref[...]
    gate = _sigmoid(g)                                                # [1, c]

    # --- SE-gated 1x1 projection + residual (residual == kernel input)
    gated = (d2 * gate).astype(jnp.bfloat16)
    pjt = jnp.dot(gated, wp_ref[...],
                  preferred_element_type=jnp.float32) + bp_ref[...]
    blk3 = pjt + x.astype(jnp.float32)                                # [hw, C_B2P]

    # --- head 1x1 conv + SiLU
    hd = jnp.dot(blk3.astype(jnp.bfloat16), wh_ref[...],
                 preferred_element_type=jnp.float32) + bh_ref[...]
    hd = hd * _sigmoid(hd)                                            # [hw, C_HEAD]

    # --- global average pool + folded (classifier o final Linear)
    feat = jnp.sum(hd, axis=0, keepdims=True) * (1.0 / float(hw))     # [1, C_HEAD]
    logits = jnp.dot(feat.astype(jnp.bfloat16), wf_ref[...],
                     preferred_element_type=jnp.float32) + bf_ref[...]
    o_ref[0] = logits.astype(o_ref.dtype)                             # [1, C_OUT]


# ----------------------------------------------------------------------------
# Pallas wrappers
# ----------------------------------------------------------------------------
def matmul_bias_act(a, w, b, act="none", out_dtype=jnp.float32, tm=128):
    """Row-tiled fused matmul (used for the patch-packed stem conv)."""
    m, k = a.shape
    n = w.shape[1]
    if m % tm != 0:
        tm = m
    return pl.pallas_call(
        functools.partial(_matmul_kernel, act=act),
        grid=(m // tm,),
        out_shape=jax.ShapeDtypeStruct((m, n), out_dtype),
        in_specs=[pl.BlockSpec((tm, k), lambda i: (i, 0)),
                  pl.BlockSpec((k, n), lambda i: (0, 0)),
                  pl.BlockSpec((1, n), lambda i: (0, 0))],
        out_specs=pl.BlockSpec((tm, n), lambda i: (i, 0)),
        compiler_params=_cparams(1),
    )(a, w, b)


def conv3x3_s1_residual(x, w, b, act="silu"):
    """3x3/s1 conv + BN + SiLU + residual (residual from tile centre), bf16 out."""
    bsz, h, wd, c = x.shape
    n = w.shape[2]
    xp = jnp.pad(x, ((0, 0), (1, 1), (1, 1), (0, 0)))
    out = pl.pallas_call(
        functools.partial(_conv3x3_s1_kernel, act=act),
        grid=(bsz,),
        out_shape=jax.ShapeDtypeStruct((bsz, h * wd, n), ACT_DTYPE),
        in_specs=[pl.BlockSpec((1, h + 2, wd + 2, c), lambda i: (i, 0, 0, 0)),
                  pl.BlockSpec((9, c, n), lambda i: (0, 0, 0)),
                  pl.BlockSpec((1, n), lambda i: (0, 0))],
        out_specs=pl.BlockSpec((1, h * wd, n), lambda i: (i, 0, 0)),
        compiler_params=_cparams(1),
    )(xp, w, b)
    return out.reshape(bsz, h, wd, n)


def block2_fused(x, we, be, wp, bp):
    """Stride-2 expand conv + SiLU + 1x1 project, fused; returns [B, H/2*W/2, C]."""
    bsz, h, wd, c = x.shape
    ho, wo = h // 2, wd // 2
    hq, wq = ho + 1, wo + 1
    n_e = we.shape[2]
    n_p = wp.shape[1]
    xpad = jnp.pad(x, ((0, 0), (1, 1), (1, 1), (0, 0)))
    # even/odd phase split: pure data movement on a tiny bf16 tensor
    phases = [xpad[:, a::2, bb::2, :] for a in (0, 1) for bb in (0, 1)]
    phase_spec = pl.BlockSpec((1, hq, wq, c), lambda i: (i, 0, 0, 0))
    return pl.pallas_call(
        _block2_kernel,
        grid=(bsz,),
        out_shape=jax.ShapeDtypeStruct((bsz, ho * wo, n_p), ACT_DTYPE),
        in_specs=[phase_spec, phase_spec, phase_spec, phase_spec,
                  pl.BlockSpec((9, c, n_e), lambda i: (0, 0, 0)),
                  pl.BlockSpec((1, n_e), lambda i: (0, 0)),
                  pl.BlockSpec((n_e, n_p), lambda i: (0, 0)),
                  pl.BlockSpec((1, n_p), lambda i: (0, 0))],
        out_specs=pl.BlockSpec((1, ho * wo, n_p), lambda i: (i, 0, 0)),
        compiler_params=_cparams(1),
    )(*phases, we, be, wp, bp)


def block3_head_fused(x_flat, p, h, w):
    """Block-3 (MBConv+SE) + head + GAP + folded classifier; returns [B, 1, C_OUT]."""
    bsz, hw, c = x_flat.shape
    weights = (p["b3e_w"], p["b3e_b"],
               p["b3d_w"], p["b3d_s"], p["b3d_b"],
               p["b3se1_w"], p["b3se1_b"], p["b3se2_w"], p["b3se2_b"],
               p["b3p_w"], p["b3p_b"],
               p["head_w"], p["head_b"],
               p["fc_w"], p["fc_b"])
    w_specs = [pl.BlockSpec(a.shape, lambda i: (0, 0)) for a in weights]
    n_out = p["fc_w"].shape[1]
    return pl.pallas_call(
        functools.partial(_block3_head_kernel, h=h, w=w),
        grid=(bsz,),
        out_shape=jax.ShapeDtypeStruct((bsz, 1, n_out), jnp.float32),
        in_specs=[pl.BlockSpec((1, hw, c), lambda i: (i, 0, 0))] + w_specs,
        out_specs=pl.BlockSpec((1, 1, n_out), lambda i: (i, 0, 0)),
        compiler_params=_cparams(1),
    )(x_flat, *weights)


# ----------------------------------------------------------------------------
# deterministic synthetic parameters (lane-padded, BN folded, bf16 MXU weights)
# ----------------------------------------------------------------------------
def init_params(key, num_classes=10):
    keys = iter(jax.random.split(key, 64))

    def nrm(shape, scale=0.05):
        return scale * jax.random.normal(next(keys), shape, jnp.float32)

    def pad_to(a, shape):
        return jnp.pad(a, [(0, t - s) for s, t in zip(a.shape, shape)])

    p = {}

    def conv_bn(name, kin, kout, kin_pad, kout_pad, taps=None):
        # BatchNorm (eval) folded into the conv weight / bias (mean=0, var=1 stats).
        shape = (taps, kin, kout) if taps else (kin, kout)
        w = nrm(shape)
        gamma = 1.0 + 0.1 * jax.random.normal(next(keys), (kout,), jnp.float32)
        beta = nrm((kout,))
        w = w * gamma
        tgt = (taps, kin_pad, kout_pad) if taps else (kin_pad, kout_pad)
        p[name + "_w"] = pad_to(w, tgt).astype(jnp.bfloat16)
        p[name + "_b"] = pad_to(beta, (kout_pad,)).reshape(1, kout_pad)

    # stem conv3x3/s2 (3 -> 24): taps pre-stacked along K (27 -> STEM_K)
    w = nrm((9, 3, 24))
    gamma = 1.0 + 0.1 * jax.random.normal(next(keys), (24,), jnp.float32)
    beta = nrm((24,))
    w = (w * gamma).reshape(27, 24)
    p["stem_w"] = pad_to(w, (STEM_K, C_STEM)).astype(jnp.bfloat16)
    p["stem_b"] = pad_to(beta, (C_STEM,)).reshape(1, C_STEM)

    conv_bn("b1", 24, 24, C_STEM, C_B1, taps=9)       # FusedMBConv expand 1
    conv_bn("b2e", 24, 96, C_B1, C_B2E, taps=9)       # FusedMBConv expand 4, s2
    conv_bn("b2p", 96, 48, C_B2E, C_B2P)
    conv_bn("b3e", 48, 192, C_B2P, C_B3E)             # MBConv expand 4 (SE)
    # depthwise 3x3 (f32 VPU path) + folded BN
    p["b3d_w"] = pad_to(nrm((9, 192)), (9, C_B3E))
    p["b3d_s"] = pad_to(1.0 + 0.1 * jax.random.normal(next(keys), (192,),
                                                      jnp.float32),
                        (C_B3E,)).reshape(1, C_B3E)
    p["b3d_b"] = pad_to(nrm((192,)), (C_B3E,)).reshape(1, C_B3E)
    # SE squeeze / excite (48 // 4 = 12 hidden units)
    p["b3se1_w"] = pad_to(nrm((192, 12)), (C_B3E, C_SE)).astype(jnp.bfloat16)
    p["b3se1_b"] = pad_to(nrm((12,)), (C_SE,)).reshape(1, C_SE)
    p["b3se2_w"] = pad_to(nrm((12, 192)), (C_SE, C_B3E)).astype(jnp.bfloat16)
    p["b3se2_b"] = pad_to(nrm((192,)), (C_B3E,)).reshape(1, C_B3E)
    conv_bn("b3p", 192, 48, C_B3E, C_B2P)
    conv_bn("head", 48, 128, C_B2P, C_HEAD)           # head 1x1 conv

    # backbone classifier (128 -> 1000) folded with self.linear (1000 -> nc):
    #   logits = feat @ (cls_w @ lin_w) + (cls_b @ lin_w + lin_b)
    cls_w = nrm((128, 1000))
    cls_b = nrm((1000,))
    lin_w = nrm((1000, num_classes))
    lin_b = nrm((num_classes,))
    fc_w = cls_w @ lin_w
    fc_b = cls_b @ lin_w + lin_b
    p["fc_w"] = pad_to(fc_w, (C_HEAD, C_OUT)).astype(jnp.bfloat16)
    p["fc_b"] = pad_to(fc_b, (C_OUT,)).reshape(1, C_OUT)
    return p


# ----------------------------------------------------------------------------
# forward pass
# ----------------------------------------------------------------------------
def efficientnetv2_forward(params, x_nchw, num_classes=10):
    # PyTorch feeds NCHW; kernels use NHWC with channels padded to 128 lanes.
    x = jnp.transpose(x_nchw, (0, 2, 3, 1)).astype(jnp.float32)
    bsz, hin, win, _ = x.shape
    h1, w1 = hin // 2, win // 2      # after stem (stride 2)
    h2, w2 = h1 // 2, w1 // 2        # after block 2 (stride 2)

    # --- stem: conv3x3/s2 + BN + SiLU as ONE patch-packed MXU dot (K=27->32)
    xp = jnp.pad(x, ((0, 0), (1, 1), (1, 1), (0, 0)))
    cols = [xp[:, kh:kh + hin:2, kw:kw + win:2, :]
            for kh in range(3) for kw in range(3)]
    patches = jnp.concatenate(cols, axis=-1)                     # [B,h1,w1,27]
    patches = jnp.pad(patches, ((0, 0), (0, 0), (0, 0), (0, STEM_K - 27)))
    a = patches.reshape(bsz * h1 * w1, STEM_K)
    x = matmul_bias_act(a, params["stem_w"], params["stem_b"], act="silu",
                        out_dtype=ACT_DTYPE)
    x = x.reshape(bsz, h1, w1, C_STEM)                           # bf16

    # --- block 1: FusedMBConv expand=1 (conv3x3 + BN + SiLU + residual, fused)
    x = conv3x3_s1_residual(x, params["b1_w"], params["b1_b"])   # bf16

    # --- block 2: FusedMBConv expand=4, stride 2 (expand + project fused)
    x = block2_fused(x, params["b2e_w"], params["b2e_b"],
                     params["b2p_w"], params["b2p_b"])           # [B, h2*w2, 128] bf16

    # --- block 3 (MBConv+SE) + head + GAP + folded classifier, all fused
    # TODO(synk): dropout (p=0.2) / stochastic depth are identity in eval mode; omitted.
    logits = block3_head_fused(x, params, h2, w2)                # [B, 1, C_OUT] f32
    return logits[:, 0, :num_classes]


# ----------------------------------------------------------------------------
if __name__ == "__main__":
    key = jax.random.PRNGKey(0)
    pkey, xkey = jax.random.split(key)
    num_classes = 10
    params = init_params(pkey, num_classes=num_classes)

    # NCHW input, as the PyTorch module would receive.
    x = jax.random.normal(xkey, (2, 3, 32, 32), jnp.float32)

    fwd = jax.jit(functools.partial(efficientnetv2_forward,
                                    num_classes=num_classes))
    out = fwd(params, x)
    out = jax.block_until_ready(out)
    assert out.shape == (2, num_classes), out.shape
    assert jnp.all(jnp.isfinite(out))
    print("KERNEL_OK")
</pallas_src>

<mosaic_0001>
module attributes {stable_mosaic.version = 11 : i64} {
  func.func @_matmul_kernel(%arg0: i32, %arg1: memref<128x32xf32, #tpu.memory_space<vmem>>, %arg2: memref<32x128xbf16, #tpu.memory_space<vmem>>, %arg3: memref<1x128xf32, #tpu.memory_space<vmem>>, %arg4: memref<128x128xbf16, #tpu.memory_space<vmem>>) attributes {dimension_semantics = [#tpu.dimension_semantics<parallel>], iteration_bounds = array<i64: 4>, scalar_prefetch = 0 : i64, scratch_operands = 0 : i64, tpu.core_type = #tpu.core_type<tc>, window_params = [{transform_indices = @transform_0, window_bounds = array<i64: 128, 32>}, {pipeline_mode = #tpu.pipeline_mode<synchronous>, transform_indices = @transform_1, window_bounds = array<i64: 32, 128>}, {pipeline_mode = #tpu.pipeline_mode<synchronous>, transform_indices = @transform_2, window_bounds = array<i64: 1, 128>}, {transform_indices = @transform_3, window_bounds = array<i64: 128, 128>}]} {
    %c0 = arith.constant 0 : index
    %c0_0 = arith.constant 0 : index
    %0 = vector.load %arg1[%c0, %c0_0] : memref<128x32xf32, #tpu.memory_space<vmem>>, vector<128x32xf32>
    %1 = arith.truncf %0 : vector<128x32xf32> to vector<128x32xbf16>
    %c0_1 = arith.constant 0 : index
    %c0_2 = arith.constant 0 : index
    %2 = vector.load %arg2[%c0_1, %c0_2] : memref<32x128xbf16, #tpu.memory_space<vmem>>, vector<32x128xbf16>
    %cst = arith.constant dense<0.000000e+00> : vector<128x128xf32>
    %3 = tpu.matmul %1, %2, %cst {dimension_numbers = #tpu.dot_dimension_numbers<[1], [0], [0], [1], [0, 0, 1, 1], [], []>} : vector<128x32xbf16>, vector<32x128xbf16>, vector<128x128xf32> -> vector<128x128xf32>
    %c0_3 = arith.constant 0 : index
    %c0_4 = arith.constant 0 : index
    %4 = vector.load %arg3[%c0_3, %c0_4] : memref<1x128xf32, #tpu.memory_space<vmem>>, vector<1x128xf32>
    %5 = vector.broadcast %4 : vector<1x128xf32> to vector<128x128xf32>
    %6 = arith.addf %3, %5 : vector<128x128xf32>
    %cst_5 = arith.constant 0.000000e+00 : f32
    %7 = vector.broadcast %cst_5 : f32 to vector<128x128xf32>
    %8 = arith.subf %7, %6 : vector<128x128xf32>
    %9 = math.exp %8 : vector<128x128xf32>
    %cst_6 = arith.constant 1.000000e+00 : f32
    %10 = vector.broadcast %cst_6 : f32 to vector<128x128xf32>
    %11 = arith.addf %10, %9 : vector<128x128xf32>
    %12 = tpu.reciprocal %11 {approx = true} : vector<128x128xf32> -> vector<128x128xf32>
    %13 = arith.mulf %6, %12 : vector<128x128xf32>
    %14 = arith.truncf %13 : vector<128x128xf32> to vector<128x128xbf16>
    %c0_7 = arith.constant 0 : index
    %c0_8 = arith.constant 0 : index
    %15 = vector.load %arg4[%c0_7, %c0_8] : memref<128x128xbf16, #tpu.memory_space<vmem>>, vector<128x128xbf16>
    tpu.vector_store %arg4[%c0_7, %c0_8], %14 {strides = array<i32>} : memref<128x128xbf16, #tpu.memory_space<vmem>>, vector<128x128xbf16>,
    return
  }
  func.func @transform_0(%arg0: i32) -> (i32, i32) {
    %c0_i32 = arith.constant 0 : i32
    %c0_i32_0 = arith.constant 0 : i32
    return %arg0, %c0_i32 : i32, i32
  }
  func.func @transform_1(%arg0: i32) -> (i32, i32) {
    %c0_i32 = arith.constant 0 : i32
    %c0_i32_0 = arith.constant 0 : i32
    %c0_i32_1 = arith.constant 0 : i32
    return %c0_i32, %c0_i32_0 : i32, i32
  }
  func.func @transform_2(%arg0: i32) -> (i32, i32) {
    %c0_i32 = arith.constant 0 : i32
    %c0_i32_0 = arith.constant 0 : i32
    %c0_i32_1 = arith.constant 0 : i32
    return %c0_i32, %c0_i32_0 : i32, i32
  }
  func.func @transform_3(%arg0: i32) -> (i32, i32) {
    %c0_i32 = arith.constant 0 : i32
    %c0_i32_0 = arith.constant 0 : i32
    return %arg0, %c0_i32 : i32, i32
  }
}

module attributes {stable_mosaic.version = 11 : i64} {
  func.func @_conv3x3_s1_kernel(%arg0: i32, %arg1: memref<1x18x18x128xbf16, #tpu.memory_space<vmem>>, %arg2: memref<9x128x128xbf16, #tpu.memory_space<vmem>>, %arg3: memref<1x128xf32, #tpu.memory_space<vmem>>, %arg4: memref<1x256x128xbf16, #tpu.memory_space<vmem>>) attributes {dimension_semantics = [#tpu.dimension_semantics<parallel>], iteration_bounds = array<i64: 2>, scalar_prefetch = 0 : i64, scratch_operands = 0 : i64, tpu.core_type = #tpu.core_type<tc>, window_params = [{transform_indices = @transform_0, window_bounds = array<i64: 1, 18, 18, 128>}, {pipeline_mode = #tpu.pipeline_mode<synchronous>, transform_indices = @transform_1, window_bounds = array<i64: 9, 128, 128>}, {pipeline_mode = #tpu.pipeline_mode<synchronous>, transform_indices = @transform_2, window_bounds = array<i64: 1, 128>}, {transform_indices = @transform_3, window_bounds = array<i64: 1, 256, 128>}]} {
    %c0 = arith.constant 0 : index
    %c0_0 = arith.constant 0 : index
    %c0_1 = arith.constant 0 : index
    %c0_2 = arith.constant 0 : index
    %0 = vector.load %arg1[%c0, %c0_0, %c0_1, %c0_2] : memref<1x18x18x128xbf16, #tpu.memory_space<vmem>>, vector<1x18x18x128xbf16>
    %1 = vector.shape_cast %0 : vector<1x18x18x128xbf16> to vector<18x18x128xbf16>
    %2 = arith.extf %1 : vector<18x18x128xbf16> to vector<18x18x128xf32>
    %cst = arith.constant 0.000000e+00 : f32
    %3 = vector.broadcast %cst : f32 to vector<256x128xf32>
    %4 = vector.extract_strided_slice %2 {offsets = [0, 0, 0], sizes = [16, 16, 128], strides = [1, 1, 1]} : vector<18x18x128xf32> to vector<16x16x128xf32>
    %5 = vector.shape_cast %4 : vector<16x16x128xf32> to vector<256x128xf32>
    %6 = arith.truncf %5 : vector<256x128xf32> to vector<256x128xbf16>
    %c0_3 = arith.constant 0 : index
    %c0_4 = arith.constant 0 : index
    %c0_5 = arith.constant 0 : index
    %7 = vector.load %arg2[%c0_3, %c0_4, %c0_5] : memref<9x128x128xbf16, #tpu.memory_space<vmem>>, vector<1x128x128xbf16>
    %8 = vector.shape_cast %7 : vector<1x128x128xbf16> to vector<128x128xbf16>
    %cst_6 = arith.constant dense<0.000000e+00> : vector<256x128xf32>
    %9 = tpu.matmul %6, %8, %cst_6 {dimension_numbers = #tpu.dot_dimension_numbers<[1], [0], [0], [1], [0, 0, 1, 1], [], []>} : vector<256x128xbf16>, vector<128x128xbf16>, vector<256x128xf32> -> vector<256x128xf32>
    %10 = arith.addf %3, %9 : vector<256x128xf32>
    %11 = vector.extract_strided_slice %2 {offsets = [0, 1, 0], sizes = [16, 16, 128], strides = [1, 1, 1]} : vector<18x18x128xf32> to vector<16x16x128xf32>
    %12 = vector.shape_cast %11 : vector<16x16x128xf32> to vector<256x128xf32>
    %13 = arith.truncf %12 : vector<256x128xf32> to vector<256x128xbf16>
    %c1 = arith.constant 1 : index
    %c0_7 = arith.constant 0 : index
    %c0_8 = arith.constant 0 : index
    %14 = vector.load %arg2[%c1, %c0_7, %c0_8] : memref<9x128x128xbf16, #tpu.memory_space<vmem>>, vector<1x128x128xbf16>
    %15 = vector.shape_cast %14 : vector<1x128x128xbf16> to vector<128x128xbf16>
    %cst_9 = arith.constant dense<0.000000e+00> : vector<256x128xf32>
    %16 = tpu.matmul %13, %15, %cst_9 {dimension_numbers = #tpu.dot_dimension_numbers<[1], [0], [0], [1], [0, 0, 1, 1], [], []>} : vector<256x128xbf16>, vector<128x128xbf16>, vector<256x128xf32> -> vector<256x128xf32>
    %17 = arith.addf %10, %16 : vector<256x128xf32>
    %18 = vector.extract_strided_slice %2 {offsets = [0, 2, 0], sizes = [16, 16, 128], strides = [1, 1, 1]} : vector<18x18x128xf32> to vector<16x16x128xf32>
    %19 = vector.shape_cast %18 : vector<16x16x128xf32> to vector<256x128xf32>
    %20 = arith.truncf %19 : vector<256x128xf32> to vector<256x128xbf16>
    %c2 = arith.constant 2 : index
    %c0_10 = arith.constant 0 : index
    %c0_11 = arith.constant 0 : index
    %21 = vector.load %arg2[%c2, %c0_10, %c0_11] : memref<9x128x128xbf16, #tpu.memory_space<vmem>>, vector<1x128x128xbf16>
    %22 = vector.shape_cast %21 : vector<1x128x128xbf16> to vector<128x128xbf16>
    %cst_12 = arith.constant dense<0.000000e+00> : vector<256x128xf32>
    %23 = tpu.matmul %20, %22, %cst_12 {dimension_numbers = #tpu.dot_dimension_numbers<[1], [0], [0], [1], [0, 0, 1, 1], [], []>} : vector<256x128xbf16>, vector<128x128xbf16>, vector<256x128xf32> -> vector<256x128xf32>
    %24 = arith.addf %17, %23 : vector<256x128xf32>
    %25 = vector.extract_strided_slice %2 {offsets = [1, 0, 0], sizes = [16, 16, 128], strides = [1, 1, 1]} : vector<18x18x128xf32> to vector<16x16x128xf32>
    %26 = vector.shape_cast %25 : vector<16x16x128xf32> to vector<256x128xf32>
    %27 = arith.truncf %26 : vector<256x128xf32> to vector<256x128xbf16>
    %c3 = arith.constant 3 : index
    %c0_13 = arith.constant 0 : index
    %c0_14 = arith.constant 0 : index
    %28 = vector.load %arg2[%c3, %c0_13, %c0_14] : memref<9x128x128xbf16, #tpu.memory_space<vmem>>, vector<1x128x128xbf16>
    %29 = vector.shape_cast %28 : vector<1x128x128xbf16> to vector<128x128xbf16>
    %cst_15 = arith.constant dense<0.000000e+00> : vector<256x128xf32>
    %30 = tpu.matmul %27, %29, %cst_15 {dimension_numbers = #tpu.dot_dimension_numbers<[1], [0], [0], [1], [0, 0, 1, 1], [], []>} : vector<256x128xbf16>, vector<128x128xbf16>, vector<256x128xf32> -> vector<256x128xf32>
    %31 = arith.addf %24, %30 : vector<256x128xf32>
    %32 = vector.extract_strided_slice %2 {offsets = [1, 1, 0], sizes = [16, 16, 128], strides = [1, 1, 1]} : vector<18x18x128xf32> to vector<16x16x128xf32>
    %33 = vector.shape_cast %32 : vector<16x16x128xf32> to vector<256x128xf32>
    %34 = arith.truncf %33 : vector<256x128xf32> to vector<256x128xbf16>
    %c4 = arith.constant 4 : index
    %c0_16 = arith.constant 0 : index
    %c0_17 = arith.constant 0 : index
    %35 = vector.load %arg2[%c4, %c0_16, %c0_17] : memref<9x128x128xbf16, #tpu.memory_space<vmem>>, vector<1x128x128xbf16>
    %36 = vector.shape_cast %35 : vector<1x128x128xbf16> to vector<128x128xbf16>
    %cst_18 = arith.constant dense<0.000000e+00> : vector<256x128xf32>
    %37 = tpu.matmul %34, %36, %cst_18 {dimension_numbers = #tpu.dot_dimension_numbers<[1], [0], [0], [1], [0, 0, 1, 1], [], []>} : vector<256x128xbf16>, vector<128x128xbf16>, vector<256x128xf32> -> vector<256x128xf32>
    %38 = arith.addf %31, %37 : vector<256x128xf32>
    %39 = vector.extract_strided_slice %2 {offsets = [1, 2, 0], sizes = [16, 16, 128], strides = [1, 1, 1]} : vector<18x18x128xf32> to vector<16x16x128xf32>
    %40 = vector.shape_cast %39 : vector<16x16x128xf32> to vector<256x128xf32>
    %41 = arith.truncf %40 : vector<256x128xf32> to vector<256x128xbf16>
    %c5 = arith.constant 5 : index
    %c0_19 = arith.constant 0 : index
    %c0_20 = arith.constant 0 : index
    %42 = vector.load %arg2[%c5, %c0_19, %c0_20] : memref<9x128x128xbf16, #tpu.memory_space<vmem>>, vector<1x128x128xbf16>
    %43 = vector.shape_cast %42 : vector<1x128x128xbf16> to vector<128x128xbf16>
    %cst_21 = arith.constant dense<0.000000e+00> : vector<256x128xf32>
    %44 = tpu.matmul %41, %43, %cst_21 {dimension_numbers = #tpu.dot_dimension_numbers<[1], [0], [0], [1], [0, 0, 1, 1], [], []>} : vector<256x128xbf16>, vector<128x128xbf16>, vector<256x128xf32> -> vector<256x128xf32>
    %45 = arith.addf %38, %44 : vector<256x128xf32>
    %46 = vector.extract_strided_slice %2 {offsets = [2, 0, 0], sizes = [16, 16, 128], strides = [1, 1, 1]} : vector<18x18x128xf32> to vector<16x16x128xf32>
    %47 = vector.shape_cast %46 : vector<16x16x128xf32> to vector<256x128xf32>
    %48 = arith.truncf %47 : vector<256x128xf32> to vector<256x128xbf16>
    %c6 = arith.constant 6 : index
    %c0_22 = arith.constant 0 : index
    %c0_23 = arith.constant 0 : index
    %49 = vector.load %arg2[%c6, %c0_22, %c0_23] : memref<9x128x128xbf16, #tpu.memory_space<vmem>>, vector<1x128x128xbf16>
    %50 = vector.shape_cast %49 : vector<1x128x128xbf16> to vector<128x128xbf16>
    %cst_24 = arith.constant dense<0.000000e+00> : vector<256x128xf32>
    %51 = tpu.matmul %48, %50, %cst_24 {dimension_numbers = #tpu.dot_dimension_numbers<[1], [0], [0], [1], [0, 0, 1, 1], [], []>} : vector<256x128xbf16>, vector<128x128xbf16>, vector<256x128xf32> -> vector<256x128xf32>
    %52 = arith.addf %45, %51 : vector<256x128xf32>
    %53 = vector.extract_strided_slice %2 {offsets = [2, 1, 0], sizes = [16, 16, 128], strides = [1, 1, 1]} : vector<18x18x128xf32> to vector<16x16x128xf32>
    %54 = vector.shape_cast %53 : vector<16x16x128xf32> to vector<256x128xf32>
    %55 = arith.truncf %54 : vector<256x128xf32> to vector<256x128xbf16>
    %c7 = arith.constant 7 : index
    %c0_25 = arith.constant 0 : index
    %c0_26 = arith.constant 0 : index
    %56 = vector.load %arg2[%c7, %c0_25, %c0_26] : memref<9x128x128xbf16, #tpu.memory_space<vmem>>, vector<1x128x128xbf16>
    %57 = vector.shape_cast %56 : vector<1x128x128xbf16> to vector<128x128xbf16>
    %cst_27 = arith.constant dense<0.000000e+00> : vector<256x128xf32>
    %58 = tpu.matmul %55, %57, %cst_27 {dimension_numbers = #tpu.dot_dimension_numbers<[1], [0], [0], [1], [0, 0, 1, 1], [], []>} : vector<256x128xbf16>, vector<128x128xbf16>, vector<256x128xf32> -> vector<256x128xf32>
    %59 = arith.addf %52, %58 : vector<256x128xf32>
    %60 = vector.extract_strided_slice %2 {offsets = [2, 2, 0], sizes = [16, 16, 128], strides = [1, 1, 1]} : vector<18x18x128xf32> to vector<16x16x128xf32>
    %61 = vector.shape_cast %60 : vector<16x16x128xf32> to vector<256x128xf32>
    %62 = arith.truncf %61 : vector<256x128xf32> to vector<256x128xbf16>
    %c8 = arith.constant 8 : index
    %c0_28 = arith.constant 0 : index
    %c0_29 = arith.constant 0 : index
    %63 = vector.load %arg2[%c8, %c0_28, %c0_29] : memref<9x128x128xbf16, #tpu.memory_space<vmem>>, vector<1x128x128xbf16>
    %64 = vector.shape_cast %63 : vector<1x128x128xbf16> to vector<128x128xbf16>
    %cst_30 = arith.constant dense<0.000000e+00> : vector<256x128xf32>
    %65 = tpu.matmul %62, %64, %cst_30 {dimension_numbers = #tpu.dot_dimension_numbers<[1], [0], [0], [1], [0, 0, 1, 1], [], []>} : vector<256x128xbf16>, vector<128x128xbf16>, vector<256x128xf32> -> vector<256x128xf32>
    %66 = arith.addf %59, %65 : vector<256x128xf32>
    %c0_31 = arith.constant 0 : index
    %c0_32 = arith.constant 0 : index
    %67 = vector.load %arg3[%c0_31, %c0_32] : memref<1x128xf32, #tpu.memory_space<vmem>>, vector<1x128xf32>
    %68 = vector.broadcast %67 : vector<1x128xf32> to vector<256x128xf32>
    %69 = arith.addf %66, %68 : vector<256x128xf32>
    %cst_33 = arith.constant 0.000000e+00 : f32
    %70 = vector.broadcast %cst_33 : f32 to vector<256x128xf32>
    %71 = arith.subf %70, %69 : vector<256x128xf32>
    %72 = math.exp %71 : vector<256x128xf32>
    %cst_34 = arith.constant 1.000000e+00 : f32
    %73 = vector.broadcast %cst_34 : f32 to vector<256x128xf32>
    %74 = arith.addf %73, %72 : vector<256x128xf32>
    %75 = tpu.reciprocal %74 {approx = true} : vector<256x128xf32> -> vector<256x128xf32>
    %76 = arith.mulf %69, %75 : vector<256x128xf32>
    %77 = vector.extract_strided_slice %2 {offsets = [1, 1, 0], sizes = [16, 16, 128], strides = [1, 1, 1]} : vector<18x18x128xf32> to vector<16x16x128xf32>
    %78 = vector.shape_cast %77 : vector<16x16x128xf32> to vector<256x128xf32>
    %79 = arith.addf %76, %78 : vector<256x128xf32>
    %80 = arith.truncf %79 : vector<256x128xf32> to vector<256x128xbf16>
    %c0_35 = arith.constant 0 : index
    %c0_36 = arith.constant 0 : index
    %c0_37 = arith.constant 0 : index
    %81 = vector.load %arg4[%c0_35, %c0_36, %c0_37] : memref<1x256x128xbf16, #tpu.memory_space<vmem>>, vector<1x256x128xbf16>
    %82 = vector.shape_cast %81 : vector<1x256x128xbf16> to vector<256x128xbf16>
    %83 = vector.shape_cast %80 : vector<256x128xbf16> to vector<1x256x128xbf16>
    tpu.vector_store %arg4[%c0_35, %c0_36, %c0_37], %83 {strides = array<i32>} : memref<1x256x128xbf16, #tpu.memory_space<vmem>>, vector<1x256x128xbf16>,
    return
  }
  func.func @transform_0(%arg0: i32) -> (i32, i32, i32, i32) {
    %c0_i32 = arith.constant 0 : i32
    %c0_i32_0 = arith.constant 0 : i32
    %c0_i32_1 = arith.constant 0 : i32
    %c0_i32_2 = arith.constant 0 : i32
    return %arg0, %c0_i32, %c0_i32_0, %c0_i32_1 : i32, i32, i32, i32
  }
  func.func @transform_1(%arg0: i32) -> (i32, i32, i32) {
    %c0_i32 = arith.constant 0 : i32
    %c0_i32_0 = arith.constant 0 : i32
    %c0_i32_1 = arith.constant 0 : i32
    %c0_i32_2 = arith.constant 0 : i32
    return %c0_i32, %c0_i32_0, %c0_i32_1 : i32, i32, i32
  }
  func.func @transform_2(%arg0: i32) -> (i32, i32) {
    %c0_i32 = arith.constant 0 : i32
    %c0_i32_0 = arith.constant 0 : i32
    %c0_i32_1 = arith.constant 0 : i32
    return %c0_i32, %c0_i32_0 : i32, i32
  }
  func.func @transform_3(%arg0: i32) -> (i32, i32, i32) {
    %c0_i32 = arith.constant 0 : i32
    %c0_i32_0 = arith.constant 0 : i32
    %c0_i32_1 = arith.constant 0 : i32
    return %arg0, %c0_i32, %c0_i32_0 : i32, i32, i32
  }
}

module attributes {stable_mosaic.version = 11 : i64} {
  func.func @_block2_kernel(%arg0: i32, %arg1: memref<1x9x9x128xbf16, #tpu.memory_space<vmem>>, %arg2: memref<1x9x9x128xbf16, #tpu.memory_space<vmem>>, %arg3: memref<1x9x9x128xbf16, #tpu.memory_space<vmem>>, %arg4: memref<1x9x9x128xbf16, #tpu.memory_space<vmem>>, %arg5: memref<9x128x128xbf16, #tpu.memory_space<vmem>>, %arg6: memref<1x128xf32, #tpu.memory_space<vmem>>, %arg7: memref<128x128xbf16, #tpu.memory_space<vmem>>, %arg8: memref<1x128xf32, #tpu.memory_space<vmem>>, %arg9: memref<1x64x128xbf16, #tpu.memory_space<vmem>>) attributes {dimension_semantics = [#tpu.dimension_semantics<parallel>], iteration_bounds = array<i64: 2>, scalar_prefetch = 0 : i64, scratch_operands = 0 : i64, tpu.core_type = #tpu.core_type<tc>, window_params = [{transform_indices = @transform_0, window_bounds = array<i64: 1, 9, 9, 128>}, {transform_indices = @transform_1, window_bounds = array<i64: 1, 9, 9, 128>}, {transform_indices = @transform_2, window_bounds = array<i64: 1, 9, 9, 128>}, {transform_indices = @transform_3, window_bounds = array<i64: 1, 9, 9, 128>}, {pipeline_mode = #tpu.pipeline_mode<synchronous>, transform_indices = @transform_4, window_bounds = array<i64: 9, 128, 128>}, {pipeline_mode = #tpu.pipeline_mode<synchronous>, transform_indices = @transform_5, window_bounds = array<i64: 1, 128>}, {pipeline_mode = #tpu.pipeline_mode<synchronous>, transform_indices = @transform_6, window_bounds = array<i64: 128, 128>}, {pipeline_mode = #tpu.pipeline_mode<synchronous>, transform_indices = @transform_7, window_bounds = array<i64: 1, 128>}, {transform_indices = @transform_8, window_bounds = array<i64: 1, 64, 128>}]} {
    %c0 = arith.constant 0 : index
    %c0_0 = arith.constant 0 : index
    %c0_1 = arith.constant 0 : index
    %c0_2 = arith.constant 0 : index
    %0 = vector.load %arg1[%c0, %c0_0, %c0_1, %c0_2] : memref<1x9x9x128xbf16, #tpu.memory_space<vmem>>, vector<1x9x9x128xbf16>
    %1 = vector.shape_cast %0 : vector<1x9x9x128xbf16> to vector<9x9x128xbf16>
    %2 = arith.extf %1 : vector<9x9x128xbf16> to vector<9x9x128xf32>
    %c0_3 = arith.constant 0 : index
    %c0_4 = arith.constant 0 : index
    %c0_5 = arith.constant 0 : index
    %c0_6 = arith.constant 0 : index
    %3 = vector.load %arg2[%c0_3, %c0_4, %c0_5, %c0_6] : memref<1x9x9x128xbf16, #tpu.memory_space<vmem>>, vector<1x9x9x128xbf16>
    %4 = vector.shape_cast %3 : vector<1x9x9x128xbf16> to vector<9x9x128xbf16>
    %5 = arith.extf %4 : vector<9x9x128xbf16> to vector<9x9x128xf32>
    %c0_7 = arith.constant 0 : index
    %c0_8 = arith.constant 0 : index
    %c0_9 = arith.constant 0 : index
    %c0_10 = arith.constant 0 : index
    %6 = vector.load %arg3[%c0_7, %c0_8, %c0_9, %c0_10] : memref<1x9x9x128xbf16, #tpu.memory_space<vmem>>, vector<1x9x9x128xbf16>
    %7 = vector.shape_cast %6 : vector<1x9x9x128xbf16> to vector<9x9x128xbf16>
    %8 = arith.extf %7 : vector<9x9x128xbf16> to vector<9x9x128xf32>
    %c0_11 = arith.constant 0 : index
    %c0_12 = arith.constant 0 : index
    %c0_13 = arith.constant 0 : index
    %c0_14 = arith.constant 0 : index
    %9 = vector.load %arg4[%c0_11, %c0_12, %c0_13, %c0_14] : memref<1x9x9x128xbf16, #tpu.memory_space<vmem>>, vector<1x9x9x128xbf16>
    %10 = vector.shape_cast %9 : vector<1x9x9x128xbf16> to vector<9x9x128xbf16>
    %11 = arith.extf %10 : vector<9x9x128xbf16> to vector<9x9x128xf32>
    %cst = arith.constant 0.000000e+00 : f32
    %12 = vector.broadcast %cst : f32 to vector<64x128xf32>
    %13 = vector.extract_strided_slice %2 {offsets = [0, 0, 0], sizes = [8, 8, 128], strides = [1, 1, 1]} : vector<9x9x128xf32> to vector<8x8x128xf32>
    %14 = vector.shape_cast %13 : vector<8x8x128xf32> to vector<64x128xf32>
    %15 = arith.truncf %14 : vector<64x128xf32> to vector<64x128xbf16>
    %c0_15 = arith.constant 0 : index
    %c0_16 = arith.constant 0 : index
    %c0_17 = arith.constant 0 : index
    %16 = vector.load %arg5[%c0_15, %c0_16, %c0_17] : memref<9x128x128xbf16, #tpu.memory_space<vmem>>, vector<1x128x128xbf16>
    %17 = vector.shape_cast %16 : vector<1x128x128xbf16> to vector<128x128xbf16>
    %cst_18 = arith.constant dense<0.000000e+00> : vector<64x128xf32>
    %18 = tpu.matmul %15, %17, %cst_18 {dimension_numbers = #tpu.dot_dimension_numbers<[1], [0], [0], [1], [0, 0, 1, 1], [], []>} : vector<64x128xbf16>, vector<128x128xbf16>, vector<64x128xf32> -> vector<64x128xf32>
    %19 = arith.addf %12, %18 : vector<64x128xf32>
    %20 = vector.extract_strided_slice %5 {offsets = [0, 0, 0], sizes = [8, 8, 128], strides = [1, 1, 1]} : vector<9x9x128xf32> to vector<8x8x128xf32>
    %21 = vector.shape_cast %20 : vector<8x8x128xf32> to vector<64x128xf32>
    %22 = arith.truncf %21 : vector<64x128xf32> to vector<64x128xbf16>
    %c1 = arith.constant 1 : index
    %c0_19 = arith.constant 0 : index
    %c0_20 = arith.constant 0 : index
    %23 = vector.load %arg5[%c1, %c0_19, %c0_20] : memref<9x128x128xbf16, #tpu.memory_space<vmem>>, vector<1x128x128xbf16>
    %24 = vector.shape_cast %23 : vector<1x128x128xbf16> to vector<128x128xbf16>
    %cst_21 = arith.constant dense<0.000000e+00> : vector<64x128xf32>
    %25 = tpu.matmul %22, %24, %cst_21 {dimension_numbers = #tpu.dot_dimension_numbers<[1], [0], [0], [1], [0, 0, 1, 1], [], []>} : vector<64x128xbf16>, vector<128x128xbf16>, vector<64x128xf32> -> vector<64x128xf32>
    %26 = arith.addf %19, %25 : vector<64x128xf32>
    %27 = vector.extract_strided_slice %2 {offsets = [0, 1, 0], sizes = [8, 8, 128], strides = [1, 1, 1]} : vector<9x9x128xf32> to vector<8x8x128xf32>
    %28 = vector.shape_cast %27 : vector<8x8x128xf32> to vector<64x128xf32>
    %29 = arith.truncf %28 : vector<64x128xf32> to vector<64x128xbf16>
    %c2 = arith.constant 2 : index
    %c0_22 = arith.constant 0 : index
    %c0_23 = arith.constant 0 : index
    %30 = vector.load %arg5[%c2, %c0_22, %c0_23] : memref<9x128x128xbf16, #tpu.memory_space<vmem>>, vector<1x128x128xbf16>
    %31 = vector.shape_cast %30 : vector<1x128x128xbf16> to vector<128x128xbf16>
    %cst_24 = arith.constant dense<0.000000e+00> : vector<64x128xf32>
    %32 = tpu.matmul %29, %31, %cst_24 {dimension_numbers = #tpu.dot_dimension_numbers<[1], [0], [0], [1], [0, 0, 1, 1], [], []>} : vector<64x128xbf16>, vector<128x128xbf16>, vector<64x128xf32> -> vector<64x128xf32>
    %33 = arith.addf %26, %32 : vector<64x128xf32>
    %34 = vector.extract_strided_slice %8 {offsets = [0, 0, 0], sizes = [8, 8, 128], strides = [1, 1, 1]} : vector<9x9x128xf32> to vector<8x8x128xf32>
    %35 = vector.shape_cast %34 : vector<8x8x128xf32> to vector<64x128xf32>
    %36 = arith.truncf %35 : vector<64x128xf32> to vector<64x128xbf16>
    %c3 = arith.constant 3 : index
    %c0_25 = arith.constant 0 : index
    %c0_26 = arith.constant 0 : index
    %37 = vector.load %arg5[%c3, %c0_25, %c0_26] : memref<9x128x128xbf16, #tpu.memory_space<vmem>>, vector<1x128x128xbf16>
    %38 = vector.shape_cast %37 : vector<1x128x128xbf16> to vector<128x128xbf16>
    %cst_27 = arith.constant dense<0.000000e+00> : vector<64x128xf32>
    %39 = tpu.matmul %36, %38, %cst_27 {dimension_numbers = #tpu.dot_dimension_numbers<[1], [0], [0], [1], [0, 0, 1, 1], [], []>} : vector<64x128xbf16>, vector<128x128xbf16>, vector<64x128xf32> -> vector<64x128xf32>
    %40 = arith.addf %33, %39 : vector<64x128xf32>
    %41 = vector.extract_strided_slice %11 {offsets = [0, 0, 0], sizes = [8, 8, 128], strides = [1, 1, 1]} : vector<9x9x128xf32> to vector<8x8x128xf32>
    %42 = vector.shape_cast %41 : vector<8x8x128xf32> to vector<64x128xf32>
    %43 = arith.truncf %42 : vector<64x128xf32> to vector<64x128xbf16>
    %c4 = arith.constant 4 : index
    %c0_28 = arith.constant 0 : index
    %c0_29 = arith.constant 0 : index
    %44 = vector.load %arg5[%c4, %c0_28, %c0_29] : memref<9x128x128xbf16, #tpu.memory_space<vmem>>, vector<1x128x128xbf16>
    %45 = vector.shape_cast %44 : vector<1x128x128xbf16> to vector<128x128xbf16>
    %cst_30 = arith.constant dense<0.000000e+00> : vector<64x128xf32>
    %46 = tpu.matmul %43, %45, %cst_30 {dimension_numbers = #tpu.dot_dimension_numbers<[1], [0], [0], [1], [0, 0, 1, 1], [], []>} : vector<64x128xbf16>, vector<128x128xbf16>, vector<64x128xf32> -> vector<64x128xf32>
    %47 = arith.addf %40, %46 : vector<64x128xf32>
    %48 = vector.extract_strided_slice %8 {offsets = [0, 1, 0], sizes = [8, 8, 128], strides = [1, 1, 1]} : vector<9x9x128xf32> to vector<8x8x128xf32>
    %49 = vector.shape_cast %48 : vector<8x8x128xf32> to vector<64x128xf32>
    %50 = arith.truncf %49 : vector<64x128xf32> to vector<64x128xbf16>
    %c5 = arith.constant 5 : index
    %c0_31 = arith.constant 0 : index
    %c0_32 = arith.constant 0 : index
    %51 = vector.load %arg5[%c5, %c0_31, %c0_32] : memref<9x128x128xbf16, #tpu.memory_space<vmem>>, vector<1x128x128xbf16>
    %52 = vector.shape_cast %51 : vector<1x128x128xbf16> to vector<128x128xbf16>
    %cst_33 = arith.constant dense<0.000000e+00> : vector<64x128xf32>
    %53 = tpu.matmul %50, %52, %cst_33 {dimension_numbers = #tpu.dot_dimension_numbers<[1], [0], [0], [1], [0, 0, 1, 1], [], []>} : vector<64x128xbf16>, vector<128x128xbf16>, vector<64x128xf32> -> vector<64x128xf32>
    %54 = arith.addf %47, %53 : vector<64x128xf32>
    %55 = vector.extract_strided_slice %2 {offsets = [1, 0, 0], sizes = [8, 8, 128], strides = [1, 1, 1]} : vector<9x9x128xf32> to vector<8x8x128xf32>
    %56 = vector.shape_cast %55 : vector<8x8x128xf32> to vector<64x128xf32>
    %57 = arith.truncf %56 : vector<64x128xf32> to vector<64x128xbf16>
    %c6 = arith.constant 6 : index
    %c0_34 = arith.constant 0 : index
    %c0_35 = arith.constant 0 : index
    %58 = vector.load %arg5[%c6, %c0_34, %c0_35] : memref<9x128x128xbf16, #tpu.memory_space<vmem>>, vector<1x128x128xbf16>
    %59 = vector.shape_cast %58 : vector<1x128x128xbf16> to vector<128x128xbf16>
    %cst_36 = arith.constant dense<0.000000e+00> : vector<64x128xf32>
    %60 = tpu.matmul %57, %59, %cst_36 {dimension_numbers = #tpu.dot_dimension_numbers<[1], [0], [0], [1], [0, 0, 1, 1], [], []>} : vector<64x128xbf16>, vector<128x128xbf16>, vector<64x128xf32> -> vector<64x128xf32>
    %61 = arith.addf %54, %60 : vector<64x128xf32>
    %62 = vector.extract_strided_slice %5 {offsets = [1, 0, 0], sizes = [8, 8, 128], strides = [1, 1, 1]} : vector<9x9x128xf32> to vector<8x8x128xf32>
    %63 = vector.shape_cast %62 : vector<8x8x128xf32> to vector<64x128xf32>
    %64 = arith.truncf %63 : vector<64x128xf32> to vector<64x128xbf16>
    %c7 = arith.constant 7 : index
    %c0_37 = arith.constant 0 : index
    %c0_38 = arith.constant 0 : index
    %65 = vector.load %arg5[%c7, %c0_37, %c0_38] : memref<9x128x128xbf16, #tpu.memory_space<vmem>>, vector<1x128x128xbf16>
    %66 = vector.shape_cast %65 : vector<1x128x128xbf16> to vector<128x128xbf16>
    %cst_39 = arith.constant dense<0.000000e+00> : vector<64x128xf32>
    %67 = tpu.matmul %64, %66, %cst_39 {dimension_numbers = #tpu.dot_dimension_numbers<[1], [0], [0], [1], [0, 0, 1, 1], [], []>} : vector<64x128xbf16>, vector<128x128xbf16>, vector<64x128xf32> -> vector<64x128xf32>
    %68 = arith.addf %61, %67 : vector<64x128xf32>
    %69 = vector.extract_strided_slice %2 {offsets = [1, 1, 0], sizes = [8, 8, 128], strides = [1, 1, 1]} : vector<9x9x128xf32> to vector<8x8x128xf32>
    %70 = vector.shape_cast %69 : vector<8x8x128xf32> to vector<64x128xf32>
    %71 = arith.truncf %70 : vector<64x128xf32> to vector<64x128xbf16>
    %c8 = arith.constant 8 : index
    %c0_40 = arith.constant 0 : index
    %c0_41 = arith.constant 0 : index
    %72 = vector.load %arg5[%c8, %c0_40, %c0_41] : memref<9x128x128xbf16, #tpu.memory_space<vmem>>, vector<1x128x128xbf16>
    %73 = vector.shape_cast %72 : vector<1x128x128xbf16> to vector<128x128xbf16>
    %cst_42 = arith.constant dense<0.000000e+00> : vector<64x128xf32>
    %74 = tpu.matmul %71, %73, %cst_42 {dimension_numbers = #tpu.dot_dimension_numbers<[1], [0], [0], [1], [0, 0, 1, 1], [], []>} : vector<64x128xbf16>, vector<128x128xbf16>, vector<64x128xf32> -> vector<64x128xf32>
    %75 = arith.addf %68, %74 : vector<64x128xf32>
    %c0_43 = arith.constant 0 : index
    %c0_44 = arith.constant 0 : index
    %76 = vector.load %arg6[%c0_43, %c0_44] : memref<1x128xf32, #tpu.memory_space<vmem>>, vector<1x128xf32>
    %77 = vector.broadcast %76 : vector<1x128xf32> to vector<64x128xf32>
    %78 = arith.addf %75, %77 : vector<64x128xf32>
    %cst_45 = arith.constant 0.000000e+00 : f32
    %79 = vector.broadcast %cst_45 : f32 to vector<64x128xf32>
    %80 = arith.subf %79, %78 : vector<64x128xf32>
    %81 = math.exp %80 : vector<64x128xf32>
    %cst_46 = arith.constant 1.000000e+00 : f32
    %82 = vector.broadcast %cst_46 : f32 to vector<64x128xf32>
    %83 = arith.addf %82, %81 : vector<64x128xf32>
    %84 = tpu.reciprocal %83 {approx = true} : vector<64x128xf32> -> vector<64x128xf32>
    %85 = arith.mulf %78, %84 : vector<64x128xf32>
    %86 = arith.truncf %85 : vector<64x128xf32> to vector<64x128xbf16>
    %c0_47 = arith.constant 0 : index
    %c0_48 = arith.constant 0 : index
    %87 = vector.load %arg7[%c0_47, %c0_48] : memref<128x128xbf16, #tpu.memory_space<vmem>>, vector<128x128xbf16>
    %cst_49 = arith.constant dense<0.000000e+00> : vector<64x128xf32>
    %88 = tpu.matmul %86, %87, %cst_49 {dimension_numbers = #tpu.dot_dimension_numbers<[1], [0], [0], [1], [0, 0, 1, 1], [], []>} : vector<64x128xbf16>, vector<128x128xbf16>, vector<64x128xf32> -> vector<64x128xf32>
    %c0_50 = arith.constant 0 : index
    %c0_51 = arith.constant 0 : index
    %89 = vector.load %arg8[%c0_50, %c0_51] : memref<1x128xf32, #tpu.memory_space<vmem>>, vector<1x128xf32>
    %90 = vector.broadcast %89 : vector<1x128xf32> to vector<64x128xf32>
    %91 = arith.addf %88, %90 : vector<64x128xf32>
    %92 = arith.truncf %91 : vector<64x128xf32> to vector<64x128xbf16>
    %c0_52 = arith.constant 0 : index
    %c0_53 = arith.constant 0 : index
    %c0_54 = arith.constant 0 : index
    %93 = vector.load %arg9[%c0_52, %c0_53, %c0_54] : memref<1x64x128xbf16, #tpu.memory_space<vmem>>, vector<1x64x128xbf16>
    %94 = vector.shape_cast %93 : vector<1x64x128xbf16> to vector<64x128xbf16>
    %95 = vector.shape_cast %92 : vector<64x128xbf16> to vector<1x64x128xbf16>
    tpu.vector_store %arg9[%c0_52, %c0_53, %c0_54], %95 {strides = array<i32>} : memref<1x64x128xbf16, #tpu.memory_space<vmem>>, vector<1x64x128xbf16>,
    return
  }
  func.func @transform_0(%arg0: i32) -> (i32, i32, i32, i32) {
    %c0_i32 = arith.constant 0 : i32
    %c0_i32_0 = arith.constant 0 : i32
    %c0_i32_1 = arith.constant 0 : i32
    %c0_i32_2 = arith.constant 0 : i32
    return %arg0, %c0_i32, %c0_i32_0, %c0_i32_1 : i32, i32, i32, i32
  }
  func.func @transform_1(%arg0: i32) -> (i32, i32, i32, i32) {
    %c0_i32 = arith.constant 0 : i32
    %c0_i32_0 = arith.constant 0 : i32
    %c0_i32_1 = arith.constant 0 : i32
    %c0_i32_2 = arith.constant 0 : i32
    return %arg0, %c0_i32, %c0_i32_0, %c0_i32_1 : i32, i32, i32, i32
  }
  func.func @transform_2(%arg0: i32) -> (i32, i32, i32, i32) {
    %c0_i32 = arith.constant 0 : i32
    %c0_i32_0 = arith.constant 0 : i32
    %c0_i32_1 = arith.constant 0 : i32
    %c0_i32_2 = arith.constant 0 : i32
    return %arg0, %c0_i32, %c0_i32_0, %c0_i32_1 : i32, i32, i32, i32
  }
  func.func @transform_3(%arg0: i32) -> (i32, i32, i32, i32) {
    %c0_i32 = arith.constant 0 : i32
    %c0_i32_0 = arith.constant 0 : i32
    %c0_i32_1 = arith.constant 0 : i32
    %c0_i32_2 = arith.constant 0 : i32
    return %arg0, %c0_i32, %c0_i32_0, %c0_i32_1 : i32, i32, i32, i32
  }
  func.func @transform_4(%arg0: i32) -> (i32, i32, i32) {
    %c0_i32 = arith.constant 0 : i32
    %c0_i32_0 = arith.constant 0 : i32
    %c0_i32_1 = arith.constant 0 : i32
    %c0_i32_2 = arith.constant 0 : i32
    return %c0_i32, %c0_i32_0, %c0_i32_1 : i32, i32, i32
  }
  func.func @transform_5(%arg0: i32) -> (i32, i32) {
    %c0_i32 = arith.constant 0 : i32
    %c0_i32_0 = arith.constant 0 : i32
    %c0_i32_1 = arith.constant 0 : i32
    return %c0_i32, %c0_i32_0 : i32, i32
  }
  func.func @transform_6(%arg0: i32) -> (i32, i32) {
    %c0_i32 = arith.constant 0 : i32
    %c0_i32_0 = arith.constant 0 : i32
    %c0_i32_1 = arith.constant 0 : i32
    return %c0_i32, %c0_i32_0 : i32, i32
  }
  func.func @transform_7(%arg0: i32) -> (i32, i32) {
    %c0_i32 = arith.constant 0 : i32
    %c0_i32_0 = arith.constant 0 : i32
    %c0_i32_1 = arith.constant 0 : i32
    return %c0_i32, %c0_i32_0 : i32, i32
  }
  func.func @transform_8(%arg0: i32) -> (i32, i32, i32) {
    %c0_i32 = arith.constant 0 : i32
    %c0_i32_0 = arith.constant 0 : i32
    %c0_i32_1 = arith.constant 0 : i32
    return %arg0, %c0_i32, %c0_i32_0 : i32, i32, i32
  }
}

module attributes {stable_mosaic.version = 11 : i64} {
  func.func @_block3_head_kernel(%arg0: i32, %arg1: memref<1x64x128xbf16, #tpu.memory_space<vmem>>, %arg2: memref<128x256xbf16, #tpu.memory_space<vmem>>, %arg3: memref<1x256xf32, #tpu.memory_space<vmem>>, %arg4: memref<9x256xf32, #tpu.memory_space<vmem>>, %arg5: memref<1x256xf32, #tpu.memory_space<vmem>>, %arg6: memref<1x256xf32, #tpu.memory_space<vmem>>, %arg7: memref<256x128xbf16, #tpu.memory_space<vmem>>, %arg8: memref<1x128xf32, #tpu.memory_space<vmem>>, %arg9: memref<128x256xbf16, #tpu.memory_space<vmem>>, %arg10: memref<1x256xf32, #tpu.memory_space<vmem>>, %arg11: memref<256x128xbf16, #tpu.memory_space<vmem>>, %arg12: memref<1x128xf32, #tpu.memory_space<vmem>>, %arg13: memref<128x128xbf16, #tpu.memory_space<vmem>>, %arg14: memref<1x128xf32, #tpu.memory_space<vmem>>, %arg15: memref<128x128xbf16, #tpu.memory_space<vmem>>, %arg16: memref<1x128xf32, #tpu.memory_space<vmem>>, %arg17: memref<1x1x128xf32, #tpu.memory_space<vmem>>) attributes {dimension_semantics = [#tpu.dimension_semantics<parallel>], iteration_bounds = array<i64: 2>, scalar_prefetch = 0 : i64, scratch_operands = 0 : i64, tpu.core_type = #tpu.core_type<tc>, window_params = [{transform_indices = @transform_0, window_bounds = array<i64: 1, 64, 128>}, {pipeline_mode = #tpu.pipeline_mode<synchronous>, transform_indices = @transform_1, window_bounds = array<i64: 128, 256>}, {pipeline_mode = #tpu.pipeline_mode<synchronous>, transform_indices = @transform_2, window_bounds = array<i64: 1, 256>}, {pipeline_mode = #tpu.pipeline_mode<synchronous>, transform_indices = @transform_3, window_bounds = array<i64: 9, 256>}, {pipeline_mode = #tpu.pipeline_mode<synchronous>, transform_indices = @transform_4, window_bounds = array<i64: 1, 256>}, {pipeline_mode = #tpu.pipeline_mode<synchronous>, transform_indices = @transform_5, window_bounds = array<i64: 1, 256>}, {pipeline_mode = #tpu.pipeline_mode<synchronous>, transform_indices = @transform_6, window_bounds = array<i64: 256, 128>}, {pipeline_mode = #tpu.pipeline_mode<synchronous>, transform_indices = @transform_7, window_bounds = array<i64: 1, 128>}, {pipeline_mode = #tpu.pipeline_mode<synchronous>, transform_indices = @transform_8, window_bounds = array<i64: 128, 256>}, {pipeline_mode = #tpu.pipeline_mode<synchronous>, transform_indices = @transform_9, window_bounds = array<i64: 1, 256>}, {pipeline_mode = #tpu.pipeline_mode<synchronous>, transform_indices = @transform_10, window_bounds = array<i64: 256, 128>}, {pipeline_mode = #tpu.pipeline_mode<synchronous>, transform_indices = @transform_11, window_bounds = array<i64: 1, 128>}, {pipeline_mode = #tpu.pipeline_mode<synchronous>, transform_indices = @transform_12, window_bounds = array<i64: 128, 128>}, {pipeline_mode = #tpu.pipeline_mode<synchronous>, transform_indices = @transform_13, window_bounds = array<i64: 1, 128>}, {pipeline_mode = #tpu.pipeline_mode<synchronous>, transform_indices = @transform_14, window_bounds = array<i64: 128, 128>}, {pipeline_mode = #tpu.pipeline_mode<synchronous>, transform_indices = @transform_15, window_bounds = array<i64: 1, 128>}, {transform_indices = @transform_16, window_bounds = array<i64: 1, 1, 128>}]} {
    %c0 = arith.constant 0 : index
    %c0_0 = arith.constant 0 : index
    %c0_1 = arith.constant 0 : index
    %0 = vector.load %arg1[%c0, %c0_0, %c0_1] : memref<1x64x128xbf16, #tpu.memory_space<vmem>>, vector<1x64x128xbf16>
    %1 = vector.shape_cast %0 : vector<1x64x128xbf16> to vector<64x128xbf16>
    %c0_2 = arith.constant 0 : index
    %c0_3 = arith.constant 0 : index
    %2 = vector.load %arg2[%c0_2, %c0_3] : memref<128x256xbf16, #tpu.memory_space<vmem>>, vector<128x256xbf16>
    %cst = arith.constant dense<0.000000e+00> : vector<64x256xf32>
    %3 = tpu.matmul %1, %2, %cst {dimension_numbers = #tpu.dot_dimension_numbers<[1], [0], [0], [1], [0, 0, 1, 1], [], []>} : vector<64x128xbf16>, vector<128x256xbf16>, vector<64x256xf32> -> vector<64x256xf32>
    %c0_4 = arith.constant 0 : index
    %c0_5 = arith.constant 0 : index
    %4 = vector.load %arg3[%c0_4, %c0_5] : memref<1x256xf32, #tpu.memory_space<vmem>>, vector<1x256xf32>
    %5 = vector.broadcast %4 : vector<1x256xf32> to vector<64x256xf32>
    %6 = arith.addf %3, %5 : vector<64x256xf32>
    %cst_6 = arith.constant 0.000000e+00 : f32
    %7 = vector.broadcast %cst_6 : f32 to vector<64x256xf32>
    %8 = arith.subf %7, %6 : vector<64x256xf32>
    %9 = math.exp %8 : vector<64x256xf32>
    %cst_7 = arith.constant 1.000000e+00 : f32
    %10 = vector.broadcast %cst_7 : f32 to vector<64x256xf32>
    %11 = arith.addf %10, %9 : vector<64x256xf32>
    %12 = tpu.reciprocal %11 {approx = true} : vector<64x256xf32> -> vector<64x256xf32>
    %13 = arith.mulf %6, %12 : vector<64x256xf32>
    %14 = vector.shape_cast %13 : vector<64x256xf32> to vector<8x8x256xf32>
    %cst_8 = arith.constant 0.000000e+00 : f32
    %15 = vector.broadcast %cst_8 : f32 to vector<1x8x256xf32>
    %16 = tpu.concatenate %15, %14, %15 in 0 : vector<1x8x256xf32>, vector<8x8x256xf32>, vector<1x8x256xf32> -> vector<10x8x256xf32>
    %cst_9 = arith.constant 0.000000e+00 : f32
    %17 = vector.broadcast %cst_9 : f32 to vector<10x1x256xf32>
    %18 = tpu.concatenate %17, %16, %17 in 1 : vector<10x1x256xf32>, vector<10x8x256xf32>, vector<10x1x256xf32> -> vector<10x10x256xf32>
    %cst_10 = arith.constant 0.000000e+00 : f32
    %19 = vector.broadcast %cst_10 : f32 to vector<8x8x256xf32>
    %20 = vector.extract_strided_slice %18 {offsets = [0, 0, 0], sizes = [8, 8, 256], strides = [1, 1, 1]} : vector<10x10x256xf32> to vector<8x8x256xf32>
    %c0_11 = arith.constant 0 : index
    %c0_12 = arith.constant 0 : index
    %21 = vector.load %arg4[%c0_11, %c0_12] : memref<9x256xf32, #tpu.memory_space<vmem>>, vector<1x256xf32>
    %22 = vector.shape_cast %21 : vector<1x256xf32> to vector<256xf32>
    %23 = vector.shape_cast %22 : vector<256xf32> to vector<1x1x256xf32>
    %24 = vector.broadcast %23 : vector<1x1x256xf32> to vector<8x8x256xf32>
    %25 = arith.mulf %20, %24 : vector<8x8x256xf32>
    %26 = arith.addf %19, %25 : vector<8x8x256xf32>
    %27 = vector.extract_strided_slice %18 {offsets = [0, 1, 0], sizes = [8, 8, 256], strides = [1, 1, 1]} : vector<10x10x256xf32> to vector<8x8x256xf32>
    %c1 = arith.constant 1 : index
    %c0_13 = arith.constant 0 : index
    %28 = vector.load %arg4[%c1, %c0_13] : memref<9x256xf32, #tpu.memory_space<vmem>>, vector<1x256xf32>
    %29 = vector.shape_cast %28 : vector<1x256xf32> to vector<256xf32>
    %30 = vector.shape_cast %29 : vector<256xf32> to vector<1x1x256xf32>
    %31 = vector.broadcast %30 : vector<1x1x256xf32> to vector<8x8x256xf32>
    %32 = arith.mulf %27, %31 : vector<8x8x256xf32>
    %33 = arith.addf %26, %32 : vector<8x8x256xf32>
    %34 = vector.extract_strided_slice %18 {offsets = [0, 2, 0], sizes = [8, 8, 256], strides = [1, 1, 1]} : vector<10x10x256xf32> to vector<8x8x256xf32>
    %c2 = arith.constant 2 : index
    %c0_14 = arith.constant 0 : index
    %35 = vector.load %arg4[%c2, %c0_14] : memref<9x256xf32, #tpu.memory_space<vmem>>, vector<1x256xf32>
    %36 = vector.shape_cast %35 : vector<1x256xf32> to vector<256xf32>
    %37 = vector.shape_cast %36 : vector<256xf32> to vector<1x1x256xf32>
    %38 = vector.broadcast %37 : vector<1x1x256xf32> to vector<8x8x256xf32>
    %39 = arith.mulf %34, %38 : vector<8x8x256xf32>
    %40 = arith.addf %33, %39 : vector<8x8x256xf32>
    %41 = vector.extract_strided_slice %18 {offsets = [1, 0, 0], sizes = [8, 8, 256], strides = [1, 1, 1]} : vector<10x10x256xf32> to vector<8x8x256xf32>
    %c3 = arith.constant 3 : index
    %c0_15 = arith.constant 0 : index
    %42 = vector.load %arg4[%c3, %c0_15] : memref<9x256xf32, #tpu.memory_space<vmem>>, vector<1x256xf32>
    %43 = vector.shape_cast %42 : vector<1x256xf32> to vector<256xf32>
    %44 = vector.shape_cast %43 : vector<256xf32> to vector<1x1x256xf32>
    %45 = vector.broadcast %44 : vector<1x1x256xf32> to vector<8x8x256xf32>
    %46 = arith.mulf %41, %45 : vector<8x8x256xf32>
    %47 = arith.addf %40, %46 : vector<8x8x256xf32>
    %48 = vector.extract_strided_slice %18 {offsets = [1, 1, 0], sizes = [8, 8, 256], strides = [1, 1, 1]} : vector<10x10x256xf32> to vector<8x8x256xf32>
    %c4 = arith.constant 4 : index
    %c0_16 = arith.constant 0 : index
    %49 = vector.load %arg4[%c4, %c0_16] : memref<9x256xf32, #tpu.memory_space<vmem>>, vector<1x256xf32>
    %50 = vector.shape_cast %49 : vector<1x256xf32> to vector<256xf32>
    %51 = vector.shape_cast %50 : vector<256xf32> to vector<1x1x256xf32>
    %52 = vector.broadcast %51 : vector<1x1x256xf32> to vector<8x8x256xf32>
    %53 = arith.mulf %48, %52 : vector<8x8x256xf32>
    %54 = arith.addf %47, %53 : vector<8x8x256xf32>
    %55 = vector.extract_strided_slice %18 {offsets = [1, 2, 0], sizes = [8, 8, 256], strides = [1, 1, 1]} : vector<10x10x256xf32> to vector<8x8x256xf32>
    %c5 = arith.constant 5 : index
    %c0_17 = arith.constant 0 : index
    %56 = vector.load %arg4[%c5, %c0_17] : memref<9x256xf32, #tpu.memory_space<vmem>>, vector<1x256xf32>
    %57 = vector.shape_cast %56 : vector<1x256xf32> to vector<256xf32>
    %58 = vector.shape_cast %57 : vector<256xf32> to vector<1x1x256xf32>
    %59 = vector.broadcast %58 : vector<1x1x256xf32> to vector<8x8x256xf32>
    %60 = arith.mulf %55, %59 : vector<8x8x256xf32>
    %61 = arith.addf %54, %60 : vector<8x8x256xf32>
    %62 = vector.extract_strided_slice %18 {offsets = [2, 0, 0], sizes = [8, 8, 256], strides = [1, 1, 1]} : vector<10x10x256xf32> to vector<8x8x256xf32>
    %c6 = arith.constant 6 : index
    %c0_18 = arith.constant 0 : index
    %63 = vector.load %arg4[%c6, %c0_18] : memref<9x256xf32, #tpu.memory_space<vmem>>, vector<1x256xf32>
    %64 = vector.shape_cast %63 : vector<1x256xf32> to vector<256xf32>
    %65 = vector.shape_cast %64 : vector<256xf32> to vector<1x1x256xf32>
    %66 = vector.broadcast %65 : vector<1x1x256xf32> to vector<8x8x256xf32>
    %67 = arith.mulf %62, %66 : vector<8x8x256xf32>
    %68 = arith.addf %61, %67 : vector<8x8x256xf32>
    %69 = vector.extract_strided_slice %18 {offsets = [2, 1, 0], sizes = [8, 8, 256], strides = [1, 1, 1]} : vector<10x10x256xf32> to vector<8x8x256xf32>
    %c7 = arith.constant 7 : index
    %c0_19 = arith.constant 0 : index
    %70 = vector.load %arg4[%c7, %c0_19] : memref<9x256xf32, #tpu.memory_space<vmem>>, vector<1x256xf32>
    %71 = vector.shape_cast %70 : vector<1x256xf32> to vector<256xf32>
    %72 = vector.shape_cast %71 : vector<256xf32> to vector<1x1x256xf32>
    %73 = vector.broadcast %72 : vector<1x1x256xf32> to vector<8x8x256xf32>
    %74 = arith.mulf %69, %73 : vector<8x8x256xf32>
    %75 = arith.addf %68, %74 : vector<8x8x256xf32>
    %76 = vector.extract_strided_slice %18 {offsets = [2, 2, 0], sizes = [8, 8, 256], strides = [1, 1, 1]} : vector<10x10x256xf32> to vector<8x8x256xf32>
    %c8 = arith.constant 8 : index
    %c0_20 = arith.constant 0 : index
    %77 = vector.load %arg4[%c8, %c0_20] : memref<9x256xf32, #tpu.memory_space<vmem>>, vector<1x256xf32>
    %78 = vector.shape_cast %77 : vector<1x256xf32> to vector<256xf32>
    %79 = vector.shape_cast %78 : vector<256xf32> to vector<1x1x256xf32>
    %80 = vector.broadcast %79 : vector<1x1x256xf32> to vector<8x8x256xf32>
    %81 = arith.mulf %76, %80 : vector<8x8x256xf32>
    %82 = arith.addf %75, %81 : vector<8x8x256xf32>
    %c0_21 = arith.constant 0 : index
    %c0_22 = arith.constant 0 : index
    %83 = vector.load %arg5[%c0_21, %c0_22] : memref<1x256xf32, #tpu.memory_space<vmem>>, vector<1x256xf32>
    %84 = vector.shape_cast %83 : vector<1x256xf32> to vector<1x1x256xf32>
    %85 = vector.broadcast %84 : vector<1x1x256xf32> to vector<8x8x256xf32>
    %86 = arith.mulf %82, %85 : vector<8x8x256xf32>
    %c0_23 = arith.constant 0 : index
    %c0_24 = arith.constant 0 : index
    %87 = vector.load %arg6[%c0_23, %c0_24] : memref<1x256xf32, #tpu.memory_space<vmem>>, vector<1x256xf32>
    %88 = vector.shape_cast %87 : vector<1x256xf32> to vector<1x1x256xf32>
    %89 = vector.broadcast %88 : vector<1x1x256xf32> to vector<8x8x256xf32>
    %90 = arith.addf %86, %89 : vector<8x8x256xf32>
    %cst_25 = arith.constant 0.000000e+00 : f32
    %91 = vector.broadcast %cst_25 : f32 to vector<8x8x256xf32>
    %92 = arith.subf %91, %90 : vector<8x8x256xf32>
    %93 = math.exp %92 : vector<8x8x256xf32>
    %cst_26 = arith.constant 1.000000e+00 : f32
    %94 = vector.broadcast %cst_26 : f32 to vector<8x8x256xf32>
    %95 = arith.addf %94, %93 : vector<8x8x256xf32>
    %96 = tpu.reciprocal %95 {approx = true} : vector<8x8x256xf32> -> vector<8x8x256xf32>
    %97 = arith.mulf %90, %96 : vector<8x8x256xf32>
    %98 = vector.shape_cast %97 : vector<8x8x256xf32> to vector<64x256xf32>
    %cst_27 = arith.constant dense<0.000000e+00> : vector<256xf32>
    %99 = vector.multi_reduction <add>, %98, %cst_27 [0] : vector<64x256xf32> to vector<256xf32>
    %100 = vector.shape_cast %99 : vector<256xf32> to vector<1x256xf32>
    %cst_28 = arith.constant 1.562500e-02 : f32
    %101 = vector.broadcast %cst_28 : f32 to vector<1x256xf32>
    %102 = arith.mulf %100, %101 : vector<1x256xf32>
    %103 = arith.truncf %102 : vector<1x256xf32> to vector<1x256xbf16>
    %c0_29 = arith.constant 0 : index
    %c0_30 = arith.constant 0 : index
    %104 = vector.load %arg7[%c0_29, %c0_30] : memref<256x128xbf16, #tpu.memory_space<vmem>>, vector<256x128xbf16>
    %cst_31 = arith.constant dense<0.000000e+00> : vector<1x128xf32>
    %105 = tpu.matmul %103, %104, %cst_31 {dimension_numbers = #tpu.dot_dimension_numbers<[1], [0], [0], [1], [0, 0, 1, 1], [], []>} : vector<1x256xbf16>, vector<256x128xbf16>, vector<1x128xf32> -> vector<1x128xf32>
    %c0_32 = arith.constant 0 : index
    %c0_33 = arith.constant 0 : index
    %106 = vector.load %arg8[%c0_32, %c0_33] : memref<1x128xf32, #tpu.memory_space<vmem>>, vector<1x128xf32>
    %107 = arith.addf %105, %106 : vector<1x128xf32>
    %cst_34 = arith.constant 0.000000e+00 : f32
    %108 = vector.broadcast %cst_34 : f32 to vector<1x128xf32>
    %109 = arith.subf %108, %107 : vector<1x128xf32>
    %110 = math.exp %109 : vector<1x128xf32>
    %cst_35 = arith.constant 1.000000e+00 : f32
    %111 = vector.broadcast %cst_35 : f32 to vector<1x128xf32>
    %112 = arith.addf %111, %110 : vector<1x128xf32>
    %113 = tpu.reciprocal %112 {approx = true} : vector<1x128xf32> -> vector<1x128xf32>
    %114 = arith.mulf %107, %113 : vector<1x128xf32>
    %115 = arith.truncf %114 : vector<1x128xf32> to vector<1x128xbf16>
    %c0_36 = arith.constant 0 : index
    %c0_37 = arith.constant 0 : index
    %116 = vector.load %arg9[%c0_36, %c0_37] : memref<128x256xbf16, #tpu.memory_space<vmem>>, vector<128x256xbf16>
    %cst_38 = arith.constant dense<0.000000e+00> : vector<1x256xf32>
    %117 = tpu.matmul %115, %116, %cst_38 {dimension_numbers = #tpu.dot_dimension_numbers<[1], [0], [0], [1], [0, 0, 1, 1], [], []>} : vector<1x128xbf16>, vector<128x256xbf16>, vector<1x256xf32> -> vector<1x256xf32>
    %c0_39 = arith.constant 0 : index
    %c0_40 = arith.constant 0 : index
    %118 = vector.load %arg10[%c0_39, %c0_40] : memref<1x256xf32, #tpu.memory_space<vmem>>, vector<1x256xf32>
    %119 = arith.addf %117, %118 : vector<1x256xf32>
    %cst_41 = arith.constant 0.000000e+00 : f32
    %120 = vector.broadcast %cst_41 : f32 to vector<1x256xf32>
    %121 = arith.subf %120, %119 : vector<1x256xf32>
    %122 = math.exp %121 : vector<1x256xf32>
    %cst_42 = arith.constant 1.000000e+00 : f32
    %123 = vector.broadcast %cst_42 : f32 to vector<1x256xf32>
    %124 = arith.addf %123, %122 : vector<1x256xf32>
    %125 = tpu.reciprocal %124 {approx = true} : vector<1x256xf32> -> vector<1x256xf32>
    %126 = vector.broadcast %125 : vector<1x256xf32> to vector<64x256xf32>
    %127 = arith.mulf %98, %126 : vector<64x256xf32>
    %128 = arith.truncf %127 : vector<64x256xf32> to vector<64x256xbf16>
    %c0_43 = arith.constant 0 : index
    %c0_44 = arith.constant 0 : index
    %129 = vector.load %arg11[%c0_43, %c0_44] : memref<256x128xbf16, #tpu.memory_space<vmem>>, vector<256x128xbf16>
    %cst_45 = arith.constant dense<0.000000e+00> : vector<64x128xf32>
    %130 = tpu.matmul %128, %129, %cst_45 {dimension_numbers = #tpu.dot_dimension_numbers<[1], [0], [0], [1], [0, 0, 1, 1], [], []>} : vector<64x256xbf16>, vector<256x128xbf16>, vector<64x128xf32> -> vector<64x128xf32>
    %c0_46 = arith.constant 0 : index
    %c0_47 = arith.constant 0 : index
    %131 = vector.load %arg12[%c0_46, %c0_47] : memref<1x128xf32, #tpu.memory_space<vmem>>, vector<1x128xf32>
    %132 = vector.broadcast %131 : vector<1x128xf32> to vector<64x128xf32>
    %133 = arith.addf %130, %132 : vector<64x128xf32>
    %134 = arith.extf %1 : vector<64x128xbf16> to vector<64x128xf32>
    %135 = arith.addf %133, %134 : vector<64x128xf32>
    %136 = arith.truncf %135 : vector<64x128xf32> to vector<64x128xbf16>
    %c0_48 = arith.constant 0 : index
    %c0_49 = arith.constant 0 : index
    %137 = vector.load %arg13[%c0_48, %c0_49] : memref<128x128xbf16, #tpu.memory_space<vmem>>, vector<128x128xbf16>
    %cst_50 = arith.constant dense<0.000000e+00> : vector<64x128xf32>
    %138 = tpu.matmul %136, %137, %cst_50 {dimension_numbers = #tpu.dot_dimension_numbers<[1], [0], [0], [1], [0, 0, 1, 1], [], []>} : vector<64x128xbf16>, vector<128x128xbf16>, vector<64x128xf32> -> vector<64x128xf32>
    %c0_51 = arith.constant 0 : index
    %c0_52 = arith.constant 0 : index
    %139 = vector.load %arg14[%c0_51, %c0_52] : memref<1x128xf32, #tpu.memory_space<vmem>>, vector<1x128xf32>
    %140 = vector.broadcast %139 : vector<1x128xf32> to vector<64x128xf32>
    %141 = arith.addf %138, %140 : vector<64x128xf32>
    %cst_53 = arith.constant 0.000000e+00 : f32
    %142 = vector.broadcast %cst_53 : f32 to vector<64x128xf32>
    %143 = arith.subf %142, %141 : vector<64x128xf32>
    %144 = math.exp %143 : vector<64x128xf32>
    %cst_54 = arith.constant 1.000000e+00 : f32
    %145 = vector.broadcast %cst_54 : f32 to vector<64x128xf32>
    %146 = arith.addf %145, %144 : vector<64x128xf32>
    %147 = tpu.reciprocal %146 {approx = true} : vector<64x128xf32> -> vector<64x128xf32>
    %148 = arith.mulf %141, %147 : vector<64x128xf32>
    %cst_55 = arith.constant dense<0.000000e+00> : vector<128xf32>
    %149 = vector.multi_reduction <add>, %148, %cst_55 [0] : vector<64x128xf32> to vector<128xf32>
    %150 = vector.shape_cast %149 : vector<128xf32> to vector<1x128xf32>
    %cst_56 = arith.constant 1.562500e-02 : f32
    %151 = vector.broadcast %cst_56 : f32 to vector<1x128xf32>
    %152 = arith.mulf %150, %151 : vector<1x128xf32>
    %153 = arith.truncf %152 : vector<1x128xf32> to vector<1x128xbf16>
    %c0_57 = arith.constant 0 : index
    %c0_58 = arith.constant 0 : index
    %154 = vector.load %arg15[%c0_57, %c0_58] : memref<128x128xbf16, #tpu.memory_space<vmem>>, vector<128x128xbf16>
    %cst_59 = arith.constant dense<0.000000e+00> : vector<1x128xf32>
    %155 = tpu.matmul %153, %154, %cst_59 {dimension_numbers = #tpu.dot_dimension_numbers<[1], [0], [0], [1], [0, 0, 1, 1], [], []>} : vector<1x128xbf16>, vector<128x128xbf16>, vector<1x128xf32> -> vector<1x128xf32>
    %c0_60 = arith.constant 0 : index
    %c0_61 = arith.constant 0 : index
    %156 = vector.load %arg16[%c0_60, %c0_61] : memref<1x128xf32, #tpu.memory_space<vmem>>, vector<1x128xf32>
    %157 = arith.addf %155, %156 : vector<1x128xf32>
    %c0_62 = arith.constant 0 : index
    %c0_63 = arith.constant 0 : index
    %c0_64 = arith.constant 0 : index
    %158 = vector.load %arg17[%c0_62, %c0_63, %c0_64] : memref<1x1x128xf32, #tpu.memory_space<vmem>>, vector<1x1x128xf32>
    %159 = vector.shape_cast %158 : vector<1x1x128xf32> to vector<1x128xf32>
    %160 = vector.shape_cast %157 : vector<1x128xf32> to vector<1x1x128xf32>
    tpu.vector_store %arg17[%c0_62, %c0_63, %c0_64], %160 {strides = array<i32>} : memref<1x1x128xf32, #tpu.memory_space<vmem>>, vector<1x1x128xf32>,
    return
  }
  func.func @transform_0(%arg0: i32) -> (i32, i32, i32) {
    %c0_i32 = arith.constant 0 : i32
    %c0_i32_0 = arith.constant 0 : i32
    %c0_i32_1 = arith.constant 0 : i32
    return %arg0, %c0_i32, %c0_i32_0 : i32, i32, i32
  }
  func.func @transform_1(%arg0: i32) -> (i32, i32) {
    %c0_i32 = arith.constant 0 : i32
    %c0_i32_0 = arith.constant 0 : i32
    %c0_i32_1 = arith.constant 0 : i32
    return %c0_i32, %c0_i32_0 : i32, i32
  }
  func.func @transform_2(%arg0: i32) -> (i32, i32) {
    %c0_i32 = arith.constant 0 : i32
    %c0_i32_0 = arith.constant 0 : i32
    %c0_i32_1 = arith.constant 0 : i32
    return %c0_i32, %c0_i32_0 : i32, i32
  }
  func.func @transform_3(%arg0: i32) -> (i32, i32) {
    %c0_i32 = arith.constant 0 : i32
    %c0_i32_0 = arith.constant 0 : i32
    %c0_i32_1 = arith.constant 0 : i32
    return %c0_i32, %c0_i32_0 : i32, i32
  }
  func.func @transform_4(%arg0: i32) -> (i32, i32) {
    %c0_i32 = arith.constant 0 : i32
    %c0_i32_0 = arith.constant 0 : i32
    %c0_i32_1 = arith.constant 0 : i32
    return %c0_i32, %c0_i32_0 : i32, i32
  }
  func.func @transform_5(%arg0: i32) -> (i32, i32) {
    %c0_i32 = arith.constant 0 : i32
    %c0_i32_0 = arith.constant 0 : i32
    %c0_i32_1 = arith.constant 0 : i32
    return %c0_i32, %c0_i32_0 : i32, i32
  }
  func.func @transform_6(%arg0: i32) -> (i32, i32) {
    %c0_i32 = arith.constant 0 : i32
    %c0_i32_0 = arith.constant 0 : i32
    %c0_i32_1 = arith.constant 0 : i32
    return %c0_i32, %c0_i32_0 : i32, i32
  }
  func.func @transform_7(%arg0: i32) -> (i32, i32) {
    %c0_i32 = arith.constant 0 : i32
    %c0_i32_0 = arith.constant 0 : i32
    %c0_i32_1 = arith.constant 0 : i32
    return %c0_i32, %c0_i32_0 : i32, i32
  }
  func.func @transform_8(%arg0: i32) -> (i32, i32) {
    %c0_i32 = arith.constant 0 : i32
    %c0_i32_0 = arith.constant 0 : i32
    %c0_i32_1 = arith.constant 0 : i32
    return %c0_i32, %c0_i32_0 : i32, i32
  }
  func.func @transform_9(%arg0: i32) -> (i32, i32) {
    %c0_i32 = arith.constant 0 : i32
    %c0_i32_0 = arith.constant 0 : i32
    %c0_i32_1 = arith.constant 0 : i32
    return %c0_i32, %c0_i32_0 : i32, i32
  }
  func.func @transform_10(%arg0: i32) -> (i32, i32) {
    %c0_i32 = arith.constant 0 : i32
    %c0_i32_0 = arith.constant 0 : i32
    %c0_i32_1 = arith.constant 0 : i32
    return %c0_i32, %c0_i32_0 : i32, i32
  }
  func.func @transform_11(%arg0: i32) -> (i32, i32) {
    %c0_i32 = arith.constant 0 : i32
    %c0_i32_0 = arith.constant 0 : i32
    %c0_i32_1 = arith.constant 0 : i32
    return %c0_i32, %c0_i32_0 : i32, i32
  }
  func.func @transform_12(%arg0: i32) -> (i32, i32) {
    %c0_i32 = arith.constant 0 : i32
    %c0_i32_0 = arith.constant 0 : i32
    %c0_i32_1 = arith.constant 0 : i32
    return %c0_i32, %c0_i32_0 : i32, i32
  }
  func.func @transform_13(%arg0: i32) -> (i32, i32) {
    %c0_i32 = arith.constant 0 : i32
    %c0_i32_0 = arith.constant 0 : i32
    %c0_i32_1 = arith.constant 0 : i32
    return %c0_i32, %c0_i32_0 : i32, i32
  }
  func.func @transform_14(%arg0: i32) -> (i32, i32) {
    %c0_i32 = arith.constant 0 : i32
    %c0_i32_0 = arith.constant 0 : i32
    %c0_i32_1 = arith.constant 0 : i32
    return %c0_i32, %c0_i32_0 : i32, i32
  }
  func.func @transform_15(%arg0: i32) -> (i32, i32) {
    %c0_i32 = arith.constant 0 : i32
    %c0_i32_0 = arith.constant 0 : i32
    %c0_i32_1 = arith.constant 0 : i32
    return %c0_i32, %c0_i32_0 : i32, i32
  }
  func.func @transform_16(%arg0: i32) -> (i32, i32, i32) {
    %c0_i32 = arith.constant 0 : i32
    %c0_i32_0 = arith.constant 0 : i32
    %c0_i32_1 = arith.constant 0 : i32
    return %arg0, %c0_i32, %c0_i32_0 : i32, i32, i32
  }
}

</mosaic_0001>

<llo_original>
// kernel: efficientnetv2_forward.4
$region0: #{efficientnetv2_forward.4}
  #allocation0 [shape = 'u32[]', space=smem, size = 0x4, offset = 0x4, fixed_abs, tag = 'smem constant byte address 0x4 - core index']
  #allocation1 [shape = 'u32[144,128]{1,0:T(1,128)}', space=vmem, size = 0x12000, scoped, tag = 'internal scratch']
  %s0 = inlined_call_operand.vmem [shape: f32[512,32], index: 0, kind: input, shape index: {}]
  %s1 = inlined_call_operand.vmem [shape: bf16[32,128], index: 1, kind: input, shape index: {}]
  %s2 = inlined_call_operand.vmem [shape: f32[1,128], index: 2, kind: input, shape index: {}]
  %s3 = inlined_call_operand.vmem [shape: bf16[512,128], index: 3, kind: output, shape index: {}]
  %s4 = sld [smem:[#allocation0]]
  $region45: #{efficientnetv2_forward.4} parent=0
    _
  %s6 = ssub.s32 1, %s4
  %s7 = scalar_select 0, %s6, %s4
  loop: start=0, step=1, limit=6
  $region2: #{efficientnetv2_forward.4} parent=0 // loop_pre_header
    _
  $region3: #{efficientnetv2_forward.4} parent=0 // loop_header
    %s9 = sphi 0, %s13
    %p10 = scmp.ge.s32.totalorder %s9, 6
    %s19 = sphi 0, %s21
    %s22 = sphi 0, %s19
    %s23 = sphi 0, %s22
    %s39 = sphi 0, %s23
    %s43 = sphi 0, %s43
    %s45 = sphi 0, %s43
    %s46 = sphi 0, %s45
    %s60 = sphi 0, %s46
    %s64 = sphi 0, %s64
    %s66 = sphi 0, %s64
    %s67 = sphi 0, %s66
    %s81 = sphi 0, %s67
    %s87 = sphi 0, %s89
    %s90 = sphi 0, %s87
    %s91 = sphi 0, %s90
    %s107 = sphi 0, %s91
  $region4: #{efficientnetv2_forward.4} parent=0 // loop_header_branch
    %12 = sbr.rel (%p10) target = $region8
  $region5: #{efficientnetv2_forward.4} parent=0 // loop_body
    %s14 = ssub.s32 %s9, 1
    %s15 = ssub.s32 %s9, 2
    %s16 = sadd.s32 %s9, 1
    %s17 = ssub.s32 %s9, %s16
    %p18 = scmp.eq.s32.totalorder %s17, 0
    %s20 = sadd.s32 %s19, 1
    %s21 = scalar_select %p18, %s19, %s20
    %p24 = pneg %p18
    %p25 = scmp.eq.s32.totalorder %s9, 3
    %p26 = por %p24, %p25
    %p27 = scmp.ne.s32.totalorder %s19, %s22
    %p28 = scmp.eq.s32.totalorder %s9, 0
    %p29 = por %p27, %p28
    %p30 = scmp.ne.s32.totalorder %s19, %s22
    %p31 = scmp.eq.s32.totalorder %s14, 3
    %p32 = por %p30, %p31
    %p33 = scmp.ne.s32.totalorder %s22, %s23
    %p34 = scmp.eq.s32.totalorder %s14, 0
    %p35 = por %p33, %p34
    %p36 = scmp.ne.s32.totalorder %s22, %s23
    %p37 = scmp.eq.s32.totalorder %s15, 3
    %p38 = por %p36, %p37
    %p40 = scmp.ne.s32.totalorder %s23, %s39
    %p41 = scmp.eq.s32.totalorder %s15, 0
    %p42 = por %p40, %p41
    %s44 = sadd.s32 %s43, 1
    %p47 = scmp.eq.s32.totalorder %s9, 3
    %p48 = scmp.ne.s32.totalorder %s43, %s45
    %p49 = scmp.eq.s32.totalorder %s9, 0
    %p50 = por %p48, %p49
    %p51 = scmp.ne.s32.totalorder %s43, %s45
    %p52 = scmp.eq.s32.totalorder %s14, 3
    %p53 = por %p51, %p52
    %p54 = scmp.ne.s32.totalorder %s45, %s46
    %p55 = scmp.eq.s32.totalorder %s14, 0
    %p56 = por %p54, %p55
    %p57 = scmp.ne.s32.totalorder %s45, %s46
    %p58 = scmp.eq.s32.totalorder %s15, 3
    %p59 = por %p57, %p58
    %p61 = scmp.ne.s32.totalorder %s46, %s60
    %p62 = scmp.eq.s32.totalorder %s15, 0
    %p63 = por %p61, %p62
    %s65 = sadd.s32 %s64, 1
    %p68 = scmp.eq.s32.totalorder %s9, 3
    %p69 = scmp.ne.s32.totalorder %s64, %s66
    %p70 = scmp.eq.s32.totalorder %s9, 0
    %p71 = por %p69, %p70
    %p72 = scmp.ne.s32.totalorder %s64, %s66
    %p73 = scmp.eq.s32.totalorder %s14, 3
    %p74 = por %p72, %p73
    %p75 = scmp.ne.s32.totalorder %s66, %s67
    %p76 = scmp.eq.s32.totalorder %s14, 0
    %p77 = por %p75, %p76
    %p78 = scmp.ne.s32.totalorder %s66, %s67
    %p79 = scmp.eq.s32.totalorder %s15, 3
    %p80 = por %p78, %p79
    %p82 = scmp.ne.s32.totalorder %s67, %s81
    %p83 = scmp.eq.s32.totalorder %s15, 0
    %p84 = por %p82, %p83
    %s85 = ssub.s32 %s9, %s16
    %p86 = scmp.eq.s32.totalorder %s85, 0
    %s88 = sadd.s32 %s87, 1
    %s89 = scalar_select %p86, %s87, %s88
    %p92 = pneg %p86
    %p93 = scmp.eq.s32.totalorder %s9, 3
    %p94 = por %p92, %p93
    %p95 = scmp.ne.s32.totalorder %s87, %s90
    %p96 = scmp.eq.s32.totalorder %s9, 0
    %p97 = por %p95, %p96
    %p98 = scmp.ne.s32.totalorder %s87, %s90
    %p99 = scmp.eq.s32.totalorder %s14, 3
    %p100 = por %p98, %p99
    %p101 = scmp.ne.s32.totalorder %s90, %s91
    %p102 = scmp.eq.s32.totalorder %s14, 0
    %p103 = por %p101, %p102
    %p104 = scmp.ne.s32.totalorder %s90, %s91
    %p105 = scmp.eq.s32.totalorder %s15, 3
    %p106 = por %p104, %p105
    %p108 = scmp.ne.s32.totalorder %s91, %s107
    %p109 = scmp.eq.s32.totalorder %s15, 0
    %p110 = por %p108, %p109
    %p111 = scmp.le.s32.totalorder 1, %s9
    %p112 = scmp.lt.s32.totalorder %s9, 5
    %p113 = pnand %p111, %p112
    %p114 = pneg %p113
    // Predicated region
    $region9: #{efficientnetv2_forward.4} parent=5 // pred_check
      _
    $region10: #{efficientnetv2_forward.4} parent=5 // pred_check_branch
      %116 = sbr.rel (%p113) target = $region12
    $region11: #{efficientnetv2_forward.4} parent=5 // pred_region
      %s117 = ssub.s32 %s9, 1
      // Predicated region
      $region13: #{efficientnetv2_forward.4} parent=11 // pred_check
        %p118 = pneg %p56
      $region14: #{efficientnetv2_forward.4} parent=11 // pred_check_branch
        %120 = sbr.rel (%p118) target = $region16
      $region15: #{efficientnetv2_forward.4} parent=11 // pred_region
        _
      $region16: #{efficientnetv2_forward.4} parent=11 // pred_fallthru
        _
      // Predicated region
      $region17: #{efficientnetv2_forward.4} parent=11 // pred_check
        %p121 = pneg %p77
      $region18: #{efficientnetv2_forward.4} parent=11 // pred_check_branch
        %123 = sbr.rel (%p121) target = $region20
      $region19: #{efficientnetv2_forward.4} parent=11 // pred_region
        _
      $region20: #{efficientnetv2_forward.4} parent=11 // pred_fallthru
        _
    $region12: #{efficientnetv2_forward.4} parent=5 // pred_fallthru
      _
    %p124 = scmp.lt.s32.totalorder %s9, 4
    // Predicated region
    $region21: #{efficientnetv2_forward.4} parent=5 // pred_check
      %p125 = pneg %p124
    $region22: #{efficientnetv2_forward.4} parent=5 // pred_check_branch
      %127 = sbr.rel (%p125) target = $region24
    $region23: #{efficientnetv2_forward.4} parent=5 // pred_region
      // Predicated region
      $region25: #{efficientnetv2_forward.4} parent=23 // pred_check
        %p128 = pneg %p29
      $region26: #{efficientnetv2_forward.4} parent=23 // pred_check_branch
        %130 = sbr.rel (%p128) target = $region28
      $region27: #{efficientnetv2_forward.4} parent=23 // pred_region
        %s131 = smul.u32 16, %s9
        %p132 = scmp.lt.s32.totalorder %s131, 63
        %s133 = scalar_select %p132, %s131, 63
        %s134 = smul.addr %s133, 8
        %s135 = scalar_lea.vmem %s0, %s134
        %s136 = smul.u32 16, %s9
      $region28: #{efficientnetv2_forward.4} parent=23 // pred_fallthru
        _
    $region24: #{efficientnetv2_forward.4} parent=5 // pred_fallthru
      _
    %p137 = scmp.le.s32.totalorder 1, %s9
    %p138 = scmp.lt.s32.totalorder %s9, 5
    %p139 = pnand %p137, %p138
    %p140 = pneg %p139
    // Predicated region
    $region29: #{efficientnetv2_forward.4} parent=5 // pred_check
      _
    $region30: #{efficientnetv2_forward.4} parent=5 // pred_check_branch
      %142 = sbr.rel (%p139) target = $region32
    $region31: #{efficientnetv2_forward.4} parent=5 // pred_region
      %s143 = ssub.s32 %s9, 1
      %s144 = smul.u32 16, %s14
      %p145 = scmp.lt.s32.totalorder %s144, 63
      %s146 = scalar_select %p145, %s144, 63
      %s147 = smul.addr %s146, 8
      %s148 = scalar_lea.vmem %s0, %s147
      %p149 = pneg %p35
      %p150 = pneg %p32
      %p151 = pneg %p56
      %p152 = pneg %p53
      %p153 = pneg %p77
      %p154 = pneg %p74
      %p155 = pneg %p103
      %p156 = pneg %p100
      %s157 = smul.u32 16, %s14
      %p158 = scmp.lt.s32.totalorder %s157, 63
      %s159 = scalar_select %p158, %s157, 63
      %s160 = smul.addr %s159, 4
      %s161 = scalar_lea.vmem %s3, %s160
      %s162 = smul.u32 16, %s14
      %p163 = scmp.lt.s32.totalorder %s162, 63
      %s164 = scalar_select %p163, %s162, 63
      %s165 = smul.addr %s164, 8
      %s166 = scalar_lea.vmem %s0, %s165
      %s167 = smul.u32 16, %s14
      %s168 = smul.u32 16, %s14
      %p169 = scmp.lt.s32.totalorder %s168, 63
      %s170 = scalar_select %p169, %s168, 63
      %s171 = smul.addr %s170, 4
      %s172 = scalar_lea.vmem %s3, %s171
      %s173 = smul.u32 16, %s14
      %v175 = vld [vmem:[%s166] sm:$0xff]
      %v176 = vld [vmem:[%s166 + $0x8] sm:$0xff]
      %v177 = vld [vmem:[%s166 + $0x10] sm:$0xff]
      %v178 = vld [vmem:[%s166 + $0x18] sm:$0xff]
      %v179 = vld [vmem:[%s166 + $0x20] sm:$0xff]
      %v180 = vld [vmem:[%s166 + $0x28] sm:$0xff]
      %v181 = vld [vmem:[%s166 + $0x30] sm:$0xff]
      %v182 = vld [vmem:[%s166 + $0x38] sm:$0xff]
      %v183 = vld [vmem:[%s166 + $0x40] sm:$0xff]
      %v184 = vld [vmem:[%s166 + $0x48] sm:$0xff]
      %v185 = vld [vmem:[%s166 + $0x50] sm:$0xff]
      %v186 = vld [vmem:[%s166 + $0x58] sm:$0xff]
      %v187 = vld [vmem:[%s166 + $0x60] sm:$0xff]
      %v188 = vld [vmem:[%s166 + $0x68] sm:$0xff]
      %v189 = vld [vmem:[%s166 + $0x70] sm:$0xff]
      %v190 = vld [vmem:[%s166 + $0x78] sm:$0xff]
      %v191 = vpack.c.bf16 %v176, %v175
      %v192 = vpack.c.bf16 %v178, %v177
      %v193 = vpack.c.bf16 %v180, %v179
      %v194 = vpack.c.bf16 %v182, %v181
      %v195 = vpack.c.bf16 %v184, %v183
      %v196 = vpack.c.bf16 %v186, %v185
      %v197 = vpack.c.bf16 %v188, %v187
      %v198 = vpack.c.bf16 %v190, %v189
      %v199 = vld [vmem:[%s1] sm:$0xf]
      %v200 = vld [vmem:[%s1 + $0x4] sm:$0xf]
      %v201 = vld [vmem:[%s1 + $0x8] sm:$0xf]
      %v202 = vld [vmem:[%s1 + $0xc] sm:$0xf]
      %v203 = vld [vmem:[%s2] sm:$0x1]
      %v205 = vlaneseq
      %v206 = vshrl.u32 %v205, 7
      %v207 = vsub.s32 0, %v206
      %v208 = vrot.slane %v203, %v207
      %v214 = vunpack.c.l.b16 %v199
      %v215 = vunpack.c.l.b16 %v200
      %v216 = vunpack.c.l.b16 %v201
      %v217 = vunpack.c.l.b16 %v202
      %v218 = vpack.c.b16 %v215, %v214
      %v219 = vpack.c.b16 %v217, %v216
      %vm222 = vcmask 261120
      %v224 = vsel %vm222, %v191, 0
      %v227 = vsel %vm222, %v192, 0
      %v230 = vsel %vm222, %v193, 0
      %v233 = vsel %vm222, %v194, 0
      %v236 = vsel %vm222, %v195, 0
      %v239 = vsel %vm222, %v196, 0
      %v242 = vsel %vm222, %v197, 0
      %v245 = vsel %vm222, %v198, 0
      %247 = vmatprep.subr.bf16.mxu0 0
      %248 = vmatpush1.bf16.msra.mxu0 0
      %249 = vmatprep.subr.bf16.mxu0 0
      %250 = vmatpush1.bf16.msra.mxu0 0
      %251 = vmatprep.subr.bf16.mxu0 0
      %252 = vmatpush1.bf16.msra.mxu0 0
      %253 = vmatprep.subr.bf16.mxu0 0
      %254 = vmatpush1.bf16.msra.mxu0 0
      %255 = vmatprep.subr.bf16.mxu0 0
      %256 = vmatpush1.bf16.msra.mxu0 0
      %257 = vmatprep.subr.bf16.mxu0 0
      %258 = vmatpush1.bf16.msra.mxu0 0
      %259 = vmatprep.subr.bf16.mxu0 0
      %260 = vmatpush1.bf16.msra.mxu0 %v219
      %261 = vmatprep.subr.bf16.mxu0 0
      %262 = vmatpush1.bf16.msra.mxu0 %v218
      %263 = vmatprep.subr.bf16.mxu0 0
      %264 = vmatpush2.bf16.msra.mxu0 0
      %265 = vmatprep.subr.bf16.mxu0 0
      %266 = vmatpush2.bf16.msra.mxu0 0
      %267 = vmatprep.subr.bf16.mxu0 0
      %268 = vmatpush2.bf16.msra.mxu0 0
      %269 = vmatprep.subr.bf16.mxu0 0
      %270 = vmatpush2.bf16.msra.mxu0 0
      %271 = vmatprep.subr.bf16.mxu0 0
      %272 = vmatpush2.bf16.msra.mxu0 0
      %273 = vmatprep.subr.bf16.mxu0 0
      %274 = vmatpush2.bf16.msra.mxu0 0
      %275 = vmatprep.subr.bf16.mxu0 0
      %276 = vmatpush2.bf16.msra.mxu0 0
      %277 = vmatprep.subr.bf16.mxu0 0
      %278 = vmatpush2.bf16.msra.mxu0 0
      %279 = vmatprep.mubr.bf16.mxu0 0
      %280 = vmatmul.mubr.bf16.gmra.mxu0 %v224
      %v281 = vpop.f32.mrf.mxu0
      %v282 = vadd.f32 %v208, %v281
      %v283 = vpop.f32.mrf.mxu0
      %v284 = vpop.f32.mrf.mxu0
      %v285 = vadd.f32 %v208, %v284
      %v286 = vpop.f32.mrf.mxu0
      %287 = vmatprep.mubr.bf16.mxu0 0
      %288 = vmatmul.mubr.bf16.gmra.mxu0 %v227
      %v289 = vpop.f32.mrf.mxu0
      %v290 = vadd.f32 %v208, %v289
      %v291 = vpop.f32.mrf.mxu0
      %v292 = vpop.f32.mrf.mxu0
      %v293 = vadd.f32 %v208, %v292
      %v294 = vpop.f32.mrf.mxu0
      %295 = vmatprep.mubr.bf16.mxu0 0
      %296 = vmatmul.mubr.bf16.gmra.mxu0 %v230
      %v297 = vpop.f32.mrf.mxu0
      %v298 = vadd.f32 %v208, %v297
      %v299 = vpop.f32.mrf.mxu0
      %v300 = vpop.f32.mrf.mxu0
      %v301 = vadd.f32 %v208, %v300
      %v302 = vpop.f32.mrf.mxu0
      %303 = vmatprep.mubr.bf16.mxu0 0
      %304 = vmatmul.mubr.bf16.gmra.mxu0 %v233
      %v305 = vpop.f32.mrf.mxu0
      %v306 = vadd.f32 %v208, %v305
      %v307 = vpop.f32.mrf.mxu0
      %v308 = vpop.f32.mrf.mxu0
      %v309 = vadd.f32 %v208, %v308
      %v310 = vpop.f32.mrf.mxu0
      %311 = vmatprep.mubr.bf16.mxu0 0
      %312 = vmatmul.mubr.bf16.gmra.mxu0 %v236
      %v313 = vpop.f32.mrf.mxu0
      %v314 = vadd.f32 %v208, %v313
      %v315 = vpop.f32.mrf.mxu0
      %v316 = vpop.f32.mrf.mxu0
      %v317 = vadd.f32 %v208, %v316
      %v318 = vpop.f32.mrf.mxu0
      %319 = vmatprep.mubr.bf16.mxu0 0
      %320 = vmatmul.mubr.bf16.gmra.mxu0 %v239
      %v321 = vpop.f32.mrf.mxu0
      %v322 = vadd.f32 %v208, %v321
      %v323 = vpop.f32.mrf.mxu0
      %v324 = vpop.f32.mrf.mxu0
      %v325 = vadd.f32 %v208, %v324
      %v326 = vpop.f32.mrf.mxu0
      %327 = vmatprep.mubr.bf16.mxu0 0
      %328 = vmatmul.mubr.bf16.gmra.mxu0 %v242
      %v329 = vpop.f32.mrf.mxu0
      %v330 = vadd.f32 %v208, %v329
      %v331 = vpop.f32.mrf.mxu0
      %v332 = vpop.f32.mrf.mxu0
      %v333 = vadd.f32 %v208, %v332
      %v334 = vpop.f32.mrf.mxu0
      %335 = vmatprep.mubr.bf16.mxu0 0
      %336 = vmatmul.mubr.bf16.gmra.mxu0 %v245
      %v337 = vpop.f32.mrf.mxu0
      %v338 = vadd.f32 %v208, %v337
      %v339 = vpop.f32.mrf.mxu0
      %v340 = vpop.f32.mrf.mxu0
      %v341 = vadd.f32 %v208, %v340
      %v342 = vpop.f32.mrf.mxu0
      %343 = vdwg.mxu0
      %v344 = vsub.f32 0.0, %v282
      %v345 = vsub.f32 0.0, %v285
      %v346 = vsub.f32 0.0, %v290
      %v347 = vsub.f32 0.0, %v293
      %v348 = vsub.f32 0.0, %v298
      %v349 = vsub.f32 0.0, %v301
      %v350 = vsub.f32 0.0, %v306
      %v351 = vsub.f32 0.0, %v309
      %v352 = vsub.f32 0.0, %v314
      %v353 = vsub.f32 0.0, %v317
      %v354 = vsub.f32 0.0, %v322
      %v355 = vsub.f32 0.0, %v325
      %v356 = vsub.f32 0.0, %v330
      %v357 = vsub.f32 0.0, %v333
      %v358 = vsub.f32 0.0, %v338
      %v359 = vsub.f32 0.0, %v341
      %v360 = vmul.f32 %v344, 1.442695
      %v361 = vpow.pop %v360
      %v362 = vmul.f32 %v345, 1.442695
      %v363 = vpow.pop %v362
      %v364 = vmul.f32 %v346, 1.442695
      %v365 = vpow.pop %v364
      %v366 = vmul.f32 %v347, 1.442695
      %v367 = vpow.pop %v366
      %v368 = vmul.f32 %v348, 1.442695
      %v369 = vpow.pop %v368
      %v370 = vmul.f32 %v349, 1.442695
      %v371 = vpow.pop %v370
      %v372 = vmul.f32 %v350, 1.442695
      %v373 = vpow.pop %v372
      %v374 = vmul.f32 %v351, 1.442695
      %v375 = vpow.pop %v374
      %v376 = vmul.f32 %v352, 1.442695
      %v377 = vpow.pop %v376
      %v378 = vmul.f32 %v353, 1.442695
      %v379 = vpow.pop %v378
      %v380 = vmul.f32 %v354, 1.442695
      %v381 = vpow.pop %v380
      %v382 = vmul.f32 %v355, 1.442695
      %v383 = vpow.pop %v382
      %v384 = vmul.f32 %v356, 1.442695
      %v385 = vpow.pop %v384
      %v386 = vmul.f32 %v357, 1.442695
      %v387 = vpow.pop %v386
      %v388 = vmul.f32 %v358, 1.442695
      %v389 = vpow.pop %v388
      %v390 = vmul.f32 %v359, 1.442695
      %v391 = vpow.pop %v390
      %v392 = vadd.f32 %v361, 1.0
      %v393 = vadd.f32 %v363, 1.0
      %v394 = vadd.f32 %v365, 1.0
      %v395 = vadd.f32 %v367, 1.0
      %v396 = vadd.f32 %v369, 1.0
      %v397 = vadd.f32 %v371, 1.0
      %v398 = vadd.f32 %v373, 1.0
      %v399 = vadd.f32 %v375, 1.0
      %v400 = vadd.f32 %v377, 1.0
      %v401 = vadd.f32 %v379, 1.0
      %v402 = vadd.f32 %v381, 1.0
      %v403 = vadd.f32 %v383, 1.0
      %v404 = vadd.f32 %v385, 1.0
      %v405 = vadd.f32 %v387, 1.0
      %v406 = vadd.f32 %v389, 1.0
      %v407 = vadd.f32 %v391, 1.0
      %v408 = vrcp.pop %v392
      %v409 = vrcp.pop %v393
      %v410 = vrcp.pop %v394
      %v411 = vrcp.pop %v395
      %v412 = vrcp.pop %v396
      %v413 = vrcp.pop %v397
      %v414 = vrcp.pop %v398
      %v415 = vrcp.pop %v399
      %v416 = vrcp.pop %v400
      %v417 = vrcp.pop %v401
      %v418 = vrcp.pop %v402
      %v419 = vrcp.pop %v403
      %v420 = vrcp.pop %v404
      %v421 = vrcp.pop %v405
      %v422 = vrcp.pop %v406
      %v423 = vrcp.pop %v407
      %v424 = vmul.f32 %v282, %v408
      %v425 = vmul.f32 %v285, %v409
      %v426 = vmul.f32 %v290, %v410
      %v427 = vmul.f32 %v293, %v411
      %v428 = vmul.f32 %v298, %v412
      %v429 = vmul.f32 %v301, %v413
      %v430 = vmul.f32 %v306, %v414
      %v431 = vmul.f32 %v309, %v415
      %v432 = vmul.f32 %v314, %v416
      %v433 = vmul.f32 %v317, %v417
      %v434 = vmul.f32 %v322, %v418
      %v435 = vmul.f32 %v325, %v419
      %v436 = vmul.f32 %v330, %v420
      %v437 = vmul.f32 %v333, %v421
      %v438 = vmul.f32 %v338, %v422
      %v439 = vmul.f32 %v341, %v423
      %v440 = vpack.c.bf16 %v425, %v424
      %v441 = vpack.c.bf16 %v427, %v426
      %v442 = vpack.c.bf16 %v429, %v428
      %v443 = vpack.c.bf16 %v431, %v430
      %v444 = vpack.c.bf16 %v433, %v432
      %v445 = vpack.c.bf16 %v435, %v434
      %v446 = vpack.c.bf16 %v437, %v436
      %v447 = vpack.c.bf16 %v439, %v438
      %v456 = vunpack.c.l.b16 %v440
      %v457 = vunpack.c.h.b16 %v440
      %v458 = vunpack.c.l.b16 %v441
      %v459 = vunpack.c.h.b16 %v441
      %v460 = vunpack.c.l.b16 %v442
      %v461 = vunpack.c.h.b16 %v442
      %v462 = vunpack.c.l.b16 %v443
      %v463 = vunpack.c.h.b16 %v443
      %v464 = vunpack.c.l.b16 %v444
      %v465 = vunpack.c.h.b16 %v444
      %v466 = vunpack.c.l.b16 %v445
      %v467 = vunpack.c.h.b16 %v445
      %v468 = vunpack.c.l.b16 %v446
      %v469 = vunpack.c.h.b16 %v446
      %v470 = vunpack.c.l.b16 %v447
      %v471 = vunpack.c.h.b16 %v447
      %v472 = vpack.c.b16 %v456, %v456
      %v473 = vpack.c.b16 %v457, %v457
      %v474 = vpack.c.b16 %v458, %v458
      %v475 = vpack.c.b16 %v459, %v459
      %v476 = vpack.c.b16 %v460, %v460
      %v477 = vpack.c.b16 %v461, %v461
      %v478 = vpack.c.b16 %v462, %v462
      %v479 = vpack.c.b16 %v463, %v463
      %v480 = vpack.c.b16 %v464, %v464
      %v481 = vpack.c.b16 %v465, %v465
      %v482 = vpack.c.b16 %v466, %v466
      %v483 = vpack.c.b16 %v467, %v467
      %v484 = vpack.c.b16 %v468, %v468
      %v485 = vpack.c.b16 %v469, %v469
      %v486 = vpack.c.b16 %v470, %v470
      %v487 = vpack.c.b16 %v471, %v471
      %504 = vst [vmem:[%s172] sm:$0xf] %v472
      %505 = vst [vmem:[%s172 + $0x4] sm:$0xf] %v473
      %506 = vst [vmem:[%s172 + $0x8] sm:$0xf] %v474
      %507 = vst [vmem:[%s172 + $0xc] sm:$0xf] %v475
      %508 = vst [vmem:[%s172 + $0x10] sm:$0xf] %v476
      %509 = vst [vmem:[%s172 + $0x14] sm:$0xf] %v477
      %510 = vst [vmem:[%s172 + $0x18] sm:$0xf] %v478
      %511 = vst [vmem:[%s172 + $0x1c] sm:$0xf] %v479
      %512 = vst [vmem:[%s172 + $0x20] sm:$0xf] %v480
      %513 = vst [vmem:[%s172 + $0x24] sm:$0xf] %v481
      %514 = vst [vmem:[%s172 + $0x28] sm:$0xf] %v482
      %515 = vst [vmem:[%s172 + $0x2c] sm:$0xf] %v483
      %516 = vst [vmem:[%s172 + $0x30] sm:$0xf] %v484
      %517 = vst [vmem:[%s172 + $0x34] sm:$0xf] %v485
      %518 = vst [vmem:[%s172 + $0x38] sm:$0xf] %v486
      %519 = vst [vmem:[%s172 + $0x3c] sm:$0xf] %v487
      %s520 = smul.u32 16, %s14
      %p521 = scmp.lt.s32.totalorder %s520, 63
      %s522 = scalar_select %p521, %s520, 63
      %s523 = smul.addr %s522, 4
      %s524 = scalar_lea.vmem %s3, %s523
      // Predicated region
      $region33: #{efficientnetv2_forward.4} parent=31 // pred_check
        %p525 = pneg %p100
      $region34: #{efficientnetv2_forward.4} parent=31 // pred_check_branch
        %527 = sbr.rel (%p525) target = $region36
      $region35: #{efficientnetv2_forward.4} parent=31 // pred_region
        %s528 = smul.u32 16, %s14
      $region36: #{efficientnetv2_forward.4} parent=31 // pred_fallthru
        _
    $region32: #{efficientnetv2_forward.4} parent=5 // pred_fallthru
      _
    %p529 = scmp.le.s32.totalorder 2, %s9
    // Predicated region
    $region37: #{efficientnetv2_forward.4} parent=5 // pred_check
      %p530 = pneg %p529
    $region38: #{efficientnetv2_forward.4} parent=5 // pred_check_branch
      %532 = sbr.rel (%p530) target = $region40
    $region39: #{efficientnetv2_forward.4} parent=5 // pred_region
      %s533 = ssub.s32 %s9, 2
      // Predicated region
      $region41: #{efficientnetv2_forward.4} parent=39 // pred_check
        %p534 = pneg %p106
      $region42: #{efficientnetv2_forward.4} parent=39 // pred_check_branch
        %536 = sbr.rel (%p534) target = $region44
      $region43: #{efficientnetv2_forward.4} parent=39 // pred_region
        %s537 = smul.u32 16, %s15
        %p538 = scmp.lt.s32.totalorder %s537, 63
        %s539 = scalar_select %p538, %s537, 63
        %s540 = smul.addr %s539, 4
        %s541 = scalar_lea.vmem %s3, %s540
      $region44: #{efficientnetv2_forward.4} parent=39 // pred_fallthru
        _
    $region40: #{efficientnetv2_forward.4} parent=5 // pred_fallthru
      _
  $region6: #{efficientnetv2_forward.4} parent=0 // loop_footer
    %s13 = sadd.s32 1, %s9
  $region7: #{efficientnetv2_forward.4} parent=0 // loop_footer_branch
    %8 = sbr.rel target = $region3
  $region8: #{efficientnetv2_forward.4} parent=0 // loop_exit
    _

// kernel: efficientnetv2_forward.5
$region0: #{efficientnetv2_forward.5}
  #allocation0 [shape = 'u32[]', space=smem, size = 0x4, offset = 0x4, fixed_abs, tag = 'smem constant byte address 0x4 - core index']
  #allocation1 [shape = 'u32[144,128]{1,0:T(1,128)}', space=vmem, size = 0x12000, scoped, tag = 'internal scratch']
  %s0 = inlined_call_operand.vmem [shape: bf16[2,18,18,128], index: 0, kind: input, shape index: {}]
  %s1 = inlined_call_operand.vmem [shape: bf16[9,128,128], index: 1, kind: input, shape index: {}]
  %s2 = inlined_call_operand.vmem [shape: f32[1,128], index: 2, kind: input, shape index: {}]
  %s3 = inlined_call_operand.vmem [shape: bf16[2,256,128], index: 3, kind: output, shape index: {}]
  %s4 = sld [smem:[#allocation0]]
  $region45: #{efficientnetv2_forward.5} parent=0
    _
  %s6 = ssub.s32 1, %s4
  %s7 = scalar_select 0, %s6, %s4
  loop: start=0, step=1, limit=4
  $region2: #{efficientnetv2_forward.5} parent=0 // loop_pre_header
    _
  $region3: #{efficientnetv2_forward.5} parent=0 // loop_header
    %s9 = sphi 0, %s13
    %p10 = scmp.ge.s32.totalorder %s9, 4
    %s19 = sphi 0, %s21
    %s22 = sphi 0, %s19
    %s23 = sphi 0, %s22
    %s39 = sphi 0, %s23
    %s43 = sphi 0, %s43
    %s45 = sphi 0, %s43
    %s46 = sphi 0, %s45
    %s60 = sphi 0, %s46
    %s64 = sphi 0, %s64
    %s66 = sphi 0, %s64
    %s67 = sphi 0, %s66
    %s81 = sphi 0, %s67
    %s87 = sphi 0, %s89
    %s90 = sphi 0, %s87
    %s91 = sphi 0, %s90
    %s107 = sphi 0, %s91
  $region4: #{efficientnetv2_forward.5} parent=0 // loop_header_branch
    %12 = sbr.rel (%p10) target = $region8
  $region5: #{efficientnetv2_forward.5} parent=0 // loop_body
    %s14 = ssub.s32 %s9, 1
    %s15 = ssub.s32 %s9, 2
    %s16 = sadd.s32 %s9, 1
    %s17 = ssub.s32 %s9, %s16
    %p18 = scmp.eq.s32.totalorder %s17, 0
    %s20 = sadd.s32 %s19, 1
    %s21 = scalar_select %p18, %s19, %s20
    %p24 = pneg %p18
    %p25 = scmp.eq.s32.totalorder %s9, 1
    %p26 = por %p24, %p25
    %p27 = scmp.ne.s32.totalorder %s19, %s22
    %p28 = scmp.eq.s32.totalorder %s9, 0
    %p29 = por %p27, %p28
    %p30 = scmp.ne.s32.totalorder %s19, %s22
    %p31 = scmp.eq.s32.totalorder %s14, 1
    %p32 = por %p30, %p31
    %p33 = scmp.ne.s32.totalorder %s22, %s23
    %p34 = scmp.eq.s32.totalorder %s14, 0
    %p35 = por %p33, %p34
    %p36 = scmp.ne.s32.totalorder %s22, %s23
    %p37 = scmp.eq.s32.totalorder %s15, 1
    %p38 = por %p36, %p37
    %p40 = scmp.ne.s32.totalorder %s23, %s39
    %p41 = scmp.eq.s32.totalorder %s15, 0
    %p42 = por %p40, %p41
    %s44 = sadd.s32 %s43, 1
    %p47 = scmp.eq.s32.totalorder %s9, 1
    %p48 = scmp.ne.s32.totalorder %s43, %s45
    %p49 = scmp.eq.s32.totalorder %s9, 0
    %p50 = por %p48, %p49
    %p51 = scmp.ne.s32.totalorder %s43, %s45
    %p52 = scmp.eq.s32.totalorder %s14, 1
    %p53 = por %p51, %p52
    %p54 = scmp.ne.s32.totalorder %s45, %s46
    %p55 = scmp.eq.s32.totalorder %s14, 0
    %p56 = por %p54, %p55
    %p57 = scmp.ne.s32.totalorder %s45, %s46
    %p58 = scmp.eq.s32.totalorder %s15, 1
    %p59 = por %p57, %p58
    %p61 = scmp.ne.s32.totalorder %s46, %s60
    %p62 = scmp.eq.s32.totalorder %s15, 0
    %p63 = por %p61, %p62
    %s65 = sadd.s32 %s64, 1
    %p68 = scmp.eq.s32.totalorder %s9, 1
    %p69 = scmp.ne.s32.totalorder %s64, %s66
    %p70 = scmp.eq.s32.totalorder %s9, 0
    %p71 = por %p69, %p70
    %p72 = scmp.ne.s32.totalorder %s64, %s66
    %p73 = scmp.eq.s32.totalorder %s14, 1
    %p74 = por %p72, %p73
    %p75 = scmp.ne.s32.totalorder %s66, %s67
    %p76 = scmp.eq.s32.totalorder %s14, 0
    %p77 = por %p75, %p76
    %p78 = scmp.ne.s32.totalorder %s66, %s67
    %p79 = scmp.eq.s32.totalorder %s15, 1
    %p80 = por %p78, %p79
    %p82 = scmp.ne.s32.totalorder %s67, %s81
    %p83 = scmp.eq.s32.totalorder %s15, 0
    %p84 = por %p82, %p83
    %s85 = ssub.s32 %s9, %s16
    %p86 = scmp.eq.s32.totalorder %s85, 0
    %s88 = sadd.s32 %s87, 1
    %s89 = scalar_select %p86, %s87, %s88
    %p92 = pneg %p86
    %p93 = scmp.eq.s32.totalorder %s9, 1
    %p94 = por %p92, %p93
    %p95 = scmp.ne.s32.totalorder %s87, %s90
    %p96 = scmp.eq.s32.totalorder %s9, 0
    %p97 = por %p95, %p96
    %p98 = scmp.ne.s32.totalorder %s87, %s90
    %p99 = scmp.eq.s32.totalorder %s14, 1
    %p100 = por %p98, %p99
    %p101 = scmp.ne.s32.totalorder %s90, %s91
    %p102 = scmp.eq.s32.totalorder %s14, 0
    %p103 = por %p101, %p102
    %p104 = scmp.ne.s32.totalorder %s90, %s91
    %p105 = scmp.eq.s32.totalorder %s15, 1
    %p106 = por %p104, %p105
    %p108 = scmp.ne.s32.totalorder %s91, %s107
    %p109 = scmp.eq.s32.totalorder %s15, 0
    %p110 = por %p108, %p109
    %p111 = scmp.le.s32.totalorder 1, %s9
    %p112 = scmp.lt.s32.totalorder %s9, 3
    %p113 = pnand %p111, %p112
    %p114 = pneg %p113
    // Predicated region
    $region9: #{efficientnetv2_forward.5} parent=5 // pred_check
      _
    $region10: #{efficientnetv2_forward.5} parent=5 // pred_check_branch
      %116 = sbr.rel (%p113) target = $region12
    $region11: #{efficientnetv2_forward.5} parent=5 // pred_region
      %s117 = ssub.s32 %s9, 1
      // Predicated region
      $region13: #{efficientnetv2_forward.5} parent=11 // pred_check
        %p118 = pneg %p56
      $region14: #{efficientnetv2_forward.5} parent=11 // pred_check_branch
        %120 = sbr.rel (%p118) target = $region16
      $region15: #{efficientnetv2_forward.5} parent=11 // pred_region
        _
      $region16: #{efficientnetv2_forward.5} parent=11 // pred_fallthru
        _
      // Predicated region
      $region17: #{efficientnetv2_forward.5} parent=11 // pred_check
        %p121 = pneg %p77
      $region18: #{efficientnetv2_forward.5} parent=11 // pred_check_branch
        %123 = sbr.rel (%p121) target = $region20
      $region19: #{efficientnetv2_forward.5} parent=11 // pred_region
        _
      $region20: #{efficientnetv2_forward.5} parent=11 // pred_fallthru
        _
    $region12: #{efficientnetv2_forward.5} parent=5 // pred_fallthru
      _
    %p124 = scmp.lt.s32.totalorder %s9, 2
    // Predicated region
    $region21: #{efficientnetv2_forward.5} parent=5 // pred_check
      %p125 = pneg %p124
    $region22: #{efficientnetv2_forward.5} parent=5 // pred_check_branch
      %127 = sbr.rel (%p125) target = $region24
    $region23: #{efficientnetv2_forward.5} parent=5 // pred_region
      // Predicated region
      $region25: #{efficientnetv2_forward.5} parent=23 // pred_check
        %p128 = pneg %p29
      $region26: #{efficientnetv2_forward.5} parent=23 // pred_check_branch
        %130 = sbr.rel (%p128) target = $region28
      $region27: #{efficientnetv2_forward.5} parent=23 // pred_region
        %p131 = scmp.lt.s32.totalorder %s9, 1
        %s132 = scalar_select %p131, %s9, 1
        %s133 = smul.addr %s132, 54
        %s134 = smul.addr %s133, 4
        %s135 = scalar_lea.vmem %s0, %s134
      $region28: #{efficientnetv2_forward.5} parent=23 // pred_fallthru
        _
    $region24: #{efficientnetv2_forward.5} parent=5 // pred_fallthru
      _
    %p136 = scmp.le.s32.totalorder 1, %s9
    %p137 = scmp.lt.s32.totalorder %s9, 3
    %p138 = pnand %p136, %p137
    %p139 = pneg %p138
    // Predicated region
    $region29: #{efficientnetv2_forward.5} parent=5 // pred_check
      _
    $region30: #{efficientnetv2_forward.5} parent=5 // pred_check_branch
      %141 = sbr.rel (%p138) target = $region32
    $region31: #{efficientnetv2_forward.5} parent=5 // pred_region
      %s142 = ssub.s32 %s9, 1
      %p143 = scmp.lt.s32.totalorder %s14, 1
      %s144 = scalar_select %p143, %s14, 1
      %s145 = smul.addr %s144, 54
      %s146 = smul.addr %s145, 4
      %s147 = scalar_lea.vmem %s0, %s146
      %p148 = pneg %p35
      %p149 = pneg %p32
      %p150 = pneg %p56
      %p151 = pneg %p53
      %p152 = pneg %p77
      %p153 = pneg %p74
      %p154 = pneg %p103
      %p155 = pneg %p100
      %p156 = scmp.lt.s32.totalorder %s14, 1
      %s157 = scalar_select %p156, %s14, 1
      %s158 = smul.addr %s157, 32
      %s159 = smul.addr %s158, 4
      %s160 = scalar_lea.vmem %s3, %s159
      %p161 = scmp.lt.s32.totalorder %s14, 1
      %s162 = scalar_select %p161, %s14, 1
      %s163 = smul.addr %s162, 54
      %s164 = smul.addr %s163, 4
      %s165 = scalar_lea.vmem %s0, %s164
      %p166 = scmp.lt.s32.totalorder %s14, 1
      %s167 = scalar_select %p166, %s14, 1
      %s168 = smul.addr %s167, 32
      %s169 = smul.addr %s168, 4
      %s170 = scalar_lea.vmem %s3, %s169
      %v172 = vld [vmem:[%s165] sm:$0xf]
      %v173 = vld [vmem:[%s165 + $0x4] sm:$0xf]
      %v174 = vld [vmem:[%s165 + $0x8] sm:$0x1]
      %v175 = vld [vmem:[%s165 + $0xc] sm:$0xf]
      %v176 = vld [vmem:[%s165 + $0x10] sm:$0xf]
      %v177 = vld [vmem:[%s165 + $0x14] sm:$0x1]
      %v178 = vld [vmem:[%s165 + $0x18] sm:$0xf]
      %v179 = vld [vmem:[%s165 + $0x1c] sm:$0xf]
      %v180 = vld [vmem:[%s165 + $0x20] sm:$0x1]
      %v181 = vld [vmem:[%s165 + $0x24] sm:$0xf]
      %v182 = vld [vmem:[%s165 + $0x28] sm:$0xf]
      %v183 = vld [vmem:[%s165 + $0x2c] sm:$0x1]
      %v184 = vld [vmem:[%s165 + $0x30] sm:$0xf]
      %v185 = vld [vmem:[%s165 + $0x34] sm:$0xf]
      %v186 = vld [vmem:[%s165 + $0x38] sm:$0x1]
      %v187 = vld [vmem:[%s165 + $0x3c] sm:$0xf]
      %v188 = vld [vmem:[%s165 + $0x40] sm:$0xf]
      %v189 = vld [vmem:[%s165 + $0x44] sm:$0x1]
      %v190 = vld [vmem:[%s165 + $0x48] sm:$0xf]
      %v191 = vld [vmem:[%s165 + $0x4c] sm:$0xf]
      %v192 = vld [vmem:[%s165 + $0x50] sm:$0x1]
      %v193 = vld [vmem:[%s165 + $0x54] sm:$0xf]
      %v194 = vld [vmem:[%s165 + $0x58] sm:$0xf]
      %v195 = vld [vmem:[%s165 + $0x5c] sm:$0x1]
      %v196 = vld [vmem:[%s165 + $0x60] sm:$0xf]
      %v197 = vld [vmem:[%s165 + $0x64] sm:$0xf]
      %v198 = vld [vmem:[%s165 + $0x68] sm:$0x1]
      %v199 = vld [vmem:[%s165 + $0x6c] sm:$0xf]
      %v200 = vld [vmem:[%s165 + $0x70] sm:$0xf]
      %v201 = vld [vmem:[%s165 + $0x74] sm:$0x1]
      %v202 = vld [vmem:[%s165 + $0x78] sm:$0xf]
      %v203 = vld [vmem:[%s165 + $0x7c] sm:$0xf]
      %v204 = vld [vmem:[%s165 + $0x80] sm:$0x1]
      %v205 = vld [vmem:[%s165 + $0x84] sm:$0xf]
      %v206 = vld [vmem:[%s165 + $0x88] sm:$0xf]
      %v207 = vld [vmem:[%s165 + $0x8c] sm:$0x1]
      %v208 = vld [vmem:[%s165 + $0x90] sm:$0xf]
      %v209 = vld [vmem:[%s165 + $0x94] sm:$0xf]
      %v210 = vld [vmem:[%s165 + $0x98] sm:$0x1]
      %v211 = vld [vmem:[%s165 + $0x9c] sm:$0xf]
      %v212 = vld [vmem:[%s165 + $0xa0] sm:$0xf]
      %v213 = vld [vmem:[%s165 + $0xa4] sm:$0x1]
      %v214 = vld [vmem:[%s165 + $0xa8] sm:$0xf]
      %v215 = vld [vmem:[%s165 + $0xac] sm:$0xf]
      %v216 = vld [vmem:[%s165 + $0xb0] sm:$0x1]
      %v217 = vld [vmem:[%s165 + $0xb4] sm:$0xf]
      %v218 = vld [vmem:[%s165 + $0xb8] sm:$0xf]
      %v219 = vld [vmem:[%s165 + $0xbc] sm:$0x1]
      %v220 = vld [vmem:[%s165 + $0xc0] sm:$0xf]
      %v221 = vld [vmem:[%s165 + $0xc4] sm:$0xf]
      %v222 = vld [vmem:[%s165 + $0xc8] sm:$0x1]
      %v223 = vld [vmem:[%s165 + $0xcc] sm:$0xf]
      %v224 = vld [vmem:[%s165 + $0xd0] sm:$0xf]
      %v225 = vld [vmem:[%s165 + $0xd4] sm:$0x1]
      %v226 = vunpack.c.l.bf16 %v172
      %v227 = vunpack.c.l.bf16 %v173
      %v228 = vunpack.c.l.bf16 %v174
      %v229 = vunpack.c.l.bf16 %v175
      %v230 = vunpack.c.l.bf16 %v176
      %v231 = vunpack.c.l.bf16 %v177
      %v232 = vunpack.c.l.bf16 %v178
      %v233 = vunpack.c.l.bf16 %v179
      %v234 = vunpack.c.l.bf16 %v180
      %v235 = vunpack.c.l.bf16 %v181
      %v236 = vunpack.c.l.bf16 %v182
      %v237 = vunpack.c.l.bf16 %v183
      %v238 = vunpack.c.l.bf16 %v184
      %v239 = vunpack.c.l.bf16 %v185
      %v240 = vunpack.c.l.bf16 %v186
      %v241 = vunpack.c.l.bf16 %v187
      %v242 = vunpack.c.l.bf16 %v188
      %v243 = vunpack.c.l.bf16 %v189
      %v244 = vunpack.c.l.bf16 %v190
      %v245 = vunpack.c.l.bf16 %v191
      %v246 = vunpack.c.l.bf16 %v192
      %v247 = vunpack.c.l.bf16 %v193
      %v248 = vunpack.c.l.bf16 %v194
      %v249 = vunpack.c.l.bf16 %v195
      %v250 = vunpack.c.l.bf16 %v196
      %v251 = vunpack.c.l.bf16 %v197
      %v252 = vunpack.c.l.bf16 %v198
      %v253 = vunpack.c.l.bf16 %v199
      %v254 = vunpack.c.l.bf16 %v200
      %v255 = vunpack.c.l.bf16 %v201
      %v256 = vunpack.c.l.bf16 %v202
      %v257 = vunpack.c.l.bf16 %v203
      %v258 = vunpack.c.l.bf16 %v204
      %v259 = vunpack.c.l.bf16 %v205
      %v260 = vunpack.c.l.bf16 %v206
      %v261 = vunpack.c.l.bf16 %v207
      %v262 = vunpack.c.l.bf16 %v208
      %v263 = vunpack.c.l.bf16 %v209
      %v264 = vunpack.c.l.bf16 %v210
      %v265 = vunpack.c.l.bf16 %v211
      %v266 = vunpack.c.l.bf16 %v212
      %v267 = vunpack.c.l.bf16 %v213
      %v268 = vunpack.c.l.bf16 %v214
      %v269 = vunpack.c.l.bf16 %v215
      %v270 = vunpack.c.l.bf16 %v216
      %v271 = vunpack.c.l.bf16 %v217
      %v272 = vunpack.c.l.bf16 %v218
      %v273 = vunpack.c.l.bf16 %v219
      %v274 = vunpack.c.l.bf16 %v220
      %v275 = vunpack.c.l.bf16 %v221
      %v276 = vunpack.c.l.bf16 %v222
      %v277 = vunpack.c.l.bf16 %v223
      %v278 = vunpack.c.l.bf16 %v224
      %v279 = vunpack.c.l.bf16 %v225
      %v280 = vpack.c.bf16 %v227, %v226
      %v281 = vpack.c.bf16 %v230, %v229
      %v282 = vpack.c.bf16 %v233, %v232
      %v283 = vpack.c.bf16 %v236, %v235
      %v284 = vpack.c.bf16 %v239, %v238
      %v285 = vpack.c.bf16 %v242, %v241
      %v286 = vpack.c.bf16 %v245, %v244
      %v287 = vpack.c.bf16 %v248, %v247
      %v288 = vpack.c.bf16 %v251, %v250
      %v289 = vpack.c.bf16 %v254, %v253
      %v290 = vpack.c.bf16 %v257, %v256
      %v291 = vpack.c.bf16 %v260, %v259
      %v292 = vpack.c.bf16 %v263, %v262
      %v293 = vpack.c.bf16 %v266, %v265
      %v294 = vpack.c.bf16 %v269, %v268
      %v295 = vpack.c.bf16 %v272, %v271
      %v296 = vld [vmem:[%s1] sm:$0xf]
      %v297 = vld [vmem:[%s1 + $0x4] sm:$0xf]
      %v298 = vld [vmem:[%s1 + $0x8] sm:$0xf]
      %v299 = vld [vmem:[%s1 + $0xc] sm:$0xf]
      %v300 = vld [vmem:[%s1 + $0x10] sm:$0xf]
      %v301 = vld [vmem:[%s1 + $0x14] sm:$0xf]
      %v302 = vld [vmem:[%s1 + $0x18] sm:$0xf]
      %v303 = vld [vmem:[%s1 + $0x1c] sm:$0xf]
      %v304 = vld [vmem:[%s1 + $0x20] sm:$0xf]
      %v305 = vld [vmem:[%s1 + $0x24] sm:$0xf]
      %v306 = vld [vmem:[%s1 + $0x28] sm:$0xf]
      %v307 = vld [vmem:[%s1 + $0x2c] sm:$0xf]
      %v308 = vld [vmem:[%s1 + $0x30] sm:$0xf]
      %v309 = vld [vmem:[%s1 + $0x34] sm:$0xf]
      %v310 = vld [vmem:[%s1 + $0x38] sm:$0xf]
      %v311 = vld [vmem:[%s1 + $0x3c] sm:$0xf]
      %vm360 = vcmask 1046528
      %v361 = vrot.slane %v226, 1
      %v362 = vrot.slane %v227, 1
      %v363 = vsel %vm360, %v361, %v362
      %v364 = vrot.slane %v228, 1
      %v365 = vsel %vm360, %v362, %v364
      %v366 = vrot.slane %v229, 1
      %v367 = vrot.slane %v230, 1
      %v368 = vsel %vm360, %v366, %v367
      %v369 = vrot.slane %v231, 1
      %v370 = vsel %vm360, %v367, %v369
      %v371 = vrot.slane %v232, 1
      %v372 = vrot.slane %v233, 1
      %v373 = vsel %vm360, %v371, %v372
      %v374 = vrot.slane %v234, 1
      %v375 = vsel %vm360, %v372, %v374
      %v376 = vrot.slane %v235, 1
      %v377 = vrot.slane %v236, 1
      %v378 = vsel %vm360, %v376, %v377
      %v379 = vrot.slane %v237, 1
      %v380 = vsel %vm360, %v377, %v379
      %v381 = vrot.slane %v238, 1
      %v382 = vrot.slane %v239, 1
      %v383 = vsel %vm360, %v381, %v382
      %v384 = vrot.slane %v240, 1
      %v385 = vsel %vm360, %v382, %v384
      %v386 = vrot.slane %v241, 1
      %v387 = vrot.slane %v242, 1
      %v388 = vsel %vm360, %v386, %v387
      %v389 = vrot.slane %v243, 1
      %v390 = vsel %vm360, %v387, %v389
      %v391 = vrot.slane %v244, 1
      %v392 = vrot.slane %v245, 1
      %v393 = vsel %vm360, %v391, %v392
      %v394 = vrot.slane %v246, 1
      %v395 = vsel %vm360, %v392, %v394
      %v396 = vrot.slane %v247, 1
      %v397 = vrot.slane %v248, 1
      %v398 = vsel %vm360, %v396, %v397
      %v399 = vrot.slane %v249, 1
      %v400 = vsel %vm360, %v397, %v399
      %v401 = vrot.slane %v250, 1
      %v402 = vrot.slane %v251, 1
      %v403 = vsel %vm360, %v401, %v402
      %v404 = vrot.slane %v252, 1
      %v405 = vsel %vm360, %v402, %v404
      %v406 = vrot.slane %v253, 1
      %v407 = vrot.slane %v254, 1
      %v408 = vsel %vm360, %v406, %v407
      %v409 = vrot.slane %v255, 1
      %v410 = vsel %vm360, %v407, %v409
      %v411 = vrot.slane %v256, 1
      %v412 = vrot.slane %v257, 1
      %v413 = vsel %vm360, %v411, %v412
      %v414 = vrot.slane %v258, 1
      %v415 = vsel %vm360, %v412, %v414
      %v416 = vrot.slane %v259, 1
      %v417 = vrot.slane %v260, 1
      %v418 = vsel %vm360, %v416, %v417
      %v419 = vrot.slane %v261, 1
      %v420 = vsel %vm360, %v417, %v419
      %v421 = vrot.slane %v262, 1
      %v422 = vrot.slane %v263, 1
      %v423 = vsel %vm360, %v421, %v422
      %v424 = vrot.slane %v264, 1
      %v425 = vsel %vm360, %v422, %v424
      %v426 = vrot.slane %v265, 1
      %v427 = vrot.slane %v266, 1
      %v428 = vsel %vm360, %v426, %v427
      %v429 = vrot.slane %v267, 1
      %v430 = vsel %vm360, %v427, %v429
      %v431 = vrot.slane %v268, 1
      %v432 = vrot.slane %v269, 1
      %v433 = vsel %vm360, %v431, %v432
      %v434 = vrot.slane %v270, 1
      %v435 = vsel %vm360, %v432, %v434
      %v436 = vrot.slane %v271, 1
      %v437 = vrot.slane %v272, 1
      %v438 = vsel %vm360, %v436, %v437
      %v439 = vrot.slane %v273, 1
      %v440 = vsel %vm360, %v437, %v439
      %v473 = vpack.c.bf16 %v365, %v363
      %v474 = vpack.c.bf16 %v370, %v368
      %v475 = vpack.c.bf16 %v375, %v373
      %v476 = vpack.c.bf16 %v380, %v378
      %v477 = vpack.c.bf16 %v385, %v383
      %v478 = vpack.c.bf16 %v390, %v388
      %v479 = vpack.c.bf16 %v395, %v393
      %v480 = vpack.c.bf16 %v400, %v398
      %v481 = vpack.c.bf16 %v405, %v403
      %v482 = vpack.c.bf16 %v410, %v408
      %v483 = vpack.c.bf16 %v415, %v413
      %v484 = vpack.c.bf16 %v420, %v418
      %v485 = vpack.c.bf16 %v425, %v423
      %v486 = vpack.c.bf16 %v430, %v428
      %v487 = vpack.c.bf16 %v435, %v433
      %v488 = vpack.c.bf16 %v440, %v438
      %s489 = scalar_lea.vmem %s1, 64
      %v490 = vld [vmem:[%s489] sm:$0xf]
      %v491 = vld [vmem:[%s489 + $0x4] sm:$0xf]
      %v492 = vld [vmem:[%s489 + $0x8] sm:$0xf]
      %v493 = vld [vmem:[%s489 + $0xc] sm:$0xf]
      %v494 = vld [vmem:[%s489 + $0x10] sm:$0xf]
      %v495 = vld [vmem:[%s489 + $0x14] sm:$0xf]
      %v496 = vld [vmem:[%s489 + $0x18] sm:$0xf]
      %v497 = vld [vmem:[%s489 + $0x1c] sm:$0xf]
      %v498 = vld [vmem:[%s489 + $0x20] sm:$0xf]
      %v499 = vld [vmem:[%s489 + $0x24] sm:$0xf]
      %v500 = vld [vmem:[%s489 + $0x28] sm:$0xf]
      %v501 = vld [vmem:[%s489 + $0x2c] sm:$0xf]
      %v502 = vld [vmem:[%s489 + $0x30] sm:$0xf]
      %v503 = vld [vmem:[%s489 + $0x34] sm:$0xf]
      %v504 = vld [vmem:[%s489 + $0x38] sm:$0xf]
      %v505 = vld [vmem:[%s489 + $0x3c] sm:$0xf]
      %v522 = vunpack.c.l.b16 %v490
      %v523 = vunpack.c.l.b16 %v491
      %v524 = vunpack.c.l.b16 %v492
      %v525 = vunpack.c.l.b16 %v493
      %v526 = vunpack.c.l.b16 %v494
      %v527 = vunpack.c.l.b16 %v495
      %v528 = vunpack.c.l.b16 %v496
      %v529 = vunpack.c.l.b16 %v497
      %v530 = vunpack.c.l.b16 %v498
      %v531 = vunpack.c.l.b16 %v499
      %v532 = vunpack.c.l.b16 %v500
      %v533 = vunpack.c.l.b16 %v501
      %v534 = vunpack.c.l.b16 %v502
      %v535 = vunpack.c.l.b16 %v503
      %v536 = vunpack.c.l.b16 %v504
      %v537 = vunpack.c.l.b16 %v505
      %v538 = vpack.c.b16 %v523, %v522
      %v539 = vpack.c.b16 %v525, %v524
      %v540 = vpack.c.b16 %v527, %v526
      %v541 = vpack.c.b16 %v529, %v528
      %v542 = vpack.c.b16 %v531, %v530
      %v543 = vpack.c.b16 %v533, %v532
      %v544 = vpack.c.b16 %v535, %v534
      %v545 = vpack.c.b16 %v537, %v536
      %554 = vmatprep.subr.bf16.mxu0 0
      %555 = vmatpush1.bf16.msra.mxu0 %v545
      %556 = vmatprep.subr.bf16.mxu0 0
      %557 = vmatpush1.bf16.msra.mxu0 %v544
      %558 = vmatprep.subr.bf16.mxu0 0
      %559 = vmatpush1.bf16.msra.mxu0 %v543
      %560 = vmatprep.subr.bf16.mxu0 0
      %561 = vmatpush1.bf16.msra.mxu0 %v542
      %562 = vmatprep.subr.bf16.mxu0 0
      %563 = vmatpush1.bf16.msra.mxu0 %v541
      %564 = vmatprep.subr.bf16.mxu0 0
      %565 = vmatpush1.bf16.msra.mxu0 %v540
      %566 = vmatprep.subr.bf16.mxu0 0
      %567 = vmatpush1.bf16.msra.mxu0 %v539
      %568 = vmatprep.subr.bf16.mxu0 0
      %569 = vmatpush1.bf16.msra.mxu0 %v538
      %570 = vmatprep.subr.bf16.mxu0 0
      %571 = vmatpush2.bf16.msra.mxu0 0
      %572 = vmatprep.subr.bf16.mxu0 0
      %573 = vmatpush2.bf16.msra.mxu0 0
      %574 = vmatprep.subr.bf16.mxu0 0
      %575 = vmatpush2.bf16.msra.mxu0 0
      %576 = vmatprep.subr.bf16.mxu0 0
      %577 = vmatpush2.bf16.msra.mxu0 0
      %578 = vmatprep.subr.bf16.mxu0 0
      %579 = vmatpush2.bf16.msra.mxu0 0
      %580 = vmatprep.subr.bf16.mxu0 0
      %581 = vmatpush2.bf16.msra.mxu0 0
      %582 = vmatprep.subr.bf16.mxu0 0
      %583 = vmatpush2.bf16.msra.mxu0 0
      %584 = vmatprep.subr.bf16.mxu0 0
      %585 = vmatpush2.bf16.msra.mxu0 0
      %586 = vmatprep.mubr.bf16.mxu0 0
      %587 = vmatmul.mubr.bf16.gmra.mxu0 %v473
      %v588 = vpop.f32.mrf.mxu0
      %v589 = vadd.f32 0.0, %v588
      %v590 = vpop.f32.mrf.mxu0
      %v591 = vpop.f32.mrf.mxu0
      %v592 = vadd.f32 0.0, %v591
      %v593 = vpop.f32.mrf.mxu0
      %594 = vmatprep.mubr.bf16.mxu0 0
      %595 = vmatmul.mubr.bf16.gmra.mxu0 %v474
      %v596 = vpop.f32.mrf.mxu0
      %v597 = vadd.f32 0.0, %v596
      %v598 = vpop.f32.mrf.mxu0
      %v599 = vpop.f32.mrf.mxu0
      %v600 = vadd.f32 0.0, %v599
      %v601 = vpop.f32.mrf.mxu0
      %602 = vmatprep.mubr.bf16.mxu0 0
      %603 = vmatmul.mubr.bf16.gmra.mxu0 %v475
      %v604 = vpop.f32.mrf.mxu0
      %v605 = vadd.f32 0.0, %v604
      %v606 = vpop.f32.mrf.mxu0
      %v607 = vpop.f32.mrf.mxu0
      %v608 = vadd.f32 0.0, %v607
      %v609 = vpop.f32.mrf.mxu0
      %610 = vmatprep.mubr.bf16.mxu0 0
      %611 = vmatmul.mubr.bf16.gmra.mxu0 %v476
      %v612 = vpop.f32.mrf.mxu0
      %v613 = vadd.f32 0.0, %v612
      %v614 = vpop.f32.mrf.mxu0
      %v615 = vpop.f32.mrf.mxu0
      %v616 = vadd.f32 0.0, %v615
      %v617 = vpop.f32.mrf.mxu0
      %618 = vmatprep.mubr.bf16.mxu0 0
      %619 = vmatmul.mubr.bf16.gmra.mxu0 %v477
      %v620 = vpop.f32.mrf.mxu0
      %v621 = vadd.f32 0.0, %v620
      %v622 = vpop.f32.mrf.mxu0
      %v623 = vpop.f32.mrf.mxu0
      %v624 = vadd.f32 0.0, %v623
      %v625 = vpop.f32.mrf.mxu0
      %626 = vmatprep.mubr.bf16.mxu0 0
      %627 = vmatmul.mubr.bf16.gmra.mxu0 %v478
      %v628 = vpop.f32.mrf.mxu0
      %v629 = vadd.f32 0.0, %v628
      %v630 = vpop.f32.mrf.mxu0
      %v631 = vpop.f32.mrf.mxu0
      %v632 = vadd.f32 0.0, %v631
      %v633 = vpop.f32.mrf.mxu0
      %634 = vmatprep.mubr.bf16.mxu0 0
      %635 = vmatmul.mubr.bf16.gmra.mxu0 %v479
      %v636 = vpop.f32.mrf.mxu0
      %v637 = vadd.f32 0.0, %v636
      %v638 = vpop.f32.mrf.mxu0
      %v639 = vpop.f32.mrf.mxu0
      %v640 = vadd.f32 0.0, %v639
      %v641 = vpop.f32.mrf.mxu0
      %642 = vmatprep.mubr.bf16.mxu0 0
      %643 = vmatmul.mubr.bf16.gmra.mxu0 %v480
      %v644 = vpop.f32.mrf.mxu0
      %v645 = vadd.f32 0.0, %v644
      %v646 = vpop.f32.mrf.mxu0
      %v647 = vpop.f32.mrf.mxu0
      %v648 = vadd.f32 0.0, %v647
      %v649 = vpop.f32.mrf.mxu0
      %650 = vmatprep.mubr.bf16.mxu0 0
      %651 = vmatmul.mubr.bf16.gmra.mxu0 %v481
      %v652 = vpop.f32.mrf.mxu0
      %v653 = vadd.f32 0.0, %v652
      %v654 = vpop.f32.mrf.mxu0
      %v655 = vpop.f32.mrf.mxu0
      %v656 = vadd.f32 0.0, %v655
      %v657 = vpop.f32.mrf.mxu0
      %658 = vmatprep.mubr.bf16.mxu0 0
      %659 = vmatmul.mubr.bf16.gmra.mxu0 %v482
      %v660 = vpop.f32.mrf.mxu0
      %v661 = vadd.f32 0.0, %v660
      %v662 = vpop.f32.mrf.mxu0
      %v663 = vpop.f32.mrf.mxu0
      %v664 = vadd.f32 0.0, %v663
      %v665 = vpop.f32.mrf.mxu0
      %666 = vmatprep.mubr.bf16.mxu0 0
      %667 = vmatmul.mubr.bf16.gmra.mxu0 %v483
      %v668 = vpop.f32.mrf.mxu0
      %v669 = vadd.f32 0.0, %v668
      %v670 = vpop.f32.mrf.mxu0
      %v671 = vpop.f32.mrf.mxu0
      %v672 = vadd.f32 0.0, %v671
      %v673 = vpop.f32.mrf.mxu0
      %674 = vmatprep.mubr.bf16.mxu0 0
      %675 = vmatmul.mubr.bf16.gmra.mxu0 %v484
      %v676 = vpop.f32.mrf.mxu0
      %v677 = vadd.f32 0.0, %v676
      %v678 = vpop.f32.mrf.mxu0
      %v679 = vpop.f32.mrf.mxu0
      %v680 = vadd.f32 0.0, %v679
      %v681 = vpop.f32.mrf.mxu0
      %682 = vmatprep.mubr.bf16.mxu0 0
      %683 = vmatmul.mubr.bf16.gmra.mxu0 %v485
      %v684 = vpop.f32.mrf.mxu0
      %v685 = vadd.f32 0.0, %v684
      %v686 = vpop.f32.mrf.mxu0
      %v687 = vpop.f32.mrf.mxu0
      %v688 = vadd.f32 0.0, %v687
      %v689 = vpop.f32.mrf.mxu0
      %690 = vmatprep.mubr.bf16.mxu0 0
      %691 = vmatmul.mubr.bf16.gmra.mxu0 %v486
      %v692 = vpop.f32.mrf.mxu0
      %v693 = vadd.f32 0.0, %v692
      %v694 = vpop.f32.mrf.mxu0
      %v695 = vpop.f32.mrf.mxu0
      %v696 = vadd.f32 0.0, %v695
      %v697 = vpop.f32.mrf.mxu0
      %698 = vmatprep.mubr.bf16.mxu0 0
      %699 = vmatmul.mubr.bf16.gmra.mxu0 %v487
      %v700 = vpop.f32.mrf.mxu0
      %v701 = vadd.f32 0.0, %v700
      %v702 = vpop.f32.mrf.mxu0
      %v703 = vpop.f32.mrf.mxu0
      %v704 = vadd.f32 0.0, %v703
      %v705 = vpop.f32.mrf.mxu0
      %706 = vmatprep.mubr.bf16.mxu0 0
      %707 = vmatmul.mubr.bf16.gmra.mxu0 %v488
      %v708 = vpop.f32.mrf.mxu0
      %v709 = vadd.f32 0.0, %v708
      %v710 = vpop.f32.mrf.mxu0
      %v711 = vpop.f32.mrf.mxu0
      %v712 = vadd.f32 0.0, %v711
      %v713 = vpop.f32.mrf.mxu0
      %714 = vdwg.mxu0
      %v731 = vunpack.c.l.b16 %v296
      %v732 = vunpack.c.l.b16 %v297
      %v733 = vunpack.c.l.b16 %v298
      %v734 = vunpack.c.l.b16 %v299
      %v735 = vunpack.c.l.b16 %v300
      %v736 = vunpack.c.l.b16 %v301
      %v737 = vunpack.c.l.b16 %v302
      %v738 = vunpack.c.l.b16 %v303
      %v739 = vunpack.c.l.b16 %v304
      %v740 = vunpack.c.l.b16 %v305
      %v741 = vunpack.c.l.b16 %v306
      %v742 = vunpack.c.l.b16 %v307
      %v743 = vunpack.c.l.b16 %v308
      %v744 = vunpack.c.l.b16 %v309
      %v745 = vunpack.c.l.b16 %v310
      %v746 = vunpack.c.l.b16 %v311
      %v747 = vpack.c.b16 %v732, %v731
      %v748 = vpack.c.b16 %v734, %v733
      %v749 = vpack.c.b16 %v736, %v735
      %v750 = vpack.c.b16 %v738, %v737
      %v751 = vpack.c.b16 %v740, %v739
      %v752 = vpack.c.b16 %v742, %v741
      %v753 = vpack.c.b16 %v744, %v743
      %v754 = vpack.c.b16 %v746, %v745
      %763 = vmatprep.subr.bf16.mxu0 0
      %764 = vmatpush1.bf16.msra.mxu0 %v754
      %765 = vmatprep.subr.bf16.mxu0 0
      %766 = vmatpush1.bf16.msra.mxu0 %v753
      %767 = vmatprep.subr.bf16.mxu0 0
      %768 = vmatpush1.bf16.msra.mxu0 %v752
      %769 = vmatprep.subr.bf16.mxu0 0
      %770 = vmatpush1.bf16.msra.mxu0 %v751
      %771 = vmatprep.subr.bf16.mxu0 0
      %772 = vmatpush1.bf16.msra.mxu0 %v750
      %773 = vmatprep.subr.bf16.mxu0 0
      %774 = vmatpush1.bf16.msra.mxu0 %v749
      %775 = vmatprep.subr.bf16.mxu0 0
      %776 = vmatpush1.bf16.msra.mxu0 %v748
      %777 = vmatprep.subr.bf16.mxu0 0
      %778 = vmatpush1.bf16.msra.mxu0 %v747
      %779 = vmatprep.subr.bf16.mxu0 0
      %780 = vmatpush2.bf16.msra.mxu0 0
      %781 = vmatprep.subr.bf16.mxu0 0
      %782 = vmatpush2.bf16.msra.mxu0 0
      %783 = vmatprep.subr.bf16.mxu0 0
      %784 = vmatpush2.bf16.msra.mxu0 0
      %785 = vmatprep.subr.bf16.mxu0 0
      %786 = vmatpush2.bf16.msra.mxu0 0
      %787 = vmatprep.subr.bf16.mxu0 0
      %788 = vmatpush2.bf16.msra.mxu0 0
      %789 = vmatprep.subr.bf16.mxu0 0
      %790 = vmatpush2.bf16.msra.mxu0 0
      %791 = vmatprep.subr.bf16.mxu0 0
      %792 = vmatpush2.bf16.msra.mxu0 0
      %793 = vmatprep.subr.bf16.mxu0 0
      %794 = vmatpush2.bf16.msra.mxu0 0
      %795 = vmatprep.mubr.bf16.mxu0 0
      %796 = vmatmul.mubr.bf16.gmra.mxu0 %v280
      %v797 = vpop.f32.mrf.mxu0
      %v798 = vadd.f32 %v589, %v797
      %v799 = vpop.f32.mrf.mxu0
      %v800 = vpop.f32.mrf.mxu0
      %v801 = vadd.f32 %v592, %v800
      %v802 = vpop.f32.mrf.mxu0
      %803 = vmatprep.mubr.bf16.mxu0 0
      %804 = vmatmul.mubr.bf16.gmra.mxu0 %v281
      %v805 = vpop.f32.mrf.mxu0
      %v806 = vadd.f32 %v597, %v805
      %v807 = vpop.f32.mrf.mxu0
      %v808 = vpop.f32.mrf.mxu0
      %v809 = vadd.f32 %v600, %v808
      %v810 = vpop.f32.mrf.mxu0
      %811 = vmatprep.mubr.bf16.mxu0 0
      %812 = vmatmul.mubr.bf16.gmra.mxu0 %v282
      %v813 = vpop.f32.mrf.mxu0
      %v814 = vadd.f32 %v605, %v813
      %v815 = vpop.f32.mrf.mxu0
      %v816 = vpop.f32.mrf.mxu0
      %v817 = vadd.f32 %v608, %v816
      %v818 = vpop.f32.mrf.mxu0
      %819 = vmatprep.mubr.bf16.mxu0 0
      %820 = vmatmul.mubr.bf16.gmra.mxu0 %v283
      %v821 = vpop.f32.mrf.mxu0
      %v822 = vadd.f32 %v613, %v821
      %v823 = vpop.f32.mrf.mxu0
      %v824 = vpop.f32.mrf.mxu0
      %v825 = vadd.f32 %v616, %v824
      %v826 = vpop.f32.mrf.mxu0
      %827 = vmatprep.mubr.bf16.mxu0 0
      %828 = vmatmul.mubr.bf16.gmra.mxu0 %v284
      %v829 = vpop.f32.mrf.mxu0
      %v830 = vadd.f32 %v621, %v829
      %v831 = vpop.f32.mrf.mxu0
      %v832 = vpop.f32.mrf.mxu0
      %v833 = vadd.f32 %v624, %v832
      %v834 = vpop.f32.mrf.mxu0
      %835 = vmatprep.mubr.bf16.mxu0 0
      %836 = vmatmul.mubr.bf16.gmra.mxu0 %v285
      %v837 = vpop.f32.mrf.mxu0
      %v838 = vadd.f32 %v629, %v837
      %v839 = vpop.f32.mrf.mxu0
      %v840 = vpop.f32.mrf.mxu0
      %v841 = vadd.f32 %v632, %v840
      %v842 = vpop.f32.mrf.mxu0
      %843 = vmatprep.mubr.bf16.mxu0 0
      %844 = vmatmul.mubr.bf16.gmra.mxu0 %v286
      %v845 = vpop.f32.mrf.mxu0
      %v846 = vadd.f32 %v637, %v845
      %v847 = vpop.f32.mrf.mxu0
      %v848 = vpop.f32.mrf.mxu0
      %v849 = vadd.f32 %v640, %v848
      %v850 = vpop.f32.mrf.mxu0
      %851 = vmatprep.mubr.bf16.mxu0 0
      %852 = vmatmul.mubr.bf16.gmra.mxu0 %v287
      %v853 = vpop.f32.mrf.mxu0
      %v854 = vadd.f32 %v645, %v853
      %v855 = vpop.f32.mrf.mxu0
      %v856 = vpop.f32.mrf.mxu0
      %v857 = vadd.f32 %v648, %v856
      %v858 = vpop.f32.mrf.mxu0
      %859 = vmatprep.mubr.bf16.mxu0 0
      %860 = vmatmul.mubr.bf16.gmra.mxu0 %v288
      %v861 = vpop.f32.mrf.mxu0
      %v862 = vadd.f32 %v653, %v861
      %v863 = vpop.f32.mrf.mxu0
      %v864 = vpop.f32.mrf.mxu0
      %v865 = vadd.f32 %v656, %v864
      %v866 = vpop.f32.mrf.mxu0
      %867 = vmatprep.mubr.bf16.mxu0 0
      %868 = vmatmul.mubr.bf16.gmra.mxu0 %v289
      %v869 = vpop.f32.mrf.mxu0
      %v870 = vadd.f32 %v661, %v869
      %v871 = vpop.f32.mrf.mxu0
      %v872 = vpop.f32.mrf.mxu0
      %v873 = vadd.f32 %v664, %v872
      %v874 = vpop.f32.mrf.mxu0
      %875 = vmatprep.mubr.bf16.mxu0 0
      %876 = vmatmul.mubr.bf16.gmra.mxu0 %v290
      %v877 = vpop.f32.mrf.mxu0
      %v878 = vadd.f32 %v669, %v877
      %v879 = vpop.f32.mrf.mxu0
      %v880 = vpop.f32.mrf.mxu0
      %v881 = vadd.f32 %v672, %v880
      %v882 = vpop.f32.mrf.mxu0
      %883 = vmatprep.mubr.bf16.mxu0 0
      %884 = vmatmul.mubr.bf16.gmra.mxu0 %v291
      %v885 = vpop.f32.mrf.mxu0
      %v886 = vadd.f32 %v677, %v885
      %v887 = vpop.f32.mrf.mxu0
      %v888 = vpop.f32.mrf.mxu0
      %v889 = vadd.f32 %v680, %v888
      %v890 = vpop.f32.mrf.mxu0
      %891 = vmatprep.mubr.bf16.mxu0 0
      %892 = vmatmul.mubr.bf16.gmra.mxu0 %v292
      %v893 = vpop.f32.mrf.mxu0
      %v894 = vadd.f32 %v685, %v893
      %v895 = vpop.f32.mrf.mxu0
      %v896 = vpop.f32.mrf.mxu0
      %v897 = vadd.f32 %v688, %v896
      %v898 = vpop.f32.mrf.mxu0
      %899 = vmatprep.mubr.bf16.mxu0 0
      %900 = vmatmul.mubr.bf16.gmra.mxu0 %v293
      %v901 = vpop.f32.mrf.mxu0
      %v902 = vadd.f32 %v693, %v901
      %v903 = vpop.f32.mrf.mxu0
      %v904 = vpop.f32.mrf.mxu0
      %v905 = vadd.f32 %v696, %v904
      %v906 = vpop.f32.mrf.mxu0
      %907 = vmatprep.mubr.bf16.mxu0 0
      %908 = vmatmul.mubr.bf16.gmra.mxu0 %v294
      %v909 = vpop.f32.mrf.mxu0
      %v910 = vadd.f32 %v701, %v909
      %v911 = vpop.f32.mrf.mxu0
      %v912 = vpop.f32.mrf.mxu0
      %v913 = vadd.f32 %v704, %v912
      %v914 = vpop.f32.mrf.mxu0
      %915 = vmatprep.mubr.bf16.mxu0 0
      %916 = vmatmul.mubr.bf16.gmra.mxu0 %v295
      %v917 = vpop.f32.mrf.mxu0
      %v918 = vadd.f32 %v709, %v917
      %v919 = vpop.f32.mrf.mxu0
      %v920 = vpop.f32.mrf.mxu0
      %v921 = vadd.f32 %v712, %v920
      %v922 = vpop.f32.mrf.mxu0
      %923 = vdwg.mxu0
      %vm924 = vcmask 1045504
      %v925 = vrot.slane %v226, 2
      %v926 = vrot.slane %v227, 2
      %v927 = vsel %vm924, %v925, %v926
      %v928 = vrot.slane %v228, 2
      %v929 = vsel %vm924, %v926, %v928
      %v930 = vrot.slane %v229, 2
      %v931 = vrot.slane %v230, 2
      %v932 = vsel %vm924, %v930, %v931
      %v933 = vrot.slane %v231, 2
      %v934 = vsel %vm924, %v931, %v933
      %v935 = vrot.slane %v232, 2
      %v936 = vrot.slane %v233, 2
      %v937 = vsel %vm924, %v935, %v936
      %v938 = vrot.slane %v234, 2
      %v939 = vsel %vm924, %v936, %v938
      %v940 = vrot.slane %v235, 2
      %v941 = vrot.slane %v236, 2
      %v942 = vsel %vm924, %v940, %v941
      %v943 = vrot.slane %v237, 2
      %v944 = vsel %vm924, %v941, %v943
      %v945 = vrot.slane %v238, 2
      %v946 = vrot.slane %v239, 2
      %v947 = vsel %vm924, %v945, %v946
      %v948 = vrot.slane %v240, 2
      %v949 = vsel %vm924, %v946, %v948
      %v950 = vrot.slane %v241, 2
      %v951 = vrot.slane %v242, 2
      %v952 = vsel %vm924, %v950, %v951
      %v953 = vrot.slane %v243, 2
      %v954 = vsel %vm924, %v951, %v953
      %v955 = vrot.slane %v244, 2
      %v956 = vrot.slane %v245, 2
      %v957 = vsel %vm924, %v955, %v956
      %v958 = vrot.slane %v246, 2
      %v959 = vsel %vm924, %v956, %v958
      %v960 = vrot.slane %v247, 2
      %v961 = vrot.slane %v248, 2
      %v962 = vsel %vm924, %v960, %v961
      %v963 = vrot.slane %v249, 2
      %v964 = vsel %vm924, %v961, %v963
      %v965 = vrot.slane %v250, 2
      %v966 = vrot.slane %v251, 2
      %v967 = vsel %vm924, %v965, %v966
      %v968 = vrot.slane %v252, 2
      %v969 = vsel %vm924, %v966, %v968
      %v970 = vrot.slane %v253, 2
      %v971 = vrot.slane %v254, 2
      %v972 = vsel %vm924, %v970, %v971
      %v973 = vrot.slane %v255, 2
      %v974 = vsel %vm924, %v971, %v973
      %v975 = vrot.slane %v256, 2
      %v976 = vrot.slane %v257, 2
      %v977 = vsel %vm924, %v975, %v976
      %v978 = vrot.slane %v258, 2
      %v979 = vsel %vm924, %v976, %v978
      %v980 = vrot.slane %v259, 2
      %v981 = vrot.slane %v260, 2
      %v982 = vsel %vm924, %v980, %v981
      %v983 = vrot.slane %v261, 2
      %v984 = vsel %vm924, %v981, %v983
      %v985 = vrot.slane %v262, 2
      %v986 = vrot.slane %v263, 2
      %v987 = vsel %vm924, %v985, %v986
      %v988 = vrot.slane %v264, 2
      %v989 = vsel %vm924, %v986, %v988
      %v990 = vrot.slane %v265, 2
      %v991 = vrot.slane %v266, 2
      %v992 = vsel %vm924, %v990, %v991
      %v993 = vrot.slane %v267, 2
      %v994 = vsel %vm924, %v991, %v993
      %v995 = vrot.slane %v268, 2
      %v996 = vrot.slane %v269, 2
      %v997 = vsel %vm924, %v995, %v996
      %v998 = vrot.slane %v270, 2
      %v999 = vsel %vm924, %v996, %v998
      %v1000 = vrot.slane %v271, 2
      %v1001 = vrot.slane %v272, 2
      %v1002 = vsel %vm924, %v1000, %v1001
      %v1003 = vrot.slane %v273, 2
      %v1004 = vsel %vm924, %v1001, %v1003
      %v1037 = vpack.c.bf16 %v929, %v927
      %v1038 = vpack.c.bf16 %v934, %v932
      %v1039 = vpack.c.bf16 %v939, %v937
      %v1040 = vpack.c.bf16 %v944, %v942
      %v1041 = vpack.c.bf16 %v949, %v947
      %v1042 = vpack.c.bf16 %v954, %v952
      %v1043 = vpack.c.bf16 %v959, %v957
      %v1044 = vpack.c.bf16 %v964, %v962
      %v1045 = vpack.c.bf16 %v969, %v967
      %v1046 = vpack.c.bf16 %v974, %v972
      %v1047 = vpack.c.bf16 %v979, %v977
      %v1048 = vpack.c.bf16 %v984, %v982
      %v1049 = vpack.c.bf16 %v989, %v987
      %v1050 = vpack.c.bf16 %v994, %v992
      %v1051 = vpack.c.bf16 %v999, %v997
      %v1052 = vpack.c.bf16 %v1004, %v1002
      %s1053 = scalar_lea.vmem %s1, 128
      %v1054 = vld [vmem:[%s1053] sm:$0xf]
      %v1055 = vld [vmem:[%s1053 + $0x4] sm:$0xf]
      %v1056 = vld [vmem:[%s1053 + $0x8] sm:$0xf]
      %v1057 = vld [vmem:[%s1053 + $0xc] sm:$0xf]
      %v1058 = vld [vmem:[%s1053 + $0x10] sm:$0xf]
      %v1059 = vld [vmem:[%s1053 + $0x14] sm:$0xf]
      %v1060 = vld [vmem:[%s1053 + $0x18] sm:$0xf]
      %v1061 = vld [vmem:[%s1053 + $0x1c] sm:$0xf]
      %v1062 = vld [vmem:[%s1053 + $0x20] sm:$0xf]
      %v1063 = vld [vmem:[%s1053 + $0x24] sm:$0xf]
      %v1064 = vld [vmem:[%s1053 + $0x28] sm:$0xf]
      %v1065 = vld [vmem:[%s1053 + $0x2c] sm:$0xf]
      %v1066 = vld [vmem:[%s1053 + $0x30] sm:$0xf]
      %v1067 = vld [vmem:[%s1053 + $0x34] sm:$0xf]
      %v1068 = vld [vmem:[%s1053 + $0x38] sm:$0xf]
      %v1069 = vld [vmem:[%s1053 + $0x3c] sm:$0xf]
      %v1086 = vunpack.c.l.b16 %v1054
      %v1087 = vunpack.c.l.b16 %v1055
      %v1088 = vunpack.c.l.b16 %v1056
      %v1089 = vunpack.c.l.b16 %v1057
      %v1090 = vunpack.c.l.b16 %v1058
      %v1091 = vunpack.c.l.b16 %v1059
      %v1092 = vunpack.c.l.b16 %v1060
      %v1093 = vunpack.c.l.b16 %v1061
      %v1094 = vunpack.c.l.b16 %v1062
      %v1095 = vunpack.c.l.b16 %v1063
      %v1096 = vunpack.c.l.b16 %v1064
      %v1097 = vunpack.c.l.b16 %v1065
      %v1098 = vunpack.c.l.b16 %v1066
      %v1099 = vunpack.c.l.b16 %v1067
      %v1100 = vunpack.c.l.b16 %v1068
      %v1101 = vunpack.c.l.b16 %v1069
      %v1102 = vpack.c.b16 %v1087, %v1086
      %v1103 = vpack.c.b16 %v1089, %v1088
      %v1104 = vpack.c.b16 %v1091, %v1090
      %v1105 = vpack.c.b16 %v1093, %v1092
      %v1106 = vpack.c.b16 %v1095, %v1094
      %v1107 = vpack.c.b16 %v1097, %v1096
      %v1108 = vpack.c.b16 %v1099, %v1098
      %v1109 = vpack.c.b16 %v1101, %v1100
      %1118 = vmatprep.subr.bf16.mxu0 0
      %1119 = vmatpush1.bf16.msra.mxu0 %v1109
      %1120 = vmatprep.subr.bf16.mxu0 0
      %1121 = vmatpush1.bf16.msra.mxu0 %v1108
      %1122 = vmatprep.subr.bf16.mxu0 0
      %1123 = vmatpush1.bf16.msra.mxu0 %v1107
      %1124 = vmatprep.subr.bf16.mxu0 0
      %1125 = vmatpush1.bf16.msra.mxu0 %v1106
      %1126 = vmatprep.subr.bf16.mxu0 0
      %1127 = vmatpush1.bf16.msra.mxu0 %v1105
      %1128 = vmatprep.subr.bf16.mxu0 0
      %1129 = vmatpush1.bf16.msra.mxu0 %v1104
      %1130 = vmatprep.subr.bf16.mxu0 0
      %1131 = vmatpush1.bf16.msra.mxu0 %v1103
      %1132 = vmatprep.subr.bf16.mxu0 0
      %1133 = vmatpush1.bf16.msra.mxu0 %v1102
      %1134 = vmatprep.subr.bf16.mxu0 0
      %1135 = vmatpush2.bf16.msra.mxu0 0
      %1136 = vmatprep.subr.bf16.mxu0 0
      %1137 = vmatpush2.bf16.msra.mxu0 0
      %1138 = vmatprep.subr.bf16.mxu0 0
      %1139 = vmatpush2.bf16.msra.mxu0 0
      %1140 = vmatprep.subr.bf16.mxu0 0
      %1141 = vmatpush2.bf16.msra.mxu0 0
      %1142 = vmatprep.subr.bf16.mxu0 0
      %1143 = vmatpush2.bf16.msra.mxu0 0
      %1144 = vmatprep.subr.bf16.mxu0 0
      %1145 = vmatpush2.bf16.msra.mxu0 0
      %1146 = vmatprep.subr.bf16.mxu0 0
      %1147 = vmatpush2.bf16.msra.mxu0 0
      %1148 = vmatprep.subr.bf16.mxu0 0
      %1149 = vmatpush2.bf16.msra.mxu0 0
      %1150 = vmatprep.mubr.bf16.mxu0 0
      %1151 = vmatmul.mubr.bf16.gmra.mxu0 %v1037
      %v1152 = vpop.f32.mrf.mxu0
      %v1153 = vadd.f32 0.0, %v1152
      %v1154 = vpop.f32.mrf.mxu0
      %v1155 = vpop.f32.mrf.mxu0
      %v1156 = vadd.f32 0.0, %v1155
      %v1157 = vpop.f32.mrf.mxu0
      %1158 = vmatprep.mubr.bf16.mxu0 0
      %1159 = vmatmul.mubr.bf16.gmra.mxu0 %v1038
      %v1160 = vpop.f32.mrf.mxu0
      %v1161 = vadd.f32 0.0, %v1160
      %v1162 = vpop.f32.mrf.mxu0
      %v1163 = vpop.f32.mrf.mxu0
      %v1164 = vadd.f32 0.0, %v1163
      %v1165 = vpop.f32.mrf.mxu0
      %1166 = vmatprep.mubr.bf16.mxu0 0
      %1167 = vmatmul.mubr.bf16.gmra.mxu0 %v1039
      %v1168 = vpop.f32.mrf.mxu0
      %v1169 = vadd.f32 0.0, %v1168
      %v1170 = vpop.f32.mrf.mxu0
      %v1171 = vpop.f32.mrf.mxu0
      %v1172 = vadd.f32 0.0, %v1171
      %v1173 = vpop.f32.mrf.mxu0
      %1174 = vmatprep.mubr.bf16.mxu0 0
      %1175 = vmatmul.mubr.bf16.gmra.mxu0 %v1040
      %v1176 = vpop.f32.mrf.mxu0
      %v1177 = vadd.f32 0.0, %v1176
      %v1178 = vpop.f32.mrf.mxu0
      %v1179 = vpop.f32.mrf.mxu0
      %v1180 = vadd.f32 0.0, %v1179
      %v1181 = vpop.f32.mrf.mxu0
      %1182 = vmatprep.mubr.bf16.mxu0 0
      %1183 = vmatmul.mubr.bf16.gmra.mxu0 %v1041
      %v1184 = vpop.f32.mrf.mxu0
      %v1185 = vadd.f32 0.0, %v1184
      %v1186 = vpop.f32.mrf.mxu0
      %v1187 = vpop.f32.mrf.mxu0
      %v1188 = vadd.f32 0.0, %v1187
      %v1189 = vpop.f32.mrf.mxu0
      %1190 = vmatprep.mubr.bf16.mxu0 0
      %1191 = vmatmul.mubr.bf16.gmra.mxu0 %v1042
      %v1192 = vpop.f32.mrf.mxu0
      %v1193 = vadd.f32 0.0, %v1192
      %v1194 = vpop.f32.mrf.mxu0
      %v1195 = vpop.f32.mrf.mxu0
      %v1196 = vadd.f32 0.0, %v1195
      %v1197 = vpop.f32.mrf.mxu0
      %1198 = vmatprep.mubr.bf16.mxu0 0
      %1199 = vmatmul.mubr.bf16.gmra.mxu0 %v1043
      %v1200 = vpop.f32.mrf.mxu0
      %v1201 = vadd.f32 0.0, %v1200
      %v1202 = vpop.f32.mrf.mxu0
      %v1203 = vpop.f32.mrf.mxu0
      %v1204 = vadd.f32 0.0, %v1203
      %v1205 = vpop.f32.mrf.mxu0
      %1206 = vmatprep.mubr.bf16.mxu0 0
      %1207 = vmatmul.mubr.bf16.gmra.mxu0 %v1044
      %v1208 = vpop.f32.mrf.mxu0
      %v1209 = vadd.f32 0.0, %v1208
      %v1210 = vpop.f32.mrf.mxu0
      %v1211 = vpop.f32.mrf.mxu0
      %v1212 = vadd.f32 0.0, %v1211
      %v1213 = vpop.f32.mrf.mxu0
      %1214 = vmatprep.mubr.bf16.mxu0 0
      %1215 = vmatmul.mubr.bf16.gmra.mxu0 %v1045
      %v1216 = vpop.f32.mrf.mxu0
      %v1217 = vadd.f32 0.0, %v1216
      %v1218 = vpop.f32.mrf.mxu0
      %v1219 = vpop.f32.mrf.mxu0
      %v1220 = vadd.f32 0.0, %v1219
      %v1221 = vpop.f32.mrf.mxu0
      %1222 = vmatprep.mubr.bf16.mxu0 0
      %1223 = vmatmul.mubr.bf16.gmra.mxu0 %v1046
      %v1224 = vpop.f32.mrf.mxu0
      %v1225 = vadd.f32 0.0, %v1224
      %v1226 = vpop.f32.mrf.mxu0
      %v1227 = vpop.f32.mrf.mxu0
      %v1228 = vadd.f32 0.0, %v1227
      %v1229 = vpop.f32.mrf.mxu0
      %1230 = vmatprep.mubr.bf16.mxu0 0
      %1231 = vmatmul.mubr.bf16.gmra.mxu0 %v1047
      %v1232 = vpop.f32.mrf.mxu0
      %v1233 = vadd.f32 0.0, %v1232
      %v1234 = vpop.f32.mrf.mxu0
      %v1235 = vpop.f32.mrf.mxu0
      %v1236 = vadd.f32 0.0, %v1235
      %v1237 = vpop.f32.mrf.mxu0
      %1238 = vmatprep.mubr.bf16.mxu0 0
      %1239 = vmatmul.mubr.bf16.gmra.mxu0 %v1048
      %v1240 = vpop.f32.mrf.mxu0
      %v1241 = vadd.f32 0.0, %v1240
      %v1242 = vpop.f32.mrf.mxu0
      %v1243 = vpop.f32.mrf.mxu0
      %v1244 = vadd.f32 0.0, %v1243
      %v1245 = vpop.f32.mrf.mxu0
      %1246 = vmatprep.mubr.bf16.mxu0 0
      %1247 = vmatmul.mubr.bf16.gmra.mxu0 %v1049
      %v1248 = vpop.f32.mrf.mxu0
      %v1249 = vadd.f32 0.0, %v1248
      %v1250 = vpop.f32.mrf.mxu0
      %v1251 = vpop.f32.mrf.mxu0
      %v1252 = vadd.f32 0.0, %v1251
      %v1253 = vpop.f32.mrf.mxu0
      %1254 = vmatprep.mubr.bf16.mxu0 0
      %1255 = vmatmul.mubr.bf16.gmra.mxu0 %v1050
      %v1256 = vpop.f32.mrf.mxu0
      %v1257 = vadd.f32 0.0, %v1256
      %v1258 = vpop.f32.mrf.mxu0
      %v1259 = vpop.f32.mrf.mxu0
      %v1260 = vadd.f32 0.0, %v1259
      %v1261 = vpop.f32.mrf.mxu0
      %1262 = vmatprep.mubr.bf16.mxu0 0
      %1263 = vmatmul.mubr.bf16.gmra.mxu0 %v1051
      %v1264 = vpop.f32.mrf.mxu0
      %v1265 = vadd.f32 0.0, %v1264
      %v1266 = vpop.f32.mrf.mxu0
      %v1267 = vpop.f32.mrf.mxu0
      %v1268 = vadd.f32 0.0, %v1267
      %v1269 = vpop.f32.mrf.mxu0
      %1270 = vmatprep.mubr.bf16.mxu0 0
      %1271 = vmatmul.mubr.bf16.gmra.mxu0 %v1052
      %v1272 = vpop.f32.mrf.mxu0
      %v1273 = vadd.f32 0.0, %v1272
      %v1274 = vpop.f32.mrf.mxu0
      %v1275 = vpop.f32.mrf.mxu0
      %v1276 = vadd.f32 0.0, %v1275
      %v1277 = vpop.f32.mrf.mxu0
      %1278 = vdwg.mxu0
      %v1279 = vadd.f32 %v798, %v1153
      %v1280 = vadd.f32 %v801, %v1156
      %v1281 = vadd.f32 %v806, %v1161
      %v1282 = vadd.f32 %v809, %v1164
      %v1283 = vadd.f32 %v814, %v1169
      %v1284 = vadd.f32 %v817, %v1172
      %v1285 = vadd.f32 %v822, %v1177
      %v1286 = vadd.f32 %v825, %v1180
      %v1287 = vadd.f32 %v830, %v1185
      %v1288 = vadd.f32 %v833, %v1188
      %v1289 = vadd.f32 %v838, %v1193
      %v1290 = vadd.f32 %v841, %v1196
      %v1291 = vadd.f32 %v846, %v1201
      %v1292 = vadd.f32 %v849, %v1204
      %v1293 = vadd.f32 %v854, %v1209
      %v1294 = vadd.f32 %v857, %v1212
      %v1295 = vadd.f32 %v862, %v1217
      %v1296 = vadd.f32 %v865, %v1220
      %v1297 = vadd.f32 %v870, %v1225
      %v1298 = vadd.f32 %v873, %v1228
      %v1299 = vadd.f32 %v878, %v1233
      %v1300 = vadd.f32 %v881, %v1236
      %v1301 = vadd.f32 %v886, %v1241
      %v1302 = vadd.f32 %v889, %v1244
      %v1303 = vadd.f32 %v894, %v1249
      %v1304 = vadd.f32 %v897, %v1252
      %v1305 = vadd.f32 %v902, %v1257
      %v1306 = vadd.f32 %v905, %v1260
      %v1307 = vadd.f32 %v910, %v1265
      %v1308 = vadd.f32 %v913, %v1268
      %v1309 = vadd.f32 %v918, %v1273
      %v1310 = vadd.f32 %v921, %v1276
      %v1311 = vpack.c.bf16 %v275, %v274
      %s1312 = scalar_lea.vmem %s1, 192
      %v1313 = vld [vmem:[%s1312] sm:$0xf]
      %v1314 = vld [vmem:[%s1312 + $0x4] sm:$0xf]
      %v1315 = vld [vmem:[%s1312 + $0x8] sm:$0xf]
      %v1316 = vld [vmem:[%s1312 + $0xc] sm:$0xf]
      %v1317 = vld [vmem:[%s1312 + $0x10] sm:$0xf]
      %v1318 = vld [vmem:[%s1312 + $0x14] sm:$0xf]
      %v1319 = vld [vmem:[%s1312 + $0x18] sm:$0xf]
      %v1320 = vld [vmem:[%s1312 + $0x1c] sm:$0xf]
      %v1321 = vld [vmem:[%s1312 + $0x20] sm:$0xf]
      %v1322 = vld [vmem:[%s1312 + $0x24] sm:$0xf]
      %v1323 = vld [vmem:[%s1312 + $0x28] sm:$0xf]
      %v1324 = vld [vmem:[%s1312 + $0x2c] sm:$0xf]
      %v1325 = vld [vmem:[%s1312 + $0x30] sm:$0xf]
      %v1326 = vld [vmem:[%s1312 + $0x34] sm:$0xf]
      %v1327 = vld [vmem:[%s1312 + $0x38] sm:$0xf]
      %v1328 = vld [vmem:[%s1312 + $0x3c] sm:$0xf]
      %v1345 = vunpack.c.l.b16 %v1313
      %v1346 = vunpack.c.l.b16 %v1314
      %v1347 = vunpack.c.l.b16 %v1315
      %v1348 = vunpack.c.l.b16 %v1316
      %v1349 = vunpack.c.l.b16 %v1317
      %v1350 = vunpack.c.l.b16 %v1318
      %v1351 = vunpack.c.l.b16 %v1319
      %v1352 = vunpack.c.l.b16 %v1320
      %v1353 = vunpack.c.l.b16 %v1321
      %v1354 = vunpack.c.l.b16 %v1322
      %v1355 = vunpack.c.l.b16 %v1323
      %v1356 = vunpack.c.l.b16 %v1324
      %v1357 = vunpack.c.l.b16 %v1325
      %v1358 = vunpack.c.l.b16 %v1326
      %v1359 = vunpack.c.l.b16 %v1327
      %v1360 = vunpack.c.l.b16 %v1328
      %v1361 = vpack.c.b16 %v1346, %v1345
      %v1362 = vpack.c.b16 %v1348, %v1347
      %v1363 = vpack.c.b16 %v1350, %v1349
      %v1364 = vpack.c.b16 %v1352, %v1351
      %v1365 = vpack.c.b16 %v1354, %v1353
      %v1366 = vpack.c.b16 %v1356, %v1355
      %v1367 = vpack.c.b16 %v1358, %v1357
      %v1368 = vpack.c.b16 %v1360, %v1359
      %1377 = vmatprep.subr.bf16.mxu0 0
      %1378 = vmatpush1.bf16.msra.mxu0 %v1368
      %1379 = vmatprep.subr.bf16.mxu0 0
      %1380 = vmatpush1.bf16.msra.mxu0 %v1367
      %1381 = vmatprep.subr.bf16.mxu0 0
      %1382 = vmatpush1.bf16.msra.mxu0 %v1366
      %1383 = vmatprep.subr.bf16.mxu0 0
      %1384 = vmatpush1.bf16.msra.mxu0 %v1365
      %1385 = vmatprep.subr.bf16.mxu0 0
      %1386 = vmatpush1.bf16.msra.mxu0 %v1364
      %1387 = vmatprep.subr.bf16.mxu0 0
      %1388 = vmatpush1.bf16.msra.mxu0 %v1363
      %1389 = vmatprep.subr.bf16.mxu0 0
      %1390 = vmatpush1.bf16.msra.mxu0 %v1362
      %1391 = vmatprep.subr.bf16.mxu0 0
      %1392 = vmatpush1.bf16.msra.mxu0 %v1361
      %1393 = vmatprep.subr.bf16.mxu0 0
      %1394 = vmatpush2.bf16.msra.mxu0 0
      %1395 = vmatprep.subr.bf16.mxu0 0
      %1396 = vmatpush2.bf16.msra.mxu0 0
      %1397 = vmatprep.subr.bf16.mxu0 0
      %1398 = vmatpush2.bf16.msra.mxu0 0
      %1399 = vmatprep.subr.bf16.mxu0 0
      %1400 = vmatpush2.bf16.msra.mxu0 0
      %1401 = vmatprep.subr.bf16.mxu0 0
      %1402 = vmatpush2.bf16.msra.mxu0 0
      %1403 = vmatprep.subr.bf16.mxu0 0
      %1404 = vmatpush2.bf16.msra.mxu0 0
      %1405 = vmatprep.subr.bf16.mxu0 0
      %1406 = vmatpush2.bf16.msra.mxu0 0
      %1407 = vmatprep.subr.bf16.mxu0 0
      %1408 = vmatpush2.bf16.msra.mxu0 0
      %1409 = vmatprep.mubr.bf16.mxu0 0
      %1410 = vmatmul.mubr.bf16.gmra.mxu0 %v281
      %v1411 = vpop.f32.mrf.mxu0
      %v1412 = vadd.f32 0.0, %v1411
      %v1413 = vpop.f32.mrf.mxu0
      %v1414 = vpop.f32.mrf.mxu0
      %v1415 = vadd.f32 0.0, %v1414
      %v1416 = vpop.f32.mrf.mxu0
      %1417 = vmatprep.mubr.bf16.mxu0 0
      %1418 = vmatmul.mubr.bf16.gmra.mxu0 %v282
      %v1419 = vpop.f32.mrf.mxu0
      %v1420 = vadd.f32 0.0, %v1419
      %v1421 = vpop.f32.mrf.mxu0
      %v1422 = vpop.f32.mrf.mxu0
      %v1423 = vadd.f32 0.0, %v1422
      %v1424 = vpop.f32.mrf.mxu0
      %1425 = vmatprep.mubr.bf16.mxu0 0
      %1426 = vmatmul.mubr.bf16.gmra.mxu0 %v283
      %v1427 = vpop.f32.mrf.mxu0
      %v1428 = vadd.f32 0.0, %v1427
      %v1429 = vpop.f32.mrf.mxu0
      %v1430 = vpop.f32.mrf.mxu0
      %v1431 = vadd.f32 0.0, %v1430
      %v1432 = vpop.f32.mrf.mxu0
      %1433 = vmatprep.mubr.bf16.mxu0 0
      %1434 = vmatmul.mubr.bf16.gmra.mxu0 %v284
      %v1435 = vpop.f32.mrf.mxu0
      %v1436 = vadd.f32 0.0, %v1435
      %v1437 = vpop.f32.mrf.mxu0
      %v1438 = vpop.f32.mrf.mxu0
      %v1439 = vadd.f32 0.0, %v1438
      %v1440 = vpop.f32.mrf.mxu0
      %1441 = vmatprep.mubr.bf16.mxu0 0
      %1442 = vmatmul.mubr.bf16.gmra.mxu0 %v285
      %v1443 = vpop.f32.mrf.mxu0
      %v1444 = vadd.f32 0.0, %v1443
      %v1445 = vpop.f32.mrf.mxu0
      %v1446 = vpop.f32.mrf.mxu0
      %v1447 = vadd.f32 0.0, %v1446
      %v1448 = vpop.f32.mrf.mxu0
      %1449 = vmatprep.mubr.bf16.mxu0 0
      %1450 = vmatmul.mubr.bf16.gmra.mxu0 %v286
      %v1451 = vpop.f32.mrf.mxu0
      %v1452 = vadd.f32 0.0, %v1451
      %v1453 = vpop.f32.mrf.mxu0
      %v1454 = vpop.f32.mrf.mxu0
      %v1455 = vadd.f32 0.0, %v1454
      %v1456 = vpop.f32.mrf.mxu0
      %1457 = vmatprep.mubr.bf16.mxu0 0
      %1458 = vmatmul.mubr.bf16.gmra.mxu0 %v287
      %v1459 = vpop.f32.mrf.mxu0
      %v1460 = vadd.f32 0.0, %v1459
      %v1461 = vpop.f32.mrf.mxu0
      %v1462 = vpop.f32.mrf.mxu0
      %v1463 = vadd.f32 0.0, %v1462
      %v1464 = vpop.f32.mrf.mxu0
      %1465 = vmatprep.mubr.bf16.mxu0 0
      %1466 = vmatmul.mubr.bf16.gmra.mxu0 %v288
      %v1467 = vpop.f32.mrf.mxu0
      %v1468 = vadd.f32 0.0, %v1467
      %v1469 = vpop.f32.mrf.mxu0
      %v1470 = vpop.f32.mrf.mxu0
      %v1471 = vadd.f32 0.0, %v1470
      %v1472 = vpop.f32.mrf.mxu0
      %1473 = vmatprep.mubr.bf16.mxu0 0
      %1474 = vmatmul.mubr.bf16.gmra.mxu0 %v289
      %v1475 = vpop.f32.mrf.mxu0
      %v1476 = vadd.f32 0.0, %v1475
      %v1477 = vpop.f32.mrf.mxu0
      %v1478 = vpop.f32.mrf.mxu0
      %v1479 = vadd.f32 0.0, %v1478
      %v1480 = vpop.f32.mrf.mxu0
      %1481 = vmatprep.mubr.bf16.mxu0 0
      %1482 = vmatmul.mubr.bf16.gmra.mxu0 %v290
      %v1483 = vpop.f32.mrf.mxu0
      %v1484 = vadd.f32 0.0, %v1483
      %v1485 = vpop.f32.mrf.mxu0
      %v1486 = vpop.f32.mrf.mxu0
      %v1487 = vadd.f32 0.0, %v1486
      %v1488 = vpop.f32.mrf.mxu0
      %1489 = vmatprep.mubr.bf16.mxu0 0
      %1490 = vmatmul.mubr.bf16.gmra.mxu0 %v291
      %v1491 = vpop.f32.mrf.mxu0
      %v1492 = vadd.f32 0.0, %v1491
      %v1493 = vpop.f32.mrf.mxu0
      %v1494 = vpop.f32.mrf.mxu0
      %v1495 = vadd.f32 0.0, %v1494
      %v1496 = vpop.f32.mrf.mxu0
      %1497 = vmatprep.mubr.bf16.mxu0 0
      %1498 = vmatmul.mubr.bf16.gmra.mxu0 %v292
      %v1499 = vpop.f32.mrf.mxu0
      %v1500 = vadd.f32 0.0, %v1499
      %v1501 = vpop.f32.mrf.mxu0
      %v1502 = vpop.f32.mrf.mxu0
      %v1503 = vadd.f32 0.0, %v1502
      %v1504 = vpop.f32.mrf.mxu0
      %1505 = vmatprep.mubr.bf16.mxu0 0
      %1506 = vmatmul.mubr.bf16.gmra.mxu0 %v293
      %v1507 = vpop.f32.mrf.mxu0
      %v1508 = vadd.f32 0.0, %v1507
      %v1509 = vpop.f32.mrf.mxu0
      %v1510 = vpop.f32.mrf.mxu0
      %v1511 = vadd.f32 0.0, %v1510
      %v1512 = vpop.f32.mrf.mxu0
      %1513 = vmatprep.mubr.bf16.mxu0 0
      %1514 = vmatmul.mubr.bf16.gmra.mxu0 %v294
      %v1515 = vpop.f32.mrf.mxu0
      %v1516 = vadd.f32 0.0, %v1515
      %v1517 = vpop.f32.mrf.mxu0
      %v1518 = vpop.f32.mrf.mxu0
      %v1519 = vadd.f32 0.0, %v1518
      %v1520 = vpop.f32.mrf.mxu0
      %1521 = vmatprep.mubr.bf16.mxu0 0
      %1522 = vmatmul.mubr.bf16.gmra.mxu0 %v295
      %v1523 = vpop.f32.mrf.mxu0
      %v1524 = vadd.f32 0.0, %v1523
      %v1525 = vpop.f32.mrf.mxu0
      %v1526 = vpop.f32.mrf.mxu0
      %v1527 = vadd.f32 0.0, %v1526
      %v1528 = vpop.f32.mrf.mxu0
      %1529 = vmatprep.mubr.bf16.mxu0 0
      %1530 = vmatmul.mubr.bf16.gmra.mxu0 %v1311
      %v1531 = vpop.f32.mrf.mxu0
      %v1532 = vadd.f32 0.0, %v1531
      %v1533 = vpop.f32.mrf.mxu0
      %v1534 = vpop.f32.mrf.mxu0
      %v1535 = vadd.f32 0.0, %v1534
      %v1536 = vpop.f32.mrf.mxu0
      %1537 = vdwg.mxu0
      %v1538 = vadd.f32 %v1279, %v1412
      %v1539 = vadd.f32 %v1280, %v1415
      %v1540 = vadd.f32 %v1281, %v1420
      %v1541 = vadd.f32 %v1282, %v1423
      %v1542 = vadd.f32 %v1283, %v1428
      %v1543 = vadd.f32 %v1284, %v1431
      %v1544 = vadd.f32 %v1285, %v1436
      %v1545 = vadd.f32 %v1286, %v1439
      %v1546 = vadd.f32 %v1287, %v1444
      %v1547 = vadd.f32 %v1288, %v1447
      %v1548 = vadd.f32 %v1289, %v1452
      %v1549 = vadd.f32 %v1290, %v1455
      %v1550 = vadd.f32 %v1291, %v1460
      %v1551 = vadd.f32 %v1292, %v1463
      %v1552 = vadd.f32 %v1293, %v1468
      %v1553 = vadd.f32 %v1294, %v1471
      %v1554 = vadd.f32 %v1295, %v1476
      %v1555 = vadd.f32 %v1296, %v1479
      %v1556 = vadd.f32 %v1297, %v1484
      %v1557 = vadd.f32 %v1298, %v1487
      %v1558 = vadd.f32 %v1299, %v1492
      %v1559 = vadd.f32 %v1300, %v1495
      %v1560 = vadd.f32 %v1301, %v1500
      %v1561 = vadd.f32 %v1302, %v1503
      %v1562 = vadd.f32 %v1303, %v1508
      %v1563 = vadd.f32 %v1304, %v1511
      %v1564 = vadd.f32 %v1305, %v1516
      %v1565 = vadd.f32 %v1306, %v1519
      %v1566 = vadd.f32 %v1307, %v1524
      %v1567 = vadd.f32 %v1308, %v1527
      %v1568 = vadd.f32 %v1309, %v1532
      %v1569 = vadd.f32 %v1310, %v1535
      %v1573 = vrot.slane %v274, 1
      %v1574 = vrot.slane %v275, 1
      %v1575 = vsel %vm360, %v1573, %v1574
      %v1576 = vrot.slane %v276, 1
      %v1577 = vsel %vm360, %v1574, %v1576
      %v1580 = vpack.c.bf16 %v1577, %v1575
      %s1581 = scalar_lea.vmem %s1, 256
      %v1582 = vld [vmem:[%s1581] sm:$0xf]
      %v1583 = vld [vmem:[%s1581 + $0x4] sm:$0xf]
      %v1584 = vld [vmem:[%s1581 + $0x8] sm:$0xf]
      %v1585 = vld [vmem:[%s1581 + $0xc] sm:$0xf]
      %v1586 = vld [vmem:[%s1581 + $0x10] sm:$0xf]
      %v1587 = vld [vmem:[%s1581 + $0x14] sm:$0xf]
      %v1588 = vld [vmem:[%s1581 + $0x18] sm:$0xf]
      %v1589 = vld [vmem:[%s1581 + $0x1c] sm:$0xf]
      %v1590 = vld [vmem:[%s1581 + $0x20] sm:$0xf]
      %v1591 = vld [vmem:[%s1581 + $0x24] sm:$0xf]
      %v1592 = vld [vmem:[%s1581 + $0x28] sm:$0xf]
      %v1593 = vld [vmem:[%s1581 + $0x2c] sm:$0xf]
      %v1594 = vld [vmem:[%s1581 + $0x30] sm:$0xf]
      %v1595 = vld [vmem:[%s1581 + $0x34] sm:$0xf]
      %v1596 = vld [vmem:[%s1581 + $0x38] sm:$0xf]
      %v1597 = vld [vmem:[%s1581 + $0x3c] sm:$0xf]
      %v1614 = vunpack.c.l.b16 %v1582
      %v1615 = vunpack.c.l.b16 %v1583
      %v1616 = vunpack.c.l.b16 %v1584
      %v1617 = vunpack.c.l.b16 %v1585
      %v1618 = vunpack.c.l.b16 %v1586
      %v1619 = vunpack.c.l.b16 %v1587
      %v1620 = vunpack.c.l.b16 %v1588
      %v1621 = vunpack.c.l.b16 %v1589
      %v1622 = vunpack.c.l.b16 %v1590
      %v1623 = vunpack.c.l.b16 %v1591
      %v1624 = vunpack.c.l.b16 %v1592
      %v1625 = vunpack.c.l.b16 %v1593
      %v1626 = vunpack.c.l.b16 %v1594
      %v1627 = vunpack.c.l.b16 %v1595
      %v1628 = vunpack.c.l.b16 %v1596
      %v1629 = vunpack.c.l.b16 %v1597
      %v1630 = vpack.c.b16 %v1615, %v1614
      %v1631 = vpack.c.b16 %v1617, %v1616
      %v1632 = vpack.c.b16 %v1619, %v1618
      %v1633 = vpack.c.b16 %v1621, %v1620
      %v1634 = vpack.c.b16 %v1623, %v1622
      %v1635 = vpack.c.b16 %v1625, %v1624
      %v1636 = vpack.c.b16 %v1627, %v1626
      %v1637 = vpack.c.b16 %v1629, %v1628
      %1646 = vmatprep.subr.bf16.mxu0 0
      %1647 = vmatpush1.bf16.msra.mxu0 %v1637
      %1648 = vmatprep.subr.bf16.mxu0 0
      %1649 = vmatpush1.bf16.msra.mxu0 %v1636
      %1650 = vmatprep.subr.bf16.mxu0 0
      %1651 = vmatpush1.bf16.msra.mxu0 %v1635
      %1652 = vmatprep.subr.bf16.mxu0 0
      %1653 = vmatpush1.bf16.msra.mxu0 %v1634
      %1654 = vmatprep.subr.bf16.mxu0 0
      %1655 = vmatpush1.bf16.msra.mxu0 %v1633
      %1656 = vmatprep.subr.bf16.mxu0 0
      %1657 = vmatpush1.bf16.msra.mxu0 %v1632
      %1658 = vmatprep.subr.bf16.mxu0 0
      %1659 = vmatpush1.bf16.msra.mxu0 %v1631
      %1660 = vmatprep.subr.bf16.mxu0 0
      %1661 = vmatpush1.bf16.msra.mxu0 %v1630
      %1662 = vmatprep.subr.bf16.mxu0 0
      %1663 = vmatpush2.bf16.msra.mxu0 0
      %1664 = vmatprep.subr.bf16.mxu0 0
      %1665 = vmatpush2.bf16.msra.mxu0 0
      %1666 = vmatprep.subr.bf16.mxu0 0
      %1667 = vmatpush2.bf16.msra.mxu0 0
      %1668 = vmatprep.subr.bf16.mxu0 0
      %1669 = vmatpush2.bf16.msra.mxu0 0
      %1670 = vmatprep.subr.bf16.mxu0 0
      %1671 = vmatpush2.bf16.msra.mxu0 0
      %1672 = vmatprep.subr.bf16.mxu0 0
      %1673 = vmatpush2.bf16.msra.mxu0 0
      %1674 = vmatprep.subr.bf16.mxu0 0
      %1675 = vmatpush2.bf16.msra.mxu0 0
      %1676 = vmatprep.subr.bf16.mxu0 0
      %1677 = vmatpush2.bf16.msra.mxu0 0
      %1678 = vmatprep.mubr.bf16.mxu0 0
      %1679 = vmatmul.mubr.bf16.gmra.mxu0 %v474
      %v1680 = vpop.f32.mrf.mxu0
      %v1681 = vadd.f32 0.0, %v1680
      %v1682 = vpop.f32.mrf.mxu0
      %v1683 = vpop.f32.mrf.mxu0
      %v1684 = vadd.f32 0.0, %v1683
      %v1685 = vpop.f32.mrf.mxu0
      %1686 = vmatprep.mubr.bf16.mxu0 0
      %1687 = vmatmul.mubr.bf16.gmra.mxu0 %v475
      %v1688 = vpop.f32.mrf.mxu0
      %v1689 = vadd.f32 0.0, %v1688
      %v1690 = vpop.f32.mrf.mxu0
      %v1691 = vpop.f32.mrf.mxu0
      %v1692 = vadd.f32 0.0, %v1691
      %v1693 = vpop.f32.mrf.mxu0
      %1694 = vmatprep.mubr.bf16.mxu0 0
      %1695 = vmatmul.mubr.bf16.gmra.mxu0 %v476
      %v1696 = vpop.f32.mrf.mxu0
      %v1697 = vadd.f32 0.0, %v1696
      %v1698 = vpop.f32.mrf.mxu0
      %v1699 = vpop.f32.mrf.mxu0
      %v1700 = vadd.f32 0.0, %v1699
      %v1701 = vpop.f32.mrf.mxu0
      %1702 = vmatprep.mubr.bf16.mxu0 0
      %1703 = vmatmul.mubr.bf16.gmra.mxu0 %v477
      %v1704 = vpop.f32.mrf.mxu0
      %v1705 = vadd.f32 0.0, %v1704
      %v1706 = vpop.f32.mrf.mxu0
      %v1707 = vpop.f32.mrf.mxu0
      %v1708 = vadd.f32 0.0, %v1707
      %v1709 = vpop.f32.mrf.mxu0
      %1710 = vmatprep.mubr.bf16.mxu0 0
      %1711 = vmatmul.mubr.bf16.gmra.mxu0 %v478
      %v1712 = vpop.f32.mrf.mxu0
      %v1713 = vadd.f32 0.0, %v1712
      %v1714 = vpop.f32.mrf.mxu0
      %v1715 = vpop.f32.mrf.mxu0
      %v1716 = vadd.f32 0.0, %v1715
      %v1717 = vpop.f32.mrf.mxu0
      %1718 = vmatprep.mubr.bf16.mxu0 0
      %1719 = vmatmul.mubr.bf16.gmra.mxu0 %v479
      %v1720 = vpop.f32.mrf.mxu0
      %v1721 = vadd.f32 0.0, %v1720
      %v1722 = vpop.f32.mrf.mxu0
      %v1723 = vpop.f32.mrf.mxu0
      %v1724 = vadd.f32 0.0, %v1723
      %v1725 = vpop.f32.mrf.mxu0
      %1726 = vmatprep.mubr.bf16.mxu0 0
      %1727 = vmatmul.mubr.bf16.gmra.mxu0 %v480
      %v1728 = vpop.f32.mrf.mxu0
      %v1729 = vadd.f32 0.0, %v1728
      %v1730 = vpop.f32.mrf.mxu0
      %v1731 = vpop.f32.mrf.mxu0
      %v1732 = vadd.f32 0.0, %v1731
      %v1733 = vpop.f32.mrf.mxu0
      %1734 = vmatprep.mubr.bf16.mxu0 0
      %1735 = vmatmul.mubr.bf16.gmra.mxu0 %v481
      %v1736 = vpop.f32.mrf.mxu0
      %v1737 = vadd.f32 0.0, %v1736
      %v1738 = vpop.f32.mrf.mxu0
      %v1739 = vpop.f32.mrf.mxu0
      %v1740 = vadd.f32 0.0, %v1739
      %v1741 = vpop.f32.mrf.mxu0
      %1742 = vmatprep.mubr.bf16.mxu0 0
      %1743 = vmatmul.mubr.bf16.gmra.mxu0 %v482
      %v1744 = vpop.f32.mrf.mxu0
      %v1745 = vadd.f32 0.0, %v1744
      %v1746 = vpop.f32.mrf.mxu0
      %v1747 = vpop.f32.mrf.mxu0
      %v1748 = vadd.f32 0.0, %v1747
      %v1749 = vpop.f32.mrf.mxu0
      %1750 = vmatprep.mubr.bf16.mxu0 0
      %1751 = vmatmul.mubr.bf16.gmra.mxu0 %v483
      %v1752 = vpop.f32.mrf.mxu0
      %v1753 = vadd.f32 0.0, %v1752
      %v1754 = vpop.f32.mrf.mxu0
      %v1755 = vpop.f32.mrf.mxu0
      %v1756 = vadd.f32 0.0, %v1755
      %v1757 = vpop.f32.mrf.mxu0
      %1758 = vmatprep.mubr.bf16.mxu0 0
      %1759 = vmatmul.mubr.bf16.gmra.mxu0 %v484
      %v1760 = vpop.f32.mrf.mxu0
      %v1761 = vadd.f32 0.0, %v1760
      %v1762 = vpop.f32.mrf.mxu0
      %v1763 = vpop.f32.mrf.mxu0
      %v1764 = vadd.f32 0.0, %v1763
      %v1765 = vpop.f32.mrf.mxu0
      %1766 = vmatprep.mubr.bf16.mxu0 0
      %1767 = vmatmul.mubr.bf16.gmra.mxu0 %v485
      %v1768 = vpop.f32.mrf.mxu0
      %v1769 = vadd.f32 0.0, %v1768
      %v1770 = vpop.f32.mrf.mxu0
      %v1771 = vpop.f32.mrf.mxu0
      %v1772 = vadd.f32 0.0, %v1771
      %v1773 = vpop.f32.mrf.mxu0
      %1774 = vmatprep.mubr.bf16.mxu0 0
      %1775 = vmatmul.mubr.bf16.gmra.mxu0 %v486
      %v1776 = vpop.f32.mrf.mxu0
      %v1777 = vadd.f32 0.0, %v1776
      %v1778 = vpop.f32.mrf.mxu0
      %v1779 = vpop.f32.mrf.mxu0
      %v1780 = vadd.f32 0.0, %v1779
      %v1781 = vpop.f32.mrf.mxu0
      %1782 = vmatprep.mubr.bf16.mxu0 0
      %1783 = vmatmul.mubr.bf16.gmra.mxu0 %v487
      %v1784 = vpop.f32.mrf.mxu0
      %v1785 = vadd.f32 0.0, %v1784
      %v1786 = vpop.f32.mrf.mxu0
      %v1787 = vpop.f32.mrf.mxu0
      %v1788 = vadd.f32 0.0, %v1787
      %v1789 = vpop.f32.mrf.mxu0
      %1790 = vmatprep.mubr.bf16.mxu0 0
      %1791 = vmatmul.mubr.bf16.gmra.mxu0 %v488
      %v1792 = vpop.f32.mrf.mxu0
      %v1793 = vadd.f32 0.0, %v1792
      %v1794 = vpop.f32.mrf.mxu0
      %v1795 = vpop.f32.mrf.mxu0
      %v1796 = vadd.f32 0.0, %v1795
      %v1797 = vpop.f32.mrf.mxu0
      %1798 = vmatprep.mubr.bf16.mxu0 0
      %1799 = vmatmul.mubr.bf16.gmra.mxu0 %v1580
      %v1800 = vpop.f32.mrf.mxu0
      %v1801 = vadd.f32 0.0, %v1800
      %v1802 = vpop.f32.mrf.mxu0
      %v1803 = vpop.f32.mrf.mxu0
      %v1804 = vadd.f32 0.0, %v1803
      %v1805 = vpop.f32.mrf.mxu0
      %1806 = vdwg.mxu0
      %v1807 = vadd.f32 %v1538, %v1681
      %v1808 = vadd.f32 %v1539, %v1684
      %v1809 = vadd.f32 %v1540, %v1689
      %v1810 = vadd.f32 %v1541, %v1692
      %v1811 = vadd.f32 %v1542, %v1697
      %v1812 = vadd.f32 %v1543, %v1700
      %v1813 = vadd.f32 %v1544, %v1705
      %v1814 = vadd.f32 %v1545, %v1708
      %v1815 = vadd.f32 %v1546, %v1713
      %v1816 = vadd.f32 %v1547, %v1716
      %v1817 = vadd.f32 %v1548, %v1721
      %v1818 = vadd.f32 %v1549, %v1724
      %v1819 = vadd.f32 %v1550, %v1729
      %v1820 = vadd.f32 %v1551, %v1732
      %v1821 = vadd.f32 %v1552, %v1737
      %v1822 = vadd.f32 %v1553, %v1740
      %v1823 = vadd.f32 %v1554, %v1745
      %v1824 = vadd.f32 %v1555, %v1748
      %v1825 = vadd.f32 %v1556, %v1753
      %v1826 = vadd.f32 %v1557, %v1756
      %v1827 = vadd.f32 %v1558, %v1761
      %v1828 = vadd.f32 %v1559, %v1764
      %v1829 = vadd.f32 %v1560, %v1769
      %v1830 = vadd.f32 %v1561, %v1772
      %v1831 = vadd.f32 %v1562, %v1777
      %v1832 = vadd.f32 %v1563, %v1780
      %v1833 = vadd.f32 %v1564, %v1785
      %v1834 = vadd.f32 %v1565, %v1788
      %v1835 = vadd.f32 %v1566, %v1793
      %v1836 = vadd.f32 %v1567, %v1796
      %v1837 = vadd.f32 %v1568, %v1801
      %v1838 = vadd.f32 %v1569, %v1804
      %v1839 = vrot.slane %v274, 2
      %v1840 = vrot.slane %v275, 2
      %v1841 = vsel %vm924, %v1839, %v1840
      %v1842 = vrot.slane %v276, 2
      %v1843 = vsel %vm924, %v1840, %v1842
      %v1846 = vpack.c.bf16 %v1843, %v1841
      %s1847 = scalar_lea.vmem %s1, 320
      %v1848 = vld [vmem:[%s1847] sm:$0xf]
      %v1849 = vld [vmem:[%s1847 + $0x4] sm:$0xf]
      %v1850 = vld [vmem:[%s1847 + $0x8] sm:$0xf]
      %v1851 = vld [vmem:[%s1847 + $0xc] sm:$0xf]
      %v1852 = vld [vmem:[%s1847 + $0x10] sm:$0xf]
      %v1853 = vld [vmem:[%s1847 + $0x14] sm:$0xf]
      %v1854 = vld [vmem:[%s1847 + $0x18] sm:$0xf]
      %v1855 = vld [vmem:[%s1847 + $0x1c] sm:$0xf]
      %v1856 = vld [vmem:[%s1847 + $0x20] sm:$0xf]
      %v1857 = vld [vmem:[%s1847 + $0x24] sm:$0xf]
      %v1858 = vld [vmem:[%s1847 + $0x28] sm:$0xf]
      %v1859 = vld [vmem:[%s1847 + $0x2c] sm:$0xf]
      %v1860 = vld [vmem:[%s1847 + $0x30] sm:$0xf]
      %v1861 = vld [vmem:[%s1847 + $0x34] sm:$0xf]
      %v1862 = vld [vmem:[%s1847 + $0x38] sm:$0xf]
      %v1863 = vld [vmem:[%s1847 + $0x3c] sm:$0xf]
      %v1880 = vunpack.c.l.b16 %v1848
      %v1881 = vunpack.c.l.b16 %v1849
      %v1882 = vunpack.c.l.b16 %v1850
      %v1883 = vunpack.c.l.b16 %v1851
      %v1884 = vunpack.c.l.b16 %v1852
      %v1885 = vunpack.c.l.b16 %v1853
      %v1886 = vunpack.c.l.b16 %v1854
      %v1887 = vunpack.c.l.b16 %v1855
      %v1888 = vunpack.c.l.b16 %v1856
      %v1889 = vunpack.c.l.b16 %v1857
      %v1890 = vunpack.c.l.b16 %v1858
      %v1891 = vunpack.c.l.b16 %v1859
      %v1892 = vunpack.c.l.b16 %v1860
      %v1893 = vunpack.c.l.b16 %v1861
      %v1894 = vunpack.c.l.b16 %v1862
      %v1895 = vunpack.c.l.b16 %v1863
      %v1896 = vpack.c.b16 %v1881, %v1880
      %v1897 = vpack.c.b16 %v1883, %v1882
      %v1898 = vpack.c.b16 %v1885, %v1884
      %v1899 = vpack.c.b16 %v1887, %v1886
      %v1900 = vpack.c.b16 %v1889, %v1888
      %v1901 = vpack.c.b16 %v1891, %v1890
      %v1902 = vpack.c.b16 %v1893, %v1892
      %v1903 = vpack.c.b16 %v1895, %v1894
      %1912 = vmatprep.subr.bf16.mxu0 0
      %1913 = vmatpush1.bf16.msra.mxu0 %v1903
      %1914 = vmatprep.subr.bf16.mxu0 0
      %1915 = vmatpush1.bf16.msra.mxu0 %v1902
      %1916 = vmatprep.subr.bf16.mxu0 0
      %1917 = vmatpush1.bf16.msra.mxu0 %v1901
      %1918 = vmatprep.subr.bf16.mxu0 0
      %1919 = vmatpush1.bf16.msra.mxu0 %v1900
      %1920 = vmatprep.subr.bf16.mxu0 0
      %1921 = vmatpush1.bf16.msra.mxu0 %v1899
      %1922 = vmatprep.subr.bf16.mxu0 0
      %1923 = vmatpush1.bf16.msra.mxu0 %v1898
      %1924 = vmatprep.subr.bf16.mxu0 0
      %1925 = vmatpush1.bf16.msra.mxu0 %v1897
      %1926 = vmatprep.subr.bf16.mxu0 0
      %1927 = vmatpush1.bf16.msra.mxu0 %v1896
      %1928 = vmatprep.subr.bf16.mxu0 0
      %1929 = vmatpush2.bf16.msra.mxu0 0
      %1930 = vmatprep.subr.bf16.mxu0 0
      %1931 = vmatpush2.bf16.msra.mxu0 0
      %1932 = vmatprep.subr.bf16.mxu0 0
      %1933 = vmatpush2.bf16.msra.mxu0 0
      %1934 = vmatprep.subr.bf16.mxu0 0
      %1935 = vmatpush2.bf16.msra.mxu0 0
      %1936 = vmatprep.subr.bf16.mxu0 0
      %1937 = vmatpush2.bf16.msra.mxu0 0
      %1938 = vmatprep.subr.bf16.mxu0 0
      %1939 = vmatpush2.bf16.msra.mxu0 0
      %1940 = vmatprep.subr.bf16.mxu0 0
      %1941 = vmatpush2.bf16.msra.mxu0 0
      %1942 = vmatprep.subr.bf16.mxu0 0
      %1943 = vmatpush2.bf16.msra.mxu0 0
      %1944 = vmatprep.mubr.bf16.mxu0 0
      %1945 = vmatmul.mubr.bf16.gmra.mxu0 %v1038
      %v1946 = vpop.f32.mrf.mxu0
      %v1947 = vadd.f32 0.0, %v1946
      %v1948 = vpop.f32.mrf.mxu0
      %v1949 = vpop.f32.mrf.mxu0
      %v1950 = vadd.f32 0.0, %v1949
      %v1951 = vpop.f32.mrf.mxu0
      %1952 = vmatprep.mubr.bf16.mxu0 0
      %1953 = vmatmul.mubr.bf16.gmra.mxu0 %v1039
      %v1954 = vpop.f32.mrf.mxu0
      %v1955 = vadd.f32 0.0, %v1954
      %v1956 = vpop.f32.mrf.mxu0
      %v1957 = vpop.f32.mrf.mxu0
      %v1958 = vadd.f32 0.0, %v1957
      %v1959 = vpop.f32.mrf.mxu0
      %1960 = vmatprep.mubr.bf16.mxu0 0
      %1961 = vmatmul.mubr.bf16.gmra.mxu0 %v1040
      %v1962 = vpop.f32.mrf.mxu0
      %v1963 = vadd.f32 0.0, %v1962
      %v1964 = vpop.f32.mrf.mxu0
      %v1965 = vpop.f32.mrf.mxu0
      %v1966 = vadd.f32 0.0, %v1965
      %v1967 = vpop.f32.mrf.mxu0
      %1968 = vmatprep.mubr.bf16.mxu0 0
      %1969 = vmatmul.mubr.bf16.gmra.mxu0 %v1041
      %v1970 = vpop.f32.mrf.mxu0
      %v1971 = vadd.f32 0.0, %v1970
      %v1972 = vpop.f32.mrf.mxu0
      %v1973 = vpop.f32.mrf.mxu0
      %v1974 = vadd.f32 0.0, %v1973
      %v1975 = vpop.f32.mrf.mxu0
      %1976 = vmatprep.mubr.bf16.mxu0 0
      %1977 = vmatmul.mubr.bf16.gmra.mxu0 %v1042
      %v1978 = vpop.f32.mrf.mxu0
      %v1979 = vadd.f32 0.0, %v1978
      %v1980 = vpop.f32.mrf.mxu0
      %v1981 = vpop.f32.mrf.mxu0
      %v1982 = vadd.f32 0.0, %v1981
      %v1983 = vpop.f32.mrf.mxu0
      %1984 = vmatprep.mubr.bf16.mxu0 0
      %1985 = vmatmul.mubr.bf16.gmra.mxu0 %v1043
      %v1986 = vpop.f32.mrf.mxu0
      %v1987 = vadd.f32 0.0, %v1986
      %v1988 = vpop.f32.mrf.mxu0
      %v1989 = vpop.f32.mrf.mxu0
      %v1990 = vadd.f32 0.0, %v1989
      %v1991 = vpop.f32.mrf.mxu0
      %1992 = vmatprep.mubr.bf16.mxu0 0
      %1993 = vmatmul.mubr.bf16.gmra.mxu0 %v1044
      %v1994 = vpop.f32.mrf.mxu0
      %v1995 = vadd.f32 0.0, %v1994
      %v1996 = vpop.f32.mrf.mxu0
      %v1997 = vpop.f32.mrf.mxu0
      %v1998 = vadd.f32 0.0, %v1997
      %v1999 = vpop.f32.mrf.mxu0
      %2000 = vmatprep.mubr.bf16.mxu0 0
      %2001 = vmatmul.mubr.bf16.gmra.mxu0 %v1045
      %v2002 = vpop.f32.mrf.mxu0
      %v2003 = vadd.f32 0.0, %v2002
      %v2004 = vpop.f32.mrf.mxu0
      %v2005 = vpop.f32.mrf.mxu0
      %v2006 = vadd.f32 0.0, %v2005
      %v2007 = vpop.f32.mrf.mxu0
      %2008 = vmatprep.mubr.bf16.mxu0 0
      %2009 = vmatmul.mubr.bf16.gmra.mxu0 %v1046
      %v2010 = vpop.f32.mrf.mxu0
      %v2011 = vadd.f32 0.0, %v2010
      %v2012 = vpop.f32.mrf.mxu0
      %v2013 = vpop.f32.mrf.mxu0
      %v2014 = vadd.f32 0.0, %v2013
      %v2015 = vpop.f32.mrf.mxu0
      %2016 = vmatprep.mubr.bf16.mxu0 0
      %2017 = vmatmul.mubr.bf16.gmra.mxu0 %v1047
      %v2018 = vpop.f32.mrf.mxu0
      %v2019 = vadd.f32 0.0, %v2018
      %v2020 = vpop.f32.mrf.mxu0
      %v2021 = vpop.f32.mrf.mxu0
      %v2022 = vadd.f32 0.0, %v2021
      %v2023 = vpop.f32.mrf.mxu0
      %2024 = vmatprep.mubr.bf16.mxu0 0
      %2025 = vmatmul.mubr.bf16.gmra.mxu0 %v1048
      %v2026 = vpop.f32.mrf.mxu0
      %v2027 = vadd.f32 0.0, %v2026
      %v2028 = vpop.f32.mrf.mxu0
      %v2029 = vpop.f32.mrf.mxu0
      %v2030 = vadd.f32 0.0, %v2029
      %v2031 = vpop.f32.mrf.mxu0
      %2032 = vmatprep.mubr.bf16.mxu0 0
      %2033 = vmatmul.mubr.bf16.gmra.mxu0 %v1049
      %v2034 = vpop.f32.mrf.mxu0
      %v2035 = vadd.f32 0.0, %v2034
      %v2036 = vpop.f32.mrf.mxu0
      %v2037 = vpop.f32.mrf.mxu0
      %v2038 = vadd.f32 0.0, %v2037
      %v2039 = vpop.f32.mrf.mxu0
      %2040 = vmatprep.mubr.bf16.mxu0 0
      %2041 = vmatmul.mubr.bf16.gmra.mxu0 %v1050
      %v2042 = vpop.f32.mrf.mxu0
      %v2043 = vadd.f32 0.0, %v2042
      %v2044 = vpop.f32.mrf.mxu0
      %v2045 = vpop.f32.mrf.mxu0
      %v2046 = vadd.f32 0.0, %v2045
      %v2047 = vpop.f32.mrf.mxu0
      %2048 = vmatprep.mubr.bf16.mxu0 0
      %2049 = vmatmul.mubr.bf16.gmra.mxu0 %v1051
      %v2050 = vpop.f32.mrf.mxu0
      %v2051 = vadd.f32 0.0, %v2050
      %v2052 = vpop.f32.mrf.mxu0
      %v2053 = vpop.f32.mrf.mxu0
      %v2054 = vadd.f32 0.0, %v2053
      %v2055 = vpop.f32.mrf.mxu0
      %2056 = vmatprep.mubr.bf16.mxu0 0
      %2057 = vmatmul.mubr.bf16.gmra.mxu0 %v1052
      %v2058 = vpop.f32.mrf.mxu0
      %v2059 = vadd.f32 0.0, %v2058
      %v2060 = vpop.f32.mrf.mxu0
      %v2061 = vpop.f32.mrf.mxu0
      %v2062 = vadd.f32 0.0, %v2061
      %v2063 = vpop.f32.mrf.mxu0
      %2064 = vmatprep.mubr.bf16.mxu0 0
      %2065 = vmatmul.mubr.bf16.gmra.mxu0 %v1846
      %v2066 = vpop.f32.mrf.mxu0
      %v2067 = vadd.f32 0.0, %v2066
      %v2068 = vpop.f32.mrf.mxu0
      %v2069 = vpop.f32.mrf.mxu0
      %v2070 = vadd.f32 0.0, %v2069
      %v2071 = vpop.f32.mrf.mxu0
      %2072 = vdwg.mxu0
      %v2073 = vadd.f32 %v1807, %v1947
      %v2074 = vadd.f32 %v1808, %v1950
      %v2075 = vadd.f32 %v1809, %v1955
      %v2076 = vadd.f32 %v1810, %v1958
      %v2077 = vadd.f32 %v1811, %v1963
      %v2078 = vadd.f32 %v1812, %v1966
      %v2079 = vadd.f32 %v1813, %v1971
      %v2080 = vadd.f32 %v1814, %v1974
      %v2081 = vadd.f32 %v1815, %v1979
      %v2082 = vadd.f32 %v1816, %v1982
      %v2083 = vadd.f32 %v1817, %v1987
      %v2084 = vadd.f32 %v1818, %v1990
      %v2085 = vadd.f32 %v1819, %v1995
      %v2086 = vadd.f32 %v1820, %v1998
      %v2087 = vadd.f32 %v1821, %v2003
      %v2088 = vadd.f32 %v1822, %v2006
      %v2089 = vadd.f32 %v1823, %v2011
      %v2090 = vadd.f32 %v1824, %v2014
      %v2091 = vadd.f32 %v1825, %v2019
      %v2092 = vadd.f32 %v1826, %v2022
      %v2093 = vadd.f32 %v1827, %v2027
      %v2094 = vadd.f32 %v1828, %v2030
      %v2095 = vadd.f32 %v1829, %v2035
      %v2096 = vadd.f32 %v1830, %v2038
      %v2097 = vadd.f32 %v1831, %v2043
      %v2098 = vadd.f32 %v1832, %v2046
      %v2099 = vadd.f32 %v1833, %v2051
      %v2100 = vadd.f32 %v1834, %v2054
      %v2101 = vadd.f32 %v1835, %v2059
      %v2102 = vadd.f32 %v1836, %v2062
      %v2103 = vadd.f32 %v1837, %v2067
      %v2104 = vadd.f32 %v1838, %v2070
      %v2105 = vpack.c.bf16 %v278, %v277
      %s2106 = scalar_lea.vmem %s1, 384
      %v2107 = vld [vmem:[%s2106] sm:$0xf]
      %v2108 = vld [vmem:[%s2106 + $0x4] sm:$0xf]
      %v2109 = vld [vmem:[%s2106 + $0x8] sm:$0xf]
      %v2110 = vld [vmem:[%s2106 + $0xc] sm:$0xf]
      %v2111 = vld [vmem:[%s2106 + $0x10] sm:$0xf]
      %v2112 = vld [vmem:[%s2106 + $0x14] sm:$0xf]
      %v2113 = vld [vmem:[%s2106 + $0x18] sm:$0xf]
      %v2114 = vld [vmem:[%s2106 + $0x1c] sm:$0xf]
      %v2115 = vld [vmem:[%s2106 + $0x20] sm:$0xf]
      %v2116 = vld [vmem:[%s2106 + $0x24] sm:$0xf]
      %v2117 = vld [vmem:[%s2106 + $0x28] sm:$0xf]
      %v2118 = vld [vmem:[%s2106 + $0x2c] sm:$0xf]
      %v2119 = vld [vmem:[%s2106 + $0x30] sm:$0xf]
      %v2120 = vld [vmem:[%s2106 + $0x34] sm:$0xf]
      %v2121 = vld [vmem:[%s2106 + $0x38] sm:$0xf]
      %v2122 = vld [vmem:[%s2106 + $0x3c] sm:$0xf]
      %v2139 = vunpack.c.l.b16 %v2107
      %v2140 = vunpack.c.l.b16 %v2108
      %v2141 = vunpack.c.l.b16 %v2109
      %v2142 = vunpack.c.l.b16 %v2110
      %v2143 = vunpack.c.l.b16 %v2111
      %v2144 = vunpack.c.l.b16 %v2112
      %v2145 = vunpack.c.l.b16 %v2113
      %v2146 = vunpack.c.l.b16 %v2114
      %v2147 = vunpack.c.l.b16 %v2115
      %v2148 = vunpack.c.l.b16 %v2116
      %v2149 = vunpack.c.l.b16 %v2117
      %v2150 = vunpack.c.l.b16 %v2118
      %v2151 = vunpack.c.l.b16 %v2119
      %v2152 = vunpack.c.l.b16 %v2120
      %v2153 = vunpack.c.l.b16 %v2121
      %v2154 = vunpack.c.l.b16 %v2122
      %v2155 = vpack.c.b16 %v2140, %v2139
      %v2156 = vpack.c.b16 %v2142, %v2141
      %v2157 = vpack.c.b16 %v2144, %v2143
      %v2158 = vpack.c.b16 %v2146, %v2145
      %v2159 = vpack.c.b16 %v2148, %v2147
      %v2160 = vpack.c.b16 %v2150, %v2149
      %v2161 = vpack.c.b16 %v2152, %v2151
      %v2162 = vpack.c.b16 %v2154, %v2153
      %2171 = vmatprep.subr.bf16.mxu0 0
      %2172 = vmatpush1.bf16.msra.mxu0 %v2162
      %2173 = vmatprep.subr.bf16.mxu0 0
      %2174 = vmatpush1.bf16.msra.mxu0 %v2161
      %2175 = vmatprep.subr.bf16.mxu0 0
      %2176 = vmatpush1.bf16.msra.mxu0 %v2160
      %2177 = vmatprep.subr.bf16.mxu0 0
      %2178 = vmatpush1.bf16.msra.mxu0 %v2159
      %2179 = vmatprep.subr.bf16.mxu0 0
      %2180 = vmatpush1.bf16.msra.mxu0 %v2158
      %2181 = vmatprep.subr.bf16.mxu0 0
      %2182 = vmatpush1.bf16.msra.mxu0 %v2157
      %2183 = vmatprep.subr.bf16.mxu0 0
      %2184 = vmatpush1.bf16.msra.mxu0 %v2156
      %2185 = vmatprep.subr.bf16.mxu0 0
      %2186 = vmatpush1.bf16.msra.mxu0 %v2155
      %2187 = vmatprep.subr.bf16.mxu0 0
      %2188 = vmatpush2.bf16.msra.mxu0 0
      %2189 = vmatprep.subr.bf16.mxu0 0
      %2190 = vmatpush2.bf16.msra.mxu0 0
      %2191 = vmatprep.subr.bf16.mxu0 0
      %2192 = vmatpush2.bf16.msra.mxu0 0
      %2193 = vmatprep.subr.bf16.mxu0 0
      %2194 = vmatpush2.bf16.msra.mxu0 0
      %2195 = vmatprep.subr.bf16.mxu0 0
      %2196 = vmatpush2.bf16.msra.mxu0 0
      %2197 = vmatprep.subr.bf16.mxu0 0
      %2198 = vmatpush2.bf16.msra.mxu0 0
      %2199 = vmatprep.subr.bf16.mxu0 0
      %2200 = vmatpush2.bf16.msra.mxu0 0
      %2201 = vmatprep.subr.bf16.mxu0 0
      %2202 = vmatpush2.bf16.msra.mxu0 0
      %2203 = vmatprep.mubr.bf16.mxu0 0
      %2204 = vmatmul.mubr.bf16.gmra.mxu0 %v282
      %v2205 = vpop.f32.mrf.mxu0
      %v2206 = vadd.f32 0.0, %v2205
      %v2207 = vpop.f32.mrf.mxu0
      %v2208 = vpop.f32.mrf.mxu0
      %v2209 = vadd.f32 0.0, %v2208
      %v2210 = vpop.f32.mrf.mxu0
      %2211 = vmatprep.mubr.bf16.mxu0 0
      %2212 = vmatmul.mubr.bf16.gmra.mxu0 %v283
      %v2213 = vpop.f32.mrf.mxu0
      %v2214 = vadd.f32 0.0, %v2213
      %v2215 = vpop.f32.mrf.mxu0
      %v2216 = vpop.f32.mrf.mxu0
      %v2217 = vadd.f32 0.0, %v2216
      %v2218 = vpop.f32.mrf.mxu0
      %2219 = vmatprep.mubr.bf16.mxu0 0
      %2220 = vmatmul.mubr.bf16.gmra.mxu0 %v284
      %v2221 = vpop.f32.mrf.mxu0
      %v2222 = vadd.f32 0.0, %v2221
      %v2223 = vpop.f32.mrf.mxu0
      %v2224 = vpop.f32.mrf.mxu0
      %v2225 = vadd.f32 0.0, %v2224
      %v2226 = vpop.f32.mrf.mxu0
      %2227 = vmatprep.mubr.bf16.mxu0 0
      %2228 = vmatmul.mubr.bf16.gmra.mxu0 %v285
      %v2229 = vpop.f32.mrf.mxu0
      %v2230 = vadd.f32 0.0, %v2229
      %v2231 = vpop.f32.mrf.mxu0
      %v2232 = vpop.f32.mrf.mxu0
      %v2233 = vadd.f32 0.0, %v2232
      %v2234 = vpop.f32.mrf.mxu0
      %2235 = vmatprep.mubr.bf16.mxu0 0
      %2236 = vmatmul.mubr.bf16.gmra.mxu0 %v286
      %v2237 = vpop.f32.mrf.mxu0
      %v2238 = vadd.f32 0.0, %v2237
      %v2239 = vpop.f32.mrf.mxu0
      %v2240 = vpop.f32.mrf.mxu0
      %v2241 = vadd.f32 0.0, %v2240
      %v2242 = vpop.f32.mrf.mxu0
      %2243 = vmatprep.mubr.bf16.mxu0 0
      %2244 = vmatmul.mubr.bf16.gmra.mxu0 %v287
      %v2245 = vpop.f32.mrf.mxu0
      %v2246 = vadd.f32 0.0, %v2245
      %v2247 = vpop.f32.mrf.mxu0
      %v2248 = vpop.f32.mrf.mxu0
      %v2249 = vadd.f32 0.0, %v2248
      %v2250 = vpop.f32.mrf.mxu0
      %2251 = vmatprep.mubr.bf16.mxu0 0
      %2252 = vmatmul.mubr.bf16.gmra.mxu0 %v288
      %v2253 = vpop.f32.mrf.mxu0
      %v2254 = vadd.f32 0.0, %v2253
      %v2255 = vpop.f32.mrf.mxu0
      %v2256 = vpop.f32.mrf.mxu0
      %v2257 = vadd.f32 0.0, %v2256
      %v2258 = vpop.f32.mrf.mxu0
      %2259 = vmatprep.mubr.bf16.mxu0 0
      %2260 = vmatmul.mubr.bf16.gmra.mxu0 %v289
      %v2261 = vpop.f32.mrf.mxu0
      %v2262 = vadd.f32 0.0, %v2261
      %v2263 = vpop.f32.mrf.mxu0
      %v2264 = vpop.f32.mrf.mxu0
      %v2265 = vadd.f32 0.0, %v2264
      %v2266 = vpop.f32.mrf.mxu0
      %2267 = vmatprep.mubr.bf16.mxu0 0
      %2268 = vmatmul.mubr.bf16.gmra.mxu0 %v290
      %v2269 = vpop.f32.mrf.mxu0
      %v2270 = vadd.f32 0.0, %v2269
      %v2271 = vpop.f32.mrf.mxu0
      %v2272 = vpop.f32.mrf.mxu0
      %v2273 = vadd.f32 0.0, %v2272
      %v2274 = vpop.f32.mrf.mxu0
      %2275 = vmatprep.mubr.bf16.mxu0 0
      %2276 = vmatmul.mubr.bf16.gmra.mxu0 %v291
      %v2277 = vpop.f32.mrf.mxu0
      %v2278 = vadd.f32 0.0, %v2277
      %v2279 = vpop.f32.mrf.mxu0
      %v2280 = vpop.f32.mrf.mxu0
      %v2281 = vadd.f32 0.0, %v2280
      %v2282 = vpop.f32.mrf.mxu0
      %2283 = vmatprep.mubr.bf16.mxu0 0
      %2284 = vmatmul.mubr.bf16.gmra.mxu0 %v292
      %v2285 = vpop.f32.mrf.mxu0
      %v2286 = vadd.f32 0.0, %v2285
      %v2287 = vpop.f32.mrf.mxu0
      %v2288 = vpop.f32.mrf.mxu0
      %v2289 = vadd.f32 0.0, %v2288
      %v2290 = vpop.f32.mrf.mxu0
      %2291 = vmatprep.mubr.bf16.mxu0 0
      %2292 = vmatmul.mubr.bf16.gmra.mxu0 %v293
      %v2293 = vpop.f32.mrf.mxu0
      %v2294 = vadd.f32 0.0, %v2293
      %v2295 = vpop.f32.mrf.mxu0
      %v2296 = vpop.f32.mrf.mxu0
      %v2297 = vadd.f32 0.0, %v2296
      %v2298 = vpop.f32.mrf.mxu0
      %2299 = vmatprep.mubr.bf16.mxu0 0
      %2300 = vmatmul.mubr.bf16.gmra.mxu0 %v294
      %v2301 = vpop.f32.mrf.mxu0
      %v2302 = vadd.f32 0.0, %v2301
      %v2303 = vpop.f32.mrf.mxu0
      %v2304 = vpop.f32.mrf.mxu0
      %v2305 = vadd.f32 0.0, %v2304
      %v2306 = vpop.f32.mrf.mxu0
      %2307 = vmatprep.mubr.bf16.mxu0 0
      %2308 = vmatmul.mubr.bf16.gmra.mxu0 %v295
      %v2309 = vpop.f32.mrf.mxu0
      %v2310 = vadd.f32 0.0, %v2309
      %v2311 = vpop.f32.mrf.mxu0
      %v2312 = vpop.f32.mrf.mxu0
      %v2313 = vadd.f32 0.0, %v2312
      %v2314 = vpop.f32.mrf.mxu0
      %2315 = vmatprep.mubr.bf16.mxu0 0
      %2316 = vmatmul.mubr.bf16.gmra.mxu0 %v1311
      %v2317 = vpop.f32.mrf.mxu0
      %v2318 = vadd.f32 0.0, %v2317
      %v2319 = vpop.f32.mrf.mxu0
      %v2320 = vpop.f32.mrf.mxu0
      %v2321 = vadd.f32 0.0, %v2320
      %v2322 = vpop.f32.mrf.mxu0
      %2323 = vmatprep.mubr.bf16.mxu0 0
      %2324 = vmatmul.mubr.bf16.gmra.mxu0 %v2105
      %v2325 = vpop.f32.mrf.mxu0
      %v2326 = vadd.f32 0.0, %v2325
      %v2327 = vpop.f32.mrf.mxu0
      %v2328 = vpop.f32.mrf.mxu0
      %v2329 = vadd.f32 0.0, %v2328
      %v2330 = vpop.f32.mrf.mxu0
      %2331 = vdwg.mxu0
      %v2332 = vadd.f32 %v2073, %v2206
      %v2333 = vadd.f32 %v2074, %v2209
      %v2334 = vadd.f32 %v2075, %v2214
      %v2335 = vadd.f32 %v2076, %v2217
      %v2336 = vadd.f32 %v2077, %v2222
      %v2337 = vadd.f32 %v2078, %v2225
      %v2338 = vadd.f32 %v2079, %v2230
      %v2339 = vadd.f32 %v2080, %v2233
      %v2340 = vadd.f32 %v2081, %v2238
      %v2341 = vadd.f32 %v2082, %v2241
      %v2342 = vadd.f32 %v2083, %v2246
      %v2343 = vadd.f32 %v2084, %v2249
      %v2344 = vadd.f32 %v2085, %v2254
      %v2345 = vadd.f32 %v2086, %v2257
      %v2346 = vadd.f32 %v2087, %v2262
      %v2347 = vadd.f32 %v2088, %v2265
      %v2348 = vadd.f32 %v2089, %v2270
      %v2349 = vadd.f32 %v2090, %v2273
      %v2350 = vadd.f32 %v2091, %v2278
      %v2351 = vadd.f32 %v2092, %v2281
      %v2352 = vadd.f32 %v2093, %v2286
      %v2353 = vadd.f32 %v2094, %v2289
      %v2354 = vadd.f32 %v2095, %v2294
      %v2355 = vadd.f32 %v2096, %v2297
      %v2356 = vadd.f32 %v2097, %v2302
      %v2357 = vadd.f32 %v2098, %v2305
      %v2358 = vadd.f32 %v2099, %v2310
      %v2359 = vadd.f32 %v2100, %v2313
      %v2360 = vadd.f32 %v2101, %v2318
      %v2361 = vadd.f32 %v2102, %v2321
      %v2362 = vadd.f32 %v2103, %v2326
      %v2363 = vadd.f32 %v2104, %v2329
      %v2367 = vrot.slane %v277, 1
      %v2368 = vrot.slane %v278, 1
      %v2369 = vsel %vm360, %v2367, %v2368
      %v2370 = vrot.slane %v279, 1
      %v2371 = vsel %vm360, %v2368, %v2370
      %v2374 = vpack.c.bf16 %v2371, %v2369
      %s2375 = scalar_lea.vmem %s1, 448
      %v2376 = vld [vmem:[%s2375] sm:$0xf]
      %v2377 = vld [vmem:[%s2375 + $0x4] sm:$0xf]
      %v2378 = vld [vmem:[%s2375 + $0x8] sm:$0xf]
      %v2379 = vld [vmem:[%s2375 + $0xc] sm:$0xf]
      %v2380 = vld [vmem:[%s2375 + $0x10] sm:$0xf]
      %v2381 = vld [vmem:[%s2375 + $0x14] sm:$0xf]
      %v2382 = vld [vmem:[%s2375 + $0x18] sm:$0xf]
      %v2383 = vld [vmem:[%s2375 + $0x1c] sm:$0xf]
      %v2384 = vld [vmem:[%s2375 + $0x20] sm:$0xf]
      %v2385 = vld [vmem:[%s2375 + $0x24] sm:$0xf]
      %v2386 = vld [vmem:[%s2375 + $0x28] sm:$0xf]
      %v2387 = vld [vmem:[%s2375 + $0x2c] sm:$0xf]
      %v2388 = vld [vmem:[%s2375 + $0x30] sm:$0xf]
      %v2389 = vld [vmem:[%s2375 + $0x34] sm:$0xf]
      %v2390 = vld [vmem:[%s2375 + $0x38] sm:$0xf]
      %v2391 = vld [vmem:[%s2375 + $0x3c] sm:$0xf]
      %v2408 = vunpack.c.l.b16 %v2376
      %v2409 = vunpack.c.l.b16 %v2377
      %v2410 = vunpack.c.l.b16 %v2378
      %v2411 = vunpack.c.l.b16 %v2379
      %v2412 = vunpack.c.l.b16 %v2380
      %v2413 = vunpack.c.l.b16 %v2381
      %v2414 = vunpack.c.l.b16 %v2382
      %v2415 = vunpack.c.l.b16 %v2383
      %v2416 = vunpack.c.l.b16 %v2384
      %v2417 = vunpack.c.l.b16 %v2385
      %v2418 = vunpack.c.l.b16 %v2386
      %v2419 = vunpack.c.l.b16 %v2387
      %v2420 = vunpack.c.l.b16 %v2388
      %v2421 = vunpack.c.l.b16 %v2389
      %v2422 = vunpack.c.l.b16 %v2390
      %v2423 = vunpack.c.l.b16 %v2391
      %v2424 = vpack.c.b16 %v2409, %v2408
      %v2425 = vpack.c.b16 %v2411, %v2410
      %v2426 = vpack.c.b16 %v2413, %v2412
      %v2427 = vpack.c.b16 %v2415, %v2414
      %v2428 = vpack.c.b16 %v2417, %v2416
      %v2429 = vpack.c.b16 %v2419, %v2418
      %v2430 = vpack.c.b16 %v2421, %v2420
      %v2431 = vpack.c.b16 %v2423, %v2422
      %2440 = vmatprep.subr.bf16.mxu0 0
      %2441 = vmatpush1.bf16.msra.mxu0 %v2431
      %2442 = vmatprep.subr.bf16.mxu0 0
      %2443 = vmatpush1.bf16.msra.mxu0 %v2430
      %2444 = vmatprep.subr.bf16.mxu0 0
      %2445 = vmatpush1.bf16.msra.mxu0 %v2429
      %2446 = vmatprep.subr.bf16.mxu0 0
      %2447 = vmatpush1.bf16.msra.mxu0 %v2428
      %2448 = vmatprep.subr.bf16.mxu0 0
      %2449 = vmatpush1.bf16.msra.mxu0 %v2427
      %2450 = vmatprep.subr.bf16.mxu0 0
      %2451 = vmatpush1.bf16.msra.mxu0 %v2426
      %2452 = vmatprep.subr.bf16.mxu0 0
      %2453 = vmatpush1.bf16.msra.mxu0 %v2425
      %2454 = vmatprep.subr.bf16.mxu0 0
      %2455 = vmatpush1.bf16.msra.mxu0 %v2424
      %2456 = vmatprep.subr.bf16.mxu0 0
      %2457 = vmatpush2.bf16.msra.mxu0 0
      %2458 = vmatprep.subr.bf16.mxu0 0
      %2459 = vmatpush2.bf16.msra.mxu0 0
      %2460 = vmatprep.subr.bf16.mxu0 0
      %2461 = vmatpush2.bf16.msra.mxu0 0
      %2462 = vmatprep.subr.bf16.mxu0 0
      %2463 = vmatpush2.bf16.msra.mxu0 0
      %2464 = vmatprep.subr.bf16.mxu0 0
      %2465 = vmatpush2.bf16.msra.mxu0 0
      %2466 = vmatprep.subr.bf16.mxu0 0
      %2467 = vmatpush2.bf16.msra.mxu0 0
      %2468 = vmatprep.subr.bf16.mxu0 0
      %2469 = vmatpush2.bf16.msra.mxu0 0
      %2470 = vmatprep.subr.bf16.mxu0 0
      %2471 = vmatpush2.bf16.msra.mxu0 0
      %2472 = vmatprep.mubr.bf16.mxu0 0
      %2473 = vmatmul.mubr.bf16.gmra.mxu0 %v475
      %v2474 = vpop.f32.mrf.mxu0
      %v2475 = vadd.f32 0.0, %v2474
      %v2476 = vpop.f32.mrf.mxu0
      %v2477 = vpop.f32.mrf.mxu0
      %v2478 = vadd.f32 0.0, %v2477
      %v2479 = vpop.f32.mrf.mxu0
      %2480 = vmatprep.mubr.bf16.mxu0 0
      %2481 = vmatmul.mubr.bf16.gmra.mxu0 %v476
      %v2482 = vpop.f32.mrf.mxu0
      %v2483 = vadd.f32 0.0, %v2482
      %v2484 = vpop.f32.mrf.mxu0
      %v2485 = vpop.f32.mrf.mxu0
      %v2486 = vadd.f32 0.0, %v2485
      %v2487 = vpop.f32.mrf.mxu0
      %2488 = vmatprep.mubr.bf16.mxu0 0
      %2489 = vmatmul.mubr.bf16.gmra.mxu0 %v477
      %v2490 = vpop.f32.mrf.mxu0
      %v2491 = vadd.f32 0.0, %v2490
      %v2492 = vpop.f32.mrf.mxu0
      %v2493 = vpop.f32.mrf.mxu0
      %v2494 = vadd.f32 0.0, %v2493
      %v2495 = vpop.f32.mrf.mxu0
      %2496 = vmatprep.mubr.bf16.mxu0 0
      %2497 = vmatmul.mubr.bf16.gmra.mxu0 %v478
      %v2498 = vpop.f32.mrf.mxu0
      %v2499 = vadd.f32 0.0, %v2498
      %v2500 = vpop.f32.mrf.mxu0
      %v2501 = vpop.f32.mrf.mxu0
      %v2502 = vadd.f32 0.0, %v2501
      %v2503 = vpop.f32.mrf.mxu0
      %2504 = vmatprep.mubr.bf16.mxu0 0
      %2505 = vmatmul.mubr.bf16.gmra.mxu0 %v479
      %v2506 = vpop.f32.mrf.mxu0
      %v2507 = vadd.f32 0.0, %v2506
      %v2508 = vpop.f32.mrf.mxu0
      %v2509 = vpop.f32.mrf.mxu0
      %v2510 = vadd.f32 0.0, %v2509
      %v2511 = vpop.f32.mrf.mxu0
      %2512 = vmatprep.mubr.bf16.mxu0 0
      %2513 = vmatmul.mubr.bf16.gmra.mxu0 %v480
      %v2514 = vpop.f32.mrf.mxu0
      %v2515 = vadd.f32 0.0, %v2514
      %v2516 = vpop.f32.mrf.mxu0
      %v2517 = vpop.f32.mrf.mxu0
      %v2518 = vadd.f32 0.0, %v2517
      %v2519 = vpop.f32.mrf.mxu0
      %2520 = vmatprep.mubr.bf16.mxu0 0
      %2521 = vmatmul.mubr.bf16.gmra.mxu0 %v481
      %v2522 = vpop.f32.mrf.mxu0
      %v2523 = vadd.f32 0.0, %v2522
      %v2524 = vpop.f32.mrf.mxu0
      %v2525 = vpop.f32.mrf.mxu0
      %v2526 = vadd.f32 0.0, %v2525
      %v2527 = vpop.f32.mrf.mxu0
      %2528 = vmatprep.mubr.bf16.mxu0 0
      %2529 = vmatmul.mubr.bf16.gmra.mxu0 %v482
      %v2530 = vpop.f32.mrf.mxu0
      %v2531 = vadd.f32 0.0, %v2530
      %v2532 = vpop.f32.mrf.mxu0
      %v2533 = vpop.f32.mrf.mxu0
      %v2534 = vadd.f32 0.0, %v2533
      %v2535 = vpop.f32.mrf.mxu0
      %2536 = vmatprep.mubr.bf16.mxu0 0
      %2537 = vmatmul.mubr.bf16.gmra.mxu0 %v483
      %v2538 = vpop.f32.mrf.mxu0
      %v2539 = vadd.f32 0.0, %v2538
      %v2540 = vpop.f32.mrf.mxu0
      %v2541 = vpop.f32.mrf.mxu0
      %v2542 = vadd.f32 0.0, %v2541
      %v2543 = vpop.f32.mrf.mxu0
      %2544 = vmatprep.mubr.bf16.mxu0 0
      %2545 = vmatmul.mubr.bf16.gmra.mxu0 %v484
      %v2546 = vpop.f32.mrf.mxu0
      %v2547 = vadd.f32 0.0, %v2546
      %v2548 = vpop.f32.mrf.mxu0
      %v2549 = vpop.f32.mrf.mxu0
      %v2550 = vadd.f32 0.0, %v2549
      %v2551 = vpop.f32.mrf.mxu0
      %2552 = vmatprep.mubr.bf16.mxu0 0
      %2553 = vmatmul.mubr.bf16.gmra.mxu0 %v485
      %v2554 = vpop.f32.mrf.mxu0
      %v2555 = vadd.f32 0.0, %v2554
      %v2556 = vpop.f32.mrf.mxu0
      %v2557 = vpop.f32.mrf.mxu0
      %v2558 = vadd.f32 0.0, %v2557
      %v2559 = vpop.f32.mrf.mxu0
      %2560 = vmatprep.mubr.bf16.mxu0 0
      %2561 = vmatmul.mubr.bf16.gmra.mxu0 %v486
      %v2562 = vpop.f32.mrf.mxu0
      %v2563 = vadd.f32 0.0, %v2562
      %v2564 = vpop.f32.mrf.mxu0
      %v2565 = vpop.f32.mrf.mxu0
      %v2566 = vadd.f32 0.0, %v2565
      %v2567 = vpop.f32.mrf.mxu0
      %2568 = vmatprep.mubr.bf16.mxu0 0
      %2569 = vmatmul.mubr.bf16.gmra.mxu0 %v487
      %v2570 = vpop.f32.mrf.mxu0
      %v2571 = vadd.f32 0.0, %v2570
      %v2572 = vpop.f32.mrf.mxu0
      %v2573 = vpop.f32.mrf.mxu0
      %v2574 = vadd.f32 0.0, %v2573
      %v2575 = vpop.f32.mrf.mxu0
      %2576 = vmatprep.mubr.bf16.mxu0 0
      %2577 = vmatmul.mubr.bf16.gmra.mxu0 %v488
      %v2578 = vpop.f32.mrf.mxu0
      %v2579 = vadd.f32 0.0, %v2578
      %v2580 = vpop.f32.mrf.mxu0
      %v2581 = vpop.f32.mrf.mxu0
      %v2582 = vadd.f32 0.0, %v2581
      %v2583 = vpop.f32.mrf.mxu0
      %2584 = vmatprep.mubr.bf16.mxu0 0
      %2585 = vmatmul.mubr.bf16.gmra.mxu0 %v1580
      %v2586 = vpop.f32.mrf.mxu0
      %v2587 = vadd.f32 0.0, %v2586
      %v2588 = vpop.f32.mrf.mxu0
      %v2589 = vpop.f32.mrf.mxu0
      %v2590 = vadd.f32 0.0, %v2589
      %v2591 = vpop.f32.mrf.mxu0
      %2592 = vmatprep.mubr.bf16.mxu0 0
      %2593 = vmatmul.mubr.bf16.gmra.mxu0 %v2374
      %v2594 = vpop.f32.mrf.mxu0
      %v2595 = vadd.f32 0.0, %v2594
      %v2596 = vpop.f32.mrf.mxu0
      %v2597 = vpop.f32.mrf.mxu0
      %v2598 = vadd.f32 0.0, %v2597
      %v2599 = vpop.f32.mrf.mxu0
      %2600 = vdwg.mxu0
      %v2601 = vadd.f32 %v2332, %v2475
      %v2602 = vadd.f32 %v2333, %v2478
      %v2603 = vadd.f32 %v2334, %v2483
      %v2604 = vadd.f32 %v2335, %v2486
      %v2605 = vadd.f32 %v2336, %v2491
      %v2606 = vadd.f32 %v2337, %v2494
      %v2607 = vadd.f32 %v2338, %v2499
      %v2608 = vadd.f32 %v2339, %v2502
      %v2609 = vadd.f32 %v2340, %v2507
      %v2610 = vadd.f32 %v2341, %v2510
      %v2611 = vadd.f32 %v2342, %v2515
      %v2612 = vadd.f32 %v2343, %v2518
      %v2613 = vadd.f32 %v2344, %v2523
      %v2614 = vadd.f32 %v2345, %v2526
      %v2615 = vadd.f32 %v2346, %v2531
      %v2616 = vadd.f32 %v2347, %v2534
      %v2617 = vadd.f32 %v2348, %v2539
      %v2618 = vadd.f32 %v2349, %v2542
      %v2619 = vadd.f32 %v2350, %v2547
      %v2620 = vadd.f32 %v2351, %v2550
      %v2621 = vadd.f32 %v2352, %v2555
      %v2622 = vadd.f32 %v2353, %v2558
      %v2623 = vadd.f32 %v2354, %v2563
      %v2624 = vadd.f32 %v2355, %v2566
      %v2625 = vadd.f32 %v2356, %v2571
      %v2626 = vadd.f32 %v2357, %v2574
      %v2627 = vadd.f32 %v2358, %v2579
      %v2628 = vadd.f32 %v2359, %v2582
      %v2629 = vadd.f32 %v2360, %v2587
      %v2630 = vadd.f32 %v2361, %v2590
      %v2631 = vadd.f32 %v2362, %v2595
      %v2632 = vadd.f32 %v2363, %v2598
      %v2633 = vrot.slane %v277, 2
      %v2634 = vrot.slane %v278, 2
      %v2635 = vsel %vm924, %v2633, %v2634
      %v2636 = vrot.slane %v279, 2
      %v2637 = vsel %vm924, %v2634, %v2636
      %v2640 = vpack.c.bf16 %v2637, %v2635
      %s2641 = scalar_lea.vmem %s1, 512
      %v2642 = vld [vmem:[%s2641] sm:$0xf]
      %v2643 = vld [vmem:[%s2641 + $0x4] sm:$0xf]
      %v2644 = vld [vmem:[%s2641 + $0x8] sm:$0xf]
      %v2645 = vld [vmem:[%s2641 + $0xc] sm:$0xf]
      %v2646 = vld [vmem:[%s2641 + $0x10] sm:$0xf]
      %v2647 = vld [vmem:[%s2641 + $0x14] sm:$0xf]
      %v2648 = vld [vmem:[%s2641 + $0x18] sm:$0xf]
      %v2649 = vld [vmem:[%s2641 + $0x1c] sm:$0xf]
      %v2650 = vld [vmem:[%s2641 + $0x20] sm:$0xf]
      %v2651 = vld [vmem:[%s2641 + $0x24] sm:$0xf]
      %v2652 = vld [vmem:[%s2641 + $0x28] sm:$0xf]
      %v2653 = vld [vmem:[%s2641 + $0x2c] sm:$0xf]
      %v2654 = vld [vmem:[%s2641 + $0x30] sm:$0xf]
      %v2655 = vld [vmem:[%s2641 + $0x34] sm:$0xf]
      %v2656 = vld [vmem:[%s2641 + $0x38] sm:$0xf]
      %v2657 = vld [vmem:[%s2641 + $0x3c] sm:$0xf]
      %v2674 = vunpack.c.l.b16 %v2642
      %v2675 = vunpack.c.l.b16 %v2643
      %v2676 = vunpack.c.l.b16 %v2644
      %v2677 = vunpack.c.l.b16 %v2645
      %v2678 = vunpack.c.l.b16 %v2646
      %v2679 = vunpack.c.l.b16 %v2647
      %v2680 = vunpack.c.l.b16 %v2648
      %v2681 = vunpack.c.l.b16 %v2649
      %v2682 = vunpack.c.l.b16 %v2650
      %v2683 = vunpack.c.l.b16 %v2651
      %v2684 = vunpack.c.l.b16 %v2652
      %v2685 = vunpack.c.l.b16 %v2653
      %v2686 = vunpack.c.l.b16 %v2654
      %v2687 = vunpack.c.l.b16 %v2655
      %v2688 = vunpack.c.l.b16 %v2656
      %v2689 = vunpack.c.l.b16 %v2657
      %v2690 = vpack.c.b16 %v2675, %v2674
      %v2691 = vpack.c.b16 %v2677, %v2676
      %v2692 = vpack.c.b16 %v2679, %v2678
      %v2693 = vpack.c.b16 %v2681, %v2680
      %v2694 = vpack.c.b16 %v2683, %v2682
      %v2695 = vpack.c.b16 %v2685, %v2684
      %v2696 = vpack.c.b16 %v2687, %v2686
      %v2697 = vpack.c.b16 %v2689, %v2688
      %2706 = vmatprep.subr.bf16.mxu0 0
      %2707 = vmatpush1.bf16.msra.mxu0 %v2697
      %2708 = vmatprep.subr.bf16.mxu0 0
      %2709 = vmatpush1.bf16.msra.mxu0 %v2696
      %2710 = vmatprep.subr.bf16.mxu0 0
      %2711 = vmatpush1.bf16.msra.mxu0 %v2695
      %2712 = vmatprep.subr.bf16.mxu0 0
      %2713 = vmatpush1.bf16.msra.mxu0 %v2694
      %2714 = vmatprep.subr.bf16.mxu0 0
      %2715 = vmatpush1.bf16.msra.mxu0 %v2693
      %2716 = vmatprep.subr.bf16.mxu0 0
      %2717 = vmatpush1.bf16.msra.mxu0 %v2692
      %2718 = vmatprep.subr.bf16.mxu0 0
      %2719 = vmatpush1.bf16.msra.mxu0 %v2691
      %2720 = vmatprep.subr.bf16.mxu0 0
      %2721 = vmatpush1.bf16.msra.mxu0 %v2690
      %2722 = vmatprep.subr.bf16.mxu0 0
      %2723 = vmatpush2.bf16.msra.mxu0 0
      %2724 = vmatprep.subr.bf16.mxu0 0
      %2725 = vmatpush2.bf16.msra.mxu0 0
      %2726 = vmatprep.subr.bf16.mxu0 0
      %2727 = vmatpush2.bf16.msra.mxu0 0
      %2728 = vmatprep.subr.bf16.mxu0 0
      %2729 = vmatpush2.bf16.msra.mxu0 0
      %2730 = vmatprep.subr.bf16.mxu0 0
      %2731 = vmatpush2.bf16.msra.mxu0 0
      %2732 = vmatprep.subr.bf16.mxu0 0
      %2733 = vmatpush2.bf16.msra.mxu0 0
      %2734 = vmatprep.subr.bf16.mxu0 0
      %2735 = vmatpush2.bf16.msra.mxu0 0
      %2736 = vmatprep.subr.bf16.mxu0 0
      %2737 = vmatpush2.bf16.msra.mxu0 0
      %2738 = vmatprep.mubr.bf16.mxu0 0
      %2739 = vmatmul.mubr.bf16.gmra.mxu0 %v1039
      %v2740 = vpop.f32.mrf.mxu0
      %v2741 = vadd.f32 0.0, %v2740
      %v2742 = vpop.f32.mrf.mxu0
      %v2743 = vpop.f32.mrf.mxu0
      %v2744 = vadd.f32 0.0, %v2743
      %v2745 = vpop.f32.mrf.mxu0
      %2746 = vmatprep.mubr.bf16.mxu0 0
      %2747 = vmatmul.mubr.bf16.gmra.mxu0 %v1040
      %v2748 = vpop.f32.mrf.mxu0
      %v2749 = vadd.f32 0.0, %v2748
      %v2750 = vpop.f32.mrf.mxu0
      %v2751 = vpop.f32.mrf.mxu0
      %v2752 = vadd.f32 0.0, %v2751
      %v2753 = vpop.f32.mrf.mxu0
      %2754 = vmatprep.mubr.bf16.mxu0 0
      %2755 = vmatmul.mubr.bf16.gmra.mxu0 %v1041
      %v2756 = vpop.f32.mrf.mxu0
      %v2757 = vadd.f32 0.0, %v2756
      %v2758 = vpop.f32.mrf.mxu0
      %v2759 = vpop.f32.mrf.mxu0
      %v2760 = vadd.f32 0.0, %v2759
      %v2761 = vpop.f32.mrf.mxu0
      %2762 = vmatprep.mubr.bf16.mxu0 0
      %2763 = vmatmul.mubr.bf16.gmra.mxu0 %v1042
      %v2764 = vpop.f32.mrf.mxu0
      %v2765 = vadd.f32 0.0, %v2764
      %v2766 = vpop.f32.mrf.mxu0
      %v2767 = vpop.f32.mrf.mxu0
      %v2768 = vadd.f32 0.0, %v2767
      %v2769 = vpop.f32.mrf.mxu0
      %2770 = vmatprep.mubr.bf16.mxu0 0
      %2771 = vmatmul.mubr.bf16.gmra.mxu0 %v1043
      %v2772 = vpop.f32.mrf.mxu0
      %v2773 = vadd.f32 0.0, %v2772
      %v2774 = vpop.f32.mrf.mxu0
      %v2775 = vpop.f32.mrf.mxu0
      %v2776 = vadd.f32 0.0, %v2775
      %v2777 = vpop.f32.mrf.mxu0
      %2778 = vmatprep.mubr.bf16.mxu0 0
      %2779 = vmatmul.mubr.bf16.gmra.mxu0 %v1044
      %v2780 = vpop.f32.mrf.mxu0
      %v2781 = vadd.f32 0.0, %v2780
      %v2782 = vpop.f32.mrf.mxu0
      %v2783 = vpop.f32.mrf.mxu0
      %v2784 = vadd.f32 0.0, %v2783
      %v2785 = vpop.f32.mrf.mxu0
      %2786 = vmatprep.mubr.bf16.mxu0 0
      %2787 = vmatmul.mubr.bf16.gmra.mxu0 %v1045
      %v2788 = vpop.f32.mrf.mxu0
      %v2789 = vadd.f32 0.0, %v2788
      %v2790 = vpop.f32.mrf.mxu0
      %v2791 = vpop.f32.mrf.mxu0
      %v2792 = vadd.f32 0.0, %v2791
      %v2793 = vpop.f32.mrf.mxu0
      %2794 = vmatprep.mubr.bf16.mxu0 0
      %2795 = vmatmul.mubr.bf16.gmra.mxu0 %v1046
      %v2796 = vpop.f32.mrf.mxu0
      %v2797 = vadd.f32 0.0, %v2796
      %v2798 = vpop.f32.mrf.mxu0
      %v2799 = vpop.f32.mrf.mxu0
      %v2800 = vadd.f32 0.0, %v2799
      %v2801 = vpop.f32.mrf.mxu0
      %2802 = vmatprep.mubr.bf16.mxu0 0
      %2803 = vmatmul.mubr.bf16.gmra.mxu0 %v1047
      %v2804 = vpop.f32.mrf.mxu0
      %v2805 = vadd.f32 0.0, %v2804
      %v2806 = vpop.f32.mrf.mxu0
      %v2807 = vpop.f32.mrf.mxu0
      %v2808 = vadd.f32 0.0, %v2807
      %v2809 = vpop.f32.mrf.mxu0
      %2810 = vmatprep.mubr.bf16.mxu0 0
      %2811 = vmatmul.mubr.bf16.gmra.mxu0 %v1048
      %v2812 = vpop.f32.mrf.mxu0
      %v2813 = vadd.f32 0.0, %v2812
      %v2814 = vpop.f32.mrf.mxu0
      %v2815 = vpop.f32.mrf.mxu0
      %v2816 = vadd.f32 0.0, %v2815
      %v2817 = vpop.f32.mrf.mxu0
      %2818 = vmatprep.mubr.bf16.mxu0 0
      %2819 = vmatmul.mubr.bf16.gmra.mxu0 %v1049
      %v2820 = vpop.f32.mrf.mxu0
      %v2821 = vadd.f32 0.0, %v2820
      %v2822 = vpop.f32.mrf.mxu0
      %v2823 = vpop.f32.mrf.mxu0
      %v2824 = vadd.f32 0.0, %v2823
      %v2825 = vpop.f32.mrf.mxu0
      %2826 = vmatprep.mubr.bf16.mxu0 0
      %2827 = vmatmul.mubr.bf16.gmra.mxu0 %v1050
      %v2828 = vpop.f32.mrf.mxu0
      %v2829 = vadd.f32 0.0, %v2828
      %v2830 = vpop.f32.mrf.mxu0
      %v2831 = vpop.f32.mrf.mxu0
      %v2832 = vadd.f32 0.0, %v2831
      %v2833 = vpop.f32.mrf.mxu0
      %2834 = vmatprep.mubr.bf16.mxu0 0
      %2835 = vmatmul.mubr.bf16.gmra.mxu0 %v1051
      %v2836 = vpop.f32.mrf.mxu0
      %v2837 = vadd.f32 0.0, %v2836
      %v2838 = vpop.f32.mrf.mxu0
      %v2839 = vpop.f32.mrf.mxu0
      %v2840 = vadd.f32 0.0, %v2839
      %v2841 = vpop.f32.mrf.mxu0
      %2842 = vmatprep.mubr.bf16.mxu0 0
      %2843 = vmatmul.mubr.bf16.gmra.mxu0 %v1052
      %v2844 = vpop.f32.mrf.mxu0
      %v2845 = vadd.f32 0.0, %v2844
      %v2846 = vpop.f32.mrf.mxu0
      %v2847 = vpop.f32.mrf.mxu0
      %v2848 = vadd.f32 0.0, %v2847
      %v2849 = vpop.f32.mrf.mxu0
      %2850 = vmatprep.mubr.bf16.mxu0 0
      %2851 = vmatmul.mubr.bf16.gmra.mxu0 %v1846
      %v2852 = vpop.f32.mrf.mxu0
      %v2853 = vadd.f32 0.0, %v2852
      %v2854 = vpop.f32.mrf.mxu0
      %v2855 = vpop.f32.mrf.mxu0
      %v2856 = vadd.f32 0.0, %v2855
      %v2857 = vpop.f32.mrf.mxu0
      %2858 = vmatprep.mubr.bf16.mxu0 0
      %2859 = vmatmul.mubr.bf16.gmra.mxu0 %v2640
      %v2860 = vpop.f32.mrf.mxu0
      %v2861 = vadd.f32 0.0, %v2860
      %v2862 = vpop.f32.mrf.mxu0
      %v2863 = vpop.f32.mrf.mxu0
      %v2864 = vadd.f32 0.0, %v2863
      %v2865 = vpop.f32.mrf.mxu0
      %2866 = vdwg.mxu0
      %v2867 = vadd.f32 %v2601, %v2741
      %v2868 = vadd.f32 %v2602, %v2744
      %v2869 = vadd.f32 %v2603, %v2749
      %v2870 = vadd.f32 %v2604, %v2752
      %v2871 = vadd.f32 %v2605, %v2757
      %v2872 = vadd.f32 %v2606, %v2760
      %v2873 = vadd.f32 %v2607, %v2765
      %v2874 = vadd.f32 %v2608, %v2768
      %v2875 = vadd.f32 %v2609, %v2773
      %v2876 = vadd.f32 %v2610, %v2776
      %v2877 = vadd.f32 %v2611, %v2781
      %v2878 = vadd.f32 %v2612, %v2784
      %v2879 = vadd.f32 %v2613, %v2789
      %v2880 = vadd.f32 %v2614, %v2792
      %v2881 = vadd.f32 %v2615, %v2797
      %v2882 = vadd.f32 %v2616, %v2800
      %v2883 = vadd.f32 %v2617, %v2805
      %v2884 = vadd.f32 %v2618, %v2808
      %v2885 = vadd.f32 %v2619, %v2813
      %v2886 = vadd.f32 %v2620, %v2816
      %v2887 = vadd.f32 %v2621, %v2821
      %v2888 = vadd.f32 %v2622, %v2824
      %v2889 = vadd.f32 %v2623, %v2829
      %v2890 = vadd.f32 %v2624, %v2832
      %v2891 = vadd.f32 %v2625, %v2837
      %v2892 = vadd.f32 %v2626, %v2840
      %v2893 = vadd.f32 %v2627, %v2845
      %v2894 = vadd.f32 %v2628, %v2848
      %v2895 = vadd.f32 %v2629, %v2853
      %v2896 = vadd.f32 %v2630, %v2856
      %v2897 = vadd.f32 %v2631, %v2861
      %v2898 = vadd.f32 %v2632, %v2864
      %v2899 = vld [vmem:[%s2] sm:$0x1]
      %v2901 = vlaneseq
      %v2902 = vshrl.u32 %v2901, 7
      %v2903 = vsub.s32 0, %v2902
      %v2904 = vrot.slane %v2899, %v2903
      %v2906 = vadd.f32 %v2867, %v2904
      %v2907 = vadd.f32 %v2868, %v2904
      %v2908 = vadd.f32 %v2869, %v2904
      %v2909 = vadd.f32 %v2870, %v2904
      %v2910 = vadd.f32 %v2871, %v2904
      %v2911 = vadd.f32 %v2872, %v2904
      %v2912 = vadd.f32 %v2873, %v2904
      %v2913 = vadd.f32 %v2874, %v2904
      %v2914 = vadd.f32 %v2875, %v2904
      %v2915 = vadd.f32 %v2876, %v2904
      %v2916 = vadd.f32 %v2877, %v2904
      %v2917 = vadd.f32 %v2878, %v2904
      %v2918 = vadd.f32 %v2879, %v2904
      %v2919 = vadd.f32 %v2880, %v2904
      %v2920 = vadd.f32 %v2881, %v2904
      %v2921 = vadd.f32 %v2882, %v2904
      %v2922 = vadd.f32 %v2883, %v2904
      %v2923 = vadd.f32 %v2884, %v2904
      %v2924 = vadd.f32 %v2885, %v2904
      %v2925 = vadd.f32 %v2886, %v2904
      %v2926 = vadd.f32 %v2887, %v2904
      %v2927 = vadd.f32 %v2888, %v2904
      %v2928 = vadd.f32 %v2889, %v2904
      %v2929 = vadd.f32 %v2890, %v2904
      %v2930 = vadd.f32 %v2891, %v2904
      %v2931 = vadd.f32 %v2892, %v2904
      %v2932 = vadd.f32 %v2893, %v2904
      %v2933 = vadd.f32 %v2894, %v2904
      %v2934 = vadd.f32 %v2895, %v2904
      %v2935 = vadd.f32 %v2896, %v2904
      %v2936 = vadd.f32 %v2897, %v2904
      %v2937 = vadd.f32 %v2898, %v2904
      %v2938 = vsub.f32 0.0, %v2906
      %v2939 = vsub.f32 0.0, %v2907
      %v2940 = vsub.f32 0.0, %v2908
      %v2941 = vsub.f32 0.0, %v2909
      %v2942 = vsub.f32 0.0, %v2910
      %v2943 = vsub.f32 0.0, %v2911
      %v2944 = vsub.f32 0.0, %v2912
      %v2945 = vsub.f32 0.0, %v2913
      %v2946 = vsub.f32 0.0, %v2914
      %v2947 = vsub.f32 0.0, %v2915
      %v2948 = vsub.f32 0.0, %v2916
      %v2949 = vsub.f32 0.0, %v2917
      %v2950 = vsub.f32 0.0, %v2918
      %v2951 = vsub.f32 0.0, %v2919
      %v2952 = vsub.f32 0.0, %v2920
      %v2953 = vsub.f32 0.0, %v2921
      %v2954 = vsub.f32 0.0, %v2922
      %v2955 = vsub.f32 0.0, %v2923
      %v2956 = vsub.f32 0.0, %v2924
      %v2957 = vsub.f32 0.0, %v2925
      %v2958 = vsub.f32 0.0, %v2926
      %v2959 = vsub.f32 0.0, %v2927
      %v2960 = vsub.f32 0.0, %v2928
      %v2961 = vsub.f32 0.0, %v2929
      %v2962 = vsub.f32 0.0, %v2930
      %v2963 = vsub.f32 0.0, %v2931
      %v2964 = vsub.f32 0.0, %v2932
      %v2965 = vsub.f32 0.0, %v2933
      %v2966 = vsub.f32 0.0, %v2934
      %v2967 = vsub.f32 0.0, %v2935
      %v2968 = vsub.f32 0.0, %v2936
      %v2969 = vsub.f32 0.0, %v2937
      %v2970 = vmul.f32 %v2938, 1.442695
      %v2971 = vpow.pop %v2970
      %v2972 = vmul.f32 %v2939, 1.442695
      %v2973 = vpow.pop %v2972
      %v2974 = vmul.f32 %v2940, 1.442695
      %v2975 = vpow.pop %v2974
      %v2976 = vmul.f32 %v2941, 1.442695
      %v2977 = vpow.pop %v2976
      %v2978 = vmul.f32 %v2942, 1.442695
      %v2979 = vpow.pop %v2978
      %v2980 = vmul.f32 %v2943, 1.442695
      %v2981 = vpow.pop %v2980
      %v2982 = vmul.f32 %v2944, 1.442695
      %v2983 = vpow.pop %v2982
      %v2984 = vmul.f32 %v2945, 1.442695
      %v2985 = vpow.pop %v2984
      %v2986 = vmul.f32 %v2946, 1.442695
      %v2987 = vpow.pop %v2986
      %v2988 = vmul.f32 %v2947, 1.442695
      %v2989 = vpow.pop %v2988
      %v2990 = vmul.f32 %v2948, 1.442695
      %v2991 = vpow.pop %v2990
      %v2992 = vmul.f32 %v2949, 1.442695
      %v2993 = vpow.pop %v2992
      %v2994 = vmul.f32 %v2950, 1.442695
      %v2995 = vpow.pop %v2994
      %v2996 = vmul.f32 %v2951, 1.442695
      %v2997 = vpow.pop %v2996
      %v2998 = vmul.f32 %v2952, 1.442695
      %v2999 = vpow.pop %v2998
      %v3000 = vmul.f32 %v2953, 1.442695
      %v3001 = vpow.pop %v3000
      %v3002 = vmul.f32 %v2954, 1.442695
      %v3003 = vpow.pop %v3002
      %v3004 = vmul.f32 %v2955, 1.442695
      %v3005 = vpow.pop %v3004
      %v3006 = vmul.f32 %v2956, 1.442695
      %v3007 = vpow.pop %v3006
      %v3008 = vmul.f32 %v2957, 1.442695
      %v3009 = vpow.pop %v3008
      %v3010 = vmul.f32 %v2958, 1.442695
      %v3011 = vpow.pop %v3010
      %v3012 = vmul.f32 %v2959, 1.442695
      %v3013 = vpow.pop %v3012
      %v3014 = vmul.f32 %v2960, 1.442695
      %v3015 = vpow.pop %v3014
      %v3016 = vmul.f32 %v2961, 1.442695
      %v3017 = vpow.pop %v3016
      %v3018 = vmul.f32 %v2962, 1.442695
      %v3019 = vpow.pop %v3018
      %v3020 = vmul.f32 %v2963, 1.442695
      %v3021 = vpow.pop %v3020
      %v3022 = vmul.f32 %v2964, 1.442695
      %v3023 = vpow.pop %v3022
      %v3024 = vmul.f32 %v2965, 1.442695
      %v3025 = vpow.pop %v3024
      %v3026 = vmul.f32 %v2966, 1.442695
      %v3027 = vpow.pop %v3026
      %v3028 = vmul.f32 %v2967, 1.442695
      %v3029 = vpow.pop %v3028
      %v3030 = vmul.f32 %v2968, 1.442695
      %v3031 = vpow.pop %v3030
      %v3032 = vmul.f32 %v2969, 1.442695
      %v3033 = vpow.pop %v3032
      %v3034 = vadd.f32 %v2971, 1.0
      %v3035 = vadd.f32 %v2973, 1.0
      %v3036 = vadd.f32 %v2975, 1.0
      %v3037 = vadd.f32 %v2977, 1.0
      %v3038 = vadd.f32 %v2979, 1.0
      %v3039 = vadd.f32 %v2981, 1.0
      %v3040 = vadd.f32 %v2983, 1.0
      %v3041 = vadd.f32 %v2985, 1.0
      %v3042 = vadd.f32 %v2987, 1.0
      %v3043 = vadd.f32 %v2989, 1.0
      %v3044 = vadd.f32 %v2991, 1.0
      %v3045 = vadd.f32 %v2993, 1.0
      %v3046 = vadd.f32 %v2995, 1.0
      %v3047 = vadd.f32 %v2997, 1.0
      %v3048 = vadd.f32 %v2999, 1.0
      %v3049 = vadd.f32 %v3001, 1.0
      %v3050 = vadd.f32 %v3003, 1.0
      %v3051 = vadd.f32 %v3005, 1.0
      %v3052 = vadd.f32 %v3007, 1.0
      %v3053 = vadd.f32 %v3009, 1.0
      %v3054 = vadd.f32 %v3011, 1.0
      %v3055 = vadd.f32 %v3013, 1.0
      %v3056 = vadd.f32 %v3015, 1.0
      %v3057 = vadd.f32 %v3017, 1.0
      %v3058 = vadd.f32 %v3019, 1.0
      %v3059 = vadd.f32 %v3021, 1.0
      %v3060 = vadd.f32 %v3023, 1.0
      %v3061 = vadd.f32 %v3025, 1.0
      %v3062 = vadd.f32 %v3027, 1.0
      %v3063 = vadd.f32 %v3029, 1.0
      %v3064 = vadd.f32 %v3031, 1.0
      %v3065 = vadd.f32 %v3033, 1.0
      %v3066 = vrcp.pop %v3034
      %v3067 = vrcp.pop %v3035
      %v3068 = vrcp.pop %v3036
      %v3069 = vrcp.pop %v3037
      %v3070 = vrcp.pop %v3038
      %v3071 = vrcp.pop %v3039
      %v3072 = vrcp.pop %v3040
      %v3073 = vrcp.pop %v3041
      %v3074 = vrcp.pop %v3042
      %v3075 = vrcp.pop %v3043
      %v3076 = vrcp.pop %v3044
      %v3077 = vrcp.pop %v3045
      %v3078 = vrcp.pop %v3046
      %v3079 = vrcp.pop %v3047
      %v3080 = vrcp.pop %v3048
      %v3081 = vrcp.pop %v3049
      %v3082 = vrcp.pop %v3050
      %v3083 = vrcp.pop %v3051
      %v3084 = vrcp.pop %v3052
      %v3085 = vrcp.pop %v3053
      %v3086 = vrcp.pop %v3054
      %v3087 = vrcp.pop %v3055
      %v3088 = vrcp.pop %v3056
      %v3089 = vrcp.pop %v3057
      %v3090 = vrcp.pop %v3058
      %v3091 = vrcp.pop %v3059
      %v3092 = vrcp.pop %v3060
      %v3093 = vrcp.pop %v3061
      %v3094 = vrcp.pop %v3062
      %v3095 = vrcp.pop %v3063
      %v3096 = vrcp.pop %v3064
      %v3097 = vrcp.pop %v3065
      %v3098 = vmul.f32 %v2906, %v3066
      %v3099 = vmul.f32 %v2907, %v3067
      %v3100 = vmul.f32 %v2908, %v3068
      %v3101 = vmul.f32 %v2909, %v3069
      %v3102 = vmul.f32 %v2910, %v3070
      %v3103 = vmul.f32 %v2911, %v3071
      %v3104 = vmul.f32 %v2912, %v3072
      %v3105 = vmul.f32 %v2913, %v3073
      %v3106 = vmul.f32 %v2914, %v3074
      %v3107 = vmul.f32 %v2915, %v3075
      %v3108 = vmul.f32 %v2916, %v3076
      %v3109 = vmul.f32 %v2917, %v3077
      %v3110 = vmul.f32 %v2918, %v3078
      %v3111 = vmul.f32 %v2919, %v3079
      %v3112 = vmul.f32 %v2920, %v3080
      %v3113 = vmul.f32 %v2921, %v3081
      %v3114 = vmul.f32 %v2922, %v3082
      %v3115 = vmul.f32 %v2923, %v3083
      %v3116 = vmul.f32 %v2924, %v3084
      %v3117 = vmul.f32 %v2925, %v3085
      %v3118 = vmul.f32 %v2926, %v3086
      %v3119 = vmul.f32 %v2927, %v3087
      %v3120 = vmul.f32 %v2928, %v3088
      %v3121 = vmul.f32 %v2929, %v3089
      %v3122 = vmul.f32 %v2930, %v3090
      %v3123 = vmul.f32 %v2931, %v3091
      %v3124 = vmul.f32 %v2932, %v3092
      %v3125 = vmul.f32 %v2933, %v3093
      %v3126 = vmul.f32 %v2934, %v3094
      %v3127 = vmul.f32 %v2935, %v3095
      %v3128 = vmul.f32 %v2936, %v3096
      %v3129 = vmul.f32 %v2937, %v3097
      %v3130 = vadd.f32 %v3098, %v368
      %v3131 = vadd.f32 %v3099, %v370
      %v3132 = vadd.f32 %v3100, %v373
      %v3133 = vadd.f32 %v3101, %v375
      %v3134 = vadd.f32 %v3102, %v378
      %v3135 = vadd.f32 %v3103, %v380
      %v3136 = vadd.f32 %v3104, %v383
      %v3137 = vadd.f32 %v3105, %v385
      %v3138 = vadd.f32 %v3106, %v388
      %v3139 = vadd.f32 %v3107, %v390
      %v3140 = vadd.f32 %v3108, %v393
      %v3141 = vadd.f32 %v3109, %v395
      %v3142 = vadd.f32 %v3110, %v398
      %v3143 = vadd.f32 %v3111, %v400
      %v3144 = vadd.f32 %v3112, %v403
      %v3145 = vadd.f32 %v3113, %v405
      %v3146 = vadd.f32 %v3114, %v408
      %v3147 = vadd.f32 %v3115, %v410
      %v3148 = vadd.f32 %v3116, %v413
      %v3149 = vadd.f32 %v3117, %v415
      %v3150 = vadd.f32 %v3118, %v418
      %v3151 = vadd.f32 %v3119, %v420
      %v3152 = vadd.f32 %v3120, %v423
      %v3153 = vadd.f32 %v3121, %v425
      %v3154 = vadd.f32 %v3122, %v428
      %v3155 = vadd.f32 %v3123, %v430
      %v3156 = vadd.f32 %v3124, %v433
      %v3157 = vadd.f32 %v3125, %v435
      %v3158 = vadd.f32 %v3126, %v438
      %v3159 = vadd.f32 %v3127, %v440
      %v3160 = vadd.f32 %v3128, %v1575
      %v3161 = vadd.f32 %v3129, %v1577
      %v3162 = vpack.c.bf16 %v3131, %v3130
      %v3163 = vpack.c.bf16 %v3133, %v3132
      %v3164 = vpack.c.bf16 %v3135, %v3134
      %v3165 = vpack.c.bf16 %v3137, %v3136
      %v3166 = vpack.c.bf16 %v3139, %v3138
      %v3167 = vpack.c.bf16 %v3141, %v3140
      %v3168 = vpack.c.bf16 %v3143, %v3142
      %v3169 = vpack.c.bf16 %v3145, %v3144
      %v3170 = vpack.c.bf16 %v3147, %v3146
      %v3171 = vpack.c.bf16 %v3149, %v3148
      %v3172 = vpack.c.bf16 %v3151, %v3150
      %v3173 = vpack.c.bf16 %v3153, %v3152
      %v3174 = vpack.c.bf16 %v3155, %v3154
      %v3175 = vpack.c.bf16 %v3157, %v3156
      %v3176 = vpack.c.bf16 %v3159, %v3158
      %v3177 = vpack.c.bf16 %v3161, %v3160
      %v3194 = vunpack.c.l.b16 %v3162
      %v3195 = vunpack.c.h.b16 %v3162
      %v3196 = vunpack.c.l.b16 %v3163
      %v3197 = vunpack.c.h.b16 %v3163
      %v3198 = vunpack.c.l.b16 %v3164
      %v3199 = vunpack.c.h.b16 %v3164
      %v3200 = vunpack.c.l.b16 %v3165
      %v3201 = vunpack.c.h.b16 %v3165
      %v3202 = vunpack.c.l.b16 %v3166
      %v3203 = vunpack.c.h.b16 %v3166
      %v3204 = vunpack.c.l.b16 %v3167
      %v3205 = vunpack.c.h.b16 %v3167
      %v3206 = vunpack.c.l.b16 %v3168
      %v3207 = vunpack.c.h.b16 %v3168
      %v3208 = vunpack.c.l.b16 %v3169
      %v3209 = vunpack.c.h.b16 %v3169
      %v3210 = vunpack.c.l.b16 %v3170
      %v3211 = vunpack.c.h.b16 %v3170
      %v3212 = vunpack.c.l.b16 %v3171
      %v3213 = vunpack.c.h.b16 %v3171
      %v3214 = vunpack.c.l.b16 %v3172
      %v3215 = vunpack.c.h.b16 %v3172
      %v3216 = vunpack.c.l.b16 %v3173
      %v3217 = vunpack.c.h.b16 %v3173
      %v3218 = vunpack.c.l.b16 %v3174
      %v3219 = vunpack.c.h.b16 %v3174
      %v3220 = vunpack.c.l.b16 %v3175
      %v3221 = vunpack.c.h.b16 %v3175
      %v3222 = vunpack.c.l.b16 %v3176
      %v3223 = vunpack.c.h.b16 %v3176
      %v3224 = vunpack.c.l.b16 %v3177
      %v3225 = vunpack.c.h.b16 %v3177
      %v3226 = vpack.c.b16 %v3194, %v3194
      %v3227 = vpack.c.b16 %v3195, %v3195
      %v3228 = vpack.c.b16 %v3196, %v3196
      %v3229 = vpack.c.b16 %v3197, %v3197
      %v3230 = vpack.c.b16 %v3198, %v3198
      %v3231 = vpack.c.b16 %v3199, %v3199
      %v3232 = vpack.c.b16 %v3200, %v3200
      %v3233 = vpack.c.b16 %v3201, %v3201
      %v3234 = vpack.c.b16 %v3202, %v3202
      %v3235 = vpack.c.b16 %v3203, %v3203
      %v3236 = vpack.c.b16 %v3204, %v3204
      %v3237 = vpack.c.b16 %v3205, %v3205
      %v3238 = vpack.c.b16 %v3206, %v3206
      %v3239 = vpack.c.b16 %v3207, %v3207
      %v3240 = vpack.c.b16 %v3208, %v3208
      %v3241 = vpack.c.b16 %v3209, %v3209
      %v3242 = vpack.c.b16 %v3210, %v3210
      %v3243 = vpack.c.b16 %v3211, %v3211
      %v3244 = vpack.c.b16 %v3212, %v3212
      %v3245 = vpack.c.b16 %v3213, %v3213
      %v3246 = vpack.c.b16 %v3214, %v3214
      %v3247 = vpack.c.b16 %v3215, %v3215
      %v3248 = vpack.c.b16 %v3216, %v3216
      %v3249 = vpack.c.b16 %v3217, %v3217
      %v3250 = vpack.c.b16 %v3218, %v3218
      %v3251 = vpack.c.b16 %v3219, %v3219
      %v3252 = vpack.c.b16 %v3220, %v3220
      %v3253 = vpack.c.b16 %v3221, %v3221
      %v3254 = vpack.c.b16 %v3222, %v3222
      %v3255 = vpack.c.b16 %v3223, %v3223
      %v3256 = vpack.c.b16 %v3224, %v3224
      %v3257 = vpack.c.b16 %v3225, %v3225
      %3290 = vst [vmem:[%s170] sm:$0xf] %v3226
      %3291 = vst [vmem:[%s170 + $0x4] sm:$0xf] %v3227
      %3292 = vst [vmem:[%s170 + $0x8] sm:$0xf] %v3228
      %3293 = vst [vmem:[%s170 + $0xc] sm:$0xf] %v3229
      %3294 = vst [vmem:[%s170 + $0x10] sm:$0xf] %v3230
      %3295 = vst [vmem:[%s170 + $0x14] sm:$0xf] %v3231
      %3296 = vst [vmem:[%s170 + $0x18] sm:$0xf] %v3232
      %3297 = vst [vmem:[%s170 + $0x1c] sm:$0xf] %v3233
      %3298 = vst [vmem:[%s170 + $0x20] sm:$0xf] %v3234
      %3299 = vst [vmem:[%s170 + $0x24] sm:$0xf] %v3235
      %3300 = vst [vmem:[%s170 + $0x28] sm:$0xf] %v3236
      %3301 = vst [vmem:[%s170 + $0x2c] sm:$0xf] %v3237
      %3302 = vst [vmem:[%s170 + $0x30] sm:$0xf] %v3238
      %3303 = vst [vmem:[%s170 + $0x34] sm:$0xf] %v3239
      %3304 = vst [vmem:[%s170 + $0x38] sm:$0xf] %v3240
      %3305 = vst [vmem:[%s170 + $0x3c] sm:$0xf] %v3241
      %3306 = vst [vmem:[%s170 + $0x40] sm:$0xf] %v3242
      %3307 = vst [vmem:[%s170 + $0x44] sm:$0xf] %v3243
      %3308 = vst [vmem:[%s170 + $0x48] sm:$0xf] %v3244
      %3309 = vst [vmem:[%s170 + $0x4c] sm:$0xf] %v3245
      %3310 = vst [vmem:[%s170 + $0x50] sm:$0xf] %v3246
      %3311 = vst [vmem:[%s170 + $0x54] sm:$0xf] %v3247
      %3312 = vst [vmem:[%s170 + $0x58] sm:$0xf] %v3248
      %3313 = vst [vmem:[%s170 + $0x5c] sm:$0xf] %v3249
      %3314 = vst [vmem:[%s170 + $0x60] sm:$0xf] %v3250
      %3315 = vst [vmem:[%s170 + $0x64] sm:$0xf] %v3251
      %3316 = vst [vmem:[%s170 + $0x68] sm:$0xf] %v3252
      %3317 = vst [vmem:[%s170 + $0x6c] sm:$0xf] %v3253
      %3318 = vst [vmem:[%s170 + $0x70] sm:$0xf] %v3254
      %3319 = vst [vmem:[%s170 + $0x74] sm:$0xf] %v3255
      %3320 = vst [vmem:[%s170 + $0x78] sm:$0xf] %v3256
      %3321 = vst [vmem:[%s170 + $0x7c] sm:$0xf] %v3257
      %p3322 = scmp.lt.s32.totalorder %s14, 1
      %s3323 = scalar_select %p3322, %s14, 1
      %s3324 = smul.addr %s3323, 32
      %s3325 = smul.addr %s3324, 4
      %s3326 = scalar_lea.vmem %s3, %s3325
      // Predicated region
      $region33: #{efficientnetv2_forward.5} parent=31 // pred_check
        %p3327 = pneg %p100
      $region34: #{efficientnetv2_forward.5} parent=31 // pred_check_branch
        %3329 = sbr.rel (%p3327) target = $region36
      $region35: #{efficientnetv2_forward.5} parent=31 // pred_region
        _
      $region36: #{efficientnetv2_forward.5} parent=31 // pred_fallthru
        _
    $region32: #{efficientnetv2_forward.5} parent=5 // pred_fallthru
      _
    %p3330 = scmp.le.s32.totalorder 2, %s9
    // Predicated region
    $region37: #{efficientnetv2_forward.5} parent=5 // pred_check
      %p3331 = pneg %p3330
    $region38: #{efficientnetv2_forward.5} parent=5 // pred_check_branch
      %3333 = sbr.rel (%p3331) target = $region40
    $region39: #{efficientnetv2_forward.5} parent=5 // pred_region
      %s3334 = ssub.s32 %s9, 2
      // Predicated region
      $region41: #{efficientnetv2_forward.5} parent=39 // pred_check
        %p3335 = pneg %p106
      $region42: #{efficientnetv2_forward.5} parent=39 // pred_check_branch
        %3337 = sbr.rel (%p3335) target = $region44
      $region43: #{efficientnetv2_forward.5} parent=39 // pred_region
        %p3338 = scmp.lt.s32.totalorder %s15, 1
        %s3339 = scalar_select %p3338, %s15, 1
        %s3340 = smul.addr %s3339, 32
        %s3341 = smul.addr %s3340, 4
        %s3342 = scalar_lea.vmem %s3, %s3341
      $region44: #{efficientnetv2_forward.5} parent=39 // pred_fallthru
        _
    $region40: #{efficientnetv2_forward.5} parent=5 // pred_fallthru
      _
  $region6: #{efficientnetv2_forward.5} parent=0 // loop_footer
    %s13 = sadd.s32 1, %s9
  $region7: #{efficientnetv2_forward.5} parent=0 // loop_footer_branch
    %8 = sbr.rel target = $region3
  $region8: #{efficientnetv2_forward.5} parent=0 // loop_exit
    _

// kernel: efficientnetv2_forward.6
$region0: #{efficientnetv2_forward.6}
  #allocation0 [shape = 'u32[]', space=smem, size = 0x4, offset = 0x4, fixed_abs, tag = 'smem constant byte address 0x4 - core index']
  #allocation1 [shape = 'u32[144,128]{1,0:T(1,128)}', space=vmem, size = 0x12000, scoped, tag = 'internal scratch']
  %s0 = inlined_call_operand.vmem [shape: bf16[2,9,9,128], index: 0, kind: input, shape index: {}]
  %s1 = inlined_call_operand.vmem [shape: bf16[2,9,9,128], index: 1, kind: input, shape index: {}]
  %s2 = inlined_call_operand.vmem [shape: bf16[2,9,9,128], index: 2, kind: input, shape index: {}]
  %s3 = inlined_call_operand.vmem [shape: bf16[2,9,9,128], index: 3, kind: input, shape index: {}]
  %s4 = inlined_call_operand.vmem [shape: bf16[9,128,128], index: 4, kind: input, shape index: {}]
  %s5 = inlined_call_operand.vmem [shape: f32[1,128], index: 5, kind: input, shape index: {}]
  %s6 = inlined_call_operand.vmem [shape: bf16[128,128], index: 6, kind: input, shape index: {}]
  %s7 = inlined_call_operand.vmem [shape: f32[1,128], index: 7, kind: input, shape index: {}]
  %s8 = inlined_call_operand.vmem [shape: bf16[2,64,128], index: 8, kind: output, shape index: {}]
  %s9 = sld [smem:[#allocation0]]
  $region65: #{efficientnetv2_forward.6} parent=0
    _
  %s11 = ssub.s32 1, %s9
  %s12 = scalar_select 0, %s11, %s9
  loop: start=0, step=1, limit=4
  $region2: #{efficientnetv2_forward.6} parent=0 // loop_pre_header
    _
  $region3: #{efficientnetv2_forward.6} parent=0 // loop_header
    %s14 = sphi 0, %s18
    %p15 = scmp.ge.s32.totalorder %s14, 4
    %s24 = sphi 0, %s26
    %s27 = sphi 0, %s24
    %s28 = sphi 0, %s27
    %s44 = sphi 0, %s28
    %s50 = sphi 0, %s52
    %s53 = sphi 0, %s50
    %s54 = sphi 0, %s53
    %s70 = sphi 0, %s54
    %s76 = sphi 0, %s78
    %s79 = sphi 0, %s76
    %s80 = sphi 0, %s79
    %s96 = sphi 0, %s80
    %s102 = sphi 0, %s104
    %s105 = sphi 0, %s102
    %s106 = sphi 0, %s105
    %s122 = sphi 0, %s106
    %s126 = sphi 0, %s126
    %s128 = sphi 0, %s126
    %s129 = sphi 0, %s128
    %s143 = sphi 0, %s129
    %s147 = sphi 0, %s147
    %s149 = sphi 0, %s147
    %s150 = sphi 0, %s149
    %s164 = sphi 0, %s150
    %s168 = sphi 0, %s168
    %s170 = sphi 0, %s168
    %s171 = sphi 0, %s170
    %s185 = sphi 0, %s171
    %s189 = sphi 0, %s189
    %s191 = sphi 0, %s189
    %s192 = sphi 0, %s191
    %s206 = sphi 0, %s192
    %s212 = sphi 0, %s214
    %s215 = sphi 0, %s212
    %s216 = sphi 0, %s215
    %s232 = sphi 0, %s216
  $region4: #{efficientnetv2_forward.6} parent=0 // loop_header_branch
    %17 = sbr.rel (%p15) target = $region8
  $region5: #{efficientnetv2_forward.6} parent=0 // loop_body
    %s19 = ssub.s32 %s14, 1
    %s20 = ssub.s32 %s14, 2
    %s21 = sadd.s32 %s14, 1
    %s22 = ssub.s32 %s14, %s21
    %p23 = scmp.eq.s32.totalorder %s22, 0
    %s25 = sadd.s32 %s24, 1
    %s26 = scalar_select %p23, %s24, %s25
    %p29 = pneg %p23
    %p30 = scmp.eq.s32.totalorder %s14, 1
    %p31 = por %p29, %p30
    %p32 = scmp.ne.s32.totalorder %s24, %s27
    %p33 = scmp.eq.s32.totalorder %s14, 0
    %p34 = por %p32, %p33
    %p35 = scmp.ne.s32.totalorder %s24, %s27
    %p36 = scmp.eq.s32.totalorder %s19, 1
    %p37 = por %p35, %p36
    %p38 = scmp.ne.s32.totalorder %s27, %s28
    %p39 = scmp.eq.s32.totalorder %s19, 0
    %p40 = por %p38, %p39
    %p41 = scmp.ne.s32.totalorder %s27, %s28
    %p42 = scmp.eq.s32.totalorder %s20, 1
    %p43 = por %p41, %p42
    %p45 = scmp.ne.s32.totalorder %s28, %s44
    %p46 = scmp.eq.s32.totalorder %s20, 0
    %p47 = por %p45, %p46
    %s48 = ssub.s32 %s14, %s21
    %p49 = scmp.eq.s32.totalorder %s48, 0
    %s51 = sadd.s32 %s50, 1
    %s52 = scalar_select %p49, %s50, %s51
    %p55 = pneg %p49
    %p56 = scmp.eq.s32.totalorder %s14, 1
    %p57 = por %p55, %p56
    %p58 = scmp.ne.s32.totalorder %s50, %s53
    %p59 = scmp.eq.s32.totalorder %s14, 0
    %p60 = por %p58, %p59
    %p61 = scmp.ne.s32.totalorder %s50, %s53
    %p62 = scmp.eq.s32.totalorder %s19, 1
    %p63 = por %p61, %p62
    %p64 = scmp.ne.s32.totalorder %s53, %s54
    %p65 = scmp.eq.s32.totalorder %s19, 0
    %p66 = por %p64, %p65
    %p67 = scmp.ne.s32.totalorder %s53, %s54
    %p68 = scmp.eq.s32.totalorder %s20, 1
    %p69 = por %p67, %p68
    %p71 = scmp.ne.s32.totalorder %s54, %s70
    %p72 = scmp.eq.s32.totalorder %s20, 0
    %p73 = por %p71, %p72
    %s74 = ssub.s32 %s14, %s21
    %p75 = scmp.eq.s32.totalorder %s74, 0
    %s77 = sadd.s32 %s76, 1
    %s78 = scalar_select %p75, %s76, %s77
    %p81 = pneg %p75
    %p82 = scmp.eq.s32.totalorder %s14, 1
    %p83 = por %p81, %p82
    %p84 = scmp.ne.s32.totalorder %s76, %s79
    %p85 = scmp.eq.s32.totalorder %s14, 0
    %p86 = por %p84, %p85
    %p87 = scmp.ne.s32.totalorder %s76, %s79
    %p88 = scmp.eq.s32.totalorder %s19, 1
    %p89 = por %p87, %p88
    %p90 = scmp.ne.s32.totalorder %s79, %s80
    %p91 = scmp.eq.s32.totalorder %s19, 0
    %p92 = por %p90, %p91
    %p93 = scmp.ne.s32.totalorder %s79, %s80
    %p94 = scmp.eq.s32.totalorder %s20, 1
    %p95 = por %p93, %p94
    %p97 = scmp.ne.s32.totalorder %s80, %s96
    %p98 = scmp.eq.s32.totalorder %s20, 0
    %p99 = por %p97, %p98
    %s100 = ssub.s32 %s14, %s21
    %p101 = scmp.eq.s32.totalorder %s100, 0
    %s103 = sadd.s32 %s102, 1
    %s104 = scalar_select %p101, %s102, %s103
    %p107 = pneg %p101
    %p108 = scmp.eq.s32.totalorder %s14, 1
    %p109 = por %p107, %p108
    %p110 = scmp.ne.s32.totalorder %s102, %s105
    %p111 = scmp.eq.s32.totalorder %s14, 0
    %p112 = por %p110, %p111
    %p113 = scmp.ne.s32.totalorder %s102, %s105
    %p114 = scmp.eq.s32.totalorder %s19, 1
    %p115 = por %p113, %p114
    %p116 = scmp.ne.s32.totalorder %s105, %s106
    %p117 = scmp.eq.s32.totalorder %s19, 0
    %p118 = por %p116, %p117
    %p119 = scmp.ne.s32.totalorder %s105, %s106
    %p120 = scmp.eq.s32.totalorder %s20, 1
    %p121 = por %p119, %p120
    %p123 = scmp.ne.s32.totalorder %s106, %s122
    %p124 = scmp.eq.s32.totalorder %s20, 0
    %p125 = por %p123, %p124
    %s127 = sadd.s32 %s126, 1
    %p130 = scmp.eq.s32.totalorder %s14, 1
    %p131 = scmp.ne.s32.totalorder %s126, %s128
    %p132 = scmp.eq.s32.totalorder %s14, 0
    %p133 = por %p131, %p132
    %p134 = scmp.ne.s32.totalorder %s126, %s128
    %p135 = scmp.eq.s32.totalorder %s19, 1
    %p136 = por %p134, %p135
    %p137 = scmp.ne.s32.totalorder %s128, %s129
    %p138 = scmp.eq.s32.totalorder %s19, 0
    %p139 = por %p137, %p138
    %p140 = scmp.ne.s32.totalorder %s128, %s129
    %p141 = scmp.eq.s32.totalorder %s20, 1
    %p142 = por %p140, %p141
    %p144 = scmp.ne.s32.totalorder %s129, %s143
    %p145 = scmp.eq.s32.totalorder %s20, 0
    %p146 = por %p144, %p145
    %s148 = sadd.s32 %s147, 1
    %p151 = scmp.eq.s32.totalorder %s14, 1
    %p152 = scmp.ne.s32.totalorder %s147, %s149
    %p153 = scmp.eq.s32.totalorder %s14, 0
    %p154 = por %p152, %p153
    %p155 = scmp.ne.s32.totalorder %s147, %s149
    %p156 = scmp.eq.s32.totalorder %s19, 1
    %p157 = por %p155, %p156
    %p158 = scmp.ne.s32.totalorder %s149, %s150
    %p159 = scmp.eq.s32.totalorder %s19, 0
    %p160 = por %p158, %p159
    %p161 = scmp.ne.s32.totalorder %s149, %s150
    %p162 = scmp.eq.s32.totalorder %s20, 1
    %p163 = por %p161, %p162
    %p165 = scmp.ne.s32.totalorder %s150, %s164
    %p166 = scmp.eq.s32.totalorder %s20, 0
    %p167 = por %p165, %p166
    %s169 = sadd.s32 %s168, 1
    %p172 = scmp.eq.s32.totalorder %s14, 1
    %p173 = scmp.ne.s32.totalorder %s168, %s170
    %p174 = scmp.eq.s32.totalorder %s14, 0
    %p175 = por %p173, %p174
    %p176 = scmp.ne.s32.totalorder %s168, %s170
    %p177 = scmp.eq.s32.totalorder %s19, 1
    %p178 = por %p176, %p177
    %p179 = scmp.ne.s32.totalorder %s170, %s171
    %p180 = scmp.eq.s32.totalorder %s19, 0
    %p181 = por %p179, %p180
    %p182 = scmp.ne.s32.totalorder %s170, %s171
    %p183 = scmp.eq.s32.totalorder %s20, 1
    %p184 = por %p182, %p183
    %p186 = scmp.ne.s32.totalorder %s171, %s185
    %p187 = scmp.eq.s32.totalorder %s20, 0
    %p188 = por %p186, %p187
    %s190 = sadd.s32 %s189, 1
    %p193 = scmp.eq.s32.totalorder %s14, 1
    %p194 = scmp.ne.s32.totalorder %s189, %s191
    %p195 = scmp.eq.s32.totalorder %s14, 0
    %p196 = por %p194, %p195
    %p197 = scmp.ne.s32.totalorder %s189, %s191
    %p198 = scmp.eq.s32.totalorder %s19, 1
    %p199 = por %p197, %p198
    %p200 = scmp.ne.s32.totalorder %s191, %s192
    %p201 = scmp.eq.s32.totalorder %s19, 0
    %p202 = por %p200, %p201
    %p203 = scmp.ne.s32.totalorder %s191, %s192
    %p204 = scmp.eq.s32.totalorder %s20, 1
    %p205 = por %p203, %p204
    %p207 = scmp.ne.s32.totalorder %s192, %s206
    %p208 = scmp.eq.s32.totalorder %s20, 0
    %p209 = por %p207, %p208
    %s210 = ssub.s32 %s14, %s21
    %p211 = scmp.eq.s32.totalorder %s210, 0
    %s213 = sadd.s32 %s212, 1
    %s214 = scalar_select %p211, %s212, %s213
    %p217 = pneg %p211
    %p218 = scmp.eq.s32.totalorder %s14, 1
    %p219 = por %p217, %p218
    %p220 = scmp.ne.s32.totalorder %s212, %s215
    %p221 = scmp.eq.s32.totalorder %s14, 0
    %p222 = por %p220, %p221
    %p223 = scmp.ne.s32.totalorder %s212, %s215
    %p224 = scmp.eq.s32.totalorder %s19, 1
    %p225 = por %p223, %p224
    %p226 = scmp.ne.s32.totalorder %s215, %s216
    %p227 = scmp.eq.s32.totalorder %s19, 0
    %p228 = por %p226, %p227
    %p229 = scmp.ne.s32.totalorder %s215, %s216
    %p230 = scmp.eq.s32.totalorder %s20, 1
    %p231 = por %p229, %p230
    %p233 = scmp.ne.s32.totalorder %s216, %s232
    %p234 = scmp.eq.s32.totalorder %s20, 0
    %p235 = por %p233, %p234
    %p236 = scmp.le.s32.totalorder 1, %s14
    %p237 = scmp.lt.s32.totalorder %s14, 3
    %p238 = pnand %p236, %p237
    %p239 = pneg %p238
    // Predicated region
    $region9: #{efficientnetv2_forward.6} parent=5 // pred_check
      _
    $region10: #{efficientnetv2_forward.6} parent=5 // pred_check_branch
      %241 = sbr.rel (%p238) target = $region12
    $region11: #{efficientnetv2_forward.6} parent=5 // pred_region
      %s242 = ssub.s32 %s14, 1
      // Predicated region
      $region13: #{efficientnetv2_forward.6} parent=11 // pred_check
        %p243 = pneg %p139
      $region14: #{efficientnetv2_forward.6} parent=11 // pred_check_branch
        %245 = sbr.rel (%p243) target = $region16
      $region15: #{efficientnetv2_forward.6} parent=11 // pred_region
        _
      $region16: #{efficientnetv2_forward.6} parent=11 // pred_fallthru
        _
      // Predicated region
      $region17: #{efficientnetv2_forward.6} parent=11 // pred_check
        %p246 = pneg %p160
      $region18: #{efficientnetv2_forward.6} parent=11 // pred_check_branch
        %248 = sbr.rel (%p246) target = $region20
      $region19: #{efficientnetv2_forward.6} parent=11 // pred_region
        _
      $region20: #{efficientnetv2_forward.6} parent=11 // pred_fallthru
        _
      // Predicated region
      $region21: #{efficientnetv2_forward.6} parent=11 // pred_check
        %p249 = pneg %p181
      $region22: #{efficientnetv2_forward.6} parent=11 // pred_check_branch
        %251 = sbr.rel (%p249) target = $region24
      $region23: #{efficientnetv2_forward.6} parent=11 // pred_region
        _
      $region24: #{efficientnetv2_forward.6} parent=11 // pred_fallthru
        _
      // Predicated region
      $region25: #{efficientnetv2_forward.6} parent=11 // pred_check
        %p252 = pneg %p202
      $region26: #{efficientnetv2_forward.6} parent=11 // pred_check_branch
        %254 = sbr.rel (%p252) target = $region28
      $region27: #{efficientnetv2_forward.6} parent=11 // pred_region
        _
      $region28: #{efficientnetv2_forward.6} parent=11 // pred_fallthru
        _
    $region12: #{efficientnetv2_forward.6} parent=5 // pred_fallthru
      _
    %p255 = scmp.lt.s32.totalorder %s14, 2
    // Predicated region
    $region29: #{efficientnetv2_forward.6} parent=5 // pred_check
      %p256 = pneg %p255
    $region30: #{efficientnetv2_forward.6} parent=5 // pred_check_branch
      %258 = sbr.rel (%p256) target = $region32
    $region31: #{efficientnetv2_forward.6} parent=5 // pred_region
      // Predicated region
      $region33: #{efficientnetv2_forward.6} parent=31 // pred_check
        %p259 = pneg %p34
      $region34: #{efficientnetv2_forward.6} parent=31 // pred_check_branch
        %261 = sbr.rel (%p259) target = $region36
      $region35: #{efficientnetv2_forward.6} parent=31 // pred_region
        %p262 = scmp.lt.s32.totalorder %s14, 1
        %s263 = scalar_select %p262, %s14, 1
        %s264 = smul.addr %s263, 18
        %s265 = smul.addr %s264, 4
        %s266 = scalar_lea.vmem %s0, %s265
      $region36: #{efficientnetv2_forward.6} parent=31 // pred_fallthru
        _
      // Predicated region
      $region37: #{efficientnetv2_forward.6} parent=31 // pred_check
        %p267 = pneg %p60
      $region38: #{efficientnetv2_forward.6} parent=31 // pred_check_branch
        %269 = sbr.rel (%p267) target = $region40
      $region39: #{efficientnetv2_forward.6} parent=31 // pred_region
        %p270 = scmp.lt.s32.totalorder %s14, 1
        %s271 = scalar_select %p270, %s14, 1
        %s272 = smul.addr %s271, 18
        %s273 = smul.addr %s272, 4
        %s274 = scalar_lea.vmem %s1, %s273
      $region40: #{efficientnetv2_forward.6} parent=31 // pred_fallthru
        _
      // Predicated region
      $region41: #{efficientnetv2_forward.6} parent=31 // pred_check
        %p275 = pneg %p86
      $region42: #{efficientnetv2_forward.6} parent=31 // pred_check_branch
        %277 = sbr.rel (%p275) target = $region44
      $region43: #{efficientnetv2_forward.6} parent=31 // pred_region
        %p278 = scmp.lt.s32.totalorder %s14, 1
        %s279 = scalar_select %p278, %s14, 1
        %s280 = smul.addr %s279, 18
        %s281 = smul.addr %s280, 4
        %s282 = scalar_lea.vmem %s2, %s281
      $region44: #{efficientnetv2_forward.6} parent=31 // pred_fallthru
        _
      // Predicated region
      $region45: #{efficientnetv2_forward.6} parent=31 // pred_check
        %p283 = pneg %p112
      $region46: #{efficientnetv2_forward.6} parent=31 // pred_check_branch
        %285 = sbr.rel (%p283) target = $region48
      $region47: #{efficientnetv2_forward.6} parent=31 // pred_region
        %p286 = scmp.lt.s32.totalorder %s14, 1
        %s287 = scalar_select %p286, %s14, 1
        %s288 = smul.addr %s287, 18
        %s289 = smul.addr %s288, 4
        %s290 = scalar_lea.vmem %s3, %s289
      $region48: #{efficientnetv2_forward.6} parent=31 // pred_fallthru
        _
    $region32: #{efficientnetv2_forward.6} parent=5 // pred_fallthru
      _
    %p291 = scmp.le.s32.totalorder 1, %s14
    %p292 = scmp.lt.s32.totalorder %s14, 3
    %p293 = pnand %p291, %p292
    %p294 = pneg %p293
    // Predicated region
    $region49: #{efficientnetv2_forward.6} parent=5 // pred_check
      _
    $region50: #{efficientnetv2_forward.6} parent=5 // pred_check_branch
      %296 = sbr.rel (%p293) target = $region52
    $region51: #{efficientnetv2_forward.6} parent=5 // pred_region
      %s297 = ssub.s32 %s14, 1
      %p298 = scmp.lt.s32.totalorder %s19, 1
      %s299 = scalar_select %p298, %s19, 1
      %s300 = smul.addr %s299, 18
      %s301 = smul.addr %s300, 4
      %s302 = scalar_lea.vmem %s0, %s301
      %p303 = pneg %p40
      %p304 = pneg %p37
      %p305 = scmp.lt.s32.totalorder %s19, 1
      %s306 = scalar_select %p305, %s19, 1
      %s307 = smul.addr %s306, 18
      %s308 = smul.addr %s307, 4
      %s309 = scalar_lea.vmem %s1, %s308
      %p310 = pneg %p66
      %p311 = pneg %p63
      %p312 = scmp.lt.s32.totalorder %s19, 1
      %s313 = scalar_select %p312, %s19, 1
      %s314 = smul.addr %s313, 18
      %s315 = smul.addr %s314, 4
      %s316 = scalar_lea.vmem %s2, %s315
      %p317 = pneg %p92
      %p318 = pneg %p89
      %p319 = scmp.lt.s32.totalorder %s19, 1
      %s320 = scalar_select %p319, %s19, 1
      %s321 = smul.addr %s320, 18
      %s322 = smul.addr %s321, 4
      %s323 = scalar_lea.vmem %s3, %s322
      %p324 = pneg %p118
      %p325 = pneg %p115
      %p326 = pneg %p139
      %p327 = pneg %p136
      %p328 = pneg %p160
      %p329 = pneg %p157
      %p330 = pneg %p181
      %p331 = pneg %p178
      %p332 = pneg %p202
      %p333 = pneg %p199
      %p334 = pneg %p228
      %p335 = pneg %p225
      %p336 = scmp.lt.s32.totalorder %s19, 1
      %s337 = scalar_select %p336, %s19, 1
      %s338 = smul.addr %s337, 8
      %s339 = smul.addr %s338, 4
      %s340 = scalar_lea.vmem %s8, %s339
      %p341 = scmp.lt.s32.totalorder %s19, 1
      %s342 = scalar_select %p341, %s19, 1
      %s343 = smul.addr %s342, 18
      %s344 = smul.addr %s343, 4
      %s345 = scalar_lea.vmem %s0, %s344
      %p346 = scmp.lt.s32.totalorder %s19, 1
      %s347 = scalar_select %p346, %s19, 1
      %s348 = smul.addr %s347, 18
      %s349 = smul.addr %s348, 4
      %s350 = scalar_lea.vmem %s1, %s349
      %p351 = scmp.lt.s32.totalorder %s19, 1
      %s352 = scalar_select %p351, %s19, 1
      %s353 = smul.addr %s352, 18
      %s354 = smul.addr %s353, 4
      %s355 = scalar_lea.vmem %s2, %s354
      %p356 = scmp.lt.s32.totalorder %s19, 1
      %s357 = scalar_select %p356, %s19, 1
      %s358 = smul.addr %s357, 18
      %s359 = smul.addr %s358, 4
      %s360 = scalar_lea.vmem %s3, %s359
      %p361 = scmp.lt.s32.totalorder %s19, 1
      %s362 = scalar_select %p361, %s19, 1
      %s363 = smul.addr %s362, 8
      %s364 = smul.addr %s363, 4
      %s365 = scalar_lea.vmem %s8, %s364
      %v367 = vld [vmem:[%s345] sm:$0xf]
      %v368 = vld [vmem:[%s345 + $0x4] sm:$0x1]
      %v369 = vld [vmem:[%s345 + $0x8] sm:$0xf]
      %v370 = vld [vmem:[%s345 + $0xc] sm:$0x1]
      %v371 = vld [vmem:[%s345 + $0x10] sm:$0xf]
      %v372 = vld [vmem:[%s345 + $0x14] sm:$0x1]
      %v373 = vld [vmem:[%s345 + $0x18] sm:$0xf]
      %v374 = vld [vmem:[%s345 + $0x1c] sm:$0x1]
      %v375 = vld [vmem:[%s345 + $0x20] sm:$0xf]
      %v376 = vld [vmem:[%s345 + $0x24] sm:$0x1]
      %v377 = vld [vmem:[%s345 + $0x28] sm:$0xf]
      %v378 = vld [vmem:[%s345 + $0x2c] sm:$0x1]
      %v379 = vld [vmem:[%s345 + $0x30] sm:$0xf]
      %v380 = vld [vmem:[%s345 + $0x34] sm:$0x1]
      %v381 = vld [vmem:[%s345 + $0x38] sm:$0xf]
      %v382 = vld [vmem:[%s345 + $0x3c] sm:$0x1]
      %v383 = vld [vmem:[%s345 + $0x40] sm:$0xf]
      %v384 = vld [vmem:[%s345 + $0x44] sm:$0x1]
      %v385 = vunpack.c.l.bf16 %v367
      %v386 = vunpack.c.l.bf16 %v368
      %v387 = vunpack.c.l.bf16 %v369
      %v388 = vunpack.c.l.bf16 %v370
      %v389 = vunpack.c.l.bf16 %v371
      %v390 = vunpack.c.l.bf16 %v372
      %v391 = vunpack.c.l.bf16 %v373
      %v392 = vunpack.c.l.bf16 %v374
      %v393 = vunpack.c.l.bf16 %v375
      %v394 = vunpack.c.l.bf16 %v376
      %v395 = vunpack.c.l.bf16 %v377
      %v396 = vunpack.c.l.bf16 %v378
      %v397 = vunpack.c.l.bf16 %v379
      %v398 = vunpack.c.l.bf16 %v380
      %v399 = vunpack.c.l.bf16 %v381
      %v400 = vunpack.c.l.bf16 %v382
      %v401 = vunpack.c.l.bf16 %v383
      %v402 = vunpack.c.l.bf16 %v384
      %v403 = vld [vmem:[%s350] sm:$0xf]
      %v404 = vld [vmem:[%s350 + $0x8] sm:$0xf]
      %v405 = vld [vmem:[%s350 + $0x10] sm:$0xf]
      %v406 = vld [vmem:[%s350 + $0x18] sm:$0xf]
      %v407 = vld [vmem:[%s350 + $0x20] sm:$0xf]
      %v408 = vld [vmem:[%s350 + $0x28] sm:$0xf]
      %v409 = vld [vmem:[%s350 + $0x30] sm:$0xf]
      %v410 = vld [vmem:[%s350 + $0x38] sm:$0xf]
      %v411 = vld [vmem:[%s350 + $0x40] sm:$0xf]
      %v412 = vunpack.c.l.bf16 %v403
      %v413 = vunpack.c.l.bf16 %v404
      %v414 = vunpack.c.l.bf16 %v405
      %v415 = vunpack.c.l.bf16 %v406
      %v416 = vunpack.c.l.bf16 %v407
      %v417 = vunpack.c.l.bf16 %v408
      %v418 = vunpack.c.l.bf16 %v409
      %v419 = vunpack.c.l.bf16 %v410
      %v420 = vunpack.c.l.bf16 %v411
      %v421 = vld [vmem:[%s355] sm:$0xf]
      %v422 = vld [vmem:[%s355 + $0x4] sm:$0x1]
      %v423 = vld [vmem:[%s355 + $0x8] sm:$0xf]
      %v424 = vld [vmem:[%s355 + $0xc] sm:$0x1]
      %v425 = vld [vmem:[%s355 + $0x10] sm:$0xf]
      %v426 = vld [vmem:[%s355 + $0x14] sm:$0x1]
      %v427 = vld [vmem:[%s355 + $0x18] sm:$0xf]
      %v428 = vld [vmem:[%s355 + $0x1c] sm:$0x1]
      %v429 = vld [vmem:[%s355 + $0x20] sm:$0xf]
      %v430 = vld [vmem:[%s355 + $0x24] sm:$0x1]
      %v431 = vld [vmem:[%s355 + $0x28] sm:$0xf]
      %v432 = vld [vmem:[%s355 + $0x2c] sm:$0x1]
      %v433 = vld [vmem:[%s355 + $0x30] sm:$0xf]
      %v434 = vld [vmem:[%s355 + $0x34] sm:$0x1]
      %v435 = vld [vmem:[%s355 + $0x38] sm:$0xf]
      %v436 = vld [vmem:[%s355 + $0x3c] sm:$0x1]
      %v437 = vunpack.c.l.bf16 %v421
      %v438 = vunpack.c.l.bf16 %v422
      %v439 = vunpack.c.l.bf16 %v423
      %v440 = vunpack.c.l.bf16 %v424
      %v441 = vunpack.c.l.bf16 %v425
      %v442 = vunpack.c.l.bf16 %v426
      %v443 = vunpack.c.l.bf16 %v427
      %v444 = vunpack.c.l.bf16 %v428
      %v445 = vunpack.c.l.bf16 %v429
      %v446 = vunpack.c.l.bf16 %v430
      %v447 = vunpack.c.l.bf16 %v431
      %v448 = vunpack.c.l.bf16 %v432
      %v449 = vunpack.c.l.bf16 %v433
      %v450 = vunpack.c.l.bf16 %v434
      %v451 = vunpack.c.l.bf16 %v435
      %v452 = vunpack.c.l.bf16 %v436
      %v453 = vld [vmem:[%s360] sm:$0xf]
      %v454 = vld [vmem:[%s360 + $0x8] sm:$0xf]
      %v455 = vld [vmem:[%s360 + $0x10] sm:$0xf]
      %v456 = vld [vmem:[%s360 + $0x18] sm:$0xf]
      %v457 = vld [vmem:[%s360 + $0x20] sm:$0xf]
      %v458 = vld [vmem:[%s360 + $0x28] sm:$0xf]
      %v459 = vld [vmem:[%s360 + $0x30] sm:$0xf]
      %v460 = vld [vmem:[%s360 + $0x38] sm:$0xf]
      %v461 = vunpack.c.l.bf16 %v453
      %v462 = vunpack.c.l.bf16 %v454
      %v463 = vunpack.c.l.bf16 %v455
      %v464 = vunpack.c.l.bf16 %v456
      %v465 = vunpack.c.l.bf16 %v457
      %v466 = vunpack.c.l.bf16 %v458
      %v467 = vunpack.c.l.bf16 %v459
      %v468 = vunpack.c.l.bf16 %v460
      %v469 = vpack.c.bf16 %v387, %v385
      %v470 = vpack.c.bf16 %v391, %v389
      %v471 = vpack.c.bf16 %v395, %v393
      %v472 = vpack.c.bf16 %v399, %v397
      %v473 = vld [vmem:[%s4] sm:$0xf]
      %v474 = vld [vmem:[%s4 + $0x4] sm:$0xf]
      %v475 = vld [vmem:[%s4 + $0x8] sm:$0xf]
      %v476 = vld [vmem:[%s4 + $0xc] sm:$0xf]
      %v477 = vld [vmem:[%s4 + $0x10] sm:$0xf]
      %v478 = vld [vmem:[%s4 + $0x14] sm:$0xf]
      %v479 = vld [vmem:[%s4 + $0x18] sm:$0xf]
      %v480 = vld [vmem:[%s4 + $0x1c] sm:$0xf]
      %v481 = vld [vmem:[%s4 + $0x20] sm:$0xf]
      %v482 = vld [vmem:[%s4 + $0x24] sm:$0xf]
      %v483 = vld [vmem:[%s4 + $0x28] sm:$0xf]
      %v484 = vld [vmem:[%s4 + $0x2c] sm:$0xf]
      %v485 = vld [vmem:[%s4 + $0x30] sm:$0xf]
      %v486 = vld [vmem:[%s4 + $0x34] sm:$0xf]
      %v487 = vld [vmem:[%s4 + $0x38] sm:$0xf]
      %v488 = vld [vmem:[%s4 + $0x3c] sm:$0xf]
      %v489 = vpack.c.bf16 %v413, %v412
      %v490 = vpack.c.bf16 %v415, %v414
      %v491 = vpack.c.bf16 %v417, %v416
      %v492 = vpack.c.bf16 %v419, %v418
      %s493 = scalar_lea.vmem %s4, 64
      %v494 = vld [vmem:[%s493] sm:$0xf]
      %v495 = vld [vmem:[%s493 + $0x4] sm:$0xf]
      %v496 = vld [vmem:[%s493 + $0x8] sm:$0xf]
      %v497 = vld [vmem:[%s493 + $0xc] sm:$0xf]
      %v498 = vld [vmem:[%s493 + $0x10] sm:$0xf]
      %v499 = vld [vmem:[%s493 + $0x14] sm:$0xf]
      %v500 = vld [vmem:[%s493 + $0x18] sm:$0xf]
      %v501 = vld [vmem:[%s493 + $0x1c] sm:$0xf]
      %v502 = vld [vmem:[%s493 + $0x20] sm:$0xf]
      %v503 = vld [vmem:[%s493 + $0x24] sm:$0xf]
      %v504 = vld [vmem:[%s493 + $0x28] sm:$0xf]
      %v505 = vld [vmem:[%s493 + $0x2c] sm:$0xf]
      %v506 = vld [vmem:[%s493 + $0x30] sm:$0xf]
      %v507 = vld [vmem:[%s493 + $0x34] sm:$0xf]
      %v508 = vld [vmem:[%s493 + $0x38] sm:$0xf]
      %v509 = vld [vmem:[%s493 + $0x3c] sm:$0xf]
      %v526 = vunpack.c.l.b16 %v494
      %v527 = vunpack.c.l.b16 %v495
      %v528 = vunpack.c.l.b16 %v496
      %v529 = vunpack.c.l.b16 %v497
      %v530 = vunpack.c.l.b16 %v498
      %v531 = vunpack.c.l.b16 %v499
      %v532 = vunpack.c.l.b16 %v500
      %v533 = vunpack.c.l.b16 %v501
      %v534 = vunpack.c.l.b16 %v502
      %v535 = vunpack.c.l.b16 %v503
      %v536 = vunpack.c.l.b16 %v504
      %v537 = vunpack.c.l.b16 %v505
      %v538 = vunpack.c.l.b16 %v506
      %v539 = vunpack.c.l.b16 %v507
      %v540 = vunpack.c.l.b16 %v508
      %v541 = vunpack.c.l.b16 %v509
      %v542 = vpack.c.b16 %v527, %v526
      %v543 = vpack.c.b16 %v529, %v528
      %v544 = vpack.c.b16 %v531, %v530
      %v545 = vpack.c.b16 %v533, %v532
      %v546 = vpack.c.b16 %v535, %v534
      %v547 = vpack.c.b16 %v537, %v536
      %v548 = vpack.c.b16 %v539, %v538
      %v549 = vpack.c.b16 %v541, %v540
      %558 = vmatprep.subr.bf16.mxu0 0
      %559 = vmatpush1.bf16.msra.mxu0 %v549
      %560 = vmatprep.subr.bf16.mxu0 0
      %561 = vmatpush1.bf16.msra.mxu0 %v548
      %562 = vmatprep.subr.bf16.mxu0 0
      %563 = vmatpush1.bf16.msra.mxu0 %v547
      %564 = vmatprep.subr.bf16.mxu0 0
      %565 = vmatpush1.bf16.msra.mxu0 %v546
      %566 = vmatprep.subr.bf16.mxu0 0
      %567 = vmatpush1.bf16.msra.mxu0 %v545
      %568 = vmatprep.subr.bf16.mxu0 0
      %569 = vmatpush1.bf16.msra.mxu0 %v544
      %570 = vmatprep.subr.bf16.mxu0 0
      %571 = vmatpush1.bf16.msra.mxu0 %v543
      %572 = vmatprep.subr.bf16.mxu0 0
      %573 = vmatpush1.bf16.msra.mxu0 %v542
      %574 = vmatprep.subr.bf16.mxu0 0
      %575 = vmatpush2.bf16.msra.mxu0 0
      %576 = vmatprep.subr.bf16.mxu0 0
      %577 = vmatpush2.bf16.msra.mxu0 0
      %578 = vmatprep.subr.bf16.mxu0 0
      %579 = vmatpush2.bf16.msra.mxu0 0
      %580 = vmatprep.subr.bf16.mxu0 0
      %581 = vmatpush2.bf16.msra.mxu0 0
      %582 = vmatprep.subr.bf16.mxu0 0
      %583 = vmatpush2.bf16.msra.mxu0 0
      %584 = vmatprep.subr.bf16.mxu0 0
      %585 = vmatpush2.bf16.msra.mxu0 0
      %586 = vmatprep.subr.bf16.mxu0 0
      %587 = vmatpush2.bf16.msra.mxu0 0
      %588 = vmatprep.subr.bf16.mxu0 0
      %589 = vmatpush2.bf16.msra.mxu0 0
      %590 = vmatprep.mubr.bf16.mxu0 0
      %591 = vmatmul.mubr.bf16.gmra.mxu0 %v489
      %v592 = vpop.f32.mrf.mxu0
      %v593 = vadd.f32 0.0, %v592
      %v594 = vpop.f32.mrf.mxu0
      %v595 = vpop.f32.mrf.mxu0
      %v596 = vadd.f32 0.0, %v595
      %v597 = vpop.f32.mrf.mxu0
      %598 = vmatprep.mubr.bf16.mxu0 0
      %599 = vmatmul.mubr.bf16.gmra.mxu0 %v490
      %v600 = vpop.f32.mrf.mxu0
      %v601 = vadd.f32 0.0, %v600
      %v602 = vpop.f32.mrf.mxu0
      %v603 = vpop.f32.mrf.mxu0
      %v604 = vadd.f32 0.0, %v603
      %v605 = vpop.f32.mrf.mxu0
      %606 = vmatprep.mubr.bf16.mxu0 0
      %607 = vmatmul.mubr.bf16.gmra.mxu0 %v491
      %v608 = vpop.f32.mrf.mxu0
      %v609 = vadd.f32 0.0, %v608
      %v610 = vpop.f32.mrf.mxu0
      %v611 = vpop.f32.mrf.mxu0
      %v612 = vadd.f32 0.0, %v611
      %v613 = vpop.f32.mrf.mxu0
      %614 = vmatprep.mubr.bf16.mxu0 0
      %615 = vmatmul.mubr.bf16.gmra.mxu0 %v492
      %v616 = vpop.f32.mrf.mxu0
      %v617 = vadd.f32 0.0, %v616
      %v618 = vpop.f32.mrf.mxu0
      %v619 = vpop.f32.mrf.mxu0
      %v620 = vadd.f32 0.0, %v619
      %v621 = vpop.f32.mrf.mxu0
      %622 = vdwg.mxu0
      %v639 = vunpack.c.l.b16 %v473
      %v640 = vunpack.c.l.b16 %v474
      %v641 = vunpack.c.l.b16 %v475
      %v642 = vunpack.c.l.b16 %v476
      %v643 = vunpack.c.l.b16 %v477
      %v644 = vunpack.c.l.b16 %v478
      %v645 = vunpack.c.l.b16 %v479
      %v646 = vunpack.c.l.b16 %v480
      %v647 = vunpack.c.l.b16 %v481
      %v648 = vunpack.c.l.b16 %v482
      %v649 = vunpack.c.l.b16 %v483
      %v650 = vunpack.c.l.b16 %v484
      %v651 = vunpack.c.l.b16 %v485
      %v652 = vunpack.c.l.b16 %v486
      %v653 = vunpack.c.l.b16 %v487
      %v654 = vunpack.c.l.b16 %v488
      %v655 = vpack.c.b16 %v640, %v639
      %v656 = vpack.c.b16 %v642, %v641
      %v657 = vpack.c.b16 %v644, %v643
      %v658 = vpack.c.b16 %v646, %v645
      %v659 = vpack.c.b16 %v648, %v647
      %v660 = vpack.c.b16 %v650, %v649
      %v661 = vpack.c.b16 %v652, %v651
      %v662 = vpack.c.b16 %v654, %v653
      %671 = vmatprep.subr.bf16.mxu0 0
      %672 = vmatpush1.bf16.msra.mxu0 %v662
      %673 = vmatprep.subr.bf16.mxu0 0
      %674 = vmatpush1.bf16.msra.mxu0 %v661
      %675 = vmatprep.subr.bf16.mxu0 0
      %676 = vmatpush1.bf16.msra.mxu0 %v660
      %677 = vmatprep.subr.bf16.mxu0 0
      %678 = vmatpush1.bf16.msra.mxu0 %v659
      %679 = vmatprep.subr.bf16.mxu0 0
      %680 = vmatpush1.bf16.msra.mxu0 %v658
      %681 = vmatprep.subr.bf16.mxu0 0
      %682 = vmatpush1.bf16.msra.mxu0 %v657
      %683 = vmatprep.subr.bf16.mxu0 0
      %684 = vmatpush1.bf16.msra.mxu0 %v656
      %685 = vmatprep.subr.bf16.mxu0 0
      %686 = vmatpush1.bf16.msra.mxu0 %v655
      %687 = vmatprep.subr.bf16.mxu0 0
      %688 = vmatpush2.bf16.msra.mxu0 0
      %689 = vmatprep.subr.bf16.mxu0 0
      %690 = vmatpush2.bf16.msra.mxu0 0
      %691 = vmatprep.subr.bf16.mxu0 0
      %692 = vmatpush2.bf16.msra.mxu0 0
      %693 = vmatprep.subr.bf16.mxu0 0
      %694 = vmatpush2.bf16.msra.mxu0 0
      %695 = vmatprep.subr.bf16.mxu0 0
      %696 = vmatpush2.bf16.msra.mxu0 0
      %697 = vmatprep.subr.bf16.mxu0 0
      %698 = vmatpush2.bf16.msra.mxu0 0
      %699 = vmatprep.subr.bf16.mxu0 0
      %700 = vmatpush2.bf16.msra.mxu0 0
      %701 = vmatprep.subr.bf16.mxu0 0
      %702 = vmatpush2.bf16.msra.mxu0 0
      %703 = vmatprep.mubr.bf16.mxu0 0
      %704 = vmatmul.mubr.bf16.gmra.mxu0 %v469
      %v705 = vpop.f32.mrf.mxu0
      %v706 = vadd.f32 %v593, %v705
      %v707 = vpop.f32.mrf.mxu0
      %v708 = vpop.f32.mrf.mxu0
      %v709 = vadd.f32 %v596, %v708
      %v710 = vpop.f32.mrf.mxu0
      %711 = vmatprep.mubr.bf16.mxu0 0
      %712 = vmatmul.mubr.bf16.gmra.mxu0 %v470
      %v713 = vpop.f32.mrf.mxu0
      %v714 = vadd.f32 %v601, %v713
      %v715 = vpop.f32.mrf.mxu0
      %v716 = vpop.f32.mrf.mxu0
      %v717 = vadd.f32 %v604, %v716
      %v718 = vpop.f32.mrf.mxu0
      %719 = vmatprep.mubr.bf16.mxu0 0
      %720 = vmatmul.mubr.bf16.gmra.mxu0 %v471
      %v721 = vpop.f32.mrf.mxu0
      %v722 = vadd.f32 %v609, %v721
      %v723 = vpop.f32.mrf.mxu0
      %v724 = vpop.f32.mrf.mxu0
      %v725 = vadd.f32 %v612, %v724
      %v726 = vpop.f32.mrf.mxu0
      %727 = vmatprep.mubr.bf16.mxu0 0
      %728 = vmatmul.mubr.bf16.gmra.mxu0 %v472
      %v729 = vpop.f32.mrf.mxu0
      %v730 = vadd.f32 %v617, %v729
      %v731 = vpop.f32.mrf.mxu0
      %v732 = vpop.f32.mrf.mxu0
      %v733 = vadd.f32 %v620, %v732
      %v734 = vpop.f32.mrf.mxu0
      %735 = vdwg.mxu0
      %vm752 = vcmask 1046528
      %v753 = vrot.slane %v385, 1
      %v754 = vrot.slane %v386, 1
      %v755 = vsel %vm752, %v753, %v754
      %v756 = vrot.slane %v387, 1
      %v757 = vrot.slane %v388, 1
      %v758 = vsel %vm752, %v756, %v757
      %v759 = vrot.slane %v389, 1
      %v760 = vrot.slane %v390, 1
      %v761 = vsel %vm752, %v759, %v760
      %v762 = vrot.slane %v391, 1
      %v763 = vrot.slane %v392, 1
      %v764 = vsel %vm752, %v762, %v763
      %v765 = vrot.slane %v393, 1
      %v766 = vrot.slane %v394, 1
      %v767 = vsel %vm752, %v765, %v766
      %v768 = vrot.slane %v395, 1
      %v769 = vrot.slane %v396, 1
      %v770 = vsel %vm752, %v768, %v769
      %v771 = vrot.slane %v397, 1
      %v772 = vrot.slane %v398, 1
      %v773 = vsel %vm752, %v771, %v772
      %v774 = vrot.slane %v399, 1
      %v775 = vrot.slane %v400, 1
      %v776 = vsel %vm752, %v774, %v775
      %v785 = vpack.c.bf16 %v758, %v755
      %v786 = vpack.c.bf16 %v764, %v761
      %v787 = vpack.c.bf16 %v770, %v767
      %v788 = vpack.c.bf16 %v776, %v773
      %s789 = scalar_lea.vmem %s4, 128
      %v790 = vld [vmem:[%s789] sm:$0xf]
      %v791 = vld [vmem:[%s789 + $0x4] sm:$0xf]
      %v792 = vld [vmem:[%s789 + $0x8] sm:$0xf]
      %v793 = vld [vmem:[%s789 + $0xc] sm:$0xf]
      %v794 = vld [vmem:[%s789 + $0x10] sm:$0xf]
      %v795 = vld [vmem:[%s789 + $0x14] sm:$0xf]
      %v796 = vld [vmem:[%s789 + $0x18] sm:$0xf]
      %v797 = vld [vmem:[%s789 + $0x1c] sm:$0xf]
      %v798 = vld [vmem:[%s789 + $0x20] sm:$0xf]
      %v799 = vld [vmem:[%s789 + $0x24] sm:$0xf]
      %v800 = vld [vmem:[%s789 + $0x28] sm:$0xf]
      %v801 = vld [vmem:[%s789 + $0x2c] sm:$0xf]
      %v802 = vld [vmem:[%s789 + $0x30] sm:$0xf]
      %v803 = vld [vmem:[%s789 + $0x34] sm:$0xf]
      %v804 = vld [vmem:[%s789 + $0x38] sm:$0xf]
      %v805 = vld [vmem:[%s789 + $0x3c] sm:$0xf]
      %v822 = vunpack.c.l.b16 %v790
      %v823 = vunpack.c.l.b16 %v791
      %v824 = vunpack.c.l.b16 %v792
      %v825 = vunpack.c.l.b16 %v793
      %v826 = vunpack.c.l.b16 %v794
      %v827 = vunpack.c.l.b16 %v795
      %v828 = vunpack.c.l.b16 %v796
      %v829 = vunpack.c.l.b16 %v797
      %v830 = vunpack.c.l.b16 %v798
      %v831 = vunpack.c.l.b16 %v799
      %v832 = vunpack.c.l.b16 %v800
      %v833 = vunpack.c.l.b16 %v801
      %v834 = vunpack.c.l.b16 %v802
      %v835 = vunpack.c.l.b16 %v803
      %v836 = vunpack.c.l.b16 %v804
      %v837 = vunpack.c.l.b16 %v805
      %v838 = vpack.c.b16 %v823, %v822
      %v839 = vpack.c.b16 %v825, %v824
      %v840 = vpack.c.b16 %v827, %v826
      %v841 = vpack.c.b16 %v829, %v828
      %v842 = vpack.c.b16 %v831, %v830
      %v843 = vpack.c.b16 %v833, %v832
      %v844 = vpack.c.b16 %v835, %v834
      %v845 = vpack.c.b16 %v837, %v836
      %854 = vmatprep.subr.bf16.mxu0 0
      %855 = vmatpush1.bf16.msra.mxu0 %v845
      %856 = vmatprep.subr.bf16.mxu0 0
      %857 = vmatpush1.bf16.msra.mxu0 %v844
      %858 = vmatprep.subr.bf16.mxu0 0
      %859 = vmatpush1.bf16.msra.mxu0 %v843
      %860 = vmatprep.subr.bf16.mxu0 0
      %861 = vmatpush1.bf16.msra.mxu0 %v842
      %862 = vmatprep.subr.bf16.mxu0 0
      %863 = vmatpush1.bf16.msra.mxu0 %v841
      %864 = vmatprep.subr.bf16.mxu0 0
      %865 = vmatpush1.bf16.msra.mxu0 %v840
      %866 = vmatprep.subr.bf16.mxu0 0
      %867 = vmatpush1.bf16.msra.mxu0 %v839
      %868 = vmatprep.subr.bf16.mxu0 0
      %869 = vmatpush1.bf16.msra.mxu0 %v838
      %870 = vmatprep.subr.bf16.mxu0 0
      %871 = vmatpush2.bf16.msra.mxu0 0
      %872 = vmatprep.subr.bf16.mxu0 0
      %873 = vmatpush2.bf16.msra.mxu0 0
      %874 = vmatprep.subr.bf16.mxu0 0
      %875 = vmatpush2.bf16.msra.mxu0 0
      %876 = vmatprep.subr.bf16.mxu0 0
      %877 = vmatpush2.bf16.msra.mxu0 0
      %878 = vmatprep.subr.bf16.mxu0 0
      %879 = vmatpush2.bf16.msra.mxu0 0
      %880 = vmatprep.subr.bf16.mxu0 0
      %881 = vmatpush2.bf16.msra.mxu0 0
      %882 = vmatprep.subr.bf16.mxu0 0
      %883 = vmatpush2.bf16.msra.mxu0 0
      %884 = vmatprep.subr.bf16.mxu0 0
      %885 = vmatpush2.bf16.msra.mxu0 0
      %886 = vmatprep.mubr.bf16.mxu0 0
      %887 = vmatmul.mubr.bf16.gmra.mxu0 %v785
      %v888 = vpop.f32.mrf.mxu0
      %v889 = vadd.f32 0.0, %v888
      %v890 = vpop.f32.mrf.mxu0
      %v891 = vpop.f32.mrf.mxu0
      %v892 = vadd.f32 0.0, %v891
      %v893 = vpop.f32.mrf.mxu0
      %894 = vmatprep.mubr.bf16.mxu0 0
      %895 = vmatmul.mubr.bf16.gmra.mxu0 %v786
      %v896 = vpop.f32.mrf.mxu0
      %v897 = vadd.f32 0.0, %v896
      %v898 = vpop.f32.mrf.mxu0
      %v899 = vpop.f32.mrf.mxu0
      %v900 = vadd.f32 0.0, %v899
      %v901 = vpop.f32.mrf.mxu0
      %902 = vmatprep.mubr.bf16.mxu0 0
      %903 = vmatmul.mubr.bf16.gmra.mxu0 %v787
      %v904 = vpop.f32.mrf.mxu0
      %v905 = vadd.f32 0.0, %v904
      %v906 = vpop.f32.mrf.mxu0
      %v907 = vpop.f32.mrf.mxu0
      %v908 = vadd.f32 0.0, %v907
      %v909 = vpop.f32.mrf.mxu0
      %910 = vmatprep.mubr.bf16.mxu0 0
      %911 = vmatmul.mubr.bf16.gmra.mxu0 %v788
      %v912 = vpop.f32.mrf.mxu0
      %v913 = vadd.f32 0.0, %v912
      %v914 = vpop.f32.mrf.mxu0
      %v915 = vpop.f32.mrf.mxu0
      %v916 = vadd.f32 0.0, %v915
      %v917 = vpop.f32.mrf.mxu0
      %918 = vdwg.mxu0
      %v919 = vadd.f32 %v706, %v889
      %v920 = vadd.f32 %v709, %v892
      %v921 = vadd.f32 %v714, %v897
      %v922 = vadd.f32 %v717, %v900
      %v923 = vadd.f32 %v722, %v905
      %v924 = vadd.f32 %v725, %v908
      %v925 = vadd.f32 %v730, %v913
      %v926 = vadd.f32 %v733, %v916
      %v927 = vpack.c.bf16 %v439, %v437
      %v928 = vpack.c.bf16 %v443, %v441
      %v929 = vpack.c.bf16 %v447, %v445
      %v930 = vpack.c.bf16 %v451, %v449
      %s931 = scalar_lea.vmem %s4, 192
      %v932 = vld [vmem:[%s931] sm:$0xf]
      %v933 = vld [vmem:[%s931 + $0x4] sm:$0xf]
      %v934 = vld [vmem:[%s931 + $0x8] sm:$0xf]
      %v935 = vld [vmem:[%s931 + $0xc] sm:$0xf]
      %v936 = vld [vmem:[%s931 + $0x10] sm:$0xf]
      %v937 = vld [vmem:[%s931 + $0x14] sm:$0xf]
      %v938 = vld [vmem:[%s931 + $0x18] sm:$0xf]
      %v939 = vld [vmem:[%s931 + $0x1c] sm:$0xf]
      %v940 = vld [vmem:[%s931 + $0x20] sm:$0xf]
      %v941 = vld [vmem:[%s931 + $0x24] sm:$0xf]
      %v942 = vld [vmem:[%s931 + $0x28] sm:$0xf]
      %v943 = vld [vmem:[%s931 + $0x2c] sm:$0xf]
      %v944 = vld [vmem:[%s931 + $0x30] sm:$0xf]
      %v945 = vld [vmem:[%s931 + $0x34] sm:$0xf]
      %v946 = vld [vmem:[%s931 + $0x38] sm:$0xf]
      %v947 = vld [vmem:[%s931 + $0x3c] sm:$0xf]
      %v964 = vunpack.c.l.b16 %v932
      %v965 = vunpack.c.l.b16 %v933
      %v966 = vunpack.c.l.b16 %v934
      %v967 = vunpack.c.l.b16 %v935
      %v968 = vunpack.c.l.b16 %v936
      %v969 = vunpack.c.l.b16 %v937
      %v970 = vunpack.c.l.b16 %v938
      %v971 = vunpack.c.l.b16 %v939
      %v972 = vunpack.c.l.b16 %v940
      %v973 = vunpack.c.l.b16 %v941
      %v974 = vunpack.c.l.b16 %v942
      %v975 = vunpack.c.l.b16 %v943
      %v976 = vunpack.c.l.b16 %v944
      %v977 = vunpack.c.l.b16 %v945
      %v978 = vunpack.c.l.b16 %v946
      %v979 = vunpack.c.l.b16 %v947
      %v980 = vpack.c.b16 %v965, %v964
      %v981 = vpack.c.b16 %v967, %v966
      %v982 = vpack.c.b16 %v969, %v968
      %v983 = vpack.c.b16 %v971, %v970
      %v984 = vpack.c.b16 %v973, %v972
      %v985 = vpack.c.b16 %v975, %v974
      %v986 = vpack.c.b16 %v977, %v976
      %v987 = vpack.c.b16 %v979, %v978
      %996 = vmatprep.subr.bf16.mxu0 0
      %997 = vmatpush1.bf16.msra.mxu0 %v987
      %998 = vmatprep.subr.bf16.mxu0 0
      %999 = vmatpush1.bf16.msra.mxu0 %v986
      %1000 = vmatprep.subr.bf16.mxu0 0
      %1001 = vmatpush1.bf16.msra.mxu0 %v985
      %1002 = vmatprep.subr.bf16.mxu0 0
      %1003 = vmatpush1.bf16.msra.mxu0 %v984
      %1004 = vmatprep.subr.bf16.mxu0 0
      %1005 = vmatpush1.bf16.msra.mxu0 %v983
      %1006 = vmatprep.subr.bf16.mxu0 0
      %1007 = vmatpush1.bf16.msra.mxu0 %v982
      %1008 = vmatprep.subr.bf16.mxu0 0
      %1009 = vmatpush1.bf16.msra.mxu0 %v981
      %1010 = vmatprep.subr.bf16.mxu0 0
      %1011 = vmatpush1.bf16.msra.mxu0 %v980
      %1012 = vmatprep.subr.bf16.mxu0 0
      %1013 = vmatpush2.bf16.msra.mxu0 0
      %1014 = vmatprep.subr.bf16.mxu0 0
      %1015 = vmatpush2.bf16.msra.mxu0 0
      %1016 = vmatprep.subr.bf16.mxu0 0
      %1017 = vmatpush2.bf16.msra.mxu0 0
      %1018 = vmatprep.subr.bf16.mxu0 0
      %1019 = vmatpush2.bf16.msra.mxu0 0
      %1020 = vmatprep.subr.bf16.mxu0 0
      %1021 = vmatpush2.bf16.msra.mxu0 0
      %1022 = vmatprep.subr.bf16.mxu0 0
      %1023 = vmatpush2.bf16.msra.mxu0 0
      %1024 = vmatprep.subr.bf16.mxu0 0
      %1025 = vmatpush2.bf16.msra.mxu0 0
      %1026 = vmatprep.subr.bf16.mxu0 0
      %1027 = vmatpush2.bf16.msra.mxu0 0
      %1028 = vmatprep.mubr.bf16.mxu0 0
      %1029 = vmatmul.mubr.bf16.gmra.mxu0 %v927
      %v1030 = vpop.f32.mrf.mxu0
      %v1031 = vadd.f32 0.0, %v1030
      %v1032 = vpop.f32.mrf.mxu0
      %v1033 = vpop.f32.mrf.mxu0
      %v1034 = vadd.f32 0.0, %v1033
      %v1035 = vpop.f32.mrf.mxu0
      %1036 = vmatprep.mubr.bf16.mxu0 0
      %1037 = vmatmul.mubr.bf16.gmra.mxu0 %v928
      %v1038 = vpop.f32.mrf.mxu0
      %v1039 = vadd.f32 0.0, %v1038
      %v1040 = vpop.f32.mrf.mxu0
      %v1041 = vpop.f32.mrf.mxu0
      %v1042 = vadd.f32 0.0, %v1041
      %v1043 = vpop.f32.mrf.mxu0
      %1044 = vmatprep.mubr.bf16.mxu0 0
      %1045 = vmatmul.mubr.bf16.gmra.mxu0 %v929
      %v1046 = vpop.f32.mrf.mxu0
      %v1047 = vadd.f32 0.0, %v1046
      %v1048 = vpop.f32.mrf.mxu0
      %v1049 = vpop.f32.mrf.mxu0
      %v1050 = vadd.f32 0.0, %v1049
      %v1051 = vpop.f32.mrf.mxu0
      %1052 = vmatprep.mubr.bf16.mxu0 0
      %1053 = vmatmul.mubr.bf16.gmra.mxu0 %v930
      %v1054 = vpop.f32.mrf.mxu0
      %v1055 = vadd.f32 0.0, %v1054
      %v1056 = vpop.f32.mrf.mxu0
      %v1057 = vpop.f32.mrf.mxu0
      %v1058 = vadd.f32 0.0, %v1057
      %v1059 = vpop.f32.mrf.mxu0
      %1060 = vdwg.mxu0
      %v1061 = vadd.f32 %v919, %v1031
      %v1062 = vadd.f32 %v920, %v1034
      %v1063 = vadd.f32 %v921, %v1039
      %v1064 = vadd.f32 %v922, %v1042
      %v1065 = vadd.f32 %v923, %v1047
      %v1066 = vadd.f32 %v924, %v1050
      %v1067 = vadd.f32 %v925, %v1055
      %v1068 = vadd.f32 %v926, %v1058
      %v1069 = vpack.c.bf16 %v462, %v461
      %v1070 = vpack.c.bf16 %v464, %v463
      %v1071 = vpack.c.bf16 %v466, %v465
      %v1072 = vpack.c.bf16 %v468, %v467
      %s1073 = scalar_lea.vmem %s4, 256
      %v1074 = vld [vmem:[%s1073] sm:$0xf]
      %v1075 = vld [vmem:[%s1073 + $0x4] sm:$0xf]
      %v1076 = vld [vmem:[%s1073 + $0x8] sm:$0xf]
      %v1077 = vld [vmem:[%s1073 + $0xc] sm:$0xf]
      %v1078 = vld [vmem:[%s1073 + $0x10] sm:$0xf]
      %v1079 = vld [vmem:[%s1073 + $0x14] sm:$0xf]
      %v1080 = vld [vmem:[%s1073 + $0x18] sm:$0xf]
      %v1081 = vld [vmem:[%s1073 + $0x1c] sm:$0xf]
      %v1082 = vld [vmem:[%s1073 + $0x20] sm:$0xf]
      %v1083 = vld [vmem:[%s1073 + $0x24] sm:$0xf]
      %v1084 = vld [vmem:[%s1073 + $0x28] sm:$0xf]
      %v1085 = vld [vmem:[%s1073 + $0x2c] sm:$0xf]
      %v1086 = vld [vmem:[%s1073 + $0x30] sm:$0xf]
      %v1087 = vld [vmem:[%s1073 + $0x34] sm:$0xf]
      %v1088 = vld [vmem:[%s1073 + $0x38] sm:$0xf]
      %v1089 = vld [vmem:[%s1073 + $0x3c] sm:$0xf]
      %v1106 = vunpack.c.l.b16 %v1074
      %v1107 = vunpack.c.l.b16 %v1075
      %v1108 = vunpack.c.l.b16 %v1076
      %v1109 = vunpack.c.l.b16 %v1077
      %v1110 = vunpack.c.l.b16 %v1078
      %v1111 = vunpack.c.l.b16 %v1079
      %v1112 = vunpack.c.l.b16 %v1080
      %v1113 = vunpack.c.l.b16 %v1081
      %v1114 = vunpack.c.l.b16 %v1082
      %v1115 = vunpack.c.l.b16 %v1083
      %v1116 = vunpack.c.l.b16 %v1084
      %v1117 = vunpack.c.l.b16 %v1085
      %v1118 = vunpack.c.l.b16 %v1086
      %v1119 = vunpack.c.l.b16 %v1087
      %v1120 = vunpack.c.l.b16 %v1088
      %v1121 = vunpack.c.l.b16 %v1089
      %v1122 = vpack.c.b16 %v1107, %v1106
      %v1123 = vpack.c.b16 %v1109, %v1108
      %v1124 = vpack.c.b16 %v1111, %v1110
      %v1125 = vpack.c.b16 %v1113, %v1112
      %v1126 = vpack.c.b16 %v1115, %v1114
      %v1127 = vpack.c.b16 %v1117, %v1116
      %v1128 = vpack.c.b16 %v1119, %v1118
      %v1129 = vpack.c.b16 %v1121, %v1120
      %1138 = vmatprep.subr.bf16.mxu0 0
      %1139 = vmatpush1.bf16.msra.mxu0 %v1129
      %1140 = vmatprep.subr.bf16.mxu0 0
      %1141 = vmatpush1.bf16.msra.mxu0 %v1128
      %1142 = vmatprep.subr.bf16.mxu0 0
      %1143 = vmatpush1.bf16.msra.mxu0 %v1127
      %1144 = vmatprep.subr.bf16.mxu0 0
      %1145 = vmatpush1.bf16.msra.mxu0 %v1126
      %1146 = vmatprep.subr.bf16.mxu0 0
      %1147 = vmatpush1.bf16.msra.mxu0 %v1125
      %1148 = vmatprep.subr.bf16.mxu0 0
      %1149 = vmatpush1.bf16.msra.mxu0 %v1124
      %1150 = vmatprep.subr.bf16.mxu0 0
      %1151 = vmatpush1.bf16.msra.mxu0 %v1123
      %1152 = vmatprep.subr.bf16.mxu0 0
      %1153 = vmatpush1.bf16.msra.mxu0 %v1122
      %1154 = vmatprep.subr.bf16.mxu0 0
      %1155 = vmatpush2.bf16.msra.mxu0 0
      %1156 = vmatprep.subr.bf16.mxu0 0
      %1157 = vmatpush2.bf16.msra.mxu0 0
      %1158 = vmatprep.subr.bf16.mxu0 0
      %1159 = vmatpush2.bf16.msra.mxu0 0
      %1160 = vmatprep.subr.bf16.mxu0 0
      %1161 = vmatpush2.bf16.msra.mxu0 0
      %1162 = vmatprep.subr.bf16.mxu0 0
      %1163 = vmatpush2.bf16.msra.mxu0 0
      %1164 = vmatprep.subr.bf16.mxu0 0
      %1165 = vmatpush2.bf16.msra.mxu0 0
      %1166 = vmatprep.subr.bf16.mxu0 0
      %1167 = vmatpush2.bf16.msra.mxu0 0
      %1168 = vmatprep.subr.bf16.mxu0 0
      %1169 = vmatpush2.bf16.msra.mxu0 0
      %1170 = vmatprep.mubr.bf16.mxu0 0
      %1171 = vmatmul.mubr.bf16.gmra.mxu0 %v1069
      %v1172 = vpop.f32.mrf.mxu0
      %v1173 = vadd.f32 0.0, %v1172
      %v1174 = vpop.f32.mrf.mxu0
      %v1175 = vpop.f32.mrf.mxu0
      %v1176 = vadd.f32 0.0, %v1175
      %v1177 = vpop.f32.mrf.mxu0
      %1178 = vmatprep.mubr.bf16.mxu0 0
      %1179 = vmatmul.mubr.bf16.gmra.mxu0 %v1070
      %v1180 = vpop.f32.mrf.mxu0
      %v1181 = vadd.f32 0.0, %v1180
      %v1182 = vpop.f32.mrf.mxu0
      %v1183 = vpop.f32.mrf.mxu0
      %v1184 = vadd.f32 0.0, %v1183
      %v1185 = vpop.f32.mrf.mxu0
      %1186 = vmatprep.mubr.bf16.mxu0 0
      %1187 = vmatmul.mubr.bf16.gmra.mxu0 %v1071
      %v1188 = vpop.f32.mrf.mxu0
      %v1189 = vadd.f32 0.0, %v1188
      %v1190 = vpop.f32.mrf.mxu0
      %v1191 = vpop.f32.mrf.mxu0
      %v1192 = vadd.f32 0.0, %v1191
      %v1193 = vpop.f32.mrf.mxu0
      %1194 = vmatprep.mubr.bf16.mxu0 0
      %1195 = vmatmul.mubr.bf16.gmra.mxu0 %v1072
      %v1196 = vpop.f32.mrf.mxu0
      %v1197 = vadd.f32 0.0, %v1196
      %v1198 = vpop.f32.mrf.mxu0
      %v1199 = vpop.f32.mrf.mxu0
      %v1200 = vadd.f32 0.0, %v1199
      %v1201 = vpop.f32.mrf.mxu0
      %1202 = vdwg.mxu0
      %v1203 = vadd.f32 %v1061, %v1173
      %v1204 = vadd.f32 %v1062, %v1176
      %v1205 = vadd.f32 %v1063, %v1181
      %v1206 = vadd.f32 %v1064, %v1184
      %v1207 = vadd.f32 %v1065, %v1189
      %v1208 = vadd.f32 %v1066, %v1192
      %v1209 = vadd.f32 %v1067, %v1197
      %v1210 = vadd.f32 %v1068, %v1200
      %v1227 = vrot.slane %v437, 1
      %v1228 = vrot.slane %v438, 1
      %v1229 = vsel %vm752, %v1227, %v1228
      %v1230 = vrot.slane %v439, 1
      %v1231 = vrot.slane %v440, 1
      %v1232 = vsel %vm752, %v1230, %v1231
      %v1233 = vrot.slane %v441, 1
      %v1234 = vrot.slane %v442, 1
      %v1235 = vsel %vm752, %v1233, %v1234
      %v1236 = vrot.slane %v443, 1
      %v1237 = vrot.slane %v444, 1
      %v1238 = vsel %vm752, %v1236, %v1237
      %v1239 = vrot.slane %v445, 1
      %v1240 = vrot.slane %v446, 1
      %v1241 = vsel %vm752, %v1239, %v1240
      %v1242 = vrot.slane %v447, 1
      %v1243 = vrot.slane %v448, 1
      %v1244 = vsel %vm752, %v1242, %v1243
      %v1245 = vrot.slane %v449, 1
      %v1246 = vrot.slane %v450, 1
      %v1247 = vsel %vm752, %v1245, %v1246
      %v1248 = vrot.slane %v451, 1
      %v1249 = vrot.slane %v452, 1
      %v1250 = vsel %vm752, %v1248, %v1249
      %v1259 = vpack.c.bf16 %v1232, %v1229
      %v1260 = vpack.c.bf16 %v1238, %v1235
      %v1261 = vpack.c.bf16 %v1244, %v1241
      %v1262 = vpack.c.bf16 %v1250, %v1247
      %s1263 = scalar_lea.vmem %s4, 320
      %v1264 = vld [vmem:[%s1263] sm:$0xf]
      %v1265 = vld [vmem:[%s1263 + $0x4] sm:$0xf]
      %v1266 = vld [vmem:[%s1263 + $0x8] sm:$0xf]
      %v1267 = vld [vmem:[%s1263 + $0xc] sm:$0xf]
      %v1268 = vld [vmem:[%s1263 + $0x10] sm:$0xf]
      %v1269 = vld [vmem:[%s1263 + $0x14] sm:$0xf]
      %v1270 = vld [vmem:[%s1263 + $0x18] sm:$0xf]
      %v1271 = vld [vmem:[%s1263 + $0x1c] sm:$0xf]
      %v1272 = vld [vmem:[%s1263 + $0x20] sm:$0xf]
      %v1273 = vld [vmem:[%s1263 + $0x24] sm:$0xf]
      %v1274 = vld [vmem:[%s1263 + $0x28] sm:$0xf]
      %v1275 = vld [vmem:[%s1263 + $0x2c] sm:$0xf]
      %v1276 = vld [vmem:[%s1263 + $0x30] sm:$0xf]
      %v1277 = vld [vmem:[%s1263 + $0x34] sm:$0xf]
      %v1278 = vld [vmem:[%s1263 + $0x38] sm:$0xf]
      %v1279 = vld [vmem:[%s1263 + $0x3c] sm:$0xf]
      %v1296 = vunpack.c.l.b16 %v1264
      %v1297 = vunpack.c.l.b16 %v1265
      %v1298 = vunpack.c.l.b16 %v1266
      %v1299 = vunpack.c.l.b16 %v1267
      %v1300 = vunpack.c.l.b16 %v1268
      %v1301 = vunpack.c.l.b16 %v1269
      %v1302 = vunpack.c.l.b16 %v1270
      %v1303 = vunpack.c.l.b16 %v1271
      %v1304 = vunpack.c.l.b16 %v1272
      %v1305 = vunpack.c.l.b16 %v1273
      %v1306 = vunpack.c.l.b16 %v1274
      %v1307 = vunpack.c.l.b16 %v1275
      %v1308 = vunpack.c.l.b16 %v1276
      %v1309 = vunpack.c.l.b16 %v1277
      %v1310 = vunpack.c.l.b16 %v1278
      %v1311 = vunpack.c.l.b16 %v1279
      %v1312 = vpack.c.b16 %v1297, %v1296
      %v1313 = vpack.c.b16 %v1299, %v1298
      %v1314 = vpack.c.b16 %v1301, %v1300
      %v1315 = vpack.c.b16 %v1303, %v1302
      %v1316 = vpack.c.b16 %v1305, %v1304
      %v1317 = vpack.c.b16 %v1307, %v1306
      %v1318 = vpack.c.b16 %v1309, %v1308
      %v1319 = vpack.c.b16 %v1311, %v1310
      %1328 = vmatprep.subr.bf16.mxu0 0
      %1329 = vmatpush1.bf16.msra.mxu0 %v1319
      %1330 = vmatprep.subr.bf16.mxu0 0
      %1331 = vmatpush1.bf16.msra.mxu0 %v1318
      %1332 = vmatprep.subr.bf16.mxu0 0
      %1333 = vmatpush1.bf16.msra.mxu0 %v1317
      %1334 = vmatprep.subr.bf16.mxu0 0
      %1335 = vmatpush1.bf16.msra.mxu0 %v1316
      %1336 = vmatprep.subr.bf16.mxu0 0
      %1337 = vmatpush1.bf16.msra.mxu0 %v1315
      %1338 = vmatprep.subr.bf16.mxu0 0
      %1339 = vmatpush1.bf16.msra.mxu0 %v1314
      %1340 = vmatprep.subr.bf16.mxu0 0
      %1341 = vmatpush1.bf16.msra.mxu0 %v1313
      %1342 = vmatprep.subr.bf16.mxu0 0
      %1343 = vmatpush1.bf16.msra.mxu0 %v1312
      %1344 = vmatprep.subr.bf16.mxu0 0
      %1345 = vmatpush2.bf16.msra.mxu0 0
      %1346 = vmatprep.subr.bf16.mxu0 0
      %1347 = vmatpush2.bf16.msra.mxu0 0
      %1348 = vmatprep.subr.bf16.mxu0 0
      %1349 = vmatpush2.bf16.msra.mxu0 0
      %1350 = vmatprep.subr.bf16.mxu0 0
      %1351 = vmatpush2.bf16.msra.mxu0 0
      %1352 = vmatprep.subr.bf16.mxu0 0
      %1353 = vmatpush2.bf16.msra.mxu0 0
      %1354 = vmatprep.subr.bf16.mxu0 0
      %1355 = vmatpush2.bf16.msra.mxu0 0
      %1356 = vmatprep.subr.bf16.mxu0 0
      %1357 = vmatpush2.bf16.msra.mxu0 0
      %1358 = vmatprep.subr.bf16.mxu0 0
      %1359 = vmatpush2.bf16.msra.mxu0 0
      %1360 = vmatprep.mubr.bf16.mxu0 0
      %1361 = vmatmul.mubr.bf16.gmra.mxu0 %v1259
      %v1362 = vpop.f32.mrf.mxu0
      %v1363 = vadd.f32 0.0, %v1362
      %v1364 = vpop.f32.mrf.mxu0
      %v1365 = vpop.f32.mrf.mxu0
      %v1366 = vadd.f32 0.0, %v1365
      %v1367 = vpop.f32.mrf.mxu0
      %1368 = vmatprep.mubr.bf16.mxu0 0
      %1369 = vmatmul.mubr.bf16.gmra.mxu0 %v1260
      %v1370 = vpop.f32.mrf.mxu0
      %v1371 = vadd.f32 0.0, %v1370
      %v1372 = vpop.f32.mrf.mxu0
      %v1373 = vpop.f32.mrf.mxu0
      %v1374 = vadd.f32 0.0, %v1373
      %v1375 = vpop.f32.mrf.mxu0
      %1376 = vmatprep.mubr.bf16.mxu0 0
      %1377 = vmatmul.mubr.bf16.gmra.mxu0 %v1261
      %v1378 = vpop.f32.mrf.mxu0
      %v1379 = vadd.f32 0.0, %v1378
      %v1380 = vpop.f32.mrf.mxu0
      %v1381 = vpop.f32.mrf.mxu0
      %v1382 = vadd.f32 0.0, %v1381
      %v1383 = vpop.f32.mrf.mxu0
      %1384 = vmatprep.mubr.bf16.mxu0 0
      %1385 = vmatmul.mubr.bf16.gmra.mxu0 %v1262
      %v1386 = vpop.f32.mrf.mxu0
      %v1387 = vadd.f32 0.0, %v1386
      %v1388 = vpop.f32.mrf.mxu0
      %v1389 = vpop.f32.mrf.mxu0
      %v1390 = vadd.f32 0.0, %v1389
      %v1391 = vpop.f32.mrf.mxu0
      %1392 = vdwg.mxu0
      %v1393 = vadd.f32 %v1203, %v1363
      %v1394 = vadd.f32 %v1204, %v1366
      %v1395 = vadd.f32 %v1205, %v1371
      %v1396 = vadd.f32 %v1206, %v1374
      %v1397 = vadd.f32 %v1207, %v1379
      %v1398 = vadd.f32 %v1208, %v1382
      %v1399 = vadd.f32 %v1209, %v1387
      %v1400 = vadd.f32 %v1210, %v1390
      %v1401 = vpack.c.bf16 %v389, %v387
      %v1402 = vpack.c.bf16 %v393, %v391
      %v1403 = vpack.c.bf16 %v397, %v395
      %v1404 = vpack.c.bf16 %v401, %v399
      %s1405 = scalar_lea.vmem %s4, 384
      %v1406 = vld [vmem:[%s1405] sm:$0xf]
      %v1407 = vld [vmem:[%s1405 + $0x4] sm:$0xf]
      %v1408 = vld [vmem:[%s1405 + $0x8] sm:$0xf]
      %v1409 = vld [vmem:[%s1405 + $0xc] sm:$0xf]
      %v1410 = vld [vmem:[%s1405 + $0x10] sm:$0xf]
      %v1411 = vld [vmem:[%s1405 + $0x14] sm:$0xf]
      %v1412 = vld [vmem:[%s1405 + $0x18] sm:$0xf]
      %v1413 = vld [vmem:[%s1405 + $0x1c] sm:$0xf]
      %v1414 = vld [vmem:[%s1405 + $0x20] sm:$0xf]
      %v1415 = vld [vmem:[%s1405 + $0x24] sm:$0xf]
      %v1416 = vld [vmem:[%s1405 + $0x28] sm:$0xf]
      %v1417 = vld [vmem:[%s1405 + $0x2c] sm:$0xf]
      %v1418 = vld [vmem:[%s1405 + $0x30] sm:$0xf]
      %v1419 = vld [vmem:[%s1405 + $0x34] sm:$0xf]
      %v1420 = vld [vmem:[%s1405 + $0x38] sm:$0xf]
      %v1421 = vld [vmem:[%s1405 + $0x3c] sm:$0xf]
      %v1438 = vunpack.c.l.b16 %v1406
      %v1439 = vunpack.c.l.b16 %v1407
      %v1440 = vunpack.c.l.b16 %v1408
      %v1441 = vunpack.c.l.b16 %v1409
      %v1442 = vunpack.c.l.b16 %v1410
      %v1443 = vunpack.c.l.b16 %v1411
      %v1444 = vunpack.c.l.b16 %v1412
      %v1445 = vunpack.c.l.b16 %v1413
      %v1446 = vunpack.c.l.b16 %v1414
      %v1447 = vunpack.c.l.b16 %v1415
      %v1448 = vunpack.c.l.b16 %v1416
      %v1449 = vunpack.c.l.b16 %v1417
      %v1450 = vunpack.c.l.b16 %v1418
      %v1451 = vunpack.c.l.b16 %v1419
      %v1452 = vunpack.c.l.b16 %v1420
      %v1453 = vunpack.c.l.b16 %v1421
      %v1454 = vpack.c.b16 %v1439, %v1438
      %v1455 = vpack.c.b16 %v1441, %v1440
      %v1456 = vpack.c.b16 %v1443, %v1442
      %v1457 = vpack.c.b16 %v1445, %v1444
      %v1458 = vpack.c.b16 %v1447, %v1446
      %v1459 = vpack.c.b16 %v1449, %v1448
      %v1460 = vpack.c.b16 %v1451, %v1450
      %v1461 = vpack.c.b16 %v1453, %v1452
      %1470 = vmatprep.subr.bf16.mxu0 0
      %1471 = vmatpush1.bf16.msra.mxu0 %v1461
      %1472 = vmatprep.subr.bf16.mxu0 0
      %1473 = vmatpush1.bf16.msra.mxu0 %v1460
      %1474 = vmatprep.subr.bf16.mxu0 0
      %1475 = vmatpush1.bf16.msra.mxu0 %v1459
      %1476 = vmatprep.subr.bf16.mxu0 0
      %1477 = vmatpush1.bf16.msra.mxu0 %v1458
      %1478 = vmatprep.subr.bf16.mxu0 0
      %1479 = vmatpush1.bf16.msra.mxu0 %v1457
      %1480 = vmatprep.subr.bf16.mxu0 0
      %1481 = vmatpush1.bf16.msra.mxu0 %v1456
      %1482 = vmatprep.subr.bf16.mxu0 0
      %1483 = vmatpush1.bf16.msra.mxu0 %v1455
      %1484 = vmatprep.subr.bf16.mxu0 0
      %1485 = vmatpush1.bf16.msra.mxu0 %v1454
      %1486 = vmatprep.subr.bf16.mxu0 0
      %1487 = vmatpush2.bf16.msra.mxu0 0
      %1488 = vmatprep.subr.bf16.mxu0 0
      %1489 = vmatpush2.bf16.msra.mxu0 0
      %1490 = vmatprep.subr.bf16.mxu0 0
      %1491 = vmatpush2.bf16.msra.mxu0 0
      %1492 = vmatprep.subr.bf16.mxu0 0
      %1493 = vmatpush2.bf16.msra.mxu0 0
      %1494 = vmatprep.subr.bf16.mxu0 0
      %1495 = vmatpush2.bf16.msra.mxu0 0
      %1496 = vmatprep.subr.bf16.mxu0 0
      %1497 = vmatpush2.bf16.msra.mxu0 0
      %1498 = vmatprep.subr.bf16.mxu0 0
      %1499 = vmatpush2.bf16.msra.mxu0 0
      %1500 = vmatprep.subr.bf16.mxu0 0
      %1501 = vmatpush2.bf16.msra.mxu0 0
      %1502 = vmatprep.mubr.bf16.mxu0 0
      %1503 = vmatmul.mubr.bf16.gmra.mxu0 %v1401
      %v1504 = vpop.f32.mrf.mxu0
      %v1505 = vadd.f32 0.0, %v1504
      %v1506 = vpop.f32.mrf.mxu0
      %v1507 = vpop.f32.mrf.mxu0
      %v1508 = vadd.f32 0.0, %v1507
      %v1509 = vpop.f32.mrf.mxu0
      %1510 = vmatprep.mubr.bf16.mxu0 0
      %1511 = vmatmul.mubr.bf16.gmra.mxu0 %v1402
      %v1512 = vpop.f32.mrf.mxu0
      %v1513 = vadd.f32 0.0, %v1512
      %v1514 = vpop.f32.mrf.mxu0
      %v1515 = vpop.f32.mrf.mxu0
      %v1516 = vadd.f32 0.0, %v1515
      %v1517 = vpop.f32.mrf.mxu0
      %1518 = vmatprep.mubr.bf16.mxu0 0
      %1519 = vmatmul.mubr.bf16.gmra.mxu0 %v1403
      %v1520 = vpop.f32.mrf.mxu0
      %v1521 = vadd.f32 0.0, %v1520
      %v1522 = vpop.f32.mrf.mxu0
      %v1523 = vpop.f32.mrf.mxu0
      %v1524 = vadd.f32 0.0, %v1523
      %v1525 = vpop.f32.mrf.mxu0
      %1526 = vmatprep.mubr.bf16.mxu0 0
      %1527 = vmatmul.mubr.bf16.gmra.mxu0 %v1404
      %v1528 = vpop.f32.mrf.mxu0
      %v1529 = vadd.f32 0.0, %v1528
      %v1530 = vpop.f32.mrf.mxu0
      %v1531 = vpop.f32.mrf.mxu0
      %v1532 = vadd.f32 0.0, %v1531
      %v1533 = vpop.f32.mrf.mxu0
      %1534 = vdwg.mxu0
      %v1535 = vadd.f32 %v1393, %v1505
      %v1536 = vadd.f32 %v1394, %v1508
      %v1537 = vadd.f32 %v1395, %v1513
      %v1538 = vadd.f32 %v1396, %v1516
      %v1539 = vadd.f32 %v1397, %v1521
      %v1540 = vadd.f32 %v1398, %v1524
      %v1541 = vadd.f32 %v1399, %v1529
      %v1542 = vadd.f32 %v1400, %v1532
      %v1543 = vpack.c.bf16 %v414, %v413
      %v1544 = vpack.c.bf16 %v416, %v415
      %v1545 = vpack.c.bf16 %v418, %v417
      %v1546 = vpack.c.bf16 %v420, %v419
      %s1547 = scalar_lea.vmem %s4, 448
      %v1548 = vld [vmem:[%s1547] sm:$0xf]
      %v1549 = vld [vmem:[%s1547 + $0x4] sm:$0xf]
      %v1550 = vld [vmem:[%s1547 + $0x8] sm:$0xf]
      %v1551 = vld [vmem:[%s1547 + $0xc] sm:$0xf]
      %v1552 = vld [vmem:[%s1547 + $0x10] sm:$0xf]
      %v1553 = vld [vmem:[%s1547 + $0x14] sm:$0xf]
      %v1554 = vld [vmem:[%s1547 + $0x18] sm:$0xf]
      %v1555 = vld [vmem:[%s1547 + $0x1c] sm:$0xf]
      %v1556 = vld [vmem:[%s1547 + $0x20] sm:$0xf]
      %v1557 = vld [vmem:[%s1547 + $0x24] sm:$0xf]
      %v1558 = vld [vmem:[%s1547 + $0x28] sm:$0xf]
      %v1559 = vld [vmem:[%s1547 + $0x2c] sm:$0xf]
      %v1560 = vld [vmem:[%s1547 + $0x30] sm:$0xf]
      %v1561 = vld [vmem:[%s1547 + $0x34] sm:$0xf]
      %v1562 = vld [vmem:[%s1547 + $0x38] sm:$0xf]
      %v1563 = vld [vmem:[%s1547 + $0x3c] sm:$0xf]
      %v1580 = vunpack.c.l.b16 %v1548
      %v1581 = vunpack.c.l.b16 %v1549
      %v1582 = vunpack.c.l.b16 %v1550
      %v1583 = vunpack.c.l.b16 %v1551
      %v1584 = vunpack.c.l.b16 %v1552
      %v1585 = vunpack.c.l.b16 %v1553
      %v1586 = vunpack.c.l.b16 %v1554
      %v1587 = vunpack.c.l.b16 %v1555
      %v1588 = vunpack.c.l.b16 %v1556
      %v1589 = vunpack.c.l.b16 %v1557
      %v1590 = vunpack.c.l.b16 %v1558
      %v1591 = vunpack.c.l.b16 %v1559
      %v1592 = vunpack.c.l.b16 %v1560
      %v1593 = vunpack.c.l.b16 %v1561
      %v1594 = vunpack.c.l.b16 %v1562
      %v1595 = vunpack.c.l.b16 %v1563
      %v1596 = vpack.c.b16 %v1581, %v1580
      %v1597 = vpack.c.b16 %v1583, %v1582
      %v1598 = vpack.c.b16 %v1585, %v1584
      %v1599 = vpack.c.b16 %v1587, %v1586
      %v1600 = vpack.c.b16 %v1589, %v1588
      %v1601 = vpack.c.b16 %v1591, %v1590
      %v1602 = vpack.c.b16 %v1593, %v1592
      %v1603 = vpack.c.b16 %v1595, %v1594
      %1612 = vmatprep.subr.bf16.mxu0 0
      %1613 = vmatpush1.bf16.msra.mxu0 %v1603
      %1614 = vmatprep.subr.bf16.mxu0 0
      %1615 = vmatpush1.bf16.msra.mxu0 %v1602
      %1616 = vmatprep.subr.bf16.mxu0 0
      %1617 = vmatpush1.bf16.msra.mxu0 %v1601
      %1618 = vmatprep.subr.bf16.mxu0 0
      %1619 = vmatpush1.bf16.msra.mxu0 %v1600
      %1620 = vmatprep.subr.bf16.mxu0 0
      %1621 = vmatpush1.bf16.msra.mxu0 %v1599
      %1622 = vmatprep.subr.bf16.mxu0 0
      %1623 = vmatpush1.bf16.msra.mxu0 %v1598
      %1624 = vmatprep.subr.bf16.mxu0 0
      %1625 = vmatpush1.bf16.msra.mxu0 %v1597
      %1626 = vmatprep.subr.bf16.mxu0 0
      %1627 = vmatpush1.bf16.msra.mxu0 %v1596
      %1628 = vmatprep.subr.bf16.mxu0 0
      %1629 = vmatpush2.bf16.msra.mxu0 0
      %1630 = vmatprep.subr.bf16.mxu0 0
      %1631 = vmatpush2.bf16.msra.mxu0 0
      %1632 = vmatprep.subr.bf16.mxu0 0
      %1633 = vmatpush2.bf16.msra.mxu0 0
      %1634 = vmatprep.subr.bf16.mxu0 0
      %1635 = vmatpush2.bf16.msra.mxu0 0
      %1636 = vmatprep.subr.bf16.mxu0 0
      %1637 = vmatpush2.bf16.msra.mxu0 0
      %1638 = vmatprep.subr.bf16.mxu0 0
      %1639 = vmatpush2.bf16.msra.mxu0 0
      %1640 = vmatprep.subr.bf16.mxu0 0
      %1641 = vmatpush2.bf16.msra.mxu0 0
      %1642 = vmatprep.subr.bf16.mxu0 0
      %1643 = vmatpush2.bf16.msra.mxu0 0
      %1644 = vmatprep.mubr.bf16.mxu0 0
      %1645 = vmatmul.mubr.bf16.gmra.mxu0 %v1543
      %v1646 = vpop.f32.mrf.mxu0
      %v1647 = vadd.f32 0.0, %v1646
      %v1648 = vpop.f32.mrf.mxu0
      %v1649 = vpop.f32.mrf.mxu0
      %v1650 = vadd.f32 0.0, %v1649
      %v1651 = vpop.f32.mrf.mxu0
      %1652 = vmatprep.mubr.bf16.mxu0 0
      %1653 = vmatmul.mubr.bf16.gmra.mxu0 %v1544
      %v1654 = vpop.f32.mrf.mxu0
      %v1655 = vadd.f32 0.0, %v1654
      %v1656 = vpop.f32.mrf.mxu0
      %v1657 = vpop.f32.mrf.mxu0
      %v1658 = vadd.f32 0.0, %v1657
      %v1659 = vpop.f32.mrf.mxu0
      %1660 = vmatprep.mubr.bf16.mxu0 0
      %1661 = vmatmul.mubr.bf16.gmra.mxu0 %v1545
      %v1662 = vpop.f32.mrf.mxu0
      %v1663 = vadd.f32 0.0, %v1662
      %v1664 = vpop.f32.mrf.mxu0
      %v1665 = vpop.f32.mrf.mxu0
      %v1666 = vadd.f32 0.0, %v1665
      %v1667 = vpop.f32.mrf.mxu0
      %1668 = vmatprep.mubr.bf16.mxu0 0
      %1669 = vmatmul.mubr.bf16.gmra.mxu0 %v1546
      %v1670 = vpop.f32.mrf.mxu0
      %v1671 = vadd.f32 0.0, %v1670
      %v1672 = vpop.f32.mrf.mxu0
      %v1673 = vpop.f32.mrf.mxu0
      %v1674 = vadd.f32 0.0, %v1673
      %v1675 = vpop.f32.mrf.mxu0
      %1676 = vdwg.mxu0
      %v1677 = vadd.f32 %v1535, %v1647
      %v1678 = vadd.f32 %v1536, %v1650
      %v1679 = vadd.f32 %v1537, %v1655
      %v1680 = vadd.f32 %v1538, %v1658
      %v1681 = vadd.f32 %v1539, %v1663
      %v1682 = vadd.f32 %v1540, %v1666
      %v1683 = vadd.f32 %v1541, %v1671
      %v1684 = vadd.f32 %v1542, %v1674
      %v1687 = vrot.slane %v401, 1
      %v1688 = vrot.slane %v402, 1
      %v1689 = vsel %vm752, %v1687, %v1688
      %v1691 = vpack.c.bf16 %v761, %v758
      %v1692 = vpack.c.bf16 %v767, %v764
      %v1693 = vpack.c.bf16 %v773, %v770
      %v1694 = vpack.c.bf16 %v1689, %v776
      %s1695 = scalar_lea.vmem %s4, 512
      %v1696 = vld [vmem:[%s1695] sm:$0xf]
      %v1697 = vld [vmem:[%s1695 + $0x4] sm:$0xf]
      %v1698 = vld [vmem:[%s1695 + $0x8] sm:$0xf]
      %v1699 = vld [vmem:[%s1695 + $0xc] sm:$0xf]
      %v1700 = vld [vmem:[%s1695 + $0x10] sm:$0xf]
      %v1701 = vld [vmem:[%s1695 + $0x14] sm:$0xf]
      %v1702 = vld [vmem:[%s1695 + $0x18] sm:$0xf]
      %v1703 = vld [vmem:[%s1695 + $0x1c] sm:$0xf]
      %v1704 = vld [vmem:[%s1695 + $0x20] sm:$0xf]
      %v1705 = vld [vmem:[%s1695 + $0x24] sm:$0xf]
      %v1706 = vld [vmem:[%s1695 + $0x28] sm:$0xf]
      %v1707 = vld [vmem:[%s1695 + $0x2c] sm:$0xf]
      %v1708 = vld [vmem:[%s1695 + $0x30] sm:$0xf]
      %v1709 = vld [vmem:[%s1695 + $0x34] sm:$0xf]
      %v1710 = vld [vmem:[%s1695 + $0x38] sm:$0xf]
      %v1711 = vld [vmem:[%s1695 + $0x3c] sm:$0xf]
      %v1728 = vunpack.c.l.b16 %v1696
      %v1729 = vunpack.c.l.b16 %v1697
      %v1730 = vunpack.c.l.b16 %v1698
      %v1731 = vunpack.c.l.b16 %v1699
      %v1732 = vunpack.c.l.b16 %v1700
      %v1733 = vunpack.c.l.b16 %v1701
      %v1734 = vunpack.c.l.b16 %v1702
      %v1735 = vunpack.c.l.b16 %v1703
      %v1736 = vunpack.c.l.b16 %v1704
      %v1737 = vunpack.c.l.b16 %v1705
      %v1738 = vunpack.c.l.b16 %v1706
      %v1739 = vunpack.c.l.b16 %v1707
      %v1740 = vunpack.c.l.b16 %v1708
      %v1741 = vunpack.c.l.b16 %v1709
      %v1742 = vunpack.c.l.b16 %v1710
      %v1743 = vunpack.c.l.b16 %v1711
      %v1744 = vpack.c.b16 %v1729, %v1728
      %v1745 = vpack.c.b16 %v1731, %v1730
      %v1746 = vpack.c.b16 %v1733, %v1732
      %v1747 = vpack.c.b16 %v1735, %v1734
      %v1748 = vpack.c.b16 %v1737, %v1736
      %v1749 = vpack.c.b16 %v1739, %v1738
      %v1750 = vpack.c.b16 %v1741, %v1740
      %v1751 = vpack.c.b16 %v1743, %v1742
      %1760 = vmatprep.subr.bf16.mxu0 0
      %1761 = vmatpush1.bf16.msra.mxu0 %v1751
      %1762 = vmatprep.subr.bf16.mxu0 0
      %1763 = vmatpush1.bf16.msra.mxu0 %v1750
      %1764 = vmatprep.subr.bf16.mxu0 0
      %1765 = vmatpush1.bf16.msra.mxu0 %v1749
      %1766 = vmatprep.subr.bf16.mxu0 0
      %1767 = vmatpush1.bf16.msra.mxu0 %v1748
      %1768 = vmatprep.subr.bf16.mxu0 0
      %1769 = vmatpush1.bf16.msra.mxu0 %v1747
      %1770 = vmatprep.subr.bf16.mxu0 0
      %1771 = vmatpush1.bf16.msra.mxu0 %v1746
      %1772 = vmatprep.subr.bf16.mxu0 0
      %1773 = vmatpush1.bf16.msra.mxu0 %v1745
      %1774 = vmatprep.subr.bf16.mxu0 0
      %1775 = vmatpush1.bf16.msra.mxu0 %v1744
      %1776 = vmatprep.subr.bf16.mxu0 0
      %1777 = vmatpush2.bf16.msra.mxu0 0
      %1778 = vmatprep.subr.bf16.mxu0 0
      %1779 = vmatpush2.bf16.msra.mxu0 0
      %1780 = vmatprep.subr.bf16.mxu0 0
      %1781 = vmatpush2.bf16.msra.mxu0 0
      %1782 = vmatprep.subr.bf16.mxu0 0
      %1783 = vmatpush2.bf16.msra.mxu0 0
      %1784 = vmatprep.subr.bf16.mxu0 0
      %1785 = vmatpush2.bf16.msra.mxu0 0
      %1786 = vmatprep.subr.bf16.mxu0 0
      %1787 = vmatpush2.bf16.msra.mxu0 0
      %1788 = vmatprep.subr.bf16.mxu0 0
      %1789 = vmatpush2.bf16.msra.mxu0 0
      %1790 = vmatprep.subr.bf16.mxu0 0
      %1791 = vmatpush2.bf16.msra.mxu0 0
      %1792 = vmatprep.mubr.bf16.mxu0 0
      %1793 = vmatmul.mubr.bf16.gmra.mxu0 %v1691
      %v1794 = vpop.f32.mrf.mxu0
      %v1795 = vadd.f32 0.0, %v1794
      %v1796 = vpop.f32.mrf.mxu0
      %v1797 = vpop.f32.mrf.mxu0
      %v1798 = vadd.f32 0.0, %v1797
      %v1799 = vpop.f32.mrf.mxu0
      %1800 = vmatprep.mubr.bf16.mxu0 0
      %1801 = vmatmul.mubr.bf16.gmra.mxu0 %v1692
      %v1802 = vpop.f32.mrf.mxu0
      %v1803 = vadd.f32 0.0, %v1802
      %v1804 = vpop.f32.mrf.mxu0
      %v1805 = vpop.f32.mrf.mxu0
      %v1806 = vadd.f32 0.0, %v1805
      %v1807 = vpop.f32.mrf.mxu0
      %1808 = vmatprep.mubr.bf16.mxu0 0
      %1809 = vmatmul.mubr.bf16.gmra.mxu0 %v1693
      %v1810 = vpop.f32.mrf.mxu0
      %v1811 = vadd.f32 0.0, %v1810
      %v1812 = vpop.f32.mrf.mxu0
      %v1813 = vpop.f32.mrf.mxu0
      %v1814 = vadd.f32 0.0, %v1813
      %v1815 = vpop.f32.mrf.mxu0
      %1816 = vmatprep.mubr.bf16.mxu0 0
      %1817 = vmatmul.mubr.bf16.gmra.mxu0 %v1694
      %v1818 = vpop.f32.mrf.mxu0
      %v1819 = vadd.f32 0.0, %v1818
      %v1820 = vpop.f32.mrf.mxu0
      %v1821 = vpop.f32.mrf.mxu0
      %v1822 = vadd.f32 0.0, %v1821
      %v1823 = vpop.f32.mrf.mxu0
      %1824 = vdwg.mxu0
      %v1825 = vadd.f32 %v1677, %v1795
      %v1826 = vadd.f32 %v1678, %v1798
      %v1827 = vadd.f32 %v1679, %v1803
      %v1828 = vadd.f32 %v1680, %v1806
      %v1829 = vadd.f32 %v1681, %v1811
      %v1830 = vadd.f32 %v1682, %v1814
      %v1831 = vadd.f32 %v1683, %v1819
      %v1832 = vadd.f32 %v1684, %v1822
      %v1833 = vld [vmem:[%s5] sm:$0x1]
      %v1835 = vlaneseq
      %v1836 = vshrl.u32 %v1835, 7
      %v1837 = vsub.s32 0, %v1836
      %v1838 = vrot.slane %v1833, %v1837
      %v1840 = vadd.f32 %v1825, %v1838
      %v1841 = vadd.f32 %v1826, %v1838
      %v1842 = vadd.f32 %v1827, %v1838
      %v1843 = vadd.f32 %v1828, %v1838
      %v1844 = vadd.f32 %v1829, %v1838
      %v1845 = vadd.f32 %v1830, %v1838
      %v1846 = vadd.f32 %v1831, %v1838
      %v1847 = vadd.f32 %v1832, %v1838
      %v1848 = vsub.f32 0.0, %v1840
      %v1849 = vsub.f32 0.0, %v1841
      %v1850 = vsub.f32 0.0, %v1842
      %v1851 = vsub.f32 0.0, %v1843
      %v1852 = vsub.f32 0.0, %v1844
      %v1853 = vsub.f32 0.0, %v1845
      %v1854 = vsub.f32 0.0, %v1846
      %v1855 = vsub.f32 0.0, %v1847
      %v1856 = vmul.f32 %v1848, 1.442695
      %v1857 = vpow.pop %v1856
      %v1858 = vmul.f32 %v1849, 1.442695
      %v1859 = vpow.pop %v1858
      %v1860 = vmul.f32 %v1850, 1.442695
      %v1861 = vpow.pop %v1860
      %v1862 = vmul.f32 %v1851, 1.442695
      %v1863 = vpow.pop %v1862
      %v1864 = vmul.f32 %v1852, 1.442695
      %v1865 = vpow.pop %v1864
      %v1866 = vmul.f32 %v1853, 1.442695
      %v1867 = vpow.pop %v1866
      %v1868 = vmul.f32 %v1854, 1.442695
      %v1869 = vpow.pop %v1868
      %v1870 = vmul.f32 %v1855, 1.442695
      %v1871 = vpow.pop %v1870
      %v1872 = vadd.f32 %v1857, 1.0
      %v1873 = vadd.f32 %v1859, 1.0
      %v1874 = vadd.f32 %v1861, 1.0
      %v1875 = vadd.f32 %v1863, 1.0
      %v1876 = vadd.f32 %v1865, 1.0
      %v1877 = vadd.f32 %v1867, 1.0
      %v1878 = vadd.f32 %v1869, 1.0
      %v1879 = vadd.f32 %v1871, 1.0
      %v1880 = vrcp.pop %v1872
      %v1881 = vrcp.pop %v1873
      %v1882 = vrcp.pop %v1874
      %v1883 = vrcp.pop %v1875
      %v1884 = vrcp.pop %v1876
      %v1885 = vrcp.pop %v1877
      %v1886 = vrcp.pop %v1878
      %v1887 = vrcp.pop %v1879
      %v1888 = vmul.f32 %v1840, %v1880
      %v1889 = vmul.f32 %v1841, %v1881
      %v1890 = vmul.f32 %v1842, %v1882
      %v1891 = vmul.f32 %v1843, %v1883
      %v1892 = vmul.f32 %v1844, %v1884
      %v1893 = vmul.f32 %v1845, %v1885
      %v1894 = vmul.f32 %v1846, %v1886
      %v1895 = vmul.f32 %v1847, %v1887
      %v1896 = vpack.c.bf16 %v1889, %v1888
      %v1897 = vpack.c.bf16 %v1891, %v1890
      %v1898 = vpack.c.bf16 %v1893, %v1892
      %v1899 = vpack.c.bf16 %v1895, %v1894
      %v1900 = vld [vmem:[%s6] sm:$0xf]
      %v1901 = vld [vmem:[%s6 + $0x4] sm:$0xf]
      %v1902 = vld [vmem:[%s6 + $0x8] sm:$0xf]
      %v1903 = vld [vmem:[%s6 + $0xc] sm:$0xf]
      %v1904 = vld [vmem:[%s6 + $0x10] sm:$0xf]
      %v1905 = vld [vmem:[%s6 + $0x14] sm:$0xf]
      %v1906 = vld [vmem:[%s6 + $0x18] sm:$0xf]
      %v1907 = vld [vmem:[%s6 + $0x1c] sm:$0xf]
      %v1908 = vld [vmem:[%s6 + $0x20] sm:$0xf]
      %v1909 = vld [vmem:[%s6 + $0x24] sm:$0xf]
      %v1910 = vld [vmem:[%s6 + $0x28] sm:$0xf]
      %v1911 = vld [vmem:[%s6 + $0x2c] sm:$0xf]
      %v1912 = vld [vmem:[%s6 + $0x30] sm:$0xf]
      %v1913 = vld [vmem:[%s6 + $0x34] sm:$0xf]
      %v1914 = vld [vmem:[%s6 + $0x38] sm:$0xf]
      %v1915 = vld [vmem:[%s6 + $0x3c] sm:$0xf]
      %v1916 = vld [vmem:[%s7] sm:$0x1]
      %v1918 = vlaneseq
      %v1919 = vshrl.u32 %v1918, 7
      %v1920 = vsub.s32 0, %v1919
      %v1921 = vrot.slane %v1916, %v1920
      %v1939 = vunpack.c.l.b16 %v1900
      %v1940 = vunpack.c.l.b16 %v1901
      %v1941 = vunpack.c.l.b16 %v1902
      %v1942 = vunpack.c.l.b16 %v1903
      %v1943 = vunpack.c.l.b16 %v1904
      %v1944 = vunpack.c.l.b16 %v1905
      %v1945 = vunpack.c.l.b16 %v1906
      %v1946 = vunpack.c.l.b16 %v1907
      %v1947 = vunpack.c.l.b16 %v1908
      %v1948 = vunpack.c.l.b16 %v1909
      %v1949 = vunpack.c.l.b16 %v1910
      %v1950 = vunpack.c.l.b16 %v1911
      %v1951 = vunpack.c.l.b16 %v1912
      %v1952 = vunpack.c.l.b16 %v1913
      %v1953 = vunpack.c.l.b16 %v1914
      %v1954 = vunpack.c.l.b16 %v1915
      %v1955 = vpack.c.b16 %v1940, %v1939
      %v1956 = vpack.c.b16 %v1942, %v1941
      %v1957 = vpack.c.b16 %v1944, %v1943
      %v1958 = vpack.c.b16 %v1946, %v1945
      %v1959 = vpack.c.b16 %v1948, %v1947
      %v1960 = vpack.c.b16 %v1950, %v1949
      %v1961 = vpack.c.b16 %v1952, %v1951
      %v1962 = vpack.c.b16 %v1954, %v1953
      %1971 = vmatprep.subr.bf16.mxu0 0
      %1972 = vmatpush1.bf16.msra.mxu0 %v1962
      %1973 = vmatprep.subr.bf16.mxu0 0
      %1974 = vmatpush1.bf16.msra.mxu0 %v1961
      %1975 = vmatprep.subr.bf16.mxu0 0
      %1976 = vmatpush1.bf16.msra.mxu0 %v1960
      %1977 = vmatprep.subr.bf16.mxu0 0
      %1978 = vmatpush1.bf16.msra.mxu0 %v1959
      %1979 = vmatprep.subr.bf16.mxu0 0
      %1980 = vmatpush1.bf16.msra.mxu0 %v1958
      %1981 = vmatprep.subr.bf16.mxu0 0
      %1982 = vmatpush1.bf16.msra.mxu0 %v1957
      %1983 = vmatprep.subr.bf16.mxu0 0
      %1984 = vmatpush1.bf16.msra.mxu0 %v1956
      %1985 = vmatprep.subr.bf16.mxu0 0
      %1986 = vmatpush1.bf16.msra.mxu0 %v1955
      %1987 = vmatprep.subr.bf16.mxu0 0
      %1988 = vmatpush2.bf16.msra.mxu0 0
      %1989 = vmatprep.subr.bf16.mxu0 0
      %1990 = vmatpush2.bf16.msra.mxu0 0
      %1991 = vmatprep.subr.bf16.mxu0 0
      %1992 = vmatpush2.bf16.msra.mxu0 0
      %1993 = vmatprep.subr.bf16.mxu0 0
      %1994 = vmatpush2.bf16.msra.mxu0 0
      %1995 = vmatprep.subr.bf16.mxu0 0
      %1996 = vmatpush2.bf16.msra.mxu0 0
      %1997 = vmatprep.subr.bf16.mxu0 0
      %1998 = vmatpush2.bf16.msra.mxu0 0
      %1999 = vmatprep.subr.bf16.mxu0 0
      %2000 = vmatpush2.bf16.msra.mxu0 0
      %2001 = vmatprep.subr.bf16.mxu0 0
      %2002 = vmatpush2.bf16.msra.mxu0 0
      %2003 = vmatprep.mubr.bf16.mxu0 0
      %2004 = vmatmul.mubr.bf16.gmra.mxu0 %v1896
      %v2005 = vpop.f32.mrf.mxu0
      %v2006 = vadd.f32 %v1921, %v2005
      %v2007 = vpop.f32.mrf.mxu0
      %v2008 = vpop.f32.mrf.mxu0
      %v2009 = vadd.f32 %v1921, %v2008
      %v2010 = vpop.f32.mrf.mxu0
      %2011 = vmatprep.mubr.bf16.mxu0 0
      %2012 = vmatmul.mubr.bf16.gmra.mxu0 %v1897
      %v2013 = vpop.f32.mrf.mxu0
      %v2014 = vadd.f32 %v1921, %v2013
      %v2015 = vpop.f32.mrf.mxu0
      %v2016 = vpop.f32.mrf.mxu0
      %v2017 = vadd.f32 %v1921, %v2016
      %v2018 = vpop.f32.mrf.mxu0
      %2019 = vmatprep.mubr.bf16.mxu0 0
      %2020 = vmatmul.mubr.bf16.gmra.mxu0 %v1898
      %v2021 = vpop.f32.mrf.mxu0
      %v2022 = vadd.f32 %v1921, %v2021
      %v2023 = vpop.f32.mrf.mxu0
      %v2024 = vpop.f32.mrf.mxu0
      %v2025 = vadd.f32 %v1921, %v2024
      %v2026 = vpop.f32.mrf.mxu0
      %2027 = vmatprep.mubr.bf16.mxu0 0
      %2028 = vmatmul.mubr.bf16.gmra.mxu0 %v1899
      %v2029 = vpop.f32.mrf.mxu0
      %v2030 = vadd.f32 %v1921, %v2029
      %v2031 = vpop.f32.mrf.mxu0
      %v2032 = vpop.f32.mrf.mxu0
      %v2033 = vadd.f32 %v1921, %v2032
      %v2034 = vpop.f32.mrf.mxu0
      %2035 = vdwg.mxu0
      %v2036 = vpack.c.bf16 %v2009, %v2006
      %v2037 = vpack.c.bf16 %v2017, %v2014
      %v2038 = vpack.c.bf16 %v2025, %v2022
      %v2039 = vpack.c.bf16 %v2033, %v2030
      %v2044 = vunpack.c.l.b16 %v2036
      %v2045 = vunpack.c.h.b16 %v2036
      %v2046 = vunpack.c.l.b16 %v2037
      %v2047 = vunpack.c.h.b16 %v2037
      %v2048 = vunpack.c.l.b16 %v2038
      %v2049 = vunpack.c.h.b16 %v2038
      %v2050 = vunpack.c.l.b16 %v2039
      %v2051 = vunpack.c.h.b16 %v2039
      %v2052 = vpack.c.b16 %v2044, %v2044
      %v2053 = vpack.c.b16 %v2045, %v2045
      %v2054 = vpack.c.b16 %v2046, %v2046
      %v2055 = vpack.c.b16 %v2047, %v2047
      %v2056 = vpack.c.b16 %v2048, %v2048
      %v2057 = vpack.c.b16 %v2049, %v2049
      %v2058 = vpack.c.b16 %v2050, %v2050
      %v2059 = vpack.c.b16 %v2051, %v2051
      %2068 = vst [vmem:[%s365] sm:$0xf] %v2052
      %2069 = vst [vmem:[%s365 + $0x4] sm:$0xf] %v2053
      %2070 = vst [vmem:[%s365 + $0x8] sm:$0xf] %v2054
      %2071 = vst [vmem:[%s365 + $0xc] sm:$0xf] %v2055
      %2072 = vst [vmem:[%s365 + $0x10] sm:$0xf] %v2056
      %2073 = vst [vmem:[%s365 + $0x14] sm:$0xf] %v2057
      %2074 = vst [vmem:[%s365 + $0x18] sm:$0xf] %v2058
      %2075 = vst [vmem:[%s365 + $0x1c] sm:$0xf] %v2059
      %p2076 = scmp.lt.s32.totalorder %s19, 1
      %s2077 = scalar_select %p2076, %s19, 1
      %s2078 = smul.addr %s2077, 8
      %s2079 = smul.addr %s2078, 4
      %s2080 = scalar_lea.vmem %s8, %s2079
      // Predicated region
      $region53: #{efficientnetv2_forward.6} parent=51 // pred_check
        %p2081 = pneg %p225
      $region54: #{efficientnetv2_forward.6} parent=51 // pred_check_branch
        %2083 = sbr.rel (%p2081) target = $region56
      $region55: #{efficientnetv2_forward.6} parent=51 // pred_region
        _
      $region56: #{efficientnetv2_forward.6} parent=51 // pred_fallthru
        _
    $region52: #{efficientnetv2_forward.6} parent=5 // pred_fallthru
      _
    %p2084 = scmp.le.s32.totalorder 2, %s14
    // Predicated region
    $region57: #{efficientnetv2_forward.6} parent=5 // pred_check
      %p2085 = pneg %p2084
    $region58: #{efficientnetv2_forward.6} parent=5 // pred_check_branch
      %2087 = sbr.rel (%p2085) target = $region60
    $region59: #{efficientnetv2_forward.6} parent=5 // pred_region
      %s2088 = ssub.s32 %s14, 2
      // Predicated region
      $region61: #{efficientnetv2_forward.6} parent=59 // pred_check
        %p2089 = pneg %p231
      $region62: #{efficientnetv2_forward.6} parent=59 // pred_check_branch
        %2091 = sbr.rel (%p2089) target = $region64
      $region63: #{efficientnetv2_forward.6} parent=59 // pred_region
        %p2092 = scmp.lt.s32.totalorder %s20, 1
        %s2093 = scalar_select %p2092, %s20, 1
        %s2094 = smul.addr %s2093, 8
        %s2095 = smul.addr %s2094, 4
        %s2096 = scalar_lea.vmem %s8, %s2095
      $region64: #{efficientnetv2_forward.6} parent=59 // pred_fallthru
        _
    $region60: #{efficientnetv2_forward.6} parent=5 // pred_fallthru
      _
  $region6: #{efficientnetv2_forward.6} parent=0 // loop_footer
    %s18 = sadd.s32 1, %s14
  $region7: #{efficientnetv2_forward.6} parent=0 // loop_footer_branch
    %13 = sbr.rel target = $region3
  $region8: #{efficientnetv2_forward.6} parent=0 // loop_exit
    _

// kernel: efficientnetv2_forward.7
$region0: #{efficientnetv2_forward.7}
  #allocation0 [shape = 'u32[]', space=smem, size = 0x4, offset = 0x4, fixed_abs, tag = 'smem constant byte address 0x4 - core index']
  #allocation1 [shape = 'u32[144,128]{1,0:T(1,128)}', space=vmem, size = 0x12000, scoped, tag = 'internal scratch']
  %s0 = inlined_call_operand.vmem [shape: bf16[2,64,128], index: 0, kind: input, shape index: {}]
  %s1 = inlined_call_operand.vmem [shape: bf16[128,256], index: 1, kind: input, shape index: {}]
  %s2 = inlined_call_operand.vmem [shape: f32[1,256], index: 2, kind: input, shape index: {}]
  %s3 = inlined_call_operand.vmem [shape: f32[9,256], index: 3, kind: input, shape index: {}]
  %s4 = inlined_call_operand.vmem [shape: f32[1,256], index: 4, kind: input, shape index: {}]
  %s5 = inlined_call_operand.vmem [shape: f32[1,256], index: 5, kind: input, shape index: {}]
  %s6 = inlined_call_operand.vmem [shape: bf16[256,128], index: 6, kind: input, shape index: {}]
  %s7 = inlined_call_operand.vmem [shape: f32[1,128], index: 7, kind: input, shape index: {}]
  %s8 = inlined_call_operand.vmem [shape: bf16[128,256], index: 8, kind: input, shape index: {}]
  %s9 = inlined_call_operand.vmem [shape: f32[1,256], index: 9, kind: input, shape index: {}]
  %s10 = inlined_call_operand.vmem [shape: bf16[256,128], index: 10, kind: input, shape index: {}]
  %s11 = inlined_call_operand.vmem [shape: f32[1,128], index: 11, kind: input, shape index: {}]
  %s12 = inlined_call_operand.vmem [shape: bf16[128,128], index: 12, kind: input, shape index: {}]
  %s13 = inlined_call_operand.vmem [shape: f32[1,128], index: 13, kind: input, shape index: {}]
  %s14 = inlined_call_operand.vmem [shape: bf16[128,128], index: 14, kind: input, shape index: {}]
  %s15 = inlined_call_operand.vmem [shape: f32[1,128], index: 15, kind: input, shape index: {}]
  %s16 = inlined_call_operand.hbm [shape: f32[2,1,128], index: 16, kind: output, shape index: {}]
  %s17 = sld [smem:[#allocation0]]
  $region97: #{efficientnetv2_forward.7} parent=0
    _
  %s19 = ssub.s32 1, %s17
  %s20 = scalar_select 0, %s19, %s17
  $region1: #{efficientnetv2_forward.7} parent=0
    #allocation2 [shape = 'u8[1024]{0}', space=vmem, size = 0x400, scoped, tag = 'output window, operand 0']
    #allocation3 [shape = 's32[2]{0}', space=sflag, size = 0x8, scoped, tag = 'scoped memory for efficientnetv2_forward.7']
    %21 = vsyncpa [#allocation3], 0
    %s22 = scalar_lea.sflag [#allocation3], 1
    %23 = vsyncpa %s22, 0
    loop: start=0, step=1, limit=4
    $region2: #{efficientnetv2_forward.7} parent=1 // loop_pre_header
      _
    $region3: #{efficientnetv2_forward.7} parent=1 // loop_header
      %s25 = sphi 0, %s29
      %p26 = scmp.ge.s32.totalorder %s25, 4
      %s35 = sphi 0, %s37
      %s38 = sphi 0, %s35
      %s39 = sphi 0, %s38
      %s55 = sphi 0, %s39
      %s59 = sphi 0, %s59
      %s61 = sphi 0, %s59
      %s62 = sphi 0, %s61
      %s76 = sphi 0, %s62
      %s80 = sphi 0, %s80
      %s82 = sphi 0, %s80
      %s83 = sphi 0, %s82
      %s97 = sphi 0, %s83
      %s101 = sphi 0, %s101
      %s103 = sphi 0, %s101
      %s104 = sphi 0, %s103
      %s118 = sphi 0, %s104
      %s122 = sphi 0, %s122
      %s124 = sphi 0, %s122
      %s125 = sphi 0, %s124
      %s139 = sphi 0, %s125
      %s143 = sphi 0, %s143
      %s145 = sphi 0, %s143
      %s146 = sphi 0, %s145
      %s160 = sphi 0, %s146
      %s164 = sphi 0, %s164
      %s166 = sphi 0, %s164
      %s167 = sphi 0, %s166
      %s181 = sphi 0, %s167
      %s185 = sphi 0, %s185
      %s187 = sphi 0, %s185
      %s188 = sphi 0, %s187
      %s202 = sphi 0, %s188
      %s206 = sphi 0, %s206
      %s208 = sphi 0, %s206
      %s209 = sphi 0, %s208
      %s223 = sphi 0, %s209
      %s227 = sphi 0, %s227
      %s229 = sphi 0, %s227
      %s230 = sphi 0, %s229
      %s244 = sphi 0, %s230
      %s248 = sphi 0, %s248
      %s250 = sphi 0, %s248
      %s251 = sphi 0, %s250
      %s265 = sphi 0, %s251
      %s269 = sphi 0, %s269
      %s271 = sphi 0, %s269
      %s272 = sphi 0, %s271
      %s286 = sphi 0, %s272
      %s290 = sphi 0, %s290
      %s292 = sphi 0, %s290
      %s293 = sphi 0, %s292
      %s307 = sphi 0, %s293
      %s311 = sphi 0, %s311
      %s313 = sphi 0, %s311
      %s314 = sphi 0, %s313
      %s328 = sphi 0, %s314
      %s332 = sphi 0, %s332
      %s334 = sphi 0, %s332
      %s335 = sphi 0, %s334
      %s349 = sphi 0, %s335
      %s353 = sphi 0, %s353
      %s355 = sphi 0, %s353
      %s356 = sphi 0, %s355
      %s370 = sphi 0, %s356
      %s376 = sphi 0, %s378
      %s379 = sphi 0, %s376
      %s380 = sphi 0, %s379
      %s396 = sphi 0, %s380
    $region4: #{efficientnetv2_forward.7} parent=1 // loop_header_branch
      %28 = sbr.rel (%p26) target = $region8
    $region5: #{efficientnetv2_forward.7} parent=1 // loop_body
      %s30 = ssub.s32 %s25, 1
      %s31 = ssub.s32 %s25, 2
      %s32 = sadd.s32 %s25, 1
      %s33 = ssub.s32 %s25, %s32
      %p34 = scmp.eq.s32.totalorder %s33, 0
      %s36 = sadd.s32 %s35, 1
      %s37 = scalar_select %p34, %s35, %s36
      %p40 = pneg %p34
      %p41 = scmp.eq.s32.totalorder %s25, 1
      %p42 = por %p40, %p41
      %p43 = scmp.ne.s32.totalorder %s35, %s38
      %p44 = scmp.eq.s32.totalorder %s25, 0
      %p45 = por %p43, %p44
      %p46 = scmp.ne.s32.totalorder %s35, %s38
      %p47 = scmp.eq.s32.totalorder %s30, 1
      %p48 = por %p46, %p47
      %p49 = scmp.ne.s32.totalorder %s38, %s39
      %p50 = scmp.eq.s32.totalorder %s30, 0
      %p51 = por %p49, %p50
      %p52 = scmp.ne.s32.totalorder %s38, %s39
      %p53 = scmp.eq.s32.totalorder %s31, 1
      %p54 = por %p52, %p53
      %p56 = scmp.ne.s32.totalorder %s39, %s55
      %p57 = scmp.eq.s32.totalorder %s31, 0
      %p58 = por %p56, %p57
      %s60 = sadd.s32 %s59, 1
      %p63 = scmp.eq.s32.totalorder %s25, 1
      %p64 = scmp.ne.s32.totalorder %s59, %s61
      %p65 = scmp.eq.s32.totalorder %s25, 0
      %p66 = por %p64, %p65
      %p67 = scmp.ne.s32.totalorder %s59, %s61
      %p68 = scmp.eq.s32.totalorder %s30, 1
      %p69 = por %p67, %p68
      %p70 = scmp.ne.s32.totalorder %s61, %s62
      %p71 = scmp.eq.s32.totalorder %s30, 0
      %p72 = por %p70, %p71
      %p73 = scmp.ne.s32.totalorder %s61, %s62
      %p74 = scmp.eq.s32.totalorder %s31, 1
      %p75 = por %p73, %p74
      %p77 = scmp.ne.s32.totalorder %s62, %s76
      %p78 = scmp.eq.s32.totalorder %s31, 0
      %p79 = por %p77, %p78
      %s81 = sadd.s32 %s80, 1
      %p84 = scmp.eq.s32.totalorder %s25, 1
      %p85 = scmp.ne.s32.totalorder %s80, %s82
      %p86 = scmp.eq.s32.totalorder %s25, 0
      %p87 = por %p85, %p86
      %p88 = scmp.ne.s32.totalorder %s80, %s82
      %p89 = scmp.eq.s32.totalorder %s30, 1
      %p90 = por %p88, %p89
      %p91 = scmp.ne.s32.totalorder %s82, %s83
      %p92 = scmp.eq.s32.totalorder %s30, 0
      %p93 = por %p91, %p92
      %p94 = scmp.ne.s32.totalorder %s82, %s83
      %p95 = scmp.eq.s32.totalorder %s31, 1
      %p96 = por %p94, %p95
      %p98 = scmp.ne.s32.totalorder %s83, %s97
      %p99 = scmp.eq.s32.totalorder %s31, 0
      %p100 = por %p98, %p99
      %s102 = sadd.s32 %s101, 1
      %p105 = scmp.eq.s32.totalorder %s25, 1
      %p106 = scmp.ne.s32.totalorder %s101, %s103
      %p107 = scmp.eq.s32.totalorder %s25, 0
      %p108 = por %p106, %p107
      %p109 = scmp.ne.s32.totalorder %s101, %s103
      %p110 = scmp.eq.s32.totalorder %s30, 1
      %p111 = por %p109, %p110
      %p112 = scmp.ne.s32.totalorder %s103, %s104
      %p113 = scmp.eq.s32.totalorder %s30, 0
      %p114 = por %p112, %p113
      %p115 = scmp.ne.s32.totalorder %s103, %s104
      %p116 = scmp.eq.s32.totalorder %s31, 1
      %p117 = por %p115, %p116
      %p119 = scmp.ne.s32.totalorder %s104, %s118
      %p120 = scmp.eq.s32.totalorder %s31, 0
      %p121 = por %p119, %p120
      %s123 = sadd.s32 %s122, 1
      %p126 = scmp.eq.s32.totalorder %s25, 1
      %p127 = scmp.ne.s32.totalorder %s122, %s124
      %p128 = scmp.eq.s32.totalorder %s25, 0
      %p129 = por %p127, %p128
      %p130 = scmp.ne.s32.totalorder %s122, %s124
      %p131 = scmp.eq.s32.totalorder %s30, 1
      %p132 = por %p130, %p131
      %p133 = scmp.ne.s32.totalorder %s124, %s125
      %p134 = scmp.eq.s32.totalorder %s30, 0
      %p135 = por %p133, %p134
      %p136 = scmp.ne.s32.totalorder %s124, %s125
      %p137 = scmp.eq.s32.totalorder %s31, 1
      %p138 = por %p136, %p137
      %p140 = scmp.ne.s32.totalorder %s125, %s139
      %p141 = scmp.eq.s32.totalorder %s31, 0
      %p142 = por %p140, %p141
      %s144 = sadd.s32 %s143, 1
      %p147 = scmp.eq.s32.totalorder %s25, 1
      %p148 = scmp.ne.s32.totalorder %s143, %s145
      %p149 = scmp.eq.s32.totalorder %s25, 0
      %p150 = por %p148, %p149
      %p151 = scmp.ne.s32.totalorder %s143, %s145
      %p152 = scmp.eq.s32.totalorder %s30, 1
      %p153 = por %p151, %p152
      %p154 = scmp.ne.s32.totalorder %s145, %s146
      %p155 = scmp.eq.s32.totalorder %s30, 0
      %p156 = por %p154, %p155
      %p157 = scmp.ne.s32.totalorder %s145, %s146
      %p158 = scmp.eq.s32.totalorder %s31, 1
      %p159 = por %p157, %p158
      %p161 = scmp.ne.s32.totalorder %s146, %s160
      %p162 = scmp.eq.s32.totalorder %s31, 0
      %p163 = por %p161, %p162
      %s165 = sadd.s32 %s164, 1
      %p168 = scmp.eq.s32.totalorder %s25, 1
      %p169 = scmp.ne.s32.totalorder %s164, %s166
      %p170 = scmp.eq.s32.totalorder %s25, 0
      %p171 = por %p169, %p170
      %p172 = scmp.ne.s32.totalorder %s164, %s166
      %p173 = scmp.eq.s32.totalorder %s30, 1
      %p174 = por %p172, %p173
      %p175 = scmp.ne.s32.totalorder %s166, %s167
      %p176 = scmp.eq.s32.totalorder %s30, 0
      %p177 = por %p175, %p176
      %p178 = scmp.ne.s32.totalorder %s166, %s167
      %p179 = scmp.eq.s32.totalorder %s31, 1
      %p180 = por %p178, %p179
      %p182 = scmp.ne.s32.totalorder %s167, %s181
      %p183 = scmp.eq.s32.totalorder %s31, 0
      %p184 = por %p182, %p183
      %s186 = sadd.s32 %s185, 1
      %p189 = scmp.eq.s32.totalorder %s25, 1
      %p190 = scmp.ne.s32.totalorder %s185, %s187
      %p191 = scmp.eq.s32.totalorder %s25, 0
      %p192 = por %p190, %p191
      %p193 = scmp.ne.s32.totalorder %s185, %s187
      %p194 = scmp.eq.s32.totalorder %s30, 1
      %p195 = por %p193, %p194
      %p196 = scmp.ne.s32.totalorder %s187, %s188
      %p197 = scmp.eq.s32.totalorder %s30, 0
      %p198 = por %p196, %p197
      %p199 = scmp.ne.s32.totalorder %s187, %s188
      %p200 = scmp.eq.s32.totalorder %s31, 1
      %p201 = por %p199, %p200
      %p203 = scmp.ne.s32.totalorder %s188, %s202
      %p204 = scmp.eq.s32.totalorder %s31, 0
      %p205 = por %p203, %p204
      %s207 = sadd.s32 %s206, 1
      %p210 = scmp.eq.s32.totalorder %s25, 1
      %p211 = scmp.ne.s32.totalorder %s206, %s208
      %p212 = scmp.eq.s32.totalorder %s25, 0
      %p213 = por %p211, %p212
      %p214 = scmp.ne.s32.totalorder %s206, %s208
      %p215 = scmp.eq.s32.totalorder %s30, 1
      %p216 = por %p214, %p215
      %p217 = scmp.ne.s32.totalorder %s208, %s209
      %p218 = scmp.eq.s32.totalorder %s30, 0
      %p219 = por %p217, %p218
      %p220 = scmp.ne.s32.totalorder %s208, %s209
      %p221 = scmp.eq.s32.totalorder %s31, 1
      %p222 = por %p220, %p221
      %p224 = scmp.ne.s32.totalorder %s209, %s223
      %p225 = scmp.eq.s32.totalorder %s31, 0
      %p226 = por %p224, %p225
      %s228 = sadd.s32 %s227, 1
      %p231 = scmp.eq.s32.totalorder %s25, 1
      %p232 = scmp.ne.s32.totalorder %s227, %s229
      %p233 = scmp.eq.s32.totalorder %s25, 0
      %p234 = por %p232, %p233
      %p235 = scmp.ne.s32.totalorder %s227, %s229
      %p236 = scmp.eq.s32.totalorder %s30, 1
      %p237 = por %p235, %p236
      %p238 = scmp.ne.s32.totalorder %s229, %s230
      %p239 = scmp.eq.s32.totalorder %s30, 0
      %p240 = por %p238, %p239
      %p241 = scmp.ne.s32.totalorder %s229, %s230
      %p242 = scmp.eq.s32.totalorder %s31, 1
      %p243 = por %p241, %p242
      %p245 = scmp.ne.s32.totalorder %s230, %s244
      %p246 = scmp.eq.s32.totalorder %s31, 0
      %p247 = por %p245, %p246
      %s249 = sadd.s32 %s248, 1
      %p252 = scmp.eq.s32.totalorder %s25, 1
      %p253 = scmp.ne.s32.totalorder %s248, %s250
      %p254 = scmp.eq.s32.totalorder %s25, 0
      %p255 = por %p253, %p254
      %p256 = scmp.ne.s32.totalorder %s248, %s250
      %p257 = scmp.eq.s32.totalorder %s30, 1
      %p258 = por %p256, %p257
      %p259 = scmp.ne.s32.totalorder %s250, %s251
      %p260 = scmp.eq.s32.totalorder %s30, 0
      %p261 = por %p259, %p260
      %p262 = scmp.ne.s32.totalorder %s250, %s251
      %p263 = scmp.eq.s32.totalorder %s31, 1
      %p264 = por %p262, %p263
      %p266 = scmp.ne.s32.totalorder %s251, %s265
      %p267 = scmp.eq.s32.totalorder %s31, 0
      %p268 = por %p266, %p267
      %s270 = sadd.s32 %s269, 1
      %p273 = scmp.eq.s32.totalorder %s25, 1
      %p274 = scmp.ne.s32.totalorder %s269, %s271
      %p275 = scmp.eq.s32.totalorder %s25, 0
      %p276 = por %p274, %p275
      %p277 = scmp.ne.s32.totalorder %s269, %s271
      %p278 = scmp.eq.s32.totalorder %s30, 1
      %p279 = por %p277, %p278
      %p280 = scmp.ne.s32.totalorder %s271, %s272
      %p281 = scmp.eq.s32.totalorder %s30, 0
      %p282 = por %p280, %p281
      %p283 = scmp.ne.s32.totalorder %s271, %s272
      %p284 = scmp.eq.s32.totalorder %s31, 1
      %p285 = por %p283, %p284
      %p287 = scmp.ne.s32.totalorder %s272, %s286
      %p288 = scmp.eq.s32.totalorder %s31, 0
      %p289 = por %p287, %p288
      %s291 = sadd.s32 %s290, 1
      %p294 = scmp.eq.s32.totalorder %s25, 1
      %p295 = scmp.ne.s32.totalorder %s290, %s292
      %p296 = scmp.eq.s32.totalorder %s25, 0
      %p297 = por %p295, %p296
      %p298 = scmp.ne.s32.totalorder %s290, %s292
      %p299 = scmp.eq.s32.totalorder %s30, 1
      %p300 = por %p298, %p299
      %p301 = scmp.ne.s32.totalorder %s292, %s293
      %p302 = scmp.eq.s32.totalorder %s30, 0
      %p303 = por %p301, %p302
      %p304 = scmp.ne.s32.totalorder %s292, %s293
      %p305 = scmp.eq.s32.totalorder %s31, 1
      %p306 = por %p304, %p305
      %p308 = scmp.ne.s32.totalorder %s293, %s307
      %p309 = scmp.eq.s32.totalorder %s31, 0
      %p310 = por %p308, %p309
      %s312 = sadd.s32 %s311, 1
      %p315 = scmp.eq.s32.totalorder %s25, 1
      %p316 = scmp.ne.s32.totalorder %s311, %s313
      %p317 = scmp.eq.s32.totalorder %s25, 0
      %p318 = por %p316, %p317
      %p319 = scmp.ne.s32.totalorder %s311, %s313
      %p320 = scmp.eq.s32.totalorder %s30, 1
      %p321 = por %p319, %p320
      %p322 = scmp.ne.s32.totalorder %s313, %s314
      %p323 = scmp.eq.s32.totalorder %s30, 0
      %p324 = por %p322, %p323
      %p325 = scmp.ne.s32.totalorder %s313, %s314
      %p326 = scmp.eq.s32.totalorder %s31, 1
      %p327 = por %p325, %p326
      %p329 = scmp.ne.s32.totalorder %s314, %s328
      %p330 = scmp.eq.s32.totalorder %s31, 0
      %p331 = por %p329, %p330
      %s333 = sadd.s32 %s332, 1
      %p336 = scmp.eq.s32.totalorder %s25, 1
      %p337 = scmp.ne.s32.totalorder %s332, %s334
      %p338 = scmp.eq.s32.totalorder %s25, 0
      %p339 = por %p337, %p338
      %p340 = scmp.ne.s32.totalorder %s332, %s334
      %p341 = scmp.eq.s32.totalorder %s30, 1
      %p342 = por %p340, %p341
      %p343 = scmp.ne.s32.totalorder %s334, %s335
      %p344 = scmp.eq.s32.totalorder %s30, 0
      %p345 = por %p343, %p344
      %p346 = scmp.ne.s32.totalorder %s334, %s335
      %p347 = scmp.eq.s32.totalorder %s31, 1
      %p348 = por %p346, %p347
      %p350 = scmp.ne.s32.totalorder %s335, %s349
      %p351 = scmp.eq.s32.totalorder %s31, 0
      %p352 = por %p350, %p351
      %s354 = sadd.s32 %s353, 1
      %p357 = scmp.eq.s32.totalorder %s25, 1
      %p358 = scmp.ne.s32.totalorder %s353, %s355
      %p359 = scmp.eq.s32.totalorder %s25, 0
      %p360 = por %p358, %p359
      %p361 = scmp.ne.s32.totalorder %s353, %s355
      %p362 = scmp.eq.s32.totalorder %s30, 1
      %p363 = por %p361, %p362
      %p364 = scmp.ne.s32.totalorder %s355, %s356
      %p365 = scmp.eq.s32.totalorder %s30, 0
      %p366 = por %p364, %p365
      %p367 = scmp.ne.s32.totalorder %s355, %s356
      %p368 = scmp.eq.s32.totalorder %s31, 1
      %p369 = por %p367, %p368
      %p371 = scmp.ne.s32.totalorder %s356, %s370
      %p372 = scmp.eq.s32.totalorder %s31, 0
      %p373 = por %p371, %p372
      %s374 = ssub.s32 %s25, %s32
      %p375 = scmp.eq.s32.totalorder %s374, 0
      %s377 = sadd.s32 %s376, 1
      %s378 = scalar_select %p375, %s376, %s377
      %p381 = pneg %p375
      %p382 = scmp.eq.s32.totalorder %s25, 1
      %p383 = por %p381, %p382
      %p384 = scmp.ne.s32.totalorder %s376, %s379
      %p385 = scmp.eq.s32.totalorder %s25, 0
      %p386 = por %p384, %p385
      %p387 = scmp.ne.s32.totalorder %s376, %s379
      %p388 = scmp.eq.s32.totalorder %s30, 1
      %p389 = por %p387, %p388
      %p390 = scmp.ne.s32.totalorder %s379, %s380
      %p391 = scmp.eq.s32.totalorder %s30, 0
      %p392 = por %p390, %p391
      %p393 = scmp.ne.s32.totalorder %s379, %s380
      %p394 = scmp.eq.s32.totalorder %s31, 1
      %p395 = por %p393, %p394
      %p397 = scmp.ne.s32.totalorder %s380, %s396
      %p398 = scmp.eq.s32.totalorder %s31, 0
      %p399 = por %p397, %p398
      %p400 = scmp.le.s32.totalorder 1, %s25
      %p401 = scmp.lt.s32.totalorder %s25, 3
      %p402 = pnand %p400, %p401
      %p403 = pneg %p402
      // Predicated region
      $region9: #{efficientnetv2_forward.7} parent=5 // pred_check
        _
      $region10: #{efficientnetv2_forward.7} parent=5 // pred_check_branch
        %405 = sbr.rel (%p402) target = $region12
      $region11: #{efficientnetv2_forward.7} parent=5 // pred_region
        %s406 = ssub.s32 %s25, 1
        // Predicated region
        $region13: #{efficientnetv2_forward.7} parent=11 // pred_check
          %p407 = pneg %p72
        $region14: #{efficientnetv2_forward.7} parent=11 // pred_check_branch
          %409 = sbr.rel (%p407) target = $region16
        $region15: #{efficientnetv2_forward.7} parent=11 // pred_region
          _
        $region16: #{efficientnetv2_forward.7} parent=11 // pred_fallthru
          _
        // Predicated region
        $region17: #{efficientnetv2_forward.7} parent=11 // pred_check
          %p410 = pneg %p93
        $region18: #{efficientnetv2_forward.7} parent=11 // pred_check_branch
          %412 = sbr.rel (%p410) target = $region20
        $region19: #{efficientnetv2_forward.7} parent=11 // pred_region
          _
        $region20: #{efficientnetv2_forward.7} parent=11 // pred_fallthru
          _
        // Predicated region
        $region21: #{efficientnetv2_forward.7} parent=11 // pred_check
          %p413 = pneg %p114
        $region22: #{efficientnetv2_forward.7} parent=11 // pred_check_branch
          %415 = sbr.rel (%p413) target = $region24
        $region23: #{efficientnetv2_forward.7} parent=11 // pred_region
          _
        $region24: #{efficientnetv2_forward.7} parent=11 // pred_fallthru
          _
        // Predicated region
        $region25: #{efficientnetv2_forward.7} parent=11 // pred_check
          %p416 = pneg %p135
        $region26: #{efficientnetv2_forward.7} parent=11 // pred_check_branch
          %418 = sbr.rel (%p416) target = $region28
        $region27: #{efficientnetv2_forward.7} parent=11 // pred_region
          _
        $region28: #{efficientnetv2_forward.7} parent=11 // pred_fallthru
          _
        // Predicated region
        $region29: #{efficientnetv2_forward.7} parent=11 // pred_check
          %p419 = pneg %p156
        $region30: #{efficientnetv2_forward.7} parent=11 // pred_check_branch
          %421 = sbr.rel (%p419) target = $region32
        $region31: #{efficientnetv2_forward.7} parent=11 // pred_region
          _
        $region32: #{efficientnetv2_forward.7} parent=11 // pred_fallthru
          _
        // Predicated region
        $region33: #{efficientnetv2_forward.7} parent=11 // pred_check
          %p422 = pneg %p177
        $region34: #{efficientnetv2_forward.7} parent=11 // pred_check_branch
          %424 = sbr.rel (%p422) target = $region36
        $region35: #{efficientnetv2_forward.7} parent=11 // pred_region
          _
        $region36: #{efficientnetv2_forward.7} parent=11 // pred_fallthru
          _
        // Predicated region
        $region37: #{efficientnetv2_forward.7} parent=11 // pred_check
          %p425 = pneg %p198
        $region38: #{efficientnetv2_forward.7} parent=11 // pred_check_branch
          %427 = sbr.rel (%p425) target = $region40
        $region39: #{efficientnetv2_forward.7} parent=11 // pred_region
          _
        $region40: #{efficientnetv2_forward.7} parent=11 // pred_fallthru
          _
        // Predicated region
        $region41: #{efficientnetv2_forward.7} parent=11 // pred_check
          %p428 = pneg %p219
        $region42: #{efficientnetv2_forward.7} parent=11 // pred_check_branch
          %430 = sbr.rel (%p428) target = $region44
        $region43: #{efficientnetv2_forward.7} parent=11 // pred_region
          _
        $region44: #{efficientnetv2_forward.7} parent=11 // pred_fallthru
          _
        // Predicated region
        $region45: #{efficientnetv2_forward.7} parent=11 // pred_check
          %p431 = pneg %p240
        $region46: #{efficientnetv2_forward.7} parent=11 // pred_check_branch
          %433 = sbr.rel (%p431) target = $region48
        $region47: #{efficientnetv2_forward.7} parent=11 // pred_region
          _
        $region48: #{efficientnetv2_forward.7} parent=11 // pred_fallthru
          _
        // Predicated region
        $region49: #{efficientnetv2_forward.7} parent=11 // pred_check
          %p434 = pneg %p261
        $region50: #{efficientnetv2_forward.7} parent=11 // pred_check_branch
          %436 = sbr.rel (%p434) target = $region52
        $region51: #{efficientnetv2_forward.7} parent=11 // pred_region
          _
        $region52: #{efficientnetv2_forward.7} parent=11 // pred_fallthru
          _
        // Predicated region
        $region53: #{efficientnetv2_forward.7} parent=11 // pred_check
          %p437 = pneg %p282
        $region54: #{efficientnetv2_forward.7} parent=11 // pred_check_branch
          %439 = sbr.rel (%p437) target = $region56
        $region55: #{efficientnetv2_forward.7} parent=11 // pred_region
          _
        $region56: #{efficientnetv2_forward.7} parent=11 // pred_fallthru
          _
        // Predicated region
        $region57: #{efficientnetv2_forward.7} parent=11 // pred_check
          %p440 = pneg %p303
        $region58: #{efficientnetv2_forward.7} parent=11 // pred_check_branch
          %442 = sbr.rel (%p440) target = $region60
        $region59: #{efficientnetv2_forward.7} parent=11 // pred_region
          _
        $region60: #{efficientnetv2_forward.7} parent=11 // pred_fallthru
          _
        // Predicated region
        $region61: #{efficientnetv2_forward.7} parent=11 // pred_check
          %p443 = pneg %p324
        $region62: #{efficientnetv2_forward.7} parent=11 // pred_check_branch
          %445 = sbr.rel (%p443) target = $region64
        $region63: #{efficientnetv2_forward.7} parent=11 // pred_region
          _
        $region64: #{efficientnetv2_forward.7} parent=11 // pred_fallthru
          _
        // Predicated region
        $region65: #{efficientnetv2_forward.7} parent=11 // pred_check
          %p446 = pneg %p345
        $region66: #{efficientnetv2_forward.7} parent=11 // pred_check_branch
          %448 = sbr.rel (%p446) target = $region68
        $region67: #{efficientnetv2_forward.7} parent=11 // pred_region
          _
        $region68: #{efficientnetv2_forward.7} parent=11 // pred_fallthru
          _
        // Predicated region
        $region69: #{efficientnetv2_forward.7} parent=11 // pred_check
          %p449 = pneg %p366
        $region70: #{efficientnetv2_forward.7} parent=11 // pred_check_branch
          %451 = sbr.rel (%p449) target = $region72
        $region71: #{efficientnetv2_forward.7} parent=11 // pred_region
          _
        $region72: #{efficientnetv2_forward.7} parent=11 // pred_fallthru
          _
      $region12: #{efficientnetv2_forward.7} parent=5 // pred_fallthru
        _
      %p452 = scmp.lt.s32.totalorder %s25, 2
      // Predicated region
      $region73: #{efficientnetv2_forward.7} parent=5 // pred_check
        %p453 = pneg %p452
      $region74: #{efficientnetv2_forward.7} parent=5 // pred_check_branch
        %455 = sbr.rel (%p453) target = $region76
      $region75: #{efficientnetv2_forward.7} parent=5 // pred_region
        // Predicated region
        $region77: #{efficientnetv2_forward.7} parent=75 // pred_check
          %p456 = pneg %p45
        $region78: #{efficientnetv2_forward.7} parent=75 // pred_check_branch
          %458 = sbr.rel (%p456) target = $region80
        $region79: #{efficientnetv2_forward.7} parent=75 // pred_region
          %p459 = scmp.lt.s32.totalorder %s25, 1
          %s460 = scalar_select %p459, %s25, 1
          %s461 = smul.addr %s460, 8
          %s462 = smul.addr %s461, 4
          %s463 = scalar_lea.vmem %s0, %s462
        $region80: #{efficientnetv2_forward.7} parent=75 // pred_fallthru
          _
      $region76: #{efficientnetv2_forward.7} parent=5 // pred_fallthru
        _
      %p464 = scmp.le.s32.totalorder 1, %s25
      %p465 = scmp.lt.s32.totalorder %s25, 3
      %p466 = pnand %p464, %p465
      %p467 = pneg %p466
      // Predicated region
      $region81: #{efficientnetv2_forward.7} parent=5 // pred_check
        _
      $region82: #{efficientnetv2_forward.7} parent=5 // pred_check_branch
        %469 = sbr.rel (%p466) target = $region84
      $region83: #{efficientnetv2_forward.7} parent=5 // pred_region
        %s470 = ssub.s32 %s25, 1
        %p471 = scmp.lt.s32.totalorder %s30, 1
        %s472 = scalar_select %p471, %s30, 1
        %s473 = smul.addr %s472, 8
        %s474 = smul.addr %s473, 4
        %s475 = scalar_lea.vmem %s0, %s474
        %p476 = pneg %p51
        %p477 = pneg %p48
        %p478 = pneg %p72
        %p479 = pneg %p69
        %p480 = pneg %p93
        %p481 = pneg %p90
        %p482 = pneg %p114
        %p483 = pneg %p111
        %p484 = pneg %p135
        %p485 = pneg %p132
        %p486 = pneg %p156
        %p487 = pneg %p153
        %p488 = pneg %p177
        %p489 = pneg %p174
        %p490 = pneg %p198
        %p491 = pneg %p195
        %p492 = pneg %p219
        %p493 = pneg %p216
        %p494 = pneg %p240
        %p495 = pneg %p237
        %p496 = pneg %p261
        %p497 = pneg %p258
        %p498 = pneg %p282
        %p499 = pneg %p279
        %p500 = pneg %p303
        %p501 = pneg %p300
        %p502 = pneg %p324
        %p503 = pneg %p321
        %p504 = pneg %p345
        %p505 = pneg %p342
        %p506 = pneg %p366
        %p507 = pneg %p363
        %p508 = pneg %p392
        %p509 = pneg %p389
        %s510 = sand.u32 %s379, 1
        %s511 = scalar_lea.sflag [#allocation3], %s510
        %s512 = sand.u32 %s379, 1
        %s513 = scalar_lea.vmem [#allocation2], %s512
        %p514 = scmp.lt.s32.totalorder %s30, 1
        %s515 = scalar_select %p514, %s30, 1
        %s516 = smul.addr %s515, 8
        %s517 = smul.addr %s516, 4
        %s518 = scalar_lea.vmem %s0, %s517
        %v520 = vld [vmem:[%s518] sm:$0xf]
        %v521 = vld [vmem:[%s518 + $0x4] sm:$0xf]
        %v522 = vld [vmem:[%s518 + $0x8] sm:$0xf]
        %v523 = vld [vmem:[%s518 + $0xc] sm:$0xf]
        %v524 = vld [vmem:[%s518 + $0x10] sm:$0xf]
        %v525 = vld [vmem:[%s518 + $0x14] sm:$0xf]
        %v526 = vld [vmem:[%s518 + $0x18] sm:$0xf]
        %v527 = vld [vmem:[%s518 + $0x1c] sm:$0xf]
        %v528 = vld [vmem:[%s1] sm:$0xff]
        %v529 = vld [vmem:[%s1 + $0x8] sm:$0xff]
        %v530 = vld [vmem:[%s1 + $0x10] sm:$0xff]
        %v531 = vld [vmem:[%s1 + $0x18] sm:$0xff]
        %v532 = vld [vmem:[%s1 + $0x20] sm:$0xff]
        %v533 = vld [vmem:[%s1 + $0x28] sm:$0xff]
        %v534 = vld [vmem:[%s1 + $0x30] sm:$0xff]
        %v535 = vld [vmem:[%s1 + $0x38] sm:$0xff]
        %v536 = vld [vmem:[%s1 + $0x40] sm:$0xff]
        %v537 = vld [vmem:[%s1 + $0x48] sm:$0xff]
        %v538 = vld [vmem:[%s1 + $0x50] sm:$0xff]
        %v539 = vld [vmem:[%s1 + $0x58] sm:$0xff]
        %v540 = vld [vmem:[%s1 + $0x60] sm:$0xff]
        %v541 = vld [vmem:[%s1 + $0x68] sm:$0xff]
        %v542 = vld [vmem:[%s1 + $0x70] sm:$0xff]
        %v543 = vld [vmem:[%s1 + $0x78] sm:$0xff]
        %v544 = vld [vmem:[%s2] sm:$0x3]
        %v546 = vlaneseq
        %v547 = vshrl.u32 %v546, 7
        %v548 = vsub.s32 0, %v547
        %v549 = vrot.slane %v544, %v548
        %v550 = vlaneseq
        %v551 = vshrl.u32 %v550, 7
        %v552 = vsub.s32 1, %v551
        %v553 = vrot.slane %v544, %v552
        %v564 = vunpack.c.l.b16 %v520
        %v565 = vunpack.c.l.b16 %v521
        %v566 = vunpack.c.l.b16 %v522
        %v567 = vunpack.c.l.b16 %v523
        %v568 = vunpack.c.l.b16 %v524
        %v569 = vunpack.c.l.b16 %v525
        %v570 = vunpack.c.l.b16 %v526
        %v571 = vunpack.c.l.b16 %v527
        %v572 = vpack.c.b16 %v565, %v564
        %v573 = vpack.c.b16 %v567, %v566
        %v574 = vpack.c.b16 %v569, %v568
        %v575 = vpack.c.b16 %v571, %v570
        %v596 = vunpack.c.l.b16 %v528
        %v597 = vunpack.c.h.b16 %v528
        %v598 = vunpack.c.l.b16 %v529
        %v599 = vunpack.c.h.b16 %v529
        %v600 = vunpack.c.l.b16 %v530
        %v601 = vunpack.c.h.b16 %v530
        %v602 = vunpack.c.l.b16 %v531
        %v603 = vunpack.c.h.b16 %v531
        %v604 = vunpack.c.l.b16 %v532
        %v605 = vunpack.c.h.b16 %v532
        %v606 = vunpack.c.l.b16 %v533
        %v607 = vunpack.c.h.b16 %v533
        %v608 = vunpack.c.l.b16 %v534
        %v609 = vunpack.c.h.b16 %v534
        %v610 = vunpack.c.l.b16 %v535
        %v611 = vunpack.c.h.b16 %v535
        %v612 = vunpack.c.l.b16 %v536
        %v613 = vunpack.c.h.b16 %v536
        %v614 = vunpack.c.l.b16 %v537
        %v615 = vunpack.c.h.b16 %v537
        %v616 = vunpack.c.l.b16 %v538
        %v617 = vunpack.c.h.b16 %v538
        %v618 = vunpack.c.l.b16 %v539
        %v619 = vunpack.c.h.b16 %v539
        %v620 = vunpack.c.l.b16 %v540
        %v621 = vunpack.c.h.b16 %v540
        %v622 = vunpack.c.l.b16 %v541
        %v623 = vunpack.c.h.b16 %v541
        %v624 = vunpack.c.l.b16 %v542
        %v625 = vunpack.c.h.b16 %v542
        %v626 = vunpack.c.l.b16 %v543
        %v627 = vunpack.c.h.b16 %v543
        %v628 = vpack.c.b16 %v598, %v596
        %v629 = vpack.c.b16 %v599, %v597
        %v630 = vpack.c.b16 %v602, %v600
        %v631 = vpack.c.b16 %v603, %v601
        %v632 = vpack.c.b16 %v606, %v604
        %v633 = vpack.c.b16 %v607, %v605
        %v634 = vpack.c.b16 %v610, %v608
        %v635 = vpack.c.b16 %v611, %v609
        %v636 = vpack.c.b16 %v614, %v612
        %v637 = vpack.c.b16 %v615, %v613
        %v638 = vpack.c.b16 %v618, %v616
        %v639 = vpack.c.b16 %v619, %v617
        %v640 = vpack.c.b16 %v622, %v620
        %v641 = vpack.c.b16 %v623, %v621
        %v642 = vpack.c.b16 %v626, %v624
        %v643 = vpack.c.b16 %v627, %v625
        %660 = vmatprep.subr.bf16.mxu0 %v643
        %661 = vmatpush1.bf16.msra.mxu0 %v642
        %662 = vmatprep.subr.bf16.mxu0 %v641
        %663 = vmatpush1.bf16.msra.mxu0 %v640
        %664 = vmatprep.subr.bf16.mxu0 %v639
        %665 = vmatpush1.bf16.msra.mxu0 %v638
        %666 = vmatprep.subr.bf16.mxu0 %v637
        %667 = vmatpush1.bf16.msra.mxu0 %v636
        %668 = vmatprep.subr.bf16.mxu0 %v635
        %669 = vmatpush1.bf16.msra.mxu0 %v634
        %670 = vmatprep.subr.bf16.mxu0 %v633
        %671 = vmatpush1.bf16.msra.mxu0 %v632
        %672 = vmatprep.subr.bf16.mxu0 %v631
        %673 = vmatpush1.bf16.msra.mxu0 %v630
        %674 = vmatprep.subr.bf16.mxu0 %v629
        %675 = vmatpush1.bf16.msra.mxu0 %v628
        %676 = vmatprep.subr.bf16.mxu0 0
        %677 = vmatpush2.bf16.msra.mxu0 0
        %678 = vmatprep.subr.bf16.mxu0 0
        %679 = vmatpush2.bf16.msra.mxu0 0
        %680 = vmatprep.subr.bf16.mxu0 0
        %681 = vmatpush2.bf16.msra.mxu0 0
        %682 = vmatprep.subr.bf16.mxu0 0
        %683 = vmatpush2.bf16.msra.mxu0 0
        %684 = vmatprep.subr.bf16.mxu0 0
        %685 = vmatpush2.bf16.msra.mxu0 0
        %686 = vmatprep.subr.bf16.mxu0 0
        %687 = vmatpush2.bf16.msra.mxu0 0
        %688 = vmatprep.subr.bf16.mxu0 0
        %689 = vmatpush2.bf16.msra.mxu0 0
        %690 = vmatprep.subr.bf16.mxu0 0
        %691 = vmatpush2.bf16.msra.mxu0 0
        %692 = vmatprep.mubr.bf16.mxu0 0
        %693 = vmatmul.mubr.bf16.gmra.mxu0 %v572
        %v694 = vpop.f32.mrf.mxu0
        %v695 = vadd.f32 %v549, %v694
        %v696 = vpop.f32.mrf.mxu0
        %v697 = vadd.f32 %v553, %v696
        %v698 = vpop.f32.mrf.mxu0
        %v699 = vadd.f32 %v549, %v698
        %v700 = vpop.f32.mrf.mxu0
        %v701 = vadd.f32 %v553, %v700
        %702 = vmatprep.mubr.bf16.mxu0 0
        %703 = vmatmul.mubr.bf16.gmra.mxu0 %v573
        %v704 = vpop.f32.mrf.mxu0
        %v705 = vadd.f32 %v549, %v704
        %v706 = vpop.f32.mrf.mxu0
        %v707 = vadd.f32 %v553, %v706
        %v708 = vpop.f32.mrf.mxu0
        %v709 = vadd.f32 %v549, %v708
        %v710 = vpop.f32.mrf.mxu0
        %v711 = vadd.f32 %v553, %v710
        %712 = vmatprep.mubr.bf16.mxu0 0
        %713 = vmatmul.mubr.bf16.gmra.mxu0 %v574
        %v714 = vpop.f32.mrf.mxu0
        %v715 = vadd.f32 %v549, %v714
        %v716 = vpop.f32.mrf.mxu0
        %v717 = vadd.f32 %v553, %v716
        %v718 = vpop.f32.mrf.mxu0
        %v719 = vadd.f32 %v549, %v718
        %v720 = vpop.f32.mrf.mxu0
        %v721 = vadd.f32 %v553, %v720
        %722 = vmatprep.mubr.bf16.mxu0 0
        %723 = vmatmul.mubr.bf16.gmra.mxu0 %v575
        %v724 = vpop.f32.mrf.mxu0
        %v725 = vadd.f32 %v549, %v724
        %v726 = vpop.f32.mrf.mxu0
        %v727 = vadd.f32 %v553, %v726
        %v728 = vpop.f32.mrf.mxu0
        %v729 = vadd.f32 %v549, %v728
        %v730 = vpop.f32.mrf.mxu0
        %v731 = vadd.f32 %v553, %v730
        %732 = vdwg.mxu0
        %v733 = vsub.f32 0.0, %v695
        %v734 = vsub.f32 0.0, %v697
        %v735 = vsub.f32 0.0, %v699
        %v736 = vsub.f32 0.0, %v701
        %v737 = vsub.f32 0.0, %v705
        %v738 = vsub.f32 0.0, %v707
        %v739 = vsub.f32 0.0, %v709
        %v740 = vsub.f32 0.0, %v711
        %v741 = vsub.f32 0.0, %v715
        %v742 = vsub.f32 0.0, %v717
        %v743 = vsub.f32 0.0, %v719
        %v744 = vsub.f32 0.0, %v721
        %v745 = vsub.f32 0.0, %v725
        %v746 = vsub.f32 0.0, %v727
        %v747 = vsub.f32 0.0, %v729
        %v748 = vsub.f32 0.0, %v731
        %v749 = vmul.f32 %v733, 1.442695
        %v750 = vpow.pop %v749
        %v751 = vmul.f32 %v734, 1.442695
        %v752 = vpow.pop %v751
        %v753 = vmul.f32 %v735, 1.442695
        %v754 = vpow.pop %v753
        %v755 = vmul.f32 %v736, 1.442695
        %v756 = vpow.pop %v755
        %v757 = vmul.f32 %v737, 1.442695
        %v758 = vpow.pop %v757
        %v759 = vmul.f32 %v738, 1.442695
        %v760 = vpow.pop %v759
        %v761 = vmul.f32 %v739, 1.442695
        %v762 = vpow.pop %v761
        %v763 = vmul.f32 %v740, 1.442695
        %v764 = vpow.pop %v763
        %v765 = vmul.f32 %v741, 1.442695
        %v766 = vpow.pop %v765
        %v767 = vmul.f32 %v742, 1.442695
        %v768 = vpow.pop %v767
        %v769 = vmul.f32 %v743, 1.442695
        %v770 = vpow.pop %v769
        %v771 = vmul.f32 %v744, 1.442695
        %v772 = vpow.pop %v771
        %v773 = vmul.f32 %v745, 1.442695
        %v774 = vpow.pop %v773
        %v775 = vmul.f32 %v746, 1.442695
        %v776 = vpow.pop %v775
        %v777 = vmul.f32 %v747, 1.442695
        %v778 = vpow.pop %v777
        %v779 = vmul.f32 %v748, 1.442695
        %v780 = vpow.pop %v779
        %v781 = vadd.f32 %v750, 1.0
        %v782 = vadd.f32 %v752, 1.0
        %v783 = vadd.f32 %v754, 1.0
        %v784 = vadd.f32 %v756, 1.0
        %v785 = vadd.f32 %v758, 1.0
        %v786 = vadd.f32 %v760, 1.0
        %v787 = vadd.f32 %v762, 1.0
        %v788 = vadd.f32 %v764, 1.0
        %v789 = vadd.f32 %v766, 1.0
        %v790 = vadd.f32 %v768, 1.0
        %v791 = vadd.f32 %v770, 1.0
        %v792 = vadd.f32 %v772, 1.0
        %v793 = vadd.f32 %v774, 1.0
        %v794 = vadd.f32 %v776, 1.0
        %v795 = vadd.f32 %v778, 1.0
        %v796 = vadd.f32 %v780, 1.0
        %v797 = vrcp.pop %v781
        %v798 = vrcp.pop %v782
        %v799 = vrcp.pop %v783
        %v800 = vrcp.pop %v784
        %v801 = vrcp.pop %v785
        %v802 = vrcp.pop %v786
        %v803 = vrcp.pop %v787
        %v804 = vrcp.pop %v788
        %v805 = vrcp.pop %v789
        %v806 = vrcp.pop %v790
        %v807 = vrcp.pop %v791
        %v808 = vrcp.pop %v792
        %v809 = vrcp.pop %v793
        %v810 = vrcp.pop %v794
        %v811 = vrcp.pop %v795
        %v812 = vrcp.pop %v796
        %v813 = vmul.f32 %v695, %v797
        %v814 = vmul.f32 %v697, %v798
        %v815 = vmul.f32 %v699, %v799
        %v816 = vmul.f32 %v701, %v800
        %v817 = vmul.f32 %v705, %v801
        %v818 = vmul.f32 %v707, %v802
        %v819 = vmul.f32 %v709, %v803
        %v820 = vmul.f32 %v711, %v804
        %v821 = vmul.f32 %v715, %v805
        %v822 = vmul.f32 %v717, %v806
        %v823 = vmul.f32 %v719, %v807
        %v824 = vmul.f32 %v721, %v808
        %v825 = vmul.f32 %v725, %v809
        %v826 = vmul.f32 %v727, %v810
        %v827 = vmul.f32 %v729, %v811
        %v828 = vmul.f32 %v731, %v812
        %v846 = vrot.slane 0.0, 7
        %v847 = vrot.slane %v813, 7
        %v848 = vrot.slane %v814, 7
        %v849 = vrot.slane %v815, 7
        %v850 = vrot.slane %v816, 7
        %v851 = vrot.slane %v817, 7
        %v852 = vrot.slane %v818, 7
        %v853 = vrot.slane %v819, 7
        %v854 = vrot.slane %v820, 7
        %v855 = vrot.slane %v821, 7
        %v856 = vrot.slane %v822, 7
        %v857 = vrot.slane %v823, 7
        %v858 = vrot.slane %v824, 7
        %v859 = vrot.slane %v825, 7
        %v860 = vrot.slane %v826, 7
        %v861 = vrot.slane %v827, 7
        %v862 = vrot.slane %v828, 7
        %vm880 = vcmask 1040384
        %v881 = vsel %vm880, 0.0, %v846
        %v882 = vsel %vm880, 0.0, %v847
        %v883 = vsel %vm880, 0.0, %v848
        %v884 = vsel %vm880, 0.0, %v849
        %v885 = vsel %vm880, 0.0, %v850
        %v886 = vsel %vm880, 0.0, %v851
        %v887 = vsel %vm880, 0.0, %v852
        %v888 = vsel %vm880, 0.0, %v853
        %v889 = vsel %vm880, 0.0, %v854
        %v890 = vsel %vm880, 0.0, %v855
        %v891 = vsel %vm880, 0.0, %v856
        %v892 = vsel %vm880, 0.0, %v857
        %v893 = vsel %vm880, 0.0, %v858
        %v894 = vsel %vm880, 0.0, %v859
        %v895 = vsel %vm880, 0.0, %v860
        %v896 = vsel %vm880, 0.0, %v861
        %v897 = vsel %vm880, 0.0, %v862
        %v898 = vsel %vm880, %v846, 0.0
        %v899 = vsel %vm880, %v847, 0.0
        %v900 = vsel %vm880, %v848, 0.0
        %v901 = vsel %vm880, %v849, 0.0
        %v902 = vsel %vm880, %v850, 0.0
        %v903 = vsel %vm880, %v851, 0.0
        %v904 = vsel %vm880, %v852, 0.0
        %v905 = vsel %vm880, %v853, 0.0
        %v906 = vsel %vm880, %v854, 0.0
        %v907 = vsel %vm880, %v855, 0.0
        %v908 = vsel %vm880, %v856, 0.0
        %v909 = vsel %vm880, %v857, 0.0
        %v910 = vsel %vm880, %v858, 0.0
        %v911 = vsel %vm880, %v859, 0.0
        %v912 = vsel %vm880, %v860, 0.0
        %v913 = vsel %vm880, %v861, 0.0
        %v914 = vsel %vm880, %v862, 0.0
        %v915 = vld [vmem:[%s3] ss:$8 sm:$0x3]
        %v917 = vlaneseq
        %v918 = vshrl.u32 %v917, 7
        %v919 = vsub.s32 0, %v918
        %v920 = vrot.slane %v915, %v919
        %v921 = vlaneseq
        %v922 = vshrl.u32 %v921, 7
        %v923 = vsub.s32 1, %v922
        %v924 = vrot.slane %v915, %v923
        %v927 = vmul.f32 %v881, %v920
        %v928 = vmul.f32 %v881, %v924
        %v929 = vmul.f32 %v882, %v920
        %v930 = vmul.f32 %v883, %v924
        %v931 = vmul.f32 %v884, %v920
        %v932 = vmul.f32 %v885, %v924
        %v933 = vmul.f32 %v886, %v920
        %v934 = vmul.f32 %v887, %v924
        %v935 = vmul.f32 %v888, %v920
        %v936 = vmul.f32 %v889, %v924
        %v937 = vmul.f32 %v890, %v920
        %v938 = vmul.f32 %v891, %v924
        %v939 = vmul.f32 %v892, %v920
        %v940 = vmul.f32 %v893, %v924
        %v941 = vmul.f32 %v894, %v920
        %v942 = vmul.f32 %v895, %v924
        %v943 = vadd.f32 %v927, 0.0
        %v944 = vadd.f32 %v928, 0.0
        %v945 = vadd.f32 %v929, 0.0
        %v946 = vadd.f32 %v930, 0.0
        %v947 = vadd.f32 %v931, 0.0
        %v948 = vadd.f32 %v932, 0.0
        %v949 = vadd.f32 %v933, 0.0
        %v950 = vadd.f32 %v934, 0.0
        %v951 = vadd.f32 %v935, 0.0
        %v952 = vadd.f32 %v936, 0.0
        %v953 = vadd.f32 %v937, 0.0
        %v954 = vadd.f32 %v938, 0.0
        %v955 = vadd.f32 %v939, 0.0
        %v956 = vadd.f32 %v940, 0.0
        %v957 = vadd.f32 %v941, 0.0
        %v958 = vadd.f32 %v942, 0.0
        %s959 = scalar_lea.vmem %s3, 1
        %v960 = vld [vmem:[%s959] ss:$8 sm:$0x3]
        %v962 = vlaneseq
        %v963 = vshrl.u32 %v962, 7
        %v964 = vsub.s32 0, %v963
        %v965 = vrot.slane %v960, %v964
        %v966 = vlaneseq
        %v967 = vshrl.u32 %v966, 7
        %v968 = vsub.s32 1, %v967
        %v969 = vrot.slane %v960, %v968
        %v972 = vmul.f32 %v881, %v965
        %v973 = vmul.f32 %v881, %v969
        %v974 = vmul.f32 %v898, %v965
        %v975 = vmul.f32 %v898, %v969
        %v976 = vmul.f32 %v882, %v965
        %v977 = vmul.f32 %v883, %v969
        %v978 = vmul.f32 %v899, %v965
        %v979 = vmul.f32 %v900, %v969
        %v980 = vmul.f32 %v884, %v965
        %v981 = vmul.f32 %v885, %v969
        %v982 = vmul.f32 %v901, %v965
        %v983 = vmul.f32 %v902, %v969
        %v984 = vmul.f32 %v886, %v965
        %v985 = vmul.f32 %v887, %v969
        %v986 = vmul.f32 %v903, %v965
        %v987 = vmul.f32 %v904, %v969
        %v988 = vmul.f32 %v888, %v965
        %v989 = vmul.f32 %v889, %v969
        %v990 = vmul.f32 %v905, %v965
        %v991 = vmul.f32 %v906, %v969
        %v992 = vmul.f32 %v890, %v965
        %v993 = vmul.f32 %v891, %v969
        %v994 = vmul.f32 %v907, %v965
        %v995 = vmul.f32 %v908, %v969
        %v996 = vmul.f32 %v892, %v965
        %v997 = vmul.f32 %v893, %v969
        %v998 = vmul.f32 %v909, %v965
        %v999 = vmul.f32 %v910, %v969
        %v1000 = vmul.f32 %v894, %v965
        %v1001 = vmul.f32 %v895, %v969
        %v1002 = vmul.f32 %v911, %v965
        %v1003 = vmul.f32 %v912, %v969
        %vm1036 = vcmask 1046528
        %v1037 = vrot.slane %v972, 1
        %v1038 = vrot.slane %v974, 1
        %v1039 = vsel %vm1036, %v1037, %v1038
        %v1040 = vrot.slane %v973, 1
        %v1041 = vrot.slane %v975, 1
        %v1042 = vsel %vm1036, %v1040, %v1041
        %v1043 = vrot.slane %v976, 1
        %v1044 = vrot.slane %v978, 1
        %v1045 = vsel %vm1036, %v1043, %v1044
        %v1046 = vrot.slane %v977, 1
        %v1047 = vrot.slane %v979, 1
        %v1048 = vsel %vm1036, %v1046, %v1047
        %v1049 = vrot.slane %v980, 1
        %v1050 = vrot.slane %v982, 1
        %v1051 = vsel %vm1036, %v1049, %v1050
        %v1052 = vrot.slane %v981, 1
        %v1053 = vrot.slane %v983, 1
        %v1054 = vsel %vm1036, %v1052, %v1053
        %v1055 = vrot.slane %v984, 1
        %v1056 = vrot.slane %v986, 1
        %v1057 = vsel %vm1036, %v1055, %v1056
        %v1058 = vrot.slane %v985, 1
        %v1059 = vrot.slane %v987, 1
        %v1060 = vsel %vm1036, %v1058, %v1059
        %v1061 = vrot.slane %v988, 1
        %v1062 = vrot.slane %v990, 1
        %v1063 = vsel %vm1036, %v1061, %v1062
        %v1064 = vrot.slane %v989, 1
        %v1065 = vrot.slane %v991, 1
        %v1066 = vsel %vm1036, %v1064, %v1065
        %v1067 = vrot.slane %v992, 1
        %v1068 = vrot.slane %v994, 1
        %v1069 = vsel %vm1036, %v1067, %v1068
        %v1070 = vrot.slane %v993, 1
        %v1071 = vrot.slane %v995, 1
        %v1072 = vsel %vm1036, %v1070, %v1071
        %v1073 = vrot.slane %v996, 1
        %v1074 = vrot.slane %v998, 1
        %v1075 = vsel %vm1036, %v1073, %v1074
        %v1076 = vrot.slane %v997, 1
        %v1077 = vrot.slane %v999, 1
        %v1078 = vsel %vm1036, %v1076, %v1077
        %v1079 = vrot.slane %v1000, 1
        %v1080 = vrot.slane %v1002, 1
        %v1081 = vsel %vm1036, %v1079, %v1080
        %v1082 = vrot.slane %v1001, 1
        %v1083 = vrot.slane %v1003, 1
        %v1084 = vsel %vm1036, %v1082, %v1083
        %v1101 = vadd.f32 %v943, %v1039
        %v1102 = vadd.f32 %v944, %v1042
        %v1103 = vadd.f32 %v945, %v1045
        %v1104 = vadd.f32 %v946, %v1048
        %v1105 = vadd.f32 %v947, %v1051
        %v1106 = vadd.f32 %v948, %v1054
        %v1107 = vadd.f32 %v949, %v1057
        %v1108 = vadd.f32 %v950, %v1060
        %v1109 = vadd.f32 %v951, %v1063
        %v1110 = vadd.f32 %v952, %v1066
        %v1111 = vadd.f32 %v953, %v1069
        %v1112 = vadd.f32 %v954, %v1072
        %v1113 = vadd.f32 %v955, %v1075
        %v1114 = vadd.f32 %v956, %v1078
        %v1115 = vadd.f32 %v957, %v1081
        %v1116 = vadd.f32 %v958, %v1084
        %s1117 = scalar_lea.vmem %s3, 2
        %v1118 = vld [vmem:[%s1117] ss:$8 sm:$0x3]
        %v1120 = vlaneseq
        %v1121 = vshrl.u32 %v1120, 7
        %v1122 = vsub.s32 0, %v1121
        %v1123 = vrot.slane %v1118, %v1122
        %v1124 = vlaneseq
        %v1125 = vshrl.u32 %v1124, 7
        %v1126 = vsub.s32 1, %v1125
        %v1127 = vrot.slane %v1118, %v1126
        %v1130 = vmul.f32 %v881, %v1123
        %v1131 = vmul.f32 %v881, %v1127
        %v1132 = vmul.f32 %v898, %v1123
        %v1133 = vmul.f32 %v898, %v1127
        %v1134 = vmul.f32 %v882, %v1123
        %v1135 = vmul.f32 %v883, %v1127
        %v1136 = vmul.f32 %v899, %v1123
        %v1137 = vmul.f32 %v900, %v1127
        %v1138 = vmul.f32 %v884, %v1123
        %v1139 = vmul.f32 %v885, %v1127
        %v1140 = vmul.f32 %v901, %v1123
        %v1141 = vmul.f32 %v902, %v1127
        %v1142 = vmul.f32 %v886, %v1123
        %v1143 = vmul.f32 %v887, %v1127
        %v1144 = vmul.f32 %v903, %v1123
        %v1145 = vmul.f32 %v904, %v1127
        %v1146 = vmul.f32 %v888, %v1123
        %v1147 = vmul.f32 %v889, %v1127
        %v1148 = vmul.f32 %v905, %v1123
        %v1149 = vmul.f32 %v906, %v1127
        %v1150 = vmul.f32 %v890, %v1123
        %v1151 = vmul.f32 %v891, %v1127
        %v1152 = vmul.f32 %v907, %v1123
        %v1153 = vmul.f32 %v908, %v1127
        %v1154 = vmul.f32 %v892, %v1123
        %v1155 = vmul.f32 %v893, %v1127
        %v1156 = vmul.f32 %v909, %v1123
        %v1157 = vmul.f32 %v910, %v1127
        %v1158 = vmul.f32 %v894, %v1123
        %v1159 = vmul.f32 %v895, %v1127
        %v1160 = vmul.f32 %v911, %v1123
        %v1161 = vmul.f32 %v912, %v1127
        %vm1194 = vcmask 1045504
        %v1195 = vrot.slane %v1130, 2
        %v1196 = vrot.slane %v1132, 2
        %v1197 = vsel %vm1194, %v1195, %v1196
        %v1198 = vrot.slane %v1131, 2
        %v1199 = vrot.slane %v1133, 2
        %v1200 = vsel %vm1194, %v1198, %v1199
        %v1201 = vrot.slane %v1134, 2
        %v1202 = vrot.slane %v1136, 2
        %v1203 = vsel %vm1194, %v1201, %v1202
        %v1204 = vrot.slane %v1135, 2
        %v1205 = vrot.slane %v1137, 2
        %v1206 = vsel %vm1194, %v1204, %v1205
        %v1207 = vrot.slane %v1138, 2
        %v1208 = vrot.slane %v1140, 2
        %v1209 = vsel %vm1194, %v1207, %v1208
        %v1210 = vrot.slane %v1139, 2
        %v1211 = vrot.slane %v1141, 2
        %v1212 = vsel %vm1194, %v1210, %v1211
        %v1213 = vrot.slane %v1142, 2
        %v1214 = vrot.slane %v1144, 2
        %v1215 = vsel %vm1194, %v1213, %v1214
        %v1216 = vrot.slane %v1143, 2
        %v1217 = vrot.slane %v1145, 2
        %v1218 = vsel %vm1194, %v1216, %v1217
        %v1219 = vrot.slane %v1146, 2
        %v1220 = vrot.slane %v1148, 2
        %v1221 = vsel %vm1194, %v1219, %v1220
        %v1222 = vrot.slane %v1147, 2
        %v1223 = vrot.slane %v1149, 2
        %v1224 = vsel %vm1194, %v1222, %v1223
        %v1225 = vrot.slane %v1150, 2
        %v1226 = vrot.slane %v1152, 2
        %v1227 = vsel %vm1194, %v1225, %v1226
        %v1228 = vrot.slane %v1151, 2
        %v1229 = vrot.slane %v1153, 2
        %v1230 = vsel %vm1194, %v1228, %v1229
        %v1231 = vrot.slane %v1154, 2
        %v1232 = vrot.slane %v1156, 2
        %v1233 = vsel %vm1194, %v1231, %v1232
        %v1234 = vrot.slane %v1155, 2
        %v1235 = vrot.slane %v1157, 2
        %v1236 = vsel %vm1194, %v1234, %v1235
        %v1237 = vrot.slane %v1158, 2
        %v1238 = vrot.slane %v1160, 2
        %v1239 = vsel %vm1194, %v1237, %v1238
        %v1240 = vrot.slane %v1159, 2
        %v1241 = vrot.slane %v1161, 2
        %v1242 = vsel %vm1194, %v1240, %v1241
        %v1259 = vadd.f32 %v1101, %v1197
        %v1260 = vadd.f32 %v1102, %v1200
        %v1261 = vadd.f32 %v1103, %v1203
        %v1262 = vadd.f32 %v1104, %v1206
        %v1263 = vadd.f32 %v1105, %v1209
        %v1264 = vadd.f32 %v1106, %v1212
        %v1265 = vadd.f32 %v1107, %v1215
        %v1266 = vadd.f32 %v1108, %v1218
        %v1267 = vadd.f32 %v1109, %v1221
        %v1268 = vadd.f32 %v1110, %v1224
        %v1269 = vadd.f32 %v1111, %v1227
        %v1270 = vadd.f32 %v1112, %v1230
        %v1271 = vadd.f32 %v1113, %v1233
        %v1272 = vadd.f32 %v1114, %v1236
        %v1273 = vadd.f32 %v1115, %v1239
        %v1274 = vadd.f32 %v1116, %v1242
        %s1275 = scalar_lea.vmem %s3, 3
        %v1276 = vld [vmem:[%s1275] ss:$8 sm:$0x3]
        %v1278 = vlaneseq
        %v1279 = vshrl.u32 %v1278, 7
        %v1280 = vsub.s32 0, %v1279
        %v1281 = vrot.slane %v1276, %v1280
        %v1282 = vlaneseq
        %v1283 = vshrl.u32 %v1282, 7
        %v1284 = vsub.s32 1, %v1283
        %v1285 = vrot.slane %v1276, %v1284
        %v1288 = vmul.f32 %v882, %v1281
        %v1289 = vmul.f32 %v883, %v1285
        %v1290 = vmul.f32 %v884, %v1281
        %v1291 = vmul.f32 %v885, %v1285
        %v1292 = vmul.f32 %v886, %v1281
        %v1293 = vmul.f32 %v887, %v1285
        %v1294 = vmul.f32 %v888, %v1281
        %v1295 = vmul.f32 %v889, %v1285
        %v1296 = vmul.f32 %v890, %v1281
        %v1297 = vmul.f32 %v891, %v1285
        %v1298 = vmul.f32 %v892, %v1281
        %v1299 = vmul.f32 %v893, %v1285
        %v1300 = vmul.f32 %v894, %v1281
        %v1301 = vmul.f32 %v895, %v1285
        %v1302 = vmul.f32 %v896, %v1281
        %v1303 = vmul.f32 %v897, %v1285
        %v1304 = vadd.f32 %v1259, %v1288
        %v1305 = vadd.f32 %v1260, %v1289
        %v1306 = vadd.f32 %v1261, %v1290
        %v1307 = vadd.f32 %v1262, %v1291
        %v1308 = vadd.f32 %v1263, %v1292
        %v1309 = vadd.f32 %v1264, %v1293
        %v1310 = vadd.f32 %v1265, %v1294
        %v1311 = vadd.f32 %v1266, %v1295
        %v1312 = vadd.f32 %v1267, %v1296
        %v1313 = vadd.f32 %v1268, %v1297
        %v1314 = vadd.f32 %v1269, %v1298
        %v1315 = vadd.f32 %v1270, %v1299
        %v1316 = vadd.f32 %v1271, %v1300
        %v1317 = vadd.f32 %v1272, %v1301
        %v1318 = vadd.f32 %v1273, %v1302
        %v1319 = vadd.f32 %v1274, %v1303
        %s1320 = scalar_lea.vmem %s3, 4
        %v1321 = vld [vmem:[%s1320] ss:$8 sm:$0x3]
        %v1323 = vlaneseq
        %v1324 = vshrl.u32 %v1323, 7
        %v1325 = vsub.s32 0, %v1324
        %v1326 = vrot.slane %v1321, %v1325
        %v1327 = vlaneseq
        %v1328 = vshrl.u32 %v1327, 7
        %v1329 = vsub.s32 1, %v1328
        %v1330 = vrot.slane %v1321, %v1329
        %v1333 = vmul.f32 %v882, %v1326
        %v1334 = vmul.f32 %v883, %v1330
        %v1335 = vmul.f32 %v899, %v1326
        %v1336 = vmul.f32 %v900, %v1330
        %v1337 = vmul.f32 %v884, %v1326
        %v1338 = vmul.f32 %v885, %v1330
        %v1339 = vmul.f32 %v901, %v1326
        %v1340 = vmul.f32 %v902, %v1330
        %v1341 = vmul.f32 %v886, %v1326
        %v1342 = vmul.f32 %v887, %v1330
        %v1343 = vmul.f32 %v903, %v1326
        %v1344 = vmul.f32 %v904, %v1330
        %v1345 = vmul.f32 %v888, %v1326
        %v1346 = vmul.f32 %v889, %v1330
        %v1347 = vmul.f32 %v905, %v1326
        %v1348 = vmul.f32 %v906, %v1330
        %v1349 = vmul.f32 %v890, %v1326
        %v1350 = vmul.f32 %v891, %v1330
        %v1351 = vmul.f32 %v907, %v1326
        %v1352 = vmul.f32 %v908, %v1330
        %v1353 = vmul.f32 %v892, %v1326
        %v1354 = vmul.f32 %v893, %v1330
        %v1355 = vmul.f32 %v909, %v1326
        %v1356 = vmul.f32 %v910, %v1330
        %v1357 = vmul.f32 %v894, %v1326
        %v1358 = vmul.f32 %v895, %v1330
        %v1359 = vmul.f32 %v911, %v1326
        %v1360 = vmul.f32 %v912, %v1330
        %v1361 = vmul.f32 %v896, %v1326
        %v1362 = vmul.f32 %v897, %v1330
        %v1363 = vmul.f32 %v913, %v1326
        %v1364 = vmul.f32 %v914, %v1330
        %v1397 = vrot.slane %v1333, 1
        %v1398 = vrot.slane %v1335, 1
        %v1399 = vsel %vm1036, %v1397, %v1398
        %v1400 = vrot.slane %v1334, 1
        %v1401 = vrot.slane %v1336, 1
        %v1402 = vsel %vm1036, %v1400, %v1401
        %v1403 = vrot.slane %v1337, 1
        %v1404 = vrot.slane %v1339, 1
        %v1405 = vsel %vm1036, %v1403, %v1404
        %v1406 = vrot.slane %v1338, 1
        %v1407 = vrot.slane %v1340, 1
        %v1408 = vsel %vm1036, %v1406, %v1407
        %v1409 = vrot.slane %v1341, 1
        %v1410 = vrot.slane %v1343, 1
        %v1411 = vsel %vm1036, %v1409, %v1410
        %v1412 = vrot.slane %v1342, 1
        %v1413 = vrot.slane %v1344, 1
        %v1414 = vsel %vm1036, %v1412, %v1413
        %v1415 = vrot.slane %v1345, 1
        %v1416 = vrot.slane %v1347, 1
        %v1417 = vsel %vm1036, %v1415, %v1416
        %v1418 = vrot.slane %v1346, 1
        %v1419 = vrot.slane %v1348, 1
        %v1420 = vsel %vm1036, %v1418, %v1419
        %v1421 = vrot.slane %v1349, 1
        %v1422 = vrot.slane %v1351, 1
        %v1423 = vsel %vm1036, %v1421, %v1422
        %v1424 = vrot.slane %v1350, 1
        %v1425 = vrot.slane %v1352, 1
        %v1426 = vsel %vm1036, %v1424, %v1425
        %v1427 = vrot.slane %v1353, 1
        %v1428 = vrot.slane %v1355, 1
        %v1429 = vsel %vm1036, %v1427, %v1428
        %v1430 = vrot.slane %v1354, 1
        %v1431 = vrot.slane %v1356, 1
        %v1432 = vsel %vm1036, %v1430, %v1431
        %v1433 = vrot.slane %v1357, 1
        %v1434 = vrot.slane %v1359, 1
        %v1435 = vsel %vm1036, %v1433, %v1434
        %v1436 = vrot.slane %v1358, 1
        %v1437 = vrot.slane %v1360, 1
        %v1438 = vsel %vm1036, %v1436, %v1437
        %v1439 = vrot.slane %v1361, 1
        %v1440 = vrot.slane %v1363, 1
        %v1441 = vsel %vm1036, %v1439, %v1440
        %v1442 = vrot.slane %v1362, 1
        %v1443 = vrot.slane %v1364, 1
        %v1444 = vsel %vm1036, %v1442, %v1443
        %v1461 = vadd.f32 %v1304, %v1399
        %v1462 = vadd.f32 %v1305, %v1402
        %v1463 = vadd.f32 %v1306, %v1405
        %v1464 = vadd.f32 %v1307, %v1408
        %v1465 = vadd.f32 %v1308, %v1411
        %v1466 = vadd.f32 %v1309, %v1414
        %v1467 = vadd.f32 %v1310, %v1417
        %v1468 = vadd.f32 %v1311, %v1420
        %v1469 = vadd.f32 %v1312, %v1423
        %v1470 = vadd.f32 %v1313, %v1426
        %v1471 = vadd.f32 %v1314, %v1429
        %v1472 = vadd.f32 %v1315, %v1432
        %v1473 = vadd.f32 %v1316, %v1435
        %v1474 = vadd.f32 %v1317, %v1438
        %v1475 = vadd.f32 %v1318, %v1441
        %v1476 = vadd.f32 %v1319, %v1444
        %s1477 = scalar_lea.vmem %s3, 5
        %v1478 = vld [vmem:[%s1477] ss:$8 sm:$0x3]
        %v1480 = vlaneseq
        %v1481 = vshrl.u32 %v1480, 7
        %v1482 = vsub.s32 0, %v1481
        %v1483 = vrot.slane %v1478, %v1482
        %v1484 = vlaneseq
        %v1485 = vshrl.u32 %v1484, 7
        %v1486 = vsub.s32 1, %v1485
        %v1487 = vrot.slane %v1478, %v1486
        %v1490 = vmul.f32 %v882, %v1483
        %v1491 = vmul.f32 %v883, %v1487
        %v1492 = vmul.f32 %v899, %v1483
        %v1493 = vmul.f32 %v900, %v1487
        %v1494 = vmul.f32 %v884, %v1483
        %v1495 = vmul.f32 %v885, %v1487
        %v1496 = vmul.f32 %v901, %v1483
        %v1497 = vmul.f32 %v902, %v1487
        %v1498 = vmul.f32 %v886, %v1483
        %v1499 = vmul.f32 %v887, %v1487
        %v1500 = vmul.f32 %v903, %v1483
        %v1501 = vmul.f32 %v904, %v1487
        %v1502 = vmul.f32 %v888, %v1483
        %v1503 = vmul.f32 %v889, %v1487
        %v1504 = vmul.f32 %v905, %v1483
        %v1505 = vmul.f32 %v906, %v1487
        %v1506 = vmul.f32 %v890, %v1483
        %v1507 = vmul.f32 %v891, %v1487
        %v1508 = vmul.f32 %v907, %v1483
        %v1509 = vmul.f32 %v908, %v1487
        %v1510 = vmul.f32 %v892, %v1483
        %v1511 = vmul.f32 %v893, %v1487
        %v1512 = vmul.f32 %v909, %v1483
        %v1513 = vmul.f32 %v910, %v1487
        %v1514 = vmul.f32 %v894, %v1483
        %v1515 = vmul.f32 %v895, %v1487
        %v1516 = vmul.f32 %v911, %v1483
        %v1517 = vmul.f32 %v912, %v1487
        %v1518 = vmul.f32 %v896, %v1483
        %v1519 = vmul.f32 %v897, %v1487
        %v1520 = vmul.f32 %v913, %v1483
        %v1521 = vmul.f32 %v914, %v1487
        %v1554 = vrot.slane %v1490, 2
        %v1555 = vrot.slane %v1492, 2
        %v1556 = vsel %vm1194, %v1554, %v1555
        %v1557 = vrot.slane %v1491, 2
        %v1558 = vrot.slane %v1493, 2
        %v1559 = vsel %vm1194, %v1557, %v1558
        %v1560 = vrot.slane %v1494, 2
        %v1561 = vrot.slane %v1496, 2
        %v1562 = vsel %vm1194, %v1560, %v1561
        %v1563 = vrot.slane %v1495, 2
        %v1564 = vrot.slane %v1497, 2
        %v1565 = vsel %vm1194, %v1563, %v1564
        %v1566 = vrot.slane %v1498, 2
        %v1567 = vrot.slane %v1500, 2
        %v1568 = vsel %vm1194, %v1566, %v1567
        %v1569 = vrot.slane %v1499, 2
        %v1570 = vrot.slane %v1501, 2
        %v1571 = vsel %vm1194, %v1569, %v1570
        %v1572 = vrot.slane %v1502, 2
        %v1573 = vrot.slane %v1504, 2
        %v1574 = vsel %vm1194, %v1572, %v1573
        %v1575 = vrot.slane %v1503, 2
        %v1576 = vrot.slane %v1505, 2
        %v1577 = vsel %vm1194, %v1575, %v1576
        %v1578 = vrot.slane %v1506, 2
        %v1579 = vrot.slane %v1508, 2
        %v1580 = vsel %vm1194, %v1578, %v1579
        %v1581 = vrot.slane %v1507, 2
        %v1582 = vrot.slane %v1509, 2
        %v1583 = vsel %vm1194, %v1581, %v1582
        %v1584 = vrot.slane %v1510, 2
        %v1585 = vrot.slane %v1512, 2
        %v1586 = vsel %vm1194, %v1584, %v1585
        %v1587 = vrot.slane %v1511, 2
        %v1588 = vrot.slane %v1513, 2
        %v1589 = vsel %vm1194, %v1587, %v1588
        %v1590 = vrot.slane %v1514, 2
        %v1591 = vrot.slane %v1516, 2
        %v1592 = vsel %vm1194, %v1590, %v1591
        %v1593 = vrot.slane %v1515, 2
        %v1594 = vrot.slane %v1517, 2
        %v1595 = vsel %vm1194, %v1593, %v1594
        %v1596 = vrot.slane %v1518, 2
        %v1597 = vrot.slane %v1520, 2
        %v1598 = vsel %vm1194, %v1596, %v1597
        %v1599 = vrot.slane %v1519, 2
        %v1600 = vrot.slane %v1521, 2
        %v1601 = vsel %vm1194, %v1599, %v1600
        %v1618 = vadd.f32 %v1461, %v1556
        %v1619 = vadd.f32 %v1462, %v1559
        %v1620 = vadd.f32 %v1463, %v1562
        %v1621 = vadd.f32 %v1464, %v1565
        %v1622 = vadd.f32 %v1465, %v1568
        %v1623 = vadd.f32 %v1466, %v1571
        %v1624 = vadd.f32 %v1467, %v1574
        %v1625 = vadd.f32 %v1468, %v1577
        %v1626 = vadd.f32 %v1469, %v1580
        %v1627 = vadd.f32 %v1470, %v1583
        %v1628 = vadd.f32 %v1471, %v1586
        %v1629 = vadd.f32 %v1472, %v1589
        %v1630 = vadd.f32 %v1473, %v1592
        %v1631 = vadd.f32 %v1474, %v1595
        %v1632 = vadd.f32 %v1475, %v1598
        %v1633 = vadd.f32 %v1476, %v1601
        %s1634 = scalar_lea.vmem %s3, 6
        %v1635 = vld [vmem:[%s1634] ss:$8 sm:$0x3]
        %v1637 = vlaneseq
        %v1638 = vshrl.u32 %v1637, 7
        %v1639 = vsub.s32 0, %v1638
        %v1640 = vrot.slane %v1635, %v1639
        %v1641 = vlaneseq
        %v1642 = vshrl.u32 %v1641, 7
        %v1643 = vsub.s32 1, %v1642
        %v1644 = vrot.slane %v1635, %v1643
        %v1647 = vmul.f32 %v884, %v1640
        %v1648 = vmul.f32 %v885, %v1644
        %v1649 = vmul.f32 %v886, %v1640
        %v1650 = vmul.f32 %v887, %v1644
        %v1651 = vmul.f32 %v888, %v1640
        %v1652 = vmul.f32 %v889, %v1644
        %v1653 = vmul.f32 %v890, %v1640
        %v1654 = vmul.f32 %v891, %v1644
        %v1655 = vmul.f32 %v892, %v1640
        %v1656 = vmul.f32 %v893, %v1644
        %v1657 = vmul.f32 %v894, %v1640
        %v1658 = vmul.f32 %v895, %v1644
        %v1659 = vmul.f32 %v896, %v1640
        %v1660 = vmul.f32 %v897, %v1644
        %v1661 = vmul.f32 %v881, %v1640
        %v1662 = vmul.f32 %v881, %v1644
        %v1663 = vadd.f32 %v1618, %v1647
        %v1664 = vadd.f32 %v1619, %v1648
        %v1665 = vadd.f32 %v1620, %v1649
        %v1666 = vadd.f32 %v1621, %v1650
        %v1667 = vadd.f32 %v1622, %v1651
        %v1668 = vadd.f32 %v1623, %v1652
        %v1669 = vadd.f32 %v1624, %v1653
        %v1670 = vadd.f32 %v1625, %v1654
        %v1671 = vadd.f32 %v1626, %v1655
        %v1672 = vadd.f32 %v1627, %v1656
        %v1673 = vadd.f32 %v1628, %v1657
        %v1674 = vadd.f32 %v1629, %v1658
        %v1675 = vadd.f32 %v1630, %v1659
        %v1676 = vadd.f32 %v1631, %v1660
        %v1677 = vadd.f32 %v1632, %v1661
        %v1678 = vadd.f32 %v1633, %v1662
        %s1679 = scalar_lea.vmem %s3, 7
        %v1680 = vld [vmem:[%s1679] ss:$8 sm:$0x3]
        %v1682 = vlaneseq
        %v1683 = vshrl.u32 %v1682, 7
        %v1684 = vsub.s32 0, %v1683
        %v1685 = vrot.slane %v1680, %v1684
        %v1686 = vlaneseq
        %v1687 = vshrl.u32 %v1686, 7
        %v1688 = vsub.s32 1, %v1687
        %v1689 = vrot.slane %v1680, %v1688
        %v1692 = vmul.f32 %v884, %v1685
        %v1693 = vmul.f32 %v885, %v1689
        %v1694 = vmul.f32 %v901, %v1685
        %v1695 = vmul.f32 %v902, %v1689
        %v1696 = vmul.f32 %v886, %v1685
        %v1697 = vmul.f32 %v887, %v1689
        %v1698 = vmul.f32 %v903, %v1685
        %v1699 = vmul.f32 %v904, %v1689
        %v1700 = vmul.f32 %v888, %v1685
        %v1701 = vmul.f32 %v889, %v1689
        %v1702 = vmul.f32 %v905, %v1685
        %v1703 = vmul.f32 %v906, %v1689
        %v1704 = vmul.f32 %v890, %v1685
        %v1705 = vmul.f32 %v891, %v1689
        %v1706 = vmul.f32 %v907, %v1685
        %v1707 = vmul.f32 %v908, %v1689
        %v1708 = vmul.f32 %v892, %v1685
        %v1709 = vmul.f32 %v893, %v1689
        %v1710 = vmul.f32 %v909, %v1685
        %v1711 = vmul.f32 %v910, %v1689
        %v1712 = vmul.f32 %v894, %v1685
        %v1713 = vmul.f32 %v895, %v1689
        %v1714 = vmul.f32 %v911, %v1685
        %v1715 = vmul.f32 %v912, %v1689
        %v1716 = vmul.f32 %v896, %v1685
        %v1717 = vmul.f32 %v897, %v1689
        %v1718 = vmul.f32 %v913, %v1685
        %v1719 = vmul.f32 %v914, %v1689
        %v1720 = vmul.f32 %v881, %v1685
        %v1721 = vmul.f32 %v881, %v1689
        %v1722 = vmul.f32 %v898, %v1685
        %v1723 = vmul.f32 %v898, %v1689
        %v1756 = vrot.slane %v1692, 1
        %v1757 = vrot.slane %v1694, 1
        %v1758 = vsel %vm1036, %v1756, %v1757
        %v1759 = vrot.slane %v1693, 1
        %v1760 = vrot.slane %v1695, 1
        %v1761 = vsel %vm1036, %v1759, %v1760
        %v1762 = vrot.slane %v1696, 1
        %v1763 = vrot.slane %v1698, 1
        %v1764 = vsel %vm1036, %v1762, %v1763
        %v1765 = vrot.slane %v1697, 1
        %v1766 = vrot.slane %v1699, 1
        %v1767 = vsel %vm1036, %v1765, %v1766
        %v1768 = vrot.slane %v1700, 1
        %v1769 = vrot.slane %v1702, 1
        %v1770 = vsel %vm1036, %v1768, %v1769
        %v1771 = vrot.slane %v1701, 1
        %v1772 = vrot.slane %v1703, 1
        %v1773 = vsel %vm1036, %v1771, %v1772
        %v1774 = vrot.slane %v1704, 1
        %v1775 = vrot.slane %v1706, 1
        %v1776 = vsel %vm1036, %v1774, %v1775
        %v1777 = vrot.slane %v1705, 1
        %v1778 = vrot.slane %v1707, 1
        %v1779 = vsel %vm1036, %v1777, %v1778
        %v1780 = vrot.slane %v1708, 1
        %v1781 = vrot.slane %v1710, 1
        %v1782 = vsel %vm1036, %v1780, %v1781
        %v1783 = vrot.slane %v1709, 1
        %v1784 = vrot.slane %v1711, 1
        %v1785 = vsel %vm1036, %v1783, %v1784
        %v1786 = vrot.slane %v1712, 1
        %v1787 = vrot.slane %v1714, 1
        %v1788 = vsel %vm1036, %v1786, %v1787
        %v1789 = vrot.slane %v1713, 1
        %v1790 = vrot.slane %v1715, 1
        %v1791 = vsel %vm1036, %v1789, %v1790
        %v1792 = vrot.slane %v1716, 1
        %v1793 = vrot.slane %v1718, 1
        %v1794 = vsel %vm1036, %v1792, %v1793
        %v1795 = vrot.slane %v1717, 1
        %v1796 = vrot.slane %v1719, 1
        %v1797 = vsel %vm1036, %v1795, %v1796
        %v1798 = vrot.slane %v1720, 1
        %v1799 = vrot.slane %v1722, 1
        %v1800 = vsel %vm1036, %v1798, %v1799
        %v1801 = vrot.slane %v1721, 1
        %v1802 = vrot.slane %v1723, 1
        %v1803 = vsel %vm1036, %v1801, %v1802
        %v1820 = vadd.f32 %v1663, %v1758
        %v1821 = vadd.f32 %v1664, %v1761
        %v1822 = vadd.f32 %v1665, %v1764
        %v1823 = vadd.f32 %v1666, %v1767
        %v1824 = vadd.f32 %v1667, %v1770
        %v1825 = vadd.f32 %v1668, %v1773
        %v1826 = vadd.f32 %v1669, %v1776
        %v1827 = vadd.f32 %v1670, %v1779
        %v1828 = vadd.f32 %v1671, %v1782
        %v1829 = vadd.f32 %v1672, %v1785
        %v1830 = vadd.f32 %v1673, %v1788
        %v1831 = vadd.f32 %v1674, %v1791
        %v1832 = vadd.f32 %v1675, %v1794
        %v1833 = vadd.f32 %v1676, %v1797
        %v1834 = vadd.f32 %v1677, %v1800
        %v1835 = vadd.f32 %v1678, %v1803
        %s1836 = scalar_lea.vmem %s3, 16
        %v1837 = vld [vmem:[%s1836] ss:$8 sm:$0x3]
        %v1839 = vlaneseq
        %v1840 = vshrl.u32 %v1839, 7
        %v1841 = vsub.s32 0, %v1840
        %v1842 = vrot.slane %v1837, %v1841
        %v1843 = vlaneseq
        %v1844 = vshrl.u32 %v1843, 7
        %v1845 = vsub.s32 1, %v1844
        %v1846 = vrot.slane %v1837, %v1845
        %v1849 = vmul.f32 %v884, %v1842
        %v1850 = vmul.f32 %v885, %v1846
        %v1851 = vmul.f32 %v901, %v1842
        %v1852 = vmul.f32 %v902, %v1846
        %v1853 = vmul.f32 %v886, %v1842
        %v1854 = vmul.f32 %v887, %v1846
        %v1855 = vmul.f32 %v903, %v1842
        %v1856 = vmul.f32 %v904, %v1846
        %v1857 = vmul.f32 %v888, %v1842
        %v1858 = vmul.f32 %v889, %v1846
        %v1859 = vmul.f32 %v905, %v1842
        %v1860 = vmul.f32 %v906, %v1846
        %v1861 = vmul.f32 %v890, %v1842
        %v1862 = vmul.f32 %v891, %v1846
        %v1863 = vmul.f32 %v907, %v1842
        %v1864 = vmul.f32 %v908, %v1846
        %v1865 = vmul.f32 %v892, %v1842
        %v1866 = vmul.f32 %v893, %v1846
        %v1867 = vmul.f32 %v909, %v1842
        %v1868 = vmul.f32 %v910, %v1846
        %v1869 = vmul.f32 %v894, %v1842
        %v1870 = vmul.f32 %v895, %v1846
        %v1871 = vmul.f32 %v911, %v1842
        %v1872 = vmul.f32 %v912, %v1846
        %v1873 = vmul.f32 %v896, %v1842
        %v1874 = vmul.f32 %v897, %v1846
        %v1875 = vmul.f32 %v913, %v1842
        %v1876 = vmul.f32 %v914, %v1846
        %v1877 = vmul.f32 %v881, %v1842
        %v1878 = vmul.f32 %v881, %v1846
        %v1879 = vmul.f32 %v898, %v1842
        %v1880 = vmul.f32 %v898, %v1846
        %v1913 = vrot.slane %v1849, 2
        %v1914 = vrot.slane %v1851, 2
        %v1915 = vsel %vm1194, %v1913, %v1914
        %v1916 = vrot.slane %v1850, 2
        %v1917 = vrot.slane %v1852, 2
        %v1918 = vsel %vm1194, %v1916, %v1917
        %v1919 = vrot.slane %v1853, 2
        %v1920 = vrot.slane %v1855, 2
        %v1921 = vsel %vm1194, %v1919, %v1920
        %v1922 = vrot.slane %v1854, 2
        %v1923 = vrot.slane %v1856, 2
        %v1924 = vsel %vm1194, %v1922, %v1923
        %v1925 = vrot.slane %v1857, 2
        %v1926 = vrot.slane %v1859, 2
        %v1927 = vsel %vm1194, %v1925, %v1926
        %v1928 = vrot.slane %v1858, 2
        %v1929 = vrot.slane %v1860, 2
        %v1930 = vsel %vm1194, %v1928, %v1929
        %v1931 = vrot.slane %v1861, 2
        %v1932 = vrot.slane %v1863, 2
        %v1933 = vsel %vm1194, %v1931, %v1932
        %v1934 = vrot.slane %v1862, 2
        %v1935 = vrot.slane %v1864, 2
        %v1936 = vsel %vm1194, %v1934, %v1935
        %v1937 = vrot.slane %v1865, 2
        %v1938 = vrot.slane %v1867, 2
        %v1939 = vsel %vm1194, %v1937, %v1938
        %v1940 = vrot.slane %v1866, 2
        %v1941 = vrot.slane %v1868, 2
        %v1942 = vsel %vm1194, %v1940, %v1941
        %v1943 = vrot.slane %v1869, 2
        %v1944 = vrot.slane %v1871, 2
        %v1945 = vsel %vm1194, %v1943, %v1944
        %v1946 = vrot.slane %v1870, 2
        %v1947 = vrot.slane %v1872, 2
        %v1948 = vsel %vm1194, %v1946, %v1947
        %v1949 = vrot.slane %v1873, 2
        %v1950 = vrot.slane %v1875, 2
        %v1951 = vsel %vm1194, %v1949, %v1950
        %v1952 = vrot.slane %v1874, 2
        %v1953 = vrot.slane %v1876, 2
        %v1954 = vsel %vm1194, %v1952, %v1953
        %v1955 = vrot.slane %v1877, 2
        %v1956 = vrot.slane %v1879, 2
        %v1957 = vsel %vm1194, %v1955, %v1956
        %v1958 = vrot.slane %v1878, 2
        %v1959 = vrot.slane %v1880, 2
        %v1960 = vsel %vm1194, %v1958, %v1959
        %v1977 = vadd.f32 %v1820, %v1915
        %v1978 = vadd.f32 %v1821, %v1918
        %v1979 = vadd.f32 %v1822, %v1921
        %v1980 = vadd.f32 %v1823, %v1924
        %v1981 = vadd.f32 %v1824, %v1927
        %v1982 = vadd.f32 %v1825, %v1930
        %v1983 = vadd.f32 %v1826, %v1933
        %v1984 = vadd.f32 %v1827, %v1936
        %v1985 = vadd.f32 %v1828, %v1939
        %v1986 = vadd.f32 %v1829, %v1942
        %v1987 = vadd.f32 %v1830, %v1945
        %v1988 = vadd.f32 %v1831, %v1948
        %v1989 = vadd.f32 %v1832, %v1951
        %v1990 = vadd.f32 %v1833, %v1954
        %v1991 = vadd.f32 %v1834, %v1957
        %v1992 = vadd.f32 %v1835, %v1960
        %v1993 = vld [vmem:[%s4] sm:$0x3]
        %v1995 = vlaneseq
        %v1996 = vshrl.u32 %v1995, 7
        %v1997 = vsub.s32 0, %v1996
        %v1998 = vrot.slane %v1993, %v1997
        %v1999 = vlaneseq
        %v2000 = vshrl.u32 %v1999, 7
        %v2001 = vsub.s32 1, %v2000
        %v2002 = vrot.slane %v1993, %v2001
        %v2005 = vmul.f32 %v1977, %v1998
        %v2006 = vmul.f32 %v1978, %v2002
        %v2007 = vmul.f32 %v1979, %v1998
        %v2008 = vmul.f32 %v1980, %v2002
        %v2009 = vmul.f32 %v1981, %v1998
        %v2010 = vmul.f32 %v1982, %v2002
        %v2011 = vmul.f32 %v1983, %v1998
        %v2012 = vmul.f32 %v1984, %v2002
        %v2013 = vmul.f32 %v1985, %v1998
        %v2014 = vmul.f32 %v1986, %v2002
        %v2015 = vmul.f32 %v1987, %v1998
        %v2016 = vmul.f32 %v1988, %v2002
        %v2017 = vmul.f32 %v1989, %v1998
        %v2018 = vmul.f32 %v1990, %v2002
        %v2019 = vmul.f32 %v1991, %v1998
        %v2020 = vmul.f32 %v1992, %v2002
        %v2021 = vld [vmem:[%s5] sm:$0x3]
        %v2023 = vlaneseq
        %v2024 = vshrl.u32 %v2023, 7
        %v2025 = vsub.s32 0, %v2024
        %v2026 = vrot.slane %v2021, %v2025
        %v2027 = vlaneseq
        %v2028 = vshrl.u32 %v2027, 7
        %v2029 = vsub.s32 1, %v2028
        %v2030 = vrot.slane %v2021, %v2029
        %v2033 = vadd.f32 %v2005, %v2026
        %v2034 = vadd.f32 %v2006, %v2030
        %v2035 = vadd.f32 %v2007, %v2026
        %v2036 = vadd.f32 %v2008, %v2030
        %v2037 = vadd.f32 %v2009, %v2026
        %v2038 = vadd.f32 %v2010, %v2030
        %v2039 = vadd.f32 %v2011, %v2026
        %v2040 = vadd.f32 %v2012, %v2030
        %v2041 = vadd.f32 %v2013, %v2026
        %v2042 = vadd.f32 %v2014, %v2030
        %v2043 = vadd.f32 %v2015, %v2026
        %v2044 = vadd.f32 %v2016, %v2030
        %v2045 = vadd.f32 %v2017, %v2026
        %v2046 = vadd.f32 %v2018, %v2030
        %v2047 = vadd.f32 %v2019, %v2026
        %v2048 = vadd.f32 %v2020, %v2030
        %v2049 = vsub.f32 0.0, %v2033
        %v2050 = vsub.f32 0.0, %v2034
        %v2051 = vsub.f32 0.0, %v2035
        %v2052 = vsub.f32 0.0, %v2036
        %v2053 = vsub.f32 0.0, %v2037
        %v2054 = vsub.f32 0.0, %v2038
        %v2055 = vsub.f32 0.0, %v2039
        %v2056 = vsub.f32 0.0, %v2040
        %v2057 = vsub.f32 0.0, %v2041
        %v2058 = vsub.f32 0.0, %v2042
        %v2059 = vsub.f32 0.0, %v2043
        %v2060 = vsub.f32 0.0, %v2044
        %v2061 = vsub.f32 0.0, %v2045
        %v2062 = vsub.f32 0.0, %v2046
        %v2063 = vsub.f32 0.0, %v2047
        %v2064 = vsub.f32 0.0, %v2048
        %v2065 = vmul.f32 %v2049, 1.442695
        %v2066 = vpow.pop %v2065
        %v2067 = vmul.f32 %v2050, 1.442695
        %v2068 = vpow.pop %v2067
        %v2069 = vmul.f32 %v2051, 1.442695
        %v2070 = vpow.pop %v2069
        %v2071 = vmul.f32 %v2052, 1.442695
        %v2072 = vpow.pop %v2071
        %v2073 = vmul.f32 %v2053, 1.442695
        %v2074 = vpow.pop %v2073
        %v2075 = vmul.f32 %v2054, 1.442695
        %v2076 = vpow.pop %v2075
        %v2077 = vmul.f32 %v2055, 1.442695
        %v2078 = vpow.pop %v2077
        %v2079 = vmul.f32 %v2056, 1.442695
        %v2080 = vpow.pop %v2079
        %v2081 = vmul.f32 %v2057, 1.442695
        %v2082 = vpow.pop %v2081
        %v2083 = vmul.f32 %v2058, 1.442695
        %v2084 = vpow.pop %v2083
        %v2085 = vmul.f32 %v2059, 1.442695
        %v2086 = vpow.pop %v2085
        %v2087 = vmul.f32 %v2060, 1.442695
        %v2088 = vpow.pop %v2087
        %v2089 = vmul.f32 %v2061, 1.442695
        %v2090 = vpow.pop %v2089
        %v2091 = vmul.f32 %v2062, 1.442695
        %v2092 = vpow.pop %v2091
        %v2093 = vmul.f32 %v2063, 1.442695
        %v2094 = vpow.pop %v2093
        %v2095 = vmul.f32 %v2064, 1.442695
        %v2096 = vpow.pop %v2095
        %v2097 = vadd.f32 %v2066, 1.0
        %v2098 = vadd.f32 %v2068, 1.0
        %v2099 = vadd.f32 %v2070, 1.0
        %v2100 = vadd.f32 %v2072, 1.0
        %v2101 = vadd.f32 %v2074, 1.0
        %v2102 = vadd.f32 %v2076, 1.0
        %v2103 = vadd.f32 %v2078, 1.0
        %v2104 = vadd.f32 %v2080, 1.0
        %v2105 = vadd.f32 %v2082, 1.0
        %v2106 = vadd.f32 %v2084, 1.0
        %v2107 = vadd.f32 %v2086, 1.0
        %v2108 = vadd.f32 %v2088, 1.0
        %v2109 = vadd.f32 %v2090, 1.0
        %v2110 = vadd.f32 %v2092, 1.0
        %v2111 = vadd.f32 %v2094, 1.0
        %v2112 = vadd.f32 %v2096, 1.0
        %v2113 = vrcp.pop %v2097
        %v2114 = vrcp.pop %v2098
        %v2115 = vrcp.pop %v2099
        %v2116 = vrcp.pop %v2100
        %v2117 = vrcp.pop %v2101
        %v2118 = vrcp.pop %v2102
        %v2119 = vrcp.pop %v2103
        %v2120 = vrcp.pop %v2104
        %v2121 = vrcp.pop %v2105
        %v2122 = vrcp.pop %v2106
        %v2123 = vrcp.pop %v2107
        %v2124 = vrcp.pop %v2108
        %v2125 = vrcp.pop %v2109
        %v2126 = vrcp.pop %v2110
        %v2127 = vrcp.pop %v2111
        %v2128 = vrcp.pop %v2112
        %v2129 = vmul.f32 %v2033, %v2113
        %v2130 = vmul.f32 %v2034, %v2114
        %v2131 = vmul.f32 %v2035, %v2115
        %v2132 = vmul.f32 %v2036, %v2116
        %v2133 = vmul.f32 %v2037, %v2117
        %v2134 = vmul.f32 %v2038, %v2118
        %v2135 = vmul.f32 %v2039, %v2119
        %v2136 = vmul.f32 %v2040, %v2120
        %v2137 = vmul.f32 %v2041, %v2121
        %v2138 = vmul.f32 %v2042, %v2122
        %v2139 = vmul.f32 %v2043, %v2123
        %v2140 = vmul.f32 %v2044, %v2124
        %v2141 = vmul.f32 %v2045, %v2125
        %v2142 = vmul.f32 %v2046, %v2126
        %v2143 = vmul.f32 %v2047, %v2127
        %v2144 = vmul.f32 %v2048, %v2128
        %v2145 = vadd.f32 %v2129, %v2131
        %v2146 = vadd.f32 %v2145, %v2133
        %v2147 = vadd.f32 %v2146, %v2135
        %v2148 = vadd.f32 %v2147, %v2137
        %v2149 = vadd.f32 %v2148, %v2139
        %v2150 = vadd.f32 %v2149, %v2141
        %v2151 = vadd.f32 %v2150, %v2143
        %v2152 = vrot.slane %v2151, 4
        %v2153 = vadd.f32 %v2151, %v2152
        %v2154 = vrot.slane %v2153, 2
        %v2155 = vadd.f32 %v2153, %v2154
        %v2156 = vrot.slane %v2155, 1
        %v2157 = vadd.f32 %v2155, %v2156
        %v2158 = vadd.f32 %v2130, %v2132
        %v2159 = vadd.f32 %v2158, %v2134
        %v2160 = vadd.f32 %v2159, %v2136
        %v2161 = vadd.f32 %v2160, %v2138
        %v2162 = vadd.f32 %v2161, %v2140
        %v2163 = vadd.f32 %v2162, %v2142
        %v2164 = vadd.f32 %v2163, %v2144
        %v2165 = vrot.slane %v2164, 4
        %v2166 = vadd.f32 %v2164, %v2165
        %v2167 = vrot.slane %v2166, 2
        %v2168 = vadd.f32 %v2166, %v2167
        %v2169 = vrot.slane %v2168, 1
        %v2170 = vadd.f32 %v2168, %v2169
        %v2171 = vmul.f32 %v2157, 0.015625
        %v2172 = vmul.f32 %v2170, 0.015625
        %v2173 = vpack.c.bf16 %v2171, %v2171
        %v2174 = vpack.c.bf16 %v2172, %v2172
        %v2175 = vld [vmem:[%s6] sm:$0xf]
        %v2176 = vld [vmem:[%s6 + $0x4] sm:$0xf]
        %v2177 = vld [vmem:[%s6 + $0x8] sm:$0xf]
        %v2178 = vld [vmem:[%s6 + $0xc] sm:$0xf]
        %v2179 = vld [vmem:[%s6 + $0x10] sm:$0xf]
        %v2180 = vld [vmem:[%s6 + $0x14] sm:$0xf]
        %v2181 = vld [vmem:[%s6 + $0x18] sm:$0xf]
        %v2182 = vld [vmem:[%s6 + $0x1c] sm:$0xf]
        %v2183 = vld [vmem:[%s6 + $0x20] sm:$0xf]
        %v2184 = vld [vmem:[%s6 + $0x24] sm:$0xf]
        %v2185 = vld [vmem:[%s6 + $0x28] sm:$0xf]
        %v2186 = vld [vmem:[%s6 + $0x2c] sm:$0xf]
        %v2187 = vld [vmem:[%s6 + $0x30] sm:$0xf]
        %v2188 = vld [vmem:[%s6 + $0x34] sm:$0xf]
        %v2189 = vld [vmem:[%s6 + $0x38] sm:$0xf]
        %v2190 = vld [vmem:[%s6 + $0x3c] sm:$0xf]
        %v2191 = vld [vmem:[%s6 + $0x40] sm:$0xf]
        %v2192 = vld [vmem:[%s6 + $0x44] sm:$0xf]
        %v2193 = vld [vmem:[%s6 + $0x48] sm:$0xf]
        %v2194 = vld [vmem:[%s6 + $0x4c] sm:$0xf]
        %v2195 = vld [vmem:[%s6 + $0x50] sm:$0xf]
        %v2196 = vld [vmem:[%s6 + $0x54] sm:$0xf]
        %v2197 = vld [vmem:[%s6 + $0x58] sm:$0xf]
        %v2198 = vld [vmem:[%s6 + $0x5c] sm:$0xf]
        %v2199 = vld [vmem:[%s6 + $0x60] sm:$0xf]
        %v2200 = vld [vmem:[%s6 + $0x64] sm:$0xf]
        %v2201 = vld [vmem:[%s6 + $0x68] sm:$0xf]
        %v2202 = vld [vmem:[%s6 + $0x6c] sm:$0xf]
        %v2203 = vld [vmem:[%s6 + $0x70] sm:$0xf]
        %v2204 = vld [vmem:[%s6 + $0x74] sm:$0xf]
        %v2205 = vld [vmem:[%s6 + $0x78] sm:$0xf]
        %v2206 = vld [vmem:[%s6 + $0x7c] sm:$0xf]
        %v2207 = vld [vmem:[%s7] sm:$0x1]
        %v2240 = vunpack.c.l.b16 %v2175
        %v2241 = vunpack.c.l.b16 %v2176
        %v2242 = vunpack.c.l.b16 %v2177
        %v2243 = vunpack.c.l.b16 %v2178
        %v2244 = vunpack.c.l.b16 %v2179
        %v2245 = vunpack.c.l.b16 %v2180
        %v2246 = vunpack.c.l.b16 %v2181
        %v2247 = vunpack.c.l.b16 %v2182
        %v2248 = vunpack.c.l.b16 %v2183
        %v2249 = vunpack.c.l.b16 %v2184
        %v2250 = vunpack.c.l.b16 %v2185
        %v2251 = vunpack.c.l.b16 %v2186
        %v2252 = vunpack.c.l.b16 %v2187
        %v2253 = vunpack.c.l.b16 %v2188
        %v2254 = vunpack.c.l.b16 %v2189
        %v2255 = vunpack.c.l.b16 %v2190
        %v2256 = vunpack.c.l.b16 %v2191
        %v2257 = vunpack.c.l.b16 %v2192
        %v2258 = vunpack.c.l.b16 %v2193
        %v2259 = vunpack.c.l.b16 %v2194
        %v2260 = vunpack.c.l.b16 %v2195
        %v2261 = vunpack.c.l.b16 %v2196
        %v2262 = vunpack.c.l.b16 %v2197
        %v2263 = vunpack.c.l.b16 %v2198
        %v2264 = vunpack.c.l.b16 %v2199
        %v2265 = vunpack.c.l.b16 %v2200
        %v2266 = vunpack.c.l.b16 %v2201
        %v2267 = vunpack.c.l.b16 %v2202
        %v2268 = vunpack.c.l.b16 %v2203
        %v2269 = vunpack.c.l.b16 %v2204
        %v2270 = vunpack.c.l.b16 %v2205
        %v2271 = vunpack.c.l.b16 %v2206
        %v2272 = vpack.c.b16 %v2241, %v2240
        %v2273 = vpack.c.b16 %v2243, %v2242
        %v2274 = vpack.c.b16 %v2245, %v2244
        %v2275 = vpack.c.b16 %v2247, %v2246
        %v2276 = vpack.c.b16 %v2249, %v2248
        %v2277 = vpack.c.b16 %v2251, %v2250
        %v2278 = vpack.c.b16 %v2253, %v2252
        %v2279 = vpack.c.b16 %v2255, %v2254
        %v2280 = vpack.c.b16 %v2257, %v2256
        %v2281 = vpack.c.b16 %v2259, %v2258
        %v2282 = vpack.c.b16 %v2261, %v2260
        %v2283 = vpack.c.b16 %v2263, %v2262
        %v2284 = vpack.c.b16 %v2265, %v2264
        %v2285 = vpack.c.b16 %v2267, %v2266
        %v2286 = vpack.c.b16 %v2269, %v2268
        %v2287 = vpack.c.b16 %v2271, %v2270
        %2304 = vmatprep.subr.bf16.mxu0 0
        %2305 = vmatpush1.bf16.msra.mxu0 %v2279
        %2306 = vmatprep.subr.bf16.mxu0 0
        %2307 = vmatpush1.bf16.msra.mxu0 %v2278
        %2308 = vmatprep.subr.bf16.mxu0 0
        %2309 = vmatpush1.bf16.msra.mxu0 %v2277
        %2310 = vmatprep.subr.bf16.mxu0 0
        %2311 = vmatpush1.bf16.msra.mxu0 %v2276
        %2312 = vmatprep.subr.bf16.mxu0 0
        %2313 = vmatpush1.bf16.msra.mxu0 %v2275
        %2314 = vmatprep.subr.bf16.mxu0 0
        %2315 = vmatpush1.bf16.msra.mxu0 %v2274
        %2316 = vmatprep.subr.bf16.mxu0 0
        %2317 = vmatpush1.bf16.msra.mxu0 %v2273
        %2318 = vmatprep.subr.bf16.mxu0 0
        %2319 = vmatpush1.bf16.msra.mxu0 %v2272
        %2320 = vmatprep.subr.bf16.mxu0 0
        %2321 = vmatpush2.bf16.msra.mxu0 %v2287
        %2322 = vmatprep.subr.bf16.mxu0 0
        %2323 = vmatpush2.bf16.msra.mxu0 %v2286
        %2324 = vmatprep.subr.bf16.mxu0 0
        %2325 = vmatpush2.bf16.msra.mxu0 %v2285
        %2326 = vmatprep.subr.bf16.mxu0 0
        %2327 = vmatpush2.bf16.msra.mxu0 %v2284
        %2328 = vmatprep.subr.bf16.mxu0 0
        %2329 = vmatpush2.bf16.msra.mxu0 %v2283
        %2330 = vmatprep.subr.bf16.mxu0 0
        %2331 = vmatpush2.bf16.msra.mxu0 %v2282
        %2332 = vmatprep.subr.bf16.mxu0 0
        %2333 = vmatpush2.bf16.msra.mxu0 %v2281
        %2334 = vmatprep.subr.bf16.mxu0 0
        %2335 = vmatpush2.bf16.msra.mxu0 %v2280
        %2336 = vmatprep.mubr.bf16.mxu0 %v2174
        %2337 = vmatmul.mubr.bf16.gmra.mxu0 %v2173
        %v2338 = vpop.f32.mrf.mxu0
        %v2339 = vadd.f32 %v2207, %v2338
        %v2340 = vpop.f32.mrf.mxu0
        %v2341 = vpop.f32.mrf.mxu0
        %v2342 = vpop.f32.mrf.mxu0
        %2343 = vdwg.mxu0
        %v2344 = vsub.f32 0.0, %v2339
        %v2345 = vmul.f32 %v2344, 1.442695
        %v2346 = vpow.pop %v2345
        %v2347 = vadd.f32 %v2346, 1.0
        %v2348 = vrcp.pop %v2347
        %v2349 = vmul.f32 %v2339, %v2348
        %v2350 = vpack.c.bf16 %v2349, %v2349
        %v2351 = vld [vmem:[%s8] sm:$0xff]
        %v2352 = vld [vmem:[%s8 + $0x8] sm:$0xff]
        %v2353 = vld [vmem:[%s8 + $0x10] sm:$0xff]
        %v2354 = vld [vmem:[%s8 + $0x18] sm:$0xff]
        %v2355 = vld [vmem:[%s8 + $0x20] sm:$0xff]
        %v2356 = vld [vmem:[%s8 + $0x28] sm:$0xff]
        %v2357 = vld [vmem:[%s8 + $0x30] sm:$0xff]
        %v2358 = vld [vmem:[%s8 + $0x38] sm:$0xff]
        %v2359 = vld [vmem:[%s8 + $0x40] sm:$0xff]
        %v2360 = vld [vmem:[%s8 + $0x48] sm:$0xff]
        %v2361 = vld [vmem:[%s8 + $0x50] sm:$0xff]
        %v2362 = vld [vmem:[%s8 + $0x58] sm:$0xff]
        %v2363 = vld [vmem:[%s8 + $0x60] sm:$0xff]
        %v2364 = vld [vmem:[%s8 + $0x68] sm:$0xff]
        %v2365 = vld [vmem:[%s8 + $0x70] sm:$0xff]
        %v2366 = vld [vmem:[%s8 + $0x78] sm:$0xff]
        %v2367 = vld [vmem:[%s9] sm:$0x3]
        %v2384 = vunpack.c.l.b16 %v2351
        %v2385 = vunpack.c.h.b16 %v2351
        %v2386 = vunpack.c.l.b16 %v2352
        %v2387 = vunpack.c.h.b16 %v2352
        %v2388 = vunpack.c.l.b16 %v2353
        %v2389 = vunpack.c.h.b16 %v2353
        %v2390 = vunpack.c.l.b16 %v2354
        %v2391 = vunpack.c.h.b16 %v2354
        %v2392 = vunpack.c.l.b16 %v2355
        %v2393 = vunpack.c.h.b16 %v2355
        %v2394 = vunpack.c.l.b16 %v2356
        %v2395 = vunpack.c.h.b16 %v2356
        %v2396 = vunpack.c.l.b16 %v2357
        %v2397 = vunpack.c.h.b16 %v2357
        %v2398 = vunpack.c.l.b16 %v2358
        %v2399 = vunpack.c.h.b16 %v2358
        %v2400 = vunpack.c.l.b16 %v2359
        %v2401 = vunpack.c.h.b16 %v2359
        %v2402 = vunpack.c.l.b16 %v2360
        %v2403 = vunpack.c.h.b16 %v2360
        %v2404 = vunpack.c.l.b16 %v2361
        %v2405 = vunpack.c.h.b16 %v2361
        %v2406 = vunpack.c.l.b16 %v2362
        %v2407 = vunpack.c.h.b16 %v2362
        %v2408 = vunpack.c.l.b16 %v2363
        %v2409 = vunpack.c.h.b16 %v2363
        %v2410 = vunpack.c.l.b16 %v2364
        %v2411 = vunpack.c.h.b16 %v2364
        %v2412 = vunpack.c.l.b16 %v2365
        %v2413 = vunpack.c.h.b16 %v2365
        %v2414 = vunpack.c.l.b16 %v2366
        %v2415 = vunpack.c.h.b16 %v2366
        %v2416 = vpack.c.b16 %v2386, %v2384
        %v2417 = vpack.c.b16 %v2387, %v2385
        %v2418 = vpack.c.b16 %v2390, %v2388
        %v2419 = vpack.c.b16 %v2391, %v2389
        %v2420 = vpack.c.b16 %v2394, %v2392
        %v2421 = vpack.c.b16 %v2395, %v2393
        %v2422 = vpack.c.b16 %v2398, %v2396
        %v2423 = vpack.c.b16 %v2399, %v2397
        %v2424 = vpack.c.b16 %v2402, %v2400
        %v2425 = vpack.c.b16 %v2403, %v2401
        %v2426 = vpack.c.b16 %v2406, %v2404
        %v2427 = vpack.c.b16 %v2407, %v2405
        %v2428 = vpack.c.b16 %v2410, %v2408
        %v2429 = vpack.c.b16 %v2411, %v2409
        %v2430 = vpack.c.b16 %v2414, %v2412
        %v2431 = vpack.c.b16 %v2415, %v2413
        %v2449 = vlaneseq
        %v2450 = vshrl.u32 %v2449, 7
        %v2451 = vsub.s32 0, %v2450
        %v2452 = vrot.slane %v2367, %v2451
        %v2453 = vlaneseq
        %v2454 = vshrl.u32 %v2453, 7
        %v2455 = vsub.s32 1, %v2454
        %v2456 = vrot.slane %v2367, %v2455
        %2459 = vmatprep.subr.bf16.mxu0 %v2431
        %2460 = vmatpush1.bf16.msra.mxu0 %v2430
        %2461 = vmatprep.subr.bf16.mxu0 %v2429
        %2462 = vmatpush1.bf16.msra.mxu0 %v2428
        %2463 = vmatprep.subr.bf16.mxu0 %v2427
        %2464 = vmatpush1.bf16.msra.mxu0 %v2426
        %2465 = vmatprep.subr.bf16.mxu0 %v2425
        %2466 = vmatpush1.bf16.msra.mxu0 %v2424
        %2467 = vmatprep.subr.bf16.mxu0 %v2423
        %2468 = vmatpush1.bf16.msra.mxu0 %v2422
        %2469 = vmatprep.subr.bf16.mxu0 %v2421
        %2470 = vmatpush1.bf16.msra.mxu0 %v2420
        %2471 = vmatprep.subr.bf16.mxu0 %v2419
        %2472 = vmatpush1.bf16.msra.mxu0 %v2418
        %2473 = vmatprep.subr.bf16.mxu0 %v2417
        %2474 = vmatpush1.bf16.msra.mxu0 %v2416
        %2475 = vmatprep.subr.bf16.mxu0 0
        %2476 = vmatpush2.bf16.msra.mxu0 0
        %2477 = vmatprep.subr.bf16.mxu0 0
        %2478 = vmatpush2.bf16.msra.mxu0 0
        %2479 = vmatprep.subr.bf16.mxu0 0
        %2480 = vmatpush2.bf16.msra.mxu0 0
        %2481 = vmatprep.subr.bf16.mxu0 0
        %2482 = vmatpush2.bf16.msra.mxu0 0
        %2483 = vmatprep.subr.bf16.mxu0 0
        %2484 = vmatpush2.bf16.msra.mxu0 0
        %2485 = vmatprep.subr.bf16.mxu0 0
        %2486 = vmatpush2.bf16.msra.mxu0 0
        %2487 = vmatprep.subr.bf16.mxu0 0
        %2488 = vmatpush2.bf16.msra.mxu0 0
        %2489 = vmatprep.subr.bf16.mxu0 0
        %2490 = vmatpush2.bf16.msra.mxu0 0
        %2491 = vmatprep.mubr.bf16.mxu0 0
        %2492 = vmatmul.mubr.bf16.gmra.mxu0 %v2350
        %v2493 = vpop.f32.mrf.mxu0
        %v2494 = vadd.f32 %v2452, %v2493
        %v2495 = vpop.f32.mrf.mxu0
        %v2496 = vadd.f32 %v2456, %v2495
        %v2497 = vpop.f32.mrf.mxu0
        %v2498 = vpop.f32.mrf.mxu0
        %2499 = vdwg.mxu0
        %v2500 = vsub.f32 0.0, %v2494
        %v2501 = vsub.f32 0.0, %v2496
        %v2502 = vmul.f32 %v2500, 1.442695
        %v2503 = vpow.pop %v2502
        %v2504 = vmul.f32 %v2501, 1.442695
        %v2505 = vpow.pop %v2504
        %v2506 = vadd.f32 %v2503, 1.0
        %v2507 = vadd.f32 %v2505, 1.0
        %v2508 = vrcp.pop %v2506
        %v2509 = vrcp.pop %v2507
        %v2510 = vlaneseq
        %v2511 = vshrl.u32 %v2510, 7
        %v2512 = vsub.s32 0, %v2511
        %v2513 = vrot.slane %v2508, %v2512
        %v2514 = vlaneseq
        %v2515 = vshrl.u32 %v2514, 7
        %v2516 = vsub.s32 0, %v2515
        %v2517 = vrot.slane %v2509, %v2516
        %v2518 = vmul.f32 %v2129, %v2513
        %v2519 = vmul.f32 %v2130, %v2517
        %v2520 = vmul.f32 %v2131, %v2513
        %v2521 = vmul.f32 %v2132, %v2517
        %v2522 = vmul.f32 %v2133, %v2513
        %v2523 = vmul.f32 %v2134, %v2517
        %v2524 = vmul.f32 %v2135, %v2513
        %v2525 = vmul.f32 %v2136, %v2517
        %v2526 = vmul.f32 %v2137, %v2513
        %v2527 = vmul.f32 %v2138, %v2517
        %v2528 = vmul.f32 %v2139, %v2513
        %v2529 = vmul.f32 %v2140, %v2517
        %v2530 = vmul.f32 %v2141, %v2513
        %v2531 = vmul.f32 %v2142, %v2517
        %v2532 = vmul.f32 %v2143, %v2513
        %v2533 = vmul.f32 %v2144, %v2517
        %v2534 = vpack.c.bf16 %v2520, %v2518
        %v2535 = vpack.c.bf16 %v2521, %v2519
        %v2536 = vpack.c.bf16 %v2524, %v2522
        %v2537 = vpack.c.bf16 %v2525, %v2523
        %v2538 = vpack.c.bf16 %v2528, %v2526
        %v2539 = vpack.c.bf16 %v2529, %v2527
        %v2540 = vpack.c.bf16 %v2532, %v2530
        %v2541 = vpack.c.bf16 %v2533, %v2531
        %v2542 = vld [vmem:[%s10] sm:$0xf]
        %v2543 = vld [vmem:[%s10 + $0x4] sm:$0xf]
        %v2544 = vld [vmem:[%s10 + $0x8] sm:$0xf]
        %v2545 = vld [vmem:[%s10 + $0xc] sm:$0xf]
        %v2546 = vld [vmem:[%s10 + $0x10] sm:$0xf]
        %v2547 = vld [vmem:[%s10 + $0x14] sm:$0xf]
        %v2548 = vld [vmem:[%s10 + $0x18] sm:$0xf]
        %v2549 = vld [vmem:[%s10 + $0x1c] sm:$0xf]
        %v2550 = vld [vmem:[%s10 + $0x20] sm:$0xf]
        %v2551 = vld [vmem:[%s10 + $0x24] sm:$0xf]
        %v2552 = vld [vmem:[%s10 + $0x28] sm:$0xf]
        %v2553 = vld [vmem:[%s10 + $0x2c] sm:$0xf]
        %v2554 = vld [vmem:[%s10 + $0x30] sm:$0xf]
        %v2555 = vld [vmem:[%s10 + $0x34] sm:$0xf]
        %v2556 = vld [vmem:[%s10 + $0x38] sm:$0xf]
        %v2557 = vld [vmem:[%s10 + $0x3c] sm:$0xf]
        %v2558 = vld [vmem:[%s10 + $0x40] sm:$0xf]
        %v2559 = vld [vmem:[%s10 + $0x44] sm:$0xf]
        %v2560 = vld [vmem:[%s10 + $0x48] sm:$0xf]
        %v2561 = vld [vmem:[%s10 + $0x4c] sm:$0xf]
        %v2562 = vld [vmem:[%s10 + $0x50] sm:$0xf]
        %v2563 = vld [vmem:[%s10 + $0x54] sm:$0xf]
        %v2564 = vld [vmem:[%s10 + $0x58] sm:$0xf]
        %v2565 = vld [vmem:[%s10 + $0x5c] sm:$0xf]
        %v2566 = vld [vmem:[%s10 + $0x60] sm:$0xf]
        %v2567 = vld [vmem:[%s10 + $0x64] sm:$0xf]
        %v2568 = vld [vmem:[%s10 + $0x68] sm:$0xf]
        %v2569 = vld [vmem:[%s10 + $0x6c] sm:$0xf]
        %v2570 = vld [vmem:[%s10 + $0x70] sm:$0xf]
        %v2571 = vld [vmem:[%s10 + $0x74] sm:$0xf]
        %v2572 = vld [vmem:[%s10 + $0x78] sm:$0xf]
        %v2573 = vld [vmem:[%s10 + $0x7c] sm:$0xf]
        %v2574 = vld [vmem:[%s11] sm:$0x1]
        %v2576 = vlaneseq
        %v2577 = vshrl.u32 %v2576, 7
        %v2578 = vsub.s32 0, %v2577
        %v2579 = vrot.slane %v2574, %v2578
        %v2613 = vunpack.c.l.b16 %v2542
        %v2614 = vunpack.c.l.b16 %v2543
        %v2615 = vunpack.c.l.b16 %v2544
        %v2616 = vunpack.c.l.b16 %v2545
        %v2617 = vunpack.c.l.b16 %v2546
        %v2618 = vunpack.c.l.b16 %v2547
        %v2619 = vunpack.c.l.b16 %v2548
        %v2620 = vunpack.c.l.b16 %v2549
        %v2621 = vunpack.c.l.b16 %v2550
        %v2622 = vunpack.c.l.b16 %v2551
        %v2623 = vunpack.c.l.b16 %v2552
        %v2624 = vunpack.c.l.b16 %v2553
        %v2625 = vunpack.c.l.b16 %v2554
        %v2626 = vunpack.c.l.b16 %v2555
        %v2627 = vunpack.c.l.b16 %v2556
        %v2628 = vunpack.c.l.b16 %v2557
        %v2629 = vunpack.c.l.b16 %v2558
        %v2630 = vunpack.c.l.b16 %v2559
        %v2631 = vunpack.c.l.b16 %v2560
        %v2632 = vunpack.c.l.b16 %v2561
        %v2633 = vunpack.c.l.b16 %v2562
        %v2634 = vunpack.c.l.b16 %v2563
        %v2635 = vunpack.c.l.b16 %v2564
        %v2636 = vunpack.c.l.b16 %v2565
        %v2637 = vunpack.c.l.b16 %v2566
        %v2638 = vunpack.c.l.b16 %v2567
        %v2639 = vunpack.c.l.b16 %v2568
        %v2640 = vunpack.c.l.b16 %v2569
        %v2641 = vunpack.c.l.b16 %v2570
        %v2642 = vunpack.c.l.b16 %v2571
        %v2643 = vunpack.c.l.b16 %v2572
        %v2644 = vunpack.c.l.b16 %v2573
        %v2645 = vpack.c.b16 %v2614, %v2613
        %v2646 = vpack.c.b16 %v2616, %v2615
        %v2647 = vpack.c.b16 %v2618, %v2617
        %v2648 = vpack.c.b16 %v2620, %v2619
        %v2649 = vpack.c.b16 %v2622, %v2621
        %v2650 = vpack.c.b16 %v2624, %v2623
        %v2651 = vpack.c.b16 %v2626, %v2625
        %v2652 = vpack.c.b16 %v2628, %v2627
        %v2653 = vpack.c.b16 %v2630, %v2629
        %v2654 = vpack.c.b16 %v2632, %v2631
        %v2655 = vpack.c.b16 %v2634, %v2633
        %v2656 = vpack.c.b16 %v2636, %v2635
        %v2657 = vpack.c.b16 %v2638, %v2637
        %v2658 = vpack.c.b16 %v2640, %v2639
        %v2659 = vpack.c.b16 %v2642, %v2641
        %v2660 = vpack.c.b16 %v2644, %v2643
        %2677 = vmatprep.subr.bf16.mxu0 0
        %2678 = vmatpush1.bf16.msra.mxu0 %v2652
        %2679 = vmatprep.subr.bf16.mxu0 0
        %2680 = vmatpush1.bf16.msra.mxu0 %v2651
        %2681 = vmatprep.subr.bf16.mxu0 0
        %2682 = vmatpush1.bf16.msra.mxu0 %v2650
        %2683 = vmatprep.subr.bf16.mxu0 0
        %2684 = vmatpush1.bf16.msra.mxu0 %v2649
        %2685 = vmatprep.subr.bf16.mxu0 0
        %2686 = vmatpush1.bf16.msra.mxu0 %v2648
        %2687 = vmatprep.subr.bf16.mxu0 0
        %2688 = vmatpush1.bf16.msra.mxu0 %v2647
        %2689 = vmatprep.subr.bf16.mxu0 0
        %2690 = vmatpush1.bf16.msra.mxu0 %v2646
        %2691 = vmatprep.subr.bf16.mxu0 0
        %2692 = vmatpush1.bf16.msra.mxu0 %v2645
        %2693 = vmatprep.subr.bf16.mxu0 0
        %2694 = vmatpush2.bf16.msra.mxu0 %v2660
        %2695 = vmatprep.subr.bf16.mxu0 0
        %2696 = vmatpush2.bf16.msra.mxu0 %v2659
        %2697 = vmatprep.subr.bf16.mxu0 0
        %2698 = vmatpush2.bf16.msra.mxu0 %v2658
        %2699 = vmatprep.subr.bf16.mxu0 0
        %2700 = vmatpush2.bf16.msra.mxu0 %v2657
        %2701 = vmatprep.subr.bf16.mxu0 0
        %2702 = vmatpush2.bf16.msra.mxu0 %v2656
        %2703 = vmatprep.subr.bf16.mxu0 0
        %2704 = vmatpush2.bf16.msra.mxu0 %v2655
        %2705 = vmatprep.subr.bf16.mxu0 0
        %2706 = vmatpush2.bf16.msra.mxu0 %v2654
        %2707 = vmatprep.subr.bf16.mxu0 0
        %2708 = vmatpush2.bf16.msra.mxu0 %v2653
        %2709 = vmatprep.mubr.bf16.mxu0 %v2535
        %2710 = vmatmul.mubr.bf16.gmra.mxu0 %v2534
        %v2711 = vpop.f32.mrf.mxu0
        %v2712 = vadd.f32 %v2579, %v2711
        %v2713 = vpop.f32.mrf.mxu0
        %v2714 = vpop.f32.mrf.mxu0
        %v2715 = vadd.f32 %v2579, %v2714
        %v2716 = vpop.f32.mrf.mxu0
        %2717 = vmatprep.mubr.bf16.mxu0 %v2537
        %2718 = vmatmul.mubr.bf16.gmra.mxu0 %v2536
        %v2719 = vpop.f32.mrf.mxu0
        %v2720 = vadd.f32 %v2579, %v2719
        %v2721 = vpop.f32.mrf.mxu0
        %v2722 = vpop.f32.mrf.mxu0
        %v2723 = vadd.f32 %v2579, %v2722
        %v2724 = vpop.f32.mrf.mxu0
        %2725 = vmatprep.mubr.bf16.mxu0 %v2539
        %2726 = vmatmul.mubr.bf16.gmra.mxu0 %v2538
        %v2727 = vpop.f32.mrf.mxu0
        %v2728 = vadd.f32 %v2579, %v2727
        %v2729 = vpop.f32.mrf.mxu0
        %v2730 = vpop.f32.mrf.mxu0
        %v2731 = vadd.f32 %v2579, %v2730
        %v2732 = vpop.f32.mrf.mxu0
        %2733 = vmatprep.mubr.bf16.mxu0 %v2541
        %2734 = vmatmul.mubr.bf16.gmra.mxu0 %v2540
        %v2735 = vpop.f32.mrf.mxu0
        %v2736 = vadd.f32 %v2579, %v2735
        %v2737 = vpop.f32.mrf.mxu0
        %v2738 = vpop.f32.mrf.mxu0
        %v2739 = vadd.f32 %v2579, %v2738
        %v2740 = vpop.f32.mrf.mxu0
        %2741 = vdwg.mxu0
        %v2742 = vunpack.c.l.bf16 %v520
        %v2743 = vunpack.c.l.bf16 %v521
        %v2744 = vunpack.c.l.bf16 %v522
        %v2745 = vunpack.c.l.bf16 %v523
        %v2746 = vunpack.c.l.bf16 %v524
        %v2747 = vunpack.c.l.bf16 %v525
        %v2748 = vunpack.c.l.bf16 %v526
        %v2749 = vunpack.c.l.bf16 %v527
        %v2750 = vadd.f32 %v2712, %v2742
        %v2751 = vadd.f32 %v2715, %v2743
        %v2752 = vadd.f32 %v2720, %v2744
        %v2753 = vadd.f32 %v2723, %v2745
        %v2754 = vadd.f32 %v2728, %v2746
        %v2755 = vadd.f32 %v2731, %v2747
        %v2756 = vadd.f32 %v2736, %v2748
        %v2757 = vadd.f32 %v2739, %v2749
        %v2758 = vpack.c.bf16 %v2751, %v2750
        %v2759 = vpack.c.bf16 %v2753, %v2752
        %v2760 = vpack.c.bf16 %v2755, %v2754
        %v2761 = vpack.c.bf16 %v2757, %v2756
        %v2762 = vld [vmem:[%s12] sm:$0xf]
        %v2763 = vld [vmem:[%s12 + $0x4] sm:$0xf]
        %v2764 = vld [vmem:[%s12 + $0x8] sm:$0xf]
        %v2765 = vld [vmem:[%s12 + $0xc] sm:$0xf]
        %v2766 = vld [vmem:[%s12 + $0x10] sm:$0xf]
        %v2767 = vld [vmem:[%s12 + $0x14] sm:$0xf]
        %v2768 = vld [vmem:[%s12 + $0x18] sm:$0xf]
        %v2769 = vld [vmem:[%s12 + $0x1c] sm:$0xf]
        %v2770 = vld [vmem:[%s12 + $0x20] sm:$0xf]
        %v2771 = vld [vmem:[%s12 + $0x24] sm:$0xf]
        %v2772 = vld [vmem:[%s12 + $0x28] sm:$0xf]
        %v2773 = vld [vmem:[%s12 + $0x2c] sm:$0xf]
        %v2774 = vld [vmem:[%s12 + $0x30] sm:$0xf]
        %v2775 = vld [vmem:[%s12 + $0x34] sm:$0xf]
        %v2776 = vld [vmem:[%s12 + $0x38] sm:$0xf]
        %v2777 = vld [vmem:[%s12 + $0x3c] sm:$0xf]
        %v2778 = vld [vmem:[%s13] sm:$0x1]
        %v2780 = vlaneseq
        %v2781 = vshrl.u32 %v2780, 7
        %v2782 = vsub.s32 0, %v2781
        %v2783 = vrot.slane %v2778, %v2782
        %v2801 = vunpack.c.l.b16 %v2762
        %v2802 = vunpack.c.l.b16 %v2763
        %v2803 = vunpack.c.l.b16 %v2764
        %v2804 = vunpack.c.l.b16 %v2765
        %v2805 = vunpack.c.l.b16 %v2766
        %v2806 = vunpack.c.l.b16 %v2767
        %v2807 = vunpack.c.l.b16 %v2768
        %v2808 = vunpack.c.l.b16 %v2769
        %v2809 = vunpack.c.l.b16 %v2770
        %v2810 = vunpack.c.l.b16 %v2771
        %v2811 = vunpack.c.l.b16 %v2772
        %v2812 = vunpack.c.l.b16 %v2773
        %v2813 = vunpack.c.l.b16 %v2774
        %v2814 = vunpack.c.l.b16 %v2775
        %v2815 = vunpack.c.l.b16 %v2776
        %v2816 = vunpack.c.l.b16 %v2777
        %v2817 = vpack.c.b16 %v2802, %v2801
        %v2818 = vpack.c.b16 %v2804, %v2803
        %v2819 = vpack.c.b16 %v2806, %v2805
        %v2820 = vpack.c.b16 %v2808, %v2807
        %v2821 = vpack.c.b16 %v2810, %v2809
        %v2822 = vpack.c.b16 %v2812, %v2811
        %v2823 = vpack.c.b16 %v2814, %v2813
        %v2824 = vpack.c.b16 %v2816, %v2815
        %2833 = vmatprep.subr.bf16.mxu0 0
        %2834 = vmatpush1.bf16.msra.mxu0 %v2824
        %2835 = vmatprep.subr.bf16.mxu0 0
        %2836 = vmatpush1.bf16.msra.mxu0 %v2823
        %2837 = vmatprep.subr.bf16.mxu0 0
        %2838 = vmatpush1.bf16.msra.mxu0 %v2822
        %2839 = vmatprep.subr.bf16.mxu0 0
        %2840 = vmatpush1.bf16.msra.mxu0 %v2821
        %2841 = vmatprep.subr.bf16.mxu0 0
        %2842 = vmatpush1.bf16.msra.mxu0 %v2820
        %2843 = vmatprep.subr.bf16.mxu0 0
        %2844 = vmatpush1.bf16.msra.mxu0 %v2819
        %2845 = vmatprep.subr.bf16.mxu0 0
        %2846 = vmatpush1.bf16.msra.mxu0 %v2818
        %2847 = vmatprep.subr.bf16.mxu0 0
        %2848 = vmatpush1.bf16.msra.mxu0 %v2817
        %2849 = vmatprep.subr.bf16.mxu0 0
        %2850 = vmatpush2.bf16.msra.mxu0 0
        %2851 = vmatprep.subr.bf16.mxu0 0
        %2852 = vmatpush2.bf16.msra.mxu0 0
        %2853 = vmatprep.subr.bf16.mxu0 0
        %2854 = vmatpush2.bf16.msra.mxu0 0
        %2855 = vmatprep.subr.bf16.mxu0 0
        %2856 = vmatpush2.bf16.msra.mxu0 0
        %2857 = vmatprep.subr.bf16.mxu0 0
        %2858 = vmatpush2.bf16.msra.mxu0 0
        %2859 = vmatprep.subr.bf16.mxu0 0
        %2860 = vmatpush2.bf16.msra.mxu0 0
        %2861 = vmatprep.subr.bf16.mxu0 0
        %2862 = vmatpush2.bf16.msra.mxu0 0
        %2863 = vmatprep.subr.bf16.mxu0 0
        %2864 = vmatpush2.bf16.msra.mxu0 0
        %2865 = vmatprep.mubr.bf16.mxu0 0
        %2866 = vmatmul.mubr.bf16.gmra.mxu0 %v2758
        %v2867 = vpop.f32.mrf.mxu0
        %v2868 = vadd.f32 %v2783, %v2867
        %v2869 = vpop.f32.mrf.mxu0
        %v2870 = vpop.f32.mrf.mxu0
        %v2871 = vadd.f32 %v2783, %v2870
        %v2872 = vpop.f32.mrf.mxu0
        %2873 = vmatprep.mubr.bf16.mxu0 0
        %2874 = vmatmul.mubr.bf16.gmra.mxu0 %v2759
        %v2875 = vpop.f32.mrf.mxu0
        %v2876 = vadd.f32 %v2783, %v2875
        %v2877 = vpop.f32.mrf.mxu0
        %v2878 = vpop.f32.mrf.mxu0
        %v2879 = vadd.f32 %v2783, %v2878
        %v2880 = vpop.f32.mrf.mxu0
        %2881 = vmatprep.mubr.bf16.mxu0 0
        %2882 = vmatmul.mubr.bf16.gmra.mxu0 %v2760
        %v2883 = vpop.f32.mrf.mxu0
        %v2884 = vadd.f32 %v2783, %v2883
        %v2885 = vpop.f32.mrf.mxu0
        %v2886 = vpop.f32.mrf.mxu0
        %v2887 = vadd.f32 %v2783, %v2886
        %v2888 = vpop.f32.mrf.mxu0
        %2889 = vmatprep.mubr.bf16.mxu0 0
        %2890 = vmatmul.mubr.bf16.gmra.mxu0 %v2761
        %v2891 = vpop.f32.mrf.mxu0
        %v2892 = vadd.f32 %v2783, %v2891
        %v2893 = vpop.f32.mrf.mxu0
        %v2894 = vpop.f32.mrf.mxu0
        %v2895 = vadd.f32 %v2783, %v2894
        %v2896 = vpop.f32.mrf.mxu0
        %2897 = vdwg.mxu0
        %v2898 = vsub.f32 0.0, %v2868
        %v2899 = vsub.f32 0.0, %v2871
        %v2900 = vsub.f32 0.0, %v2876
        %v2901 = vsub.f32 0.0, %v2879
        %v2902 = vsub.f32 0.0, %v2884
        %v2903 = vsub.f32 0.0, %v2887
        %v2904 = vsub.f32 0.0, %v2892
        %v2905 = vsub.f32 0.0, %v2895
        %v2906 = vmul.f32 %v2898, 1.442695
        %v2907 = vpow.pop %v2906
        %v2908 = vmul.f32 %v2899, 1.442695
        %v2909 = vpow.pop %v2908
        %v2910 = vmul.f32 %v2900, 1.442695
        %v2911 = vpow.pop %v2910
        %v2912 = vmul.f32 %v2901, 1.442695
        %v2913 = vpow.pop %v2912
        %v2914 = vmul.f32 %v2902, 1.442695
        %v2915 = vpow.pop %v2914
        %v2916 = vmul.f32 %v2903, 1.442695
        %v2917 = vpow.pop %v2916
        %v2918 = vmul.f32 %v2904, 1.442695
        %v2919 = vpow.pop %v2918
        %v2920 = vmul.f32 %v2905, 1.442695
        %v2921 = vpow.pop %v2920
        %v2922 = vadd.f32 %v2907, 1.0
        %v2923 = vadd.f32 %v2909, 1.0
        %v2924 = vadd.f32 %v2911, 1.0
        %v2925 = vadd.f32 %v2913, 1.0
        %v2926 = vadd.f32 %v2915, 1.0
        %v2927 = vadd.f32 %v2917, 1.0
        %v2928 = vadd.f32 %v2919, 1.0
        %v2929 = vadd.f32 %v2921, 1.0
        %v2930 = vrcp.pop %v2922
        %v2931 = vrcp.pop %v2923
        %v2932 = vrcp.pop %v2924
        %v2933 = vrcp.pop %v2925
        %v2934 = vrcp.pop %v2926
        %v2935 = vrcp.pop %v2927
        %v2936 = vrcp.pop %v2928
        %v2937 = vrcp.pop %v2929
        %v2938 = vmul.f32 %v2868, %v2930
        %v2939 = vmul.f32 %v2871, %v2931
        %v2940 = vmul.f32 %v2876, %v2932
        %v2941 = vmul.f32 %v2879, %v2933
        %v2942 = vmul.f32 %v2884, %v2934
        %v2943 = vmul.f32 %v2887, %v2935
        %v2944 = vmul.f32 %v2892, %v2936
        %v2945 = vmul.f32 %v2895, %v2937
        %v2946 = vadd.f32 %v2938, %v2939
        %v2947 = vadd.f32 %v2946, %v2940
        %v2948 = vadd.f32 %v2947, %v2941
        %v2949 = vadd.f32 %v2948, %v2942
        %v2950 = vadd.f32 %v2949, %v2943
        %v2951 = vadd.f32 %v2950, %v2944
        %v2952 = vadd.f32 %v2951, %v2945
        %v2953 = vrot.slane %v2952, 4
        %v2954 = vadd.f32 %v2952, %v2953
        %v2955 = vrot.slane %v2954, 2
        %v2956 = vadd.f32 %v2954, %v2955
        %v2957 = vrot.slane %v2956, 1
        %v2958 = vadd.f32 %v2956, %v2957
        %v2959 = vmul.f32 %v2958, 0.015625
        %v2960 = vpack.c.bf16 %v2959, %v2959
        %v2961 = vld [vmem:[%s14] sm:$0xf]
        %v2962 = vld [vmem:[%s14 + $0x4] sm:$0xf]
        %v2963 = vld [vmem:[%s14 + $0x8] sm:$0xf]
        %v2964 = vld [vmem:[%s14 + $0xc] sm:$0xf]
        %v2965 = vld [vmem:[%s14 + $0x10] sm:$0xf]
        %v2966 = vld [vmem:[%s14 + $0x14] sm:$0xf]
        %v2967 = vld [vmem:[%s14 + $0x18] sm:$0xf]
        %v2968 = vld [vmem:[%s14 + $0x1c] sm:$0xf]
        %v2969 = vld [vmem:[%s14 + $0x20] sm:$0xf]
        %v2970 = vld [vmem:[%s14 + $0x24] sm:$0xf]
        %v2971 = vld [vmem:[%s14 + $0x28] sm:$0xf]
        %v2972 = vld [vmem:[%s14 + $0x2c] sm:$0xf]
        %v2973 = vld [vmem:[%s14 + $0x30] sm:$0xf]
        %v2974 = vld [vmem:[%s14 + $0x34] sm:$0xf]
        %v2975 = vld [vmem:[%s14 + $0x38] sm:$0xf]
        %v2976 = vld [vmem:[%s14 + $0x3c] sm:$0xf]
        %v2977 = vld [vmem:[%s15] sm:$0x1]
        %v2994 = vunpack.c.l.b16 %v2961
        %v2995 = vunpack.c.l.b16 %v2962
        %v2996 = vunpack.c.l.b16 %v2963
        %v2997 = vunpack.c.l.b16 %v2964
        %v2998 = vunpack.c.l.b16 %v2965
        %v2999 = vunpack.c.l.b16 %v2966
        %v3000 = vunpack.c.l.b16 %v2967
        %v3001 = vunpack.c.l.b16 %v2968
        %v3002 = vunpack.c.l.b16 %v2969
        %v3003 = vunpack.c.l.b16 %v2970
        %v3004 = vunpack.c.l.b16 %v2971
        %v3005 = vunpack.c.l.b16 %v2972
        %v3006 = vunpack.c.l.b16 %v2973
        %v3007 = vunpack.c.l.b16 %v2974
        %v3008 = vunpack.c.l.b16 %v2975
        %v3009 = vunpack.c.l.b16 %v2976
        %v3010 = vpack.c.b16 %v2995, %v2994
        %v3011 = vpack.c.b16 %v2997, %v2996
        %v3012 = vpack.c.b16 %v2999, %v2998
        %v3013 = vpack.c.b16 %v3001, %v3000
        %v3014 = vpack.c.b16 %v3003, %v3002
        %v3015 = vpack.c.b16 %v3005, %v3004
        %v3016 = vpack.c.b16 %v3007, %v3006
        %v3017 = vpack.c.b16 %v3009, %v3008
        %3026 = vmatprep.subr.bf16.mxu0 0
        %3027 = vmatpush1.bf16.msra.mxu0 %v3017
        %3028 = vmatprep.subr.bf16.mxu0 0
        %3029 = vmatpush1.bf16.msra.mxu0 %v3016
        %3030 = vmatprep.subr.bf16.mxu0 0
        %3031 = vmatpush1.bf16.msra.mxu0 %v3015
        %3032 = vmatprep.subr.bf16.mxu0 0
        %3033 = vmatpush1.bf16.msra.mxu0 %v3014
        %3034 = vmatprep.subr.bf16.mxu0 0
        %3035 = vmatpush1.bf16.msra.mxu0 %v3013
        %3036 = vmatprep.subr.bf16.mxu0 0
        %3037 = vmatpush1.bf16.msra.mxu0 %v3012
        %3038 = vmatprep.subr.bf16.mxu0 0
        %3039 = vmatpush1.bf16.msra.mxu0 %v3011
        %3040 = vmatprep.subr.bf16.mxu0 0
        %3041 = vmatpush1.bf16.msra.mxu0 %v3010
        %3042 = vmatprep.subr.bf16.mxu0 0
        %3043 = vmatpush2.bf16.msra.mxu0 0
        %3044 = vmatprep.subr.bf16.mxu0 0
        %3045 = vmatpush2.bf16.msra.mxu0 0
        %3046 = vmatprep.subr.bf16.mxu0 0
        %3047 = vmatpush2.bf16.msra.mxu0 0
        %3048 = vmatprep.subr.bf16.mxu0 0
        %3049 = vmatpush2.bf16.msra.mxu0 0
        %3050 = vmatprep.subr.bf16.mxu0 0
        %3051 = vmatpush2.bf16.msra.mxu0 0
        %3052 = vmatprep.subr.bf16.mxu0 0
        %3053 = vmatpush2.bf16.msra.mxu0 0
        %3054 = vmatprep.subr.bf16.mxu0 0
        %3055 = vmatpush2.bf16.msra.mxu0 0
        %3056 = vmatprep.subr.bf16.mxu0 0
        %3057 = vmatpush2.bf16.msra.mxu0 0
        %3058 = vmatprep.mubr.bf16.mxu0 0
        %3059 = vmatmul.mubr.bf16.gmra.mxu0 %v2960
        %v3060 = vpop.f32.mrf.mxu0
        %v3061 = vadd.f32 %v2977, %v3060
        %v3062 = vpop.f32.mrf.mxu0
        %v3063 = vpop.f32.mrf.mxu0
        %v3064 = vpop.f32.mrf.mxu0
        %3065 = vdwg.mxu0
        %3066 = vst [vmem:[%s513] sm:$0x1] %v3061
        %s3067 = sand.u32 %s379, 1
        %s3068 = scalar_lea.sflag [#allocation3], %s3067
        %s3069 = sand.u32 %s379, 1
        %s3070 = scalar_lea.vmem [#allocation2], %s3069
        // Predicated region
        $region85: #{efficientnetv2_forward.7} parent=83 // pred_check
          %p3071 = pneg %p389
        $region86: #{efficientnetv2_forward.7} parent=83 // pred_check_branch
          %3073 = sbr.rel (%p3071) target = $region88
        $region87: #{efficientnetv2_forward.7} parent=83 // pred_region
          %s3075 = ssub.s32 16, 16
          %3076 = vsyncadd %s3068, %s3075
          %s3077 = smul.addr %s30, 16
          %s3078 = scalar_lea.hbm %s16, %s3077
          %s3080 = sshll.u32 %s3070, 4
          %s3081 = int_to_ptr.vmem [resolvable:$true] %s3080
          %3083 = dma.vmem_to_hbm [thread:$0]  %s3081, 16, %s3078, %s3068
        $region88: #{efficientnetv2_forward.7} parent=83 // pred_fallthru
          _
      $region84: #{efficientnetv2_forward.7} parent=5 // pred_fallthru
        _
      %p3084 = scmp.le.s32.totalorder 2, %s25
      // Predicated region
      $region89: #{efficientnetv2_forward.7} parent=5 // pred_check
        %p3085 = pneg %p3084
      $region90: #{efficientnetv2_forward.7} parent=5 // pred_check_branch
        %3087 = sbr.rel (%p3085) target = $region92
      $region91: #{efficientnetv2_forward.7} parent=5 // pred_region
        %s3088 = ssub.s32 %s25, 2
        // Predicated region
        $region93: #{efficientnetv2_forward.7} parent=91 // pred_check
          %p3089 = pneg %p395
        $region94: #{efficientnetv2_forward.7} parent=91 // pred_check_branch
          %3091 = sbr.rel (%p3089) target = $region96
        $region95: #{efficientnetv2_forward.7} parent=91 // pred_region
          %s3092 = sand.u32 %s380, 1
          %s3093 = scalar_lea.sflag [#allocation3], %s3092
          %s3094 = sand.u32 %s380, 1
          %s3095 = scalar_lea.vmem [#allocation2], %s3094
          %3096 = dma.done %s3093, 16
        $region96: #{efficientnetv2_forward.7} parent=91 // pred_fallthru
          _
      $region92: #{efficientnetv2_forward.7} parent=5 // pred_fallthru
        _
    $region6: #{efficientnetv2_forward.7} parent=1 // loop_footer
      %s29 = sadd.s32 1, %s25
    $region7: #{efficientnetv2_forward.7} parent=1 // loop_footer_branch
      %24 = sbr.rel target = $region3
    $region8: #{efficientnetv2_forward.7} parent=1 // loop_exit
      _
    %3097 = vsyncpa [#allocation3], 1
    %s3098 = scalar_lea.sflag [#allocation3], 1
    %3099 = vsyncpa %s3098, 1

</llo_original>
